<compile_context>
chip_gen: v5e
topology: v5e:2x2
jax: 0.10.0
libtpu: 0.0.40
codegen_flags: <defaults>
</compile_context>

<pallas_src>
import functools
import math

import jax
import jax.numpy as jnp
from jax.experimental import pallas as pl
from jax.experimental.pallas import tpu as pltpu

LN_EPS = 1e-5
_GELU_C = 0.7978845608028654  # sqrt(2/pi)


# ----------------------------- in-kernel math helpers -----------------------------

def _layer_norm(x, g, b):
    mu = jnp.mean(x, axis=-1, keepdims=True)
    var = jnp.mean(jnp.square(x - mu), axis=-1, keepdims=True)
    return (x - mu) * jax.lax.rsqrt(var + LN_EPS) * g + b


def _gelu_tanh(x):
    # tanh-approximate GELU: uses the otherwise-idle EUP instead of a VALU erf
    # polynomial.  TODO(synk): PyTorch nn.GELU() default is exact erf; the
    # tanh approximation deviates by ~1e-3.
    return 0.5 * x * (1.0 + jnp.tanh(_GELU_C * (x + 0.044715 * x * x * x)))


# --------------------------------- fused kernel -----------------------------------

def _vit_block_kernel(x_ref, ln1_g_ref, ln1_b_ref, in_w_ref, in_b_ref,
                      out_w_ref, out_b_ref, ln2_g_ref, ln2_b_ref,
                      w1_ref, b1_ref, w2_ref, b2_ref, o_ref,
                      *, num_heads, head_dim, scale):
    """One grid step = one batch element's full ViT block. x_ref/o_ref: (L, D)."""
    D = num_heads * head_dim
    x = x_ref[...].astype(jnp.float32)                                  # (L, D)

    # ---- LN1 fused into the QKV projection (bf16 matmul, f32 accum/epilogue) ----
    xn = _layer_norm(x, ln1_g_ref[...], ln1_b_ref[...])
    qkv = jnp.dot(xn.astype(jnp.bfloat16), in_w_ref[...],
                  preferred_element_type=jnp.float32) + in_b_ref[...]   # (L, 3D)

    # Softmax scale folded into q once on (L, D) — not per (L, L) score tile.
    q = (qkv[:, :D] * scale).astype(jnp.bfloat16)
    k = qkv[:, D:2 * D].astype(jnp.bfloat16)
    v = qkv[:, 2 * D:].astype(jnp.bfloat16)

    # ---- attention: all heads; scores / probs never leave VMEM/vregs ----
    ctx_heads = []
    for h in range(num_heads):                      # static unroll, H is small
        lo = h * head_dim
        hi = lo + head_dim
        qh = q[:, lo:hi]                            # (L, hd) static lane slice
        kh = k[:, lo:hi]
        vh = v[:, lo:hi]
        s = jax.lax.dot_general(qh, kh, (((1,), (1,)), ((), ())),
                                preferred_element_type=jnp.float32)     # (L, L)
        m = jnp.max(s, axis=-1, keepdims=True)
        e = jnp.exp(s - m)
        p = e * pl.reciprocal(jnp.sum(e, axis=-1, keepdims=True), approx=True)
        ctx_heads.append(jnp.dot(p.astype(jnp.bfloat16), vh,
                                 preferred_element_type=jnp.float32))   # (L, hd)
    # Single lane-dense (L, D) context — feeds the out-proj matmul directly,
    # so there is exactly one full-width store for this grid step (o_ref below).
    ctx = jnp.concatenate(ctx_heads, axis=-1)                           # (L, D)

    # ---- attention out-projection + bias + residual (fused, no HBM round trip) ----
    attn = jnp.dot(ctx.astype(jnp.bfloat16), out_w_ref[...],
                   preferred_element_type=jnp.float32) + out_b_ref[...]
    x1 = x + attn

    # ---- LN2 -> fc1 -> GELU(tanh) -> fc2 -> residual ----
    xn2 = _layer_norm(x1, ln2_g_ref[...], ln2_b_ref[...])
    h1 = jnp.dot(xn2.astype(jnp.bfloat16), w1_ref[...],
                 preferred_element_type=jnp.float32) + b1_ref[...]
    h1 = _gelu_tanh(h1)
    mlp = jnp.dot(h1.astype(jnp.bfloat16), w2_ref[...],
                  preferred_element_type=jnp.float32) + b2_ref[...]

    o_ref[...] = (x1 + mlp).astype(o_ref.dtype)     # one lane-dense (L, D) store


# --------------------------------- forward wrapper ---------------------------------

@functools.partial(jax.jit, static_argnames=("num_heads",))
def vit_block_forward(x, params, *, num_heads):
    """x: (L, B, D) seq-first (PyTorch nn.MultiheadAttention default layout)."""
    L, B, D = x.shape
    head_dim = D // num_heads
    hidden = params["mlp_w1"].shape[1]
    scale = 1.0 / math.sqrt(head_dim)

    # Free metadata reshape (L, B, D) -> (L, B*D): batch b's features become the
    # contiguous lane block [b*D, (b+1)*D), so a (L, D) BlockSpec at block index
    # (0, b) selects one batch element without any transpose or gather.
    x2d = x.reshape(L, B * D)

    kern = functools.partial(_vit_block_kernel, num_heads=num_heads,
                             head_dim=head_dim, scale=scale)
    full = lambda b: (0, 0)     # weights / LN params: constant block, loaded once

    out2d = pl.pallas_call(
        kern,
        out_shape=jax.ShapeDtypeStruct((L, B * D), jnp.float32),
        grid=(B,),
        in_specs=[
            pl.BlockSpec((L, D), lambda b: (0, b)),      # x   (one batch element)
            pl.BlockSpec((1, D), full),                  # ln1 gamma
            pl.BlockSpec((1, D), full),                  # ln1 beta
            pl.BlockSpec((D, 3 * D), full),              # QKV weight   (bf16)
            pl.BlockSpec((1, 3 * D), full),              # QKV bias
            pl.BlockSpec((D, D), full),                  # out-proj weight (bf16)
            pl.BlockSpec((1, D), full),                  # out-proj bias
            pl.BlockSpec((1, D), full),                  # ln2 gamma
            pl.BlockSpec((1, D), full),                  # ln2 beta
            pl.BlockSpec((D, hidden), full),             # fc1 weight   (bf16)
            pl.BlockSpec((1, hidden), full),             # fc1 bias
            pl.BlockSpec((hidden, D), full),             # fc2 weight   (bf16)
            pl.BlockSpec((1, D), full),                  # fc2 bias
        ],
        out_specs=pl.BlockSpec((L, D), lambda b: (0, b)),
        compiler_params=pltpu.CompilerParams(
            dimension_semantics=("parallel",)),          # megacore sharding on v7x
    )(x2d,
      params["ln1_g"], params["ln1_b"], params["in_w"], params["in_b"],
      params["out_w"], params["out_b"], params["ln2_g"], params["ln2_b"],
      params["mlp_w1"], params["mlp_b1"], params["mlp_w2"], params["mlp_b2"])

    return out2d.reshape(L, B, D)


# --------------------------- plain-JAX reference (check) ---------------------------

@functools.partial(jax.jit, static_argnames=("num_heads",))
def vit_block_reference(x, params, *, num_heads):
    """Mirrors the kernel math (same bf16 casts / tanh GELU), but with exact
    softmax division instead of the approximate EUP reciprocal."""
    L, B, D = x.shape
    hd = D // num_heads
    scale = 1.0 / math.sqrt(hd)

    def ln(v, g, b):
        mu = jnp.mean(v, -1, keepdims=True)
        var = jnp.mean(jnp.square(v - mu), -1, keepdims=True)
        return (v - mu) * jax.lax.rsqrt(var + LN_EPS) * g.reshape(-1) + b.reshape(-1)

    xf = x.astype(jnp.float32)
    xn = ln(xf, params["ln1_g"], params["ln1_b"])
    qkv = jnp.dot(xn.astype(jnp.bfloat16), params["in_w"],
                  preferred_element_type=jnp.float32) + params["in_b"].reshape(-1)
    q = (qkv[..., :D] * scale).astype(jnp.bfloat16).reshape(L, B, num_heads, hd)
    k = qkv[..., D:2 * D].astype(jnp.bfloat16).reshape(L, B, num_heads, hd)
    v = qkv[..., 2 * D:].astype(jnp.bfloat16).reshape(L, B, num_heads, hd)
    s = jnp.einsum("qbhd,kbhd->bhqk", q, k, preferred_element_type=jnp.float32)
    s = s - jnp.max(s, -1, keepdims=True)
    e = jnp.exp(s)
    p = e / jnp.sum(e, -1, keepdims=True)
    ctx = jnp.einsum("bhqk,kbhd->qbhd", p.astype(jnp.bfloat16), v,
                     preferred_element_type=jnp.float32).reshape(L, B, D)
    attn = jnp.dot(ctx.astype(jnp.bfloat16), params["out_w"],
                   preferred_element_type=jnp.float32) + params["out_b"].reshape(-1)
    x1 = xf + attn
    xn2 = ln(x1, params["ln2_g"], params["ln2_b"])
    h1 = jnp.dot(xn2.astype(jnp.bfloat16), params["mlp_w1"],
                 preferred_element_type=jnp.float32) + params["mlp_b1"].reshape(-1)
    h1 = _gelu_tanh(h1)
    mlp = jnp.dot(h1.astype(jnp.bfloat16), params["mlp_w2"],
                  preferred_element_type=jnp.float32) + params["mlp_b2"].reshape(-1)
    return x1 + mlp


# ----------------------------------- parameters ------------------------------------

def init_vit_block_params(key, dim, mlp_ratio=4.0):
    hidden = int(dim * mlp_ratio)
    k_in, k_out, k1, k2, kb1, kb2 = jax.random.split(key, 6)

    def dense_w(k, fan_in, fan_out):
        w = jax.random.normal(k, (fan_in, fan_out), jnp.float32) / math.sqrt(fan_in)
        return w.astype(jnp.bfloat16)        # MXU operands kept in bf16

    return {
        "ln1_g": jnp.ones((1, dim), jnp.float32),
        "ln1_b": jnp.zeros((1, dim), jnp.float32),
        "in_w": dense_w(k_in, dim, 3 * dim),                     # QKV projection
        "in_b": jnp.zeros((1, 3 * dim), jnp.float32),
        "out_w": dense_w(k_out, dim, dim),                       # attention out-proj
        "out_b": jnp.zeros((1, dim), jnp.float32),
        "ln2_g": jnp.ones((1, dim), jnp.float32),
        "ln2_b": jnp.zeros((1, dim), jnp.float32),
        "mlp_w1": dense_w(k1, dim, hidden),
        "mlp_b1": 0.01 * jax.random.normal(kb1, (1, hidden), jnp.float32),
        "mlp_w2": dense_w(k2, hidden, dim),
        "mlp_b2": 0.01 * jax.random.normal(kb2, (1, dim), jnp.float32),
    }


# ------------------------------------- main ----------------------------------------

if __name__ == "__main__":
    key = jax.random.PRNGKey(0)
    pkey, xkey = jax.random.split(key)

    SEQ, BATCH, DIM, HEADS = 128, 2, 128, 8          # head_dim = 16
    params = init_vit_block_params(pkey, DIM, mlp_ratio=4.0)
    x = jax.random.normal(xkey, (SEQ, BATCH, DIM), jnp.float32)   # (L, B, D) seq-first

    out = jax.block_until_ready(vit_block_forward(x, params, num_heads=HEADS))
    assert out.shape == (SEQ, BATCH, DIM), out.shape
    assert bool(jnp.all(jnp.isfinite(out)))

    ref = jax.block_until_ready(vit_block_reference(x, params, num_heads=HEADS))
    max_err = float(jnp.max(jnp.abs(out - ref)))
    assert max_err < 0.1, f"kernel vs reference mismatch: max abs diff {max_err}"

    print("KERNEL_OK")
</pallas_src>

<mosaic_0001>
module attributes {stable_mosaic.version = 11 : i64} {
  func.func @_vit_block_kernel(%arg0: i32, %arg1: memref<128x128xf32, #tpu.memory_space<vmem>>, %arg2: memref<1x128xf32, #tpu.memory_space<vmem>>, %arg3: memref<1x128xf32, #tpu.memory_space<vmem>>, %arg4: memref<128x384xbf16, #tpu.memory_space<vmem>>, %arg5: memref<1x384xf32, #tpu.memory_space<vmem>>, %arg6: memref<128x128xbf16, #tpu.memory_space<vmem>>, %arg7: memref<1x128xf32, #tpu.memory_space<vmem>>, %arg8: memref<1x128xf32, #tpu.memory_space<vmem>>, %arg9: memref<1x128xf32, #tpu.memory_space<vmem>>, %arg10: memref<128x512xbf16, #tpu.memory_space<vmem>>, %arg11: memref<1x512xf32, #tpu.memory_space<vmem>>, %arg12: memref<512x128xbf16, #tpu.memory_space<vmem>>, %arg13: memref<1x128xf32, #tpu.memory_space<vmem>>, %arg14: memref<128x128xf32, #tpu.memory_space<vmem>>) attributes {dimension_semantics = [#tpu.dimension_semantics<parallel>], iteration_bounds = array<i64: 2>, scalar_prefetch = 0 : i64, scratch_operands = 0 : i64, tpu.core_type = #tpu.core_type<tc>, window_params = [{transform_indices = @transform_0, window_bounds = array<i64: 128, 128>}, {pipeline_mode = #tpu.pipeline_mode<synchronous>, transform_indices = @transform_1, window_bounds = array<i64: 1, 128>}, {pipeline_mode = #tpu.pipeline_mode<synchronous>, transform_indices = @transform_2, window_bounds = array<i64: 1, 128>}, {pipeline_mode = #tpu.pipeline_mode<synchronous>, transform_indices = @transform_3, window_bounds = array<i64: 128, 384>}, {pipeline_mode = #tpu.pipeline_mode<synchronous>, transform_indices = @transform_4, window_bounds = array<i64: 1, 384>}, {pipeline_mode = #tpu.pipeline_mode<synchronous>, transform_indices = @transform_5, window_bounds = array<i64: 128, 128>}, {pipeline_mode = #tpu.pipeline_mode<synchronous>, transform_indices = @transform_6, window_bounds = array<i64: 1, 128>}, {pipeline_mode = #tpu.pipeline_mode<synchronous>, transform_indices = @transform_7, window_bounds = array<i64: 1, 128>}, {pipeline_mode = #tpu.pipeline_mode<synchronous>, transform_indices = @transform_8, window_bounds = array<i64: 1, 128>}, {pipeline_mode = #tpu.pipeline_mode<synchronous>, transform_indices = @transform_9, window_bounds = array<i64: 128, 512>}, {pipeline_mode = #tpu.pipeline_mode<synchronous>, transform_indices = @transform_10, window_bounds = array<i64: 1, 512>}, {pipeline_mode = #tpu.pipeline_mode<synchronous>, transform_indices = @transform_11, window_bounds = array<i64: 512, 128>}, {pipeline_mode = #tpu.pipeline_mode<synchronous>, transform_indices = @transform_12, window_bounds = array<i64: 1, 128>}, {transform_indices = @transform_13, window_bounds = array<i64: 128, 128>}]} {
    %c0 = arith.constant 0 : index
    %c0_0 = arith.constant 0 : index
    %0 = vector.load %arg1[%c0, %c0_0] : memref<128x128xf32, #tpu.memory_space<vmem>>, vector<128x128xf32>
    %c0_1 = arith.constant 0 : index
    %c0_2 = arith.constant 0 : index
    %1 = vector.load %arg2[%c0_1, %c0_2] : memref<1x128xf32, #tpu.memory_space<vmem>>, vector<1x128xf32>
    %c0_3 = arith.constant 0 : index
    %c0_4 = arith.constant 0 : index
    %2 = vector.load %arg3[%c0_3, %c0_4] : memref<1x128xf32, #tpu.memory_space<vmem>>, vector<1x128xf32>
    %cst = arith.constant dense<0.000000e+00> : vector<128xf32>
    %3 = vector.multi_reduction <add>, %0, %cst [1] : vector<128x128xf32> to vector<128xf32>
    %4 = vector.shape_cast %3 : vector<128xf32> to vector<128x1xf32>
    %cst_5 = arith.constant 1.280000e+02 : f32
    %5 = vector.broadcast %cst_5 : f32 to vector<128x1xf32>
    %6 = arith.divf %4, %5 : vector<128x1xf32>
    %7 = vector.broadcast %6 : vector<128x1xf32> to vector<128x128xf32>
    %8 = arith.subf %0, %7 : vector<128x128xf32>
    %9 = arith.mulf %8, %8 : vector<128x128xf32>
    %cst_6 = arith.constant dense<0.000000e+00> : vector<128xf32>
    %10 = vector.multi_reduction <add>, %9, %cst_6 [1] : vector<128x128xf32> to vector<128xf32>
    %11 = vector.shape_cast %10 : vector<128xf32> to vector<128x1xf32>
    %cst_7 = arith.constant 1.280000e+02 : f32
    %12 = vector.broadcast %cst_7 : f32 to vector<128x1xf32>
    %13 = arith.divf %11, %12 : vector<128x1xf32>
    %14 = vector.broadcast %6 : vector<128x1xf32> to vector<128x128xf32>
    %15 = arith.subf %0, %14 : vector<128x128xf32>
    %cst_8 = arith.constant 9.99999974E-6 : f32
    %16 = vector.broadcast %cst_8 : f32 to vector<128x1xf32>
    %17 = arith.addf %13, %16 : vector<128x1xf32>
    %18 = math.rsqrt %17 : vector<128x1xf32>
    %19 = vector.broadcast %18 : vector<128x1xf32> to vector<128x128xf32>
    %20 = arith.mulf %15, %19 : vector<128x128xf32>
    %21 = vector.broadcast %1 : vector<1x128xf32> to vector<128x128xf32>
    %22 = arith.mulf %20, %21 : vector<128x128xf32>
    %23 = vector.broadcast %2 : vector<1x128xf32> to vector<128x128xf32>
    %24 = arith.addf %22, %23 : vector<128x128xf32>
    %25 = arith.truncf %24 : vector<128x128xf32> to vector<128x128xbf16>
    %c0_9 = arith.constant 0 : index
    %c0_10 = arith.constant 0 : index
    %26 = vector.load %arg4[%c0_9, %c0_10] : memref<128x384xbf16, #tpu.memory_space<vmem>>, vector<128x384xbf16>
    %cst_11 = arith.constant dense<0.000000e+00> : vector<128x384xf32>
    %27 = tpu.matmul %25, %26, %cst_11 {dimension_numbers = #tpu.dot_dimension_numbers<[1], [0], [0], [1], [0, 0, 1, 1], [], []>} : vector<128x128xbf16>, vector<128x384xbf16>, vector<128x384xf32> -> vector<128x384xf32>
    %c0_12 = arith.constant 0 : index
    %c0_13 = arith.constant 0 : index
    %28 = vector.load %arg5[%c0_12, %c0_13] : memref<1x384xf32, #tpu.memory_space<vmem>>, vector<1x384xf32>
    %29 = vector.broadcast %28 : vector<1x384xf32> to vector<128x384xf32>
    %30 = arith.addf %27, %29 : vector<128x384xf32>
    %31 = vector.extract_strided_slice %30 {offsets = [0, 0], sizes = [128, 128], strides = [1, 1]} : vector<128x384xf32> to vector<128x128xf32>
    %cst_14 = arith.constant 2.500000e-01 : f32
    %32 = vector.broadcast %cst_14 : f32 to vector<128x128xf32>
    %33 = arith.mulf %31, %32 : vector<128x128xf32>
    %34 = arith.truncf %33 : vector<128x128xf32> to vector<128x128xbf16>
    %35 = vector.extract_strided_slice %30 {offsets = [0, 128], sizes = [128, 128], strides = [1, 1]} : vector<128x384xf32> to vector<128x128xf32>
    %36 = arith.truncf %35 : vector<128x128xf32> to vector<128x128xbf16>
    %37 = vector.extract_strided_slice %30 {offsets = [0, 256], sizes = [128, 128], strides = [1, 1]} : vector<128x384xf32> to vector<128x128xf32>
    %38 = arith.truncf %37 : vector<128x128xf32> to vector<128x128xbf16>
    %39 = vector.extract_strided_slice %34 {offsets = [0, 0], sizes = [128, 16], strides = [1, 1]} : vector<128x128xbf16> to vector<128x16xbf16>
    %40 = vector.extract_strided_slice %36 {offsets = [0, 0], sizes = [128, 16], strides = [1, 1]} : vector<128x128xbf16> to vector<128x16xbf16>
    %41 = vector.extract_strided_slice %38 {offsets = [0, 0], sizes = [128, 16], strides = [1, 1]} : vector<128x128xbf16> to vector<128x16xbf16>
    %cst_15 = arith.constant dense<0.000000e+00> : vector<128x128xf32>
    %42 = tpu.matmul %39, %40, %cst_15 {dimension_numbers = #tpu.dot_dimension_numbers<[1], [1], [0], [0], [0, 0, 1, 0], [], []>} : vector<128x16xbf16>, vector<128x16xbf16>, vector<128x128xf32> -> vector<128x128xf32>
    %cst_16 = arith.constant dense<0xFF800000> : vector<128xf32>
    %43 = vector.multi_reduction <maximumf>, %42, %cst_16 [1] : vector<128x128xf32> to vector<128xf32>
    %44 = vector.shape_cast %43 : vector<128xf32> to vector<128x1xf32>
    %45 = vector.broadcast %44 : vector<128x1xf32> to vector<128x128xf32>
    %46 = arith.subf %42, %45 : vector<128x128xf32>
    %47 = math.exp %46 : vector<128x128xf32>
    %cst_17 = arith.constant dense<0.000000e+00> : vector<128xf32>
    %48 = vector.multi_reduction <add>, %47, %cst_17 [1] : vector<128x128xf32> to vector<128xf32>
    %49 = vector.shape_cast %48 : vector<128xf32> to vector<128x1xf32>
    %50 = tpu.reciprocal %49 {approx = true} : vector<128x1xf32> -> vector<128x1xf32>
    %51 = vector.broadcast %50 : vector<128x1xf32> to vector<128x128xf32>
    %52 = arith.mulf %47, %51 : vector<128x128xf32>
    %53 = arith.truncf %52 : vector<128x128xf32> to vector<128x128xbf16>
    %cst_18 = arith.constant dense<0.000000e+00> : vector<128x16xf32>
    %54 = tpu.matmul %53, %41, %cst_18 {dimension_numbers = #tpu.dot_dimension_numbers<[1], [0], [0], [1], [0, 0, 1, 1], [], []>} : vector<128x128xbf16>, vector<128x16xbf16>, vector<128x16xf32> -> vector<128x16xf32>
    %55 = vector.extract_strided_slice %34 {offsets = [0, 16], sizes = [128, 16], strides = [1, 1]} : vector<128x128xbf16> to vector<128x16xbf16>
    %56 = vector.extract_strided_slice %36 {offsets = [0, 16], sizes = [128, 16], strides = [1, 1]} : vector<128x128xbf16> to vector<128x16xbf16>
    %57 = vector.extract_strided_slice %38 {offsets = [0, 16], sizes = [128, 16], strides = [1, 1]} : vector<128x128xbf16> to vector<128x16xbf16>
    %cst_19 = arith.constant dense<0.000000e+00> : vector<128x128xf32>
    %58 = tpu.matmul %55, %56, %cst_19 {dimension_numbers = #tpu.dot_dimension_numbers<[1], [1], [0], [0], [0, 0, 1, 0], [], []>} : vector<128x16xbf16>, vector<128x16xbf16>, vector<128x128xf32> -> vector<128x128xf32>
    %cst_20 = arith.constant dense<0xFF800000> : vector<128xf32>
    %59 = vector.multi_reduction <maximumf>, %58, %cst_20 [1] : vector<128x128xf32> to vector<128xf32>
    %60 = vector.shape_cast %59 : vector<128xf32> to vector<128x1xf32>
    %61 = vector.broadcast %60 : vector<128x1xf32> to vector<128x128xf32>
    %62 = arith.subf %58, %61 : vector<128x128xf32>
    %63 = math.exp %62 : vector<128x128xf32>
    %cst_21 = arith.constant dense<0.000000e+00> : vector<128xf32>
    %64 = vector.multi_reduction <add>, %63, %cst_21 [1] : vector<128x128xf32> to vector<128xf32>
    %65 = vector.shape_cast %64 : vector<128xf32> to vector<128x1xf32>
    %66 = tpu.reciprocal %65 {approx = true} : vector<128x1xf32> -> vector<128x1xf32>
    %67 = vector.broadcast %66 : vector<128x1xf32> to vector<128x128xf32>
    %68 = arith.mulf %63, %67 : vector<128x128xf32>
    %69 = arith.truncf %68 : vector<128x128xf32> to vector<128x128xbf16>
    %cst_22 = arith.constant dense<0.000000e+00> : vector<128x16xf32>
    %70 = tpu.matmul %69, %57, %cst_22 {dimension_numbers = #tpu.dot_dimension_numbers<[1], [0], [0], [1], [0, 0, 1, 1], [], []>} : vector<128x128xbf16>, vector<128x16xbf16>, vector<128x16xf32> -> vector<128x16xf32>
    %71 = vector.extract_strided_slice %34 {offsets = [0, 32], sizes = [128, 16], strides = [1, 1]} : vector<128x128xbf16> to vector<128x16xbf16>
    %72 = vector.extract_strided_slice %36 {offsets = [0, 32], sizes = [128, 16], strides = [1, 1]} : vector<128x128xbf16> to vector<128x16xbf16>
    %73 = vector.extract_strided_slice %38 {offsets = [0, 32], sizes = [128, 16], strides = [1, 1]} : vector<128x128xbf16> to vector<128x16xbf16>
    %cst_23 = arith.constant dense<0.000000e+00> : vector<128x128xf32>
    %74 = tpu.matmul %71, %72, %cst_23 {dimension_numbers = #tpu.dot_dimension_numbers<[1], [1], [0], [0], [0, 0, 1, 0], [], []>} : vector<128x16xbf16>, vector<128x16xbf16>, vector<128x128xf32> -> vector<128x128xf32>
    %cst_24 = arith.constant dense<0xFF800000> : vector<128xf32>
    %75 = vector.multi_reduction <maximumf>, %74, %cst_24 [1] : vector<128x128xf32> to vector<128xf32>
    %76 = vector.shape_cast %75 : vector<128xf32> to vector<128x1xf32>
    %77 = vector.broadcast %76 : vector<128x1xf32> to vector<128x128xf32>
    %78 = arith.subf %74, %77 : vector<128x128xf32>
    %79 = math.exp %78 : vector<128x128xf32>
    %cst_25 = arith.constant dense<0.000000e+00> : vector<128xf32>
    %80 = vector.multi_reduction <add>, %79, %cst_25 [1] : vector<128x128xf32> to vector<128xf32>
    %81 = vector.shape_cast %80 : vector<128xf32> to vector<128x1xf32>
    %82 = tpu.reciprocal %81 {approx = true} : vector<128x1xf32> -> vector<128x1xf32>
    %83 = vector.broadcast %82 : vector<128x1xf32> to vector<128x128xf32>
    %84 = arith.mulf %79, %83 : vector<128x128xf32>
    %85 = arith.truncf %84 : vector<128x128xf32> to vector<128x128xbf16>
    %cst_26 = arith.constant dense<0.000000e+00> : vector<128x16xf32>
    %86 = tpu.matmul %85, %73, %cst_26 {dimension_numbers = #tpu.dot_dimension_numbers<[1], [0], [0], [1], [0, 0, 1, 1], [], []>} : vector<128x128xbf16>, vector<128x16xbf16>, vector<128x16xf32> -> vector<128x16xf32>
    %87 = vector.extract_strided_slice %34 {offsets = [0, 48], sizes = [128, 16], strides = [1, 1]} : vector<128x128xbf16> to vector<128x16xbf16>
    %88 = vector.extract_strided_slice %36 {offsets = [0, 48], sizes = [128, 16], strides = [1, 1]} : vector<128x128xbf16> to vector<128x16xbf16>
    %89 = vector.extract_strided_slice %38 {offsets = [0, 48], sizes = [128, 16], strides = [1, 1]} : vector<128x128xbf16> to vector<128x16xbf16>
    %cst_27 = arith.constant dense<0.000000e+00> : vector<128x128xf32>
    %90 = tpu.matmul %87, %88, %cst_27 {dimension_numbers = #tpu.dot_dimension_numbers<[1], [1], [0], [0], [0, 0, 1, 0], [], []>} : vector<128x16xbf16>, vector<128x16xbf16>, vector<128x128xf32> -> vector<128x128xf32>
    %cst_28 = arith.constant dense<0xFF800000> : vector<128xf32>
    %91 = vector.multi_reduction <maximumf>, %90, %cst_28 [1] : vector<128x128xf32> to vector<128xf32>
    %92 = vector.shape_cast %91 : vector<128xf32> to vector<128x1xf32>
    %93 = vector.broadcast %92 : vector<128x1xf32> to vector<128x128xf32>
    %94 = arith.subf %90, %93 : vector<128x128xf32>
    %95 = math.exp %94 : vector<128x128xf32>
    %cst_29 = arith.constant dense<0.000000e+00> : vector<128xf32>
    %96 = vector.multi_reduction <add>, %95, %cst_29 [1] : vector<128x128xf32> to vector<128xf32>
    %97 = vector.shape_cast %96 : vector<128xf32> to vector<128x1xf32>
    %98 = tpu.reciprocal %97 {approx = true} : vector<128x1xf32> -> vector<128x1xf32>
    %99 = vector.broadcast %98 : vector<128x1xf32> to vector<128x128xf32>
    %100 = arith.mulf %95, %99 : vector<128x128xf32>
    %101 = arith.truncf %100 : vector<128x128xf32> to vector<128x128xbf16>
    %cst_30 = arith.constant dense<0.000000e+00> : vector<128x16xf32>
    %102 = tpu.matmul %101, %89, %cst_30 {dimension_numbers = #tpu.dot_dimension_numbers<[1], [0], [0], [1], [0, 0, 1, 1], [], []>} : vector<128x128xbf16>, vector<128x16xbf16>, vector<128x16xf32> -> vector<128x16xf32>
    %103 = vector.extract_strided_slice %34 {offsets = [0, 64], sizes = [128, 16], strides = [1, 1]} : vector<128x128xbf16> to vector<128x16xbf16>
    %104 = vector.extract_strided_slice %36 {offsets = [0, 64], sizes = [128, 16], strides = [1, 1]} : vector<128x128xbf16> to vector<128x16xbf16>
    %105 = vector.extract_strided_slice %38 {offsets = [0, 64], sizes = [128, 16], strides = [1, 1]} : vector<128x128xbf16> to vector<128x16xbf16>
    %cst_31 = arith.constant dense<0.000000e+00> : vector<128x128xf32>
    %106 = tpu.matmul %103, %104, %cst_31 {dimension_numbers = #tpu.dot_dimension_numbers<[1], [1], [0], [0], [0, 0, 1, 0], [], []>} : vector<128x16xbf16>, vector<128x16xbf16>, vector<128x128xf32> -> vector<128x128xf32>
    %cst_32 = arith.constant dense<0xFF800000> : vector<128xf32>
    %107 = vector.multi_reduction <maximumf>, %106, %cst_32 [1] : vector<128x128xf32> to vector<128xf32>
    %108 = vector.shape_cast %107 : vector<128xf32> to vector<128x1xf32>
    %109 = vector.broadcast %108 : vector<128x1xf32> to vector<128x128xf32>
    %110 = arith.subf %106, %109 : vector<128x128xf32>
    %111 = math.exp %110 : vector<128x128xf32>
    %cst_33 = arith.constant dense<0.000000e+00> : vector<128xf32>
    %112 = vector.multi_reduction <add>, %111, %cst_33 [1] : vector<128x128xf32> to vector<128xf32>
    %113 = vector.shape_cast %112 : vector<128xf32> to vector<128x1xf32>
    %114 = tpu.reciprocal %113 {approx = true} : vector<128x1xf32> -> vector<128x1xf32>
    %115 = vector.broadcast %114 : vector<128x1xf32> to vector<128x128xf32>
    %116 = arith.mulf %111, %115 : vector<128x128xf32>
    %117 = arith.truncf %116 : vector<128x128xf32> to vector<128x128xbf16>
    %cst_34 = arith.constant dense<0.000000e+00> : vector<128x16xf32>
    %118 = tpu.matmul %117, %105, %cst_34 {dimension_numbers = #tpu.dot_dimension_numbers<[1], [0], [0], [1], [0, 0, 1, 1], [], []>} : vector<128x128xbf16>, vector<128x16xbf16>, vector<128x16xf32> -> vector<128x16xf32>
    %119 = vector.extract_strided_slice %34 {offsets = [0, 80], sizes = [128, 16], strides = [1, 1]} : vector<128x128xbf16> to vector<128x16xbf16>
    %120 = vector.extract_strided_slice %36 {offsets = [0, 80], sizes = [128, 16], strides = [1, 1]} : vector<128x128xbf16> to vector<128x16xbf16>
    %121 = vector.extract_strided_slice %38 {offsets = [0, 80], sizes = [128, 16], strides = [1, 1]} : vector<128x128xbf16> to vector<128x16xbf16>
    %cst_35 = arith.constant dense<0.000000e+00> : vector<128x128xf32>
    %122 = tpu.matmul %119, %120, %cst_35 {dimension_numbers = #tpu.dot_dimension_numbers<[1], [1], [0], [0], [0, 0, 1, 0], [], []>} : vector<128x16xbf16>, vector<128x16xbf16>, vector<128x128xf32> -> vector<128x128xf32>
    %cst_36 = arith.constant dense<0xFF800000> : vector<128xf32>
    %123 = vector.multi_reduction <maximumf>, %122, %cst_36 [1] : vector<128x128xf32> to vector<128xf32>
    %124 = vector.shape_cast %123 : vector<128xf32> to vector<128x1xf32>
    %125 = vector.broadcast %124 : vector<128x1xf32> to vector<128x128xf32>
    %126 = arith.subf %122, %125 : vector<128x128xf32>
    %127 = math.exp %126 : vector<128x128xf32>
    %cst_37 = arith.constant dense<0.000000e+00> : vector<128xf32>
    %128 = vector.multi_reduction <add>, %127, %cst_37 [1] : vector<128x128xf32> to vector<128xf32>
    %129 = vector.shape_cast %128 : vector<128xf32> to vector<128x1xf32>
    %130 = tpu.reciprocal %129 {approx = true} : vector<128x1xf32> -> vector<128x1xf32>
    %131 = vector.broadcast %130 : vector<128x1xf32> to vector<128x128xf32>
    %132 = arith.mulf %127, %131 : vector<128x128xf32>
    %133 = arith.truncf %132 : vector<128x128xf32> to vector<128x128xbf16>
    %cst_38 = arith.constant dense<0.000000e+00> : vector<128x16xf32>
    %134 = tpu.matmul %133, %121, %cst_38 {dimension_numbers = #tpu.dot_dimension_numbers<[1], [0], [0], [1], [0, 0, 1, 1], [], []>} : vector<128x128xbf16>, vector<128x16xbf16>, vector<128x16xf32> -> vector<128x16xf32>
    %135 = vector.extract_strided_slice %34 {offsets = [0, 96], sizes = [128, 16], strides = [1, 1]} : vector<128x128xbf16> to vector<128x16xbf16>
    %136 = vector.extract_strided_slice %36 {offsets = [0, 96], sizes = [128, 16], strides = [1, 1]} : vector<128x128xbf16> to vector<128x16xbf16>
    %137 = vector.extract_strided_slice %38 {offsets = [0, 96], sizes = [128, 16], strides = [1, 1]} : vector<128x128xbf16> to vector<128x16xbf16>
    %cst_39 = arith.constant dense<0.000000e+00> : vector<128x128xf32>
    %138 = tpu.matmul %135, %136, %cst_39 {dimension_numbers = #tpu.dot_dimension_numbers<[1], [1], [0], [0], [0, 0, 1, 0], [], []>} : vector<128x16xbf16>, vector<128x16xbf16>, vector<128x128xf32> -> vector<128x128xf32>
    %cst_40 = arith.constant dense<0xFF800000> : vector<128xf32>
    %139 = vector.multi_reduction <maximumf>, %138, %cst_40 [1] : vector<128x128xf32> to vector<128xf32>
    %140 = vector.shape_cast %139 : vector<128xf32> to vector<128x1xf32>
    %141 = vector.broadcast %140 : vector<128x1xf32> to vector<128x128xf32>
    %142 = arith.subf %138, %141 : vector<128x128xf32>
    %143 = math.exp %142 : vector<128x128xf32>
    %cst_41 = arith.constant dense<0.000000e+00> : vector<128xf32>
    %144 = vector.multi_reduction <add>, %143, %cst_41 [1] : vector<128x128xf32> to vector<128xf32>
    %145 = vector.shape_cast %144 : vector<128xf32> to vector<128x1xf32>
    %146 = tpu.reciprocal %145 {approx = true} : vector<128x1xf32> -> vector<128x1xf32>
    %147 = vector.broadcast %146 : vector<128x1xf32> to vector<128x128xf32>
    %148 = arith.mulf %143, %147 : vector<128x128xf32>
    %149 = arith.truncf %148 : vector<128x128xf32> to vector<128x128xbf16>
    %cst_42 = arith.constant dense<0.000000e+00> : vector<128x16xf32>
    %150 = tpu.matmul %149, %137, %cst_42 {dimension_numbers = #tpu.dot_dimension_numbers<[1], [0], [0], [1], [0, 0, 1, 1], [], []>} : vector<128x128xbf16>, vector<128x16xbf16>, vector<128x16xf32> -> vector<128x16xf32>
    %151 = vector.extract_strided_slice %34 {offsets = [0, 112], sizes = [128, 16], strides = [1, 1]} : vector<128x128xbf16> to vector<128x16xbf16>
    %152 = vector.extract_strided_slice %36 {offsets = [0, 112], sizes = [128, 16], strides = [1, 1]} : vector<128x128xbf16> to vector<128x16xbf16>
    %153 = vector.extract_strided_slice %38 {offsets = [0, 112], sizes = [128, 16], strides = [1, 1]} : vector<128x128xbf16> to vector<128x16xbf16>
    %cst_43 = arith.constant dense<0.000000e+00> : vector<128x128xf32>
    %154 = tpu.matmul %151, %152, %cst_43 {dimension_numbers = #tpu.dot_dimension_numbers<[1], [1], [0], [0], [0, 0, 1, 0], [], []>} : vector<128x16xbf16>, vector<128x16xbf16>, vector<128x128xf32> -> vector<128x128xf32>
    %cst_44 = arith.constant dense<0xFF800000> : vector<128xf32>
    %155 = vector.multi_reduction <maximumf>, %154, %cst_44 [1] : vector<128x128xf32> to vector<128xf32>
    %156 = vector.shape_cast %155 : vector<128xf32> to vector<128x1xf32>
    %157 = vector.broadcast %156 : vector<128x1xf32> to vector<128x128xf32>
    %158 = arith.subf %154, %157 : vector<128x128xf32>
    %159 = math.exp %158 : vector<128x128xf32>
    %cst_45 = arith.constant dense<0.000000e+00> : vector<128xf32>
    %160 = vector.multi_reduction <add>, %159, %cst_45 [1] : vector<128x128xf32> to vector<128xf32>
    %161 = vector.shape_cast %160 : vector<128xf32> to vector<128x1xf32>
    %162 = tpu.reciprocal %161 {approx = true} : vector<128x1xf32> -> vector<128x1xf32>
    %163 = vector.broadcast %162 : vector<128x1xf32> to vector<128x128xf32>
    %164 = arith.mulf %159, %163 : vector<128x128xf32>
    %165 = arith.truncf %164 : vector<128x128xf32> to vector<128x128xbf16>
    %cst_46 = arith.constant dense<0.000000e+00> : vector<128x16xf32>
    %166 = tpu.matmul %165, %153, %cst_46 {dimension_numbers = #tpu.dot_dimension_numbers<[1], [0], [0], [1], [0, 0, 1, 1], [], []>} : vector<128x128xbf16>, vector<128x16xbf16>, vector<128x16xf32> -> vector<128x16xf32>
    %167 = tpu.concatenate %54, %70, %86, %102, %118, %134, %150, %166 in 1 : vector<128x16xf32>, vector<128x16xf32>, vector<128x16xf32>, vector<128x16xf32>, vector<128x16xf32>, vector<128x16xf32>, vector<128x16xf32>, vector<128x16xf32> -> vector<128x128xf32>
    %168 = arith.truncf %167 : vector<128x128xf32> to vector<128x128xbf16>
    %c0_47 = arith.constant 0 : index
    %c0_48 = arith.constant 0 : index
    %169 = vector.load %arg6[%c0_47, %c0_48] : memref<128x128xbf16, #tpu.memory_space<vmem>>, vector<128x128xbf16>
    %cst_49 = arith.constant dense<0.000000e+00> : vector<128x128xf32>
    %170 = tpu.matmul %168, %169, %cst_49 {dimension_numbers = #tpu.dot_dimension_numbers<[1], [0], [0], [1], [0, 0, 1, 1], [], []>} : vector<128x128xbf16>, vector<128x128xbf16>, vector<128x128xf32> -> vector<128x128xf32>
    %c0_50 = arith.constant 0 : index
    %c0_51 = arith.constant 0 : index
    %171 = vector.load %arg7[%c0_50, %c0_51] : memref<1x128xf32, #tpu.memory_space<vmem>>, vector<1x128xf32>
    %172 = vector.broadcast %171 : vector<1x128xf32> to vector<128x128xf32>
    %173 = arith.addf %170, %172 : vector<128x128xf32>
    %174 = arith.addf %0, %173 : vector<128x128xf32>
    %c0_52 = arith.constant 0 : index
    %c0_53 = arith.constant 0 : index
    %175 = vector.load %arg8[%c0_52, %c0_53] : memref<1x128xf32, #tpu.memory_space<vmem>>, vector<1x128xf32>
    %c0_54 = arith.constant 0 : index
    %c0_55 = arith.constant 0 : index
    %176 = vector.load %arg9[%c0_54, %c0_55] : memref<1x128xf32, #tpu.memory_space<vmem>>, vector<1x128xf32>
    %cst_56 = arith.constant dense<0.000000e+00> : vector<128xf32>
    %177 = vector.multi_reduction <add>, %174, %cst_56 [1] : vector<128x128xf32> to vector<128xf32>
    %178 = vector.shape_cast %177 : vector<128xf32> to vector<128x1xf32>
    %cst_57 = arith.constant 1.280000e+02 : f32
    %179 = vector.broadcast %cst_57 : f32 to vector<128x1xf32>
    %180 = arith.divf %178, %179 : vector<128x1xf32>
    %181 = vector.broadcast %180 : vector<128x1xf32> to vector<128x128xf32>
    %182 = arith.subf %174, %181 : vector<128x128xf32>
    %183 = arith.mulf %182, %182 : vector<128x128xf32>
    %cst_58 = arith.constant dense<0.000000e+00> : vector<128xf32>
    %184 = vector.multi_reduction <add>, %183, %cst_58 [1] : vector<128x128xf32> to vector<128xf32>
    %185 = vector.shape_cast %184 : vector<128xf32> to vector<128x1xf32>
    %cst_59 = arith.constant 1.280000e+02 : f32
    %186 = vector.broadcast %cst_59 : f32 to vector<128x1xf32>
    %187 = arith.divf %185, %186 : vector<128x1xf32>
    %188 = vector.broadcast %180 : vector<128x1xf32> to vector<128x128xf32>
    %189 = arith.subf %174, %188 : vector<128x128xf32>
    %cst_60 = arith.constant 9.99999974E-6 : f32
    %190 = vector.broadcast %cst_60 : f32 to vector<128x1xf32>
    %191 = arith.addf %187, %190 : vector<128x1xf32>
    %192 = math.rsqrt %191 : vector<128x1xf32>
    %193 = vector.broadcast %192 : vector<128x1xf32> to vector<128x128xf32>
    %194 = arith.mulf %189, %193 : vector<128x128xf32>
    %195 = vector.broadcast %175 : vector<1x128xf32> to vector<128x128xf32>
    %196 = arith.mulf %194, %195 : vector<128x128xf32>
    %197 = vector.broadcast %176 : vector<1x128xf32> to vector<128x128xf32>
    %198 = arith.addf %196, %197 : vector<128x128xf32>
    %199 = arith.truncf %198 : vector<128x128xf32> to vector<128x128xbf16>
    %c0_61 = arith.constant 0 : index
    %c0_62 = arith.constant 0 : index
    %200 = vector.load %arg10[%c0_61, %c0_62] : memref<128x512xbf16, #tpu.memory_space<vmem>>, vector<128x512xbf16>
    %cst_63 = arith.constant dense<0.000000e+00> : vector<128x512xf32>
    %201 = tpu.matmul %199, %200, %cst_63 {dimension_numbers = #tpu.dot_dimension_numbers<[1], [0], [0], [1], [0, 0, 1, 1], [], []>} : vector<128x128xbf16>, vector<128x512xbf16>, vector<128x512xf32> -> vector<128x512xf32>
    %c0_64 = arith.constant 0 : index
    %c0_65 = arith.constant 0 : index
    %202 = vector.load %arg11[%c0_64, %c0_65] : memref<1x512xf32, #tpu.memory_space<vmem>>, vector<1x512xf32>
    %203 = vector.broadcast %202 : vector<1x512xf32> to vector<128x512xf32>
    %204 = arith.addf %201, %203 : vector<128x512xf32>
    %cst_66 = arith.constant 5.000000e-01 : f32
    %205 = vector.broadcast %cst_66 : f32 to vector<128x512xf32>
    %206 = arith.mulf %205, %204 : vector<128x512xf32>
    %cst_67 = arith.constant 4.471500e-02 : f32
    %207 = vector.broadcast %cst_67 : f32 to vector<128x512xf32>
    %208 = arith.mulf %207, %204 : vector<128x512xf32>
    %209 = arith.mulf %208, %204 : vector<128x512xf32>
    %210 = arith.mulf %209, %204 : vector<128x512xf32>
    %211 = arith.addf %204, %210 : vector<128x512xf32>
    %cst_68 = arith.constant 0.797884583 : f32
    %212 = vector.broadcast %cst_68 : f32 to vector<128x512xf32>
    %213 = arith.mulf %212, %211 : vector<128x512xf32>
    %214 = math.tanh %213 : vector<128x512xf32>
    %cst_69 = arith.constant 1.000000e+00 : f32
    %215 = vector.broadcast %cst_69 : f32 to vector<128x512xf32>
    %216 = arith.addf %215, %214 : vector<128x512xf32>
    %217 = arith.mulf %206, %216 : vector<128x512xf32>
    %218 = arith.truncf %217 : vector<128x512xf32> to vector<128x512xbf16>
    %c0_70 = arith.constant 0 : index
    %c0_71 = arith.constant 0 : index
    %219 = vector.load %arg12[%c0_70, %c0_71] : memref<512x128xbf16, #tpu.memory_space<vmem>>, vector<512x128xbf16>
    %cst_72 = arith.constant dense<0.000000e+00> : vector<128x128xf32>
    %220 = tpu.matmul %218, %219, %cst_72 {dimension_numbers = #tpu.dot_dimension_numbers<[1], [0], [0], [1], [0, 0, 1, 1], [], []>} : vector<128x512xbf16>, vector<512x128xbf16>, vector<128x128xf32> -> vector<128x128xf32>
    %c0_73 = arith.constant 0 : index
    %c0_74 = arith.constant 0 : index
    %221 = vector.load %arg13[%c0_73, %c0_74] : memref<1x128xf32, #tpu.memory_space<vmem>>, vector<1x128xf32>
    %222 = vector.broadcast %221 : vector<1x128xf32> to vector<128x128xf32>
    %223 = arith.addf %220, %222 : vector<128x128xf32>
    %224 = arith.addf %174, %223 : vector<128x128xf32>
    %c0_75 = arith.constant 0 : index
    %c0_76 = arith.constant 0 : index
    %225 = vector.load %arg14[%c0_75, %c0_76] : memref<128x128xf32, #tpu.memory_space<vmem>>, vector<128x128xf32>
    tpu.vector_store %arg14[%c0_75, %c0_76], %224 {strides = array<i32>} : memref<128x128xf32, #tpu.memory_space<vmem>>, vector<128x128xf32>,
    return
  }
  func.func @transform_0(%arg0: i32) -> (i32, i32) {
    %c0_i32 = arith.constant 0 : i32
    %c0_i32_0 = arith.constant 0 : i32
    return %c0_i32, %arg0 : i32, i32
  }
  func.func @transform_1(%arg0: i32) -> (i32, i32) {
    %c0_i32 = arith.constant 0 : i32
    %c0_i32_0 = arith.constant 0 : i32
    %c0_i32_1 = arith.constant 0 : i32
    return %c0_i32, %c0_i32_0 : i32, i32
  }
  func.func @transform_2(%arg0: i32) -> (i32, i32) {
    %c0_i32 = arith.constant 0 : i32
    %c0_i32_0 = arith.constant 0 : i32
    %c0_i32_1 = arith.constant 0 : i32
    return %c0_i32, %c0_i32_0 : i32, i32
  }
  func.func @transform_3(%arg0: i32) -> (i32, i32) {
    %c0_i32 = arith.constant 0 : i32
    %c0_i32_0 = arith.constant 0 : i32
    %c0_i32_1 = arith.constant 0 : i32
    return %c0_i32, %c0_i32_0 : i32, i32
  }
  func.func @transform_4(%arg0: i32) -> (i32, i32) {
    %c0_i32 = arith.constant 0 : i32
    %c0_i32_0 = arith.constant 0 : i32
    %c0_i32_1 = arith.constant 0 : i32
    return %c0_i32, %c0_i32_0 : i32, i32
  }
  func.func @transform_5(%arg0: i32) -> (i32, i32) {
    %c0_i32 = arith.constant 0 : i32
    %c0_i32_0 = arith.constant 0 : i32
    %c0_i32_1 = arith.constant 0 : i32
    return %c0_i32, %c0_i32_0 : i32, i32
  }
  func.func @transform_6(%arg0: i32) -> (i32, i32) {
    %c0_i32 = arith.constant 0 : i32
    %c0_i32_0 = arith.constant 0 : i32
    %c0_i32_1 = arith.constant 0 : i32
    return %c0_i32, %c0_i32_0 : i32, i32
  }
  func.func @transform_7(%arg0: i32) -> (i32, i32) {
    %c0_i32 = arith.constant 0 : i32
    %c0_i32_0 = arith.constant 0 : i32
    %c0_i32_1 = arith.constant 0 : i32
    return %c0_i32, %c0_i32_0 : i32, i32
  }
  func.func @transform_8(%arg0: i32) -> (i32, i32) {
    %c0_i32 = arith.constant 0 : i32
    %c0_i32_0 = arith.constant 0 : i32
    %c0_i32_1 = arith.constant 0 : i32
    return %c0_i32, %c0_i32_0 : i32, i32
  }
  func.func @transform_9(%arg0: i32) -> (i32, i32) {
    %c0_i32 = arith.constant 0 : i32
    %c0_i32_0 = arith.constant 0 : i32
    %c0_i32_1 = arith.constant 0 : i32
    return %c0_i32, %c0_i32_0 : i32, i32
  }
  func.func @transform_10(%arg0: i32) -> (i32, i32) {
    %c0_i32 = arith.constant 0 : i32
    %c0_i32_0 = arith.constant 0 : i32
    %c0_i32_1 = arith.constant 0 : i32
    return %c0_i32, %c0_i32_0 : i32, i32
  }
  func.func @transform_11(%arg0: i32) -> (i32, i32) {
    %c0_i32 = arith.constant 0 : i32
    %c0_i32_0 = arith.constant 0 : i32
    %c0_i32_1 = arith.constant 0 : i32
    return %c0_i32, %c0_i32_0 : i32, i32
  }
  func.func @transform_12(%arg0: i32) -> (i32, i32) {
    %c0_i32 = arith.constant 0 : i32
    %c0_i32_0 = arith.constant 0 : i32
    %c0_i32_1 = arith.constant 0 : i32
    return %c0_i32, %c0_i32_0 : i32, i32
  }
  func.func @transform_13(%arg0: i32) -> (i32, i32) {
    %c0_i32 = arith.constant 0 : i32
    %c0_i32_0 = arith.constant 0 : i32
    return %c0_i32, %arg0 : i32, i32
  }
}

</mosaic_0001>

<llo_original>
// kernel: vit_block_forward.1
$region0: #{vit_block_forward.1}
  #allocation0 [shape = 'u32[]', space=smem, size = 0x4, offset = 0x4, fixed_abs, tag = 'smem constant byte address 0x4 - core index']
  #allocation1 [shape = 'u32[72,128]{1,0:T(1,128)}', space=vmem, size = 0x9000, scoped, tag = 'internal scratch']
  %s0 = inlined_call_operand.vmem [shape: f32[128,256], index: 0, kind: input, shape index: {}]
  %s1 = inlined_call_operand.hbm [shape: f32[1,128], index: 1, kind: input, shape index: {}]
  %s2 = inlined_call_operand.hbm [shape: f32[1,128], index: 2, kind: input, shape index: {}]
  %s3 = inlined_call_operand.hbm [shape: bf16[128,384], index: 3, kind: input, shape index: {}]
  %s4 = inlined_call_operand.hbm [shape: f32[1,384], index: 4, kind: input, shape index: {}]
  %s5 = inlined_call_operand.hbm [shape: bf16[128,128], index: 5, kind: input, shape index: {}]
  %s6 = inlined_call_operand.vmem [shape: f32[1,128], index: 6, kind: input, shape index: {}]
  %s7 = inlined_call_operand.hbm [shape: f32[1,128], index: 7, kind: input, shape index: {}]
  %s8 = inlined_call_operand.hbm [shape: f32[1,128], index: 8, kind: input, shape index: {}]
  %s9 = inlined_call_operand.vmem [shape: bf16[128,512], index: 9, kind: input, shape index: {}]
  %s10 = inlined_call_operand.vmem [shape: f32[1,512], index: 10, kind: input, shape index: {}]
  %s11 = inlined_call_operand.vmem [shape: bf16[512,128], index: 11, kind: input, shape index: {}]
  %s12 = inlined_call_operand.hbm [shape: f32[1,128], index: 12, kind: input, shape index: {}]
  %s13 = inlined_call_operand.vmem [shape: f32[128,256], index: 13, kind: output, shape index: {}]
  %s14 = sld [smem:[#allocation0]]
  $region189: #{vit_block_forward.1} parent=0
    _
  %s16 = ssub.s32 1, %s14
  %s17 = scalar_select 0, %s16, %s14
  $region1: #{vit_block_forward.1} parent=0
    #allocation2 [shape = 'u8[131072]{0}', space=vmem, size = 0x20000, scoped, tag = 'input window, operand 0']
    #allocation3 [shape = 'u8[512]{0}', space=vmem, size = 0x400, scoped, tag = 'input window, operand 1, single buffered']
    #allocation4 [shape = 's32[2]{0}', space=sflag, size = 0x8, scoped, tag = 'scoped memory for vit_block_forward.1']
    #allocation5 [shape = 'u8[512]{0}', space=vmem, size = 0x400, scoped, tag = 'input window, operand 2, single buffered']
    #allocation6 [shape = 's32[1]{0}', space=sflag, size = 0x4, scoped, tag = 'scoped memory for vit_block_forward.1']
    #allocation7 [shape = 'u8[98304]{0}', space=vmem, size = 0x18000, scoped, tag = 'input window, operand 3, single buffered']
    #allocation8 [shape = 'u8[1536]{0}', space=vmem, size = 0x800, scoped, tag = 'input window, operand 4, single buffered']
    #allocation9 [shape = 's32[1]{0}', space=sflag, size = 0x4, scoped, tag = 'scoped memory for vit_block_forward.1']
    #allocation10 [shape = 'u8[32768]{0}', space=vmem, size = 0x8000, scoped, tag = 'input window, operand 5, single buffered']
    #allocation11 [shape = 'u8[512]{0}', space=vmem, size = 0x400, scoped, tag = 'input window, operand 7, single buffered']
    #allocation12 [shape = 's32[1]{0}', space=sflag, size = 0x4, scoped, tag = 'scoped memory for vit_block_forward.1']
    #allocation13 [shape = 'u8[512]{0}', space=vmem, size = 0x400, scoped, tag = 'input window, operand 8, single buffered']
    #allocation14 [shape = 'u8[512]{0}', space=vmem, size = 0x400, scoped, tag = 'input window, operand 12, single buffered']
    #allocation15 [shape = 's32[1]{0}', space=sflag, size = 0x4, scoped, tag = 'scoped memory for vit_block_forward.1']
    #allocation16 [shape = 'u8[131072]{0}', space=vmem, size = 0x20000, scoped, tag = 'output window, operand 0']
    %18 = vsyncpa [#allocation4], 0
    %19 = vsyncpa [#allocation6], 0
    %20 = vsyncpa [#allocation9], 0
    %21 = vsyncpa [#allocation12], 0
    %22 = vsyncpa [#allocation15], 0
    loop: start=0, step=1, limit=4
    $region2: #{vit_block_forward.1} parent=1 // loop_pre_header
      _
    $region3: #{vit_block_forward.1} parent=1 // loop_header
      %s24 = sphi 0, %s28
      %p25 = scmp.ge.s32.totalorder %s24, 4
      %s34 = sphi 0, %s36
      %s37 = sphi 0, %s34
      %s38 = sphi 0, %s37
      %s54 = sphi 0, %s38
      %s58 = sphi 0, %s58
      %s60 = sphi 0, %s58
      %s61 = sphi 0, %s60
      %s75 = sphi 0, %s61
      %s79 = sphi 0, %s79
      %s81 = sphi 0, %s79
      %s82 = sphi 0, %s81
      %s96 = sphi 0, %s82
      %s100 = sphi 0, %s100
      %s102 = sphi 0, %s100
      %s103 = sphi 0, %s102
      %s117 = sphi 0, %s103
      %s121 = sphi 0, %s121
      %s123 = sphi 0, %s121
      %s124 = sphi 0, %s123
      %s138 = sphi 0, %s124
      %s142 = sphi 0, %s142
      %s144 = sphi 0, %s142
      %s145 = sphi 0, %s144
      %s159 = sphi 0, %s145
      %s163 = sphi 0, %s163
      %s165 = sphi 0, %s163
      %s166 = sphi 0, %s165
      %s180 = sphi 0, %s166
      %s184 = sphi 0, %s184
      %s186 = sphi 0, %s184
      %s187 = sphi 0, %s186
      %s201 = sphi 0, %s187
      %s205 = sphi 0, %s205
      %s207 = sphi 0, %s205
      %s208 = sphi 0, %s207
      %s222 = sphi 0, %s208
      %s226 = sphi 0, %s226
      %s228 = sphi 0, %s226
      %s229 = sphi 0, %s228
      %s243 = sphi 0, %s229
      %s247 = sphi 0, %s247
      %s249 = sphi 0, %s247
      %s250 = sphi 0, %s249
      %s264 = sphi 0, %s250
      %s268 = sphi 0, %s268
      %s270 = sphi 0, %s268
      %s271 = sphi 0, %s270
      %s285 = sphi 0, %s271
      %s289 = sphi 0, %s289
      %s291 = sphi 0, %s289
      %s292 = sphi 0, %s291
      %s306 = sphi 0, %s292
      %s312 = sphi 0, %s314
      %s315 = sphi 0, %s312
      %s316 = sphi 0, %s315
      %s332 = sphi 0, %s316
    $region4: #{vit_block_forward.1} parent=1 // loop_header_branch
      %27 = sbr.rel (%p25) target = $region8
    $region5: #{vit_block_forward.1} parent=1 // loop_body
      %s29 = ssub.s32 %s24, 1
      %s30 = ssub.s32 %s24, 2
      %s31 = sadd.s32 %s24, 1
      %s32 = ssub.s32 %s24, %s31
      %p33 = scmp.eq.s32.totalorder %s32, 0
      %s35 = sadd.s32 %s34, 1
      %s36 = scalar_select %p33, %s34, %s35
      %p39 = pneg %p33
      %p40 = scmp.eq.s32.totalorder %s24, 1
      %p41 = por %p39, %p40
      %p42 = scmp.ne.s32.totalorder %s34, %s37
      %p43 = scmp.eq.s32.totalorder %s24, 0
      %p44 = por %p42, %p43
      %p45 = scmp.ne.s32.totalorder %s34, %s37
      %p46 = scmp.eq.s32.totalorder %s29, 1
      %p47 = por %p45, %p46
      %p48 = scmp.ne.s32.totalorder %s37, %s38
      %p49 = scmp.eq.s32.totalorder %s29, 0
      %p50 = por %p48, %p49
      %p51 = scmp.ne.s32.totalorder %s37, %s38
      %p52 = scmp.eq.s32.totalorder %s30, 1
      %p53 = por %p51, %p52
      %p55 = scmp.ne.s32.totalorder %s38, %s54
      %p56 = scmp.eq.s32.totalorder %s30, 0
      %p57 = por %p55, %p56
      %s59 = sadd.s32 %s58, 1
      %p62 = scmp.eq.s32.totalorder %s24, 1
      %p63 = scmp.ne.s32.totalorder %s58, %s60
      %p64 = scmp.eq.s32.totalorder %s24, 0
      %p65 = por %p63, %p64
      %p66 = scmp.ne.s32.totalorder %s58, %s60
      %p67 = scmp.eq.s32.totalorder %s29, 1
      %p68 = por %p66, %p67
      %p69 = scmp.ne.s32.totalorder %s60, %s61
      %p70 = scmp.eq.s32.totalorder %s29, 0
      %p71 = por %p69, %p70
      %p72 = scmp.ne.s32.totalorder %s60, %s61
      %p73 = scmp.eq.s32.totalorder %s30, 1
      %p74 = por %p72, %p73
      %p76 = scmp.ne.s32.totalorder %s61, %s75
      %p77 = scmp.eq.s32.totalorder %s30, 0
      %p78 = por %p76, %p77
      %s80 = sadd.s32 %s79, 1
      %p83 = scmp.eq.s32.totalorder %s24, 1
      %p84 = scmp.ne.s32.totalorder %s79, %s81
      %p85 = scmp.eq.s32.totalorder %s24, 0
      %p86 = por %p84, %p85
      %p87 = scmp.ne.s32.totalorder %s79, %s81
      %p88 = scmp.eq.s32.totalorder %s29, 1
      %p89 = por %p87, %p88
      %p90 = scmp.ne.s32.totalorder %s81, %s82
      %p91 = scmp.eq.s32.totalorder %s29, 0
      %p92 = por %p90, %p91
      %p93 = scmp.ne.s32.totalorder %s81, %s82
      %p94 = scmp.eq.s32.totalorder %s30, 1
      %p95 = por %p93, %p94
      %p97 = scmp.ne.s32.totalorder %s82, %s96
      %p98 = scmp.eq.s32.totalorder %s30, 0
      %p99 = por %p97, %p98
      %s101 = sadd.s32 %s100, 1
      %p104 = scmp.eq.s32.totalorder %s24, 1
      %p105 = scmp.ne.s32.totalorder %s100, %s102
      %p106 = scmp.eq.s32.totalorder %s24, 0
      %p107 = por %p105, %p106
      %p108 = scmp.ne.s32.totalorder %s100, %s102
      %p109 = scmp.eq.s32.totalorder %s29, 1
      %p110 = por %p108, %p109
      %p111 = scmp.ne.s32.totalorder %s102, %s103
      %p112 = scmp.eq.s32.totalorder %s29, 0
      %p113 = por %p111, %p112
      %p114 = scmp.ne.s32.totalorder %s102, %s103
      %p115 = scmp.eq.s32.totalorder %s30, 1
      %p116 = por %p114, %p115
      %p118 = scmp.ne.s32.totalorder %s103, %s117
      %p119 = scmp.eq.s32.totalorder %s30, 0
      %p120 = por %p118, %p119
      %s122 = sadd.s32 %s121, 1
      %p125 = scmp.eq.s32.totalorder %s24, 1
      %p126 = scmp.ne.s32.totalorder %s121, %s123
      %p127 = scmp.eq.s32.totalorder %s24, 0
      %p128 = por %p126, %p127
      %p129 = scmp.ne.s32.totalorder %s121, %s123
      %p130 = scmp.eq.s32.totalorder %s29, 1
      %p131 = por %p129, %p130
      %p132 = scmp.ne.s32.totalorder %s123, %s124
      %p133 = scmp.eq.s32.totalorder %s29, 0
      %p134 = por %p132, %p133
      %p135 = scmp.ne.s32.totalorder %s123, %s124
      %p136 = scmp.eq.s32.totalorder %s30, 1
      %p137 = por %p135, %p136
      %p139 = scmp.ne.s32.totalorder %s124, %s138
      %p140 = scmp.eq.s32.totalorder %s30, 0
      %p141 = por %p139, %p140
      %s143 = sadd.s32 %s142, 1
      %p146 = scmp.eq.s32.totalorder %s24, 1
      %p147 = scmp.ne.s32.totalorder %s142, %s144
      %p148 = scmp.eq.s32.totalorder %s24, 0
      %p149 = por %p147, %p148
      %p150 = scmp.ne.s32.totalorder %s142, %s144
      %p151 = scmp.eq.s32.totalorder %s29, 1
      %p152 = por %p150, %p151
      %p153 = scmp.ne.s32.totalorder %s144, %s145
      %p154 = scmp.eq.s32.totalorder %s29, 0
      %p155 = por %p153, %p154
      %p156 = scmp.ne.s32.totalorder %s144, %s145
      %p157 = scmp.eq.s32.totalorder %s30, 1
      %p158 = por %p156, %p157
      %p160 = scmp.ne.s32.totalorder %s145, %s159
      %p161 = scmp.eq.s32.totalorder %s30, 0
      %p162 = por %p160, %p161
      %s164 = sadd.s32 %s163, 1
      %p167 = scmp.eq.s32.totalorder %s24, 1
      %p168 = scmp.ne.s32.totalorder %s163, %s165
      %p169 = scmp.eq.s32.totalorder %s24, 0
      %p170 = por %p168, %p169
      %p171 = scmp.ne.s32.totalorder %s163, %s165
      %p172 = scmp.eq.s32.totalorder %s29, 1
      %p173 = por %p171, %p172
      %p174 = scmp.ne.s32.totalorder %s165, %s166
      %p175 = scmp.eq.s32.totalorder %s29, 0
      %p176 = por %p174, %p175
      %p177 = scmp.ne.s32.totalorder %s165, %s166
      %p178 = scmp.eq.s32.totalorder %s30, 1
      %p179 = por %p177, %p178
      %p181 = scmp.ne.s32.totalorder %s166, %s180
      %p182 = scmp.eq.s32.totalorder %s30, 0
      %p183 = por %p181, %p182
      %s185 = sadd.s32 %s184, 1
      %p188 = scmp.eq.s32.totalorder %s24, 1
      %p189 = scmp.ne.s32.totalorder %s184, %s186
      %p190 = scmp.eq.s32.totalorder %s24, 0
      %p191 = por %p189, %p190
      %p192 = scmp.ne.s32.totalorder %s184, %s186
      %p193 = scmp.eq.s32.totalorder %s29, 1
      %p194 = por %p192, %p193
      %p195 = scmp.ne.s32.totalorder %s186, %s187
      %p196 = scmp.eq.s32.totalorder %s29, 0
      %p197 = por %p195, %p196
      %p198 = scmp.ne.s32.totalorder %s186, %s187
      %p199 = scmp.eq.s32.totalorder %s30, 1
      %p200 = por %p198, %p199
      %p202 = scmp.ne.s32.totalorder %s187, %s201
      %p203 = scmp.eq.s32.totalorder %s30, 0
      %p204 = por %p202, %p203
      %s206 = sadd.s32 %s205, 1
      %p209 = scmp.eq.s32.totalorder %s24, 1
      %p210 = scmp.ne.s32.totalorder %s205, %s207
      %p211 = scmp.eq.s32.totalorder %s24, 0
      %p212 = por %p210, %p211
      %p213 = scmp.ne.s32.totalorder %s205, %s207
      %p214 = scmp.eq.s32.totalorder %s29, 1
      %p215 = por %p213, %p214
      %p216 = scmp.ne.s32.totalorder %s207, %s208
      %p217 = scmp.eq.s32.totalorder %s29, 0
      %p218 = por %p216, %p217
      %p219 = scmp.ne.s32.totalorder %s207, %s208
      %p220 = scmp.eq.s32.totalorder %s30, 1
      %p221 = por %p219, %p220
      %p223 = scmp.ne.s32.totalorder %s208, %s222
      %p224 = scmp.eq.s32.totalorder %s30, 0
      %p225 = por %p223, %p224
      %s227 = sadd.s32 %s226, 1
      %p230 = scmp.eq.s32.totalorder %s24, 1
      %p231 = scmp.ne.s32.totalorder %s226, %s228
      %p232 = scmp.eq.s32.totalorder %s24, 0
      %p233 = por %p231, %p232
      %p234 = scmp.ne.s32.totalorder %s226, %s228
      %p235 = scmp.eq.s32.totalorder %s29, 1
      %p236 = por %p234, %p235
      %p237 = scmp.ne.s32.totalorder %s228, %s229
      %p238 = scmp.eq.s32.totalorder %s29, 0
      %p239 = por %p237, %p238
      %p240 = scmp.ne.s32.totalorder %s228, %s229
      %p241 = scmp.eq.s32.totalorder %s30, 1
      %p242 = por %p240, %p241
      %p244 = scmp.ne.s32.totalorder %s229, %s243
      %p245 = scmp.eq.s32.totalorder %s30, 0
      %p246 = por %p244, %p245
      %s248 = sadd.s32 %s247, 1
      %p251 = scmp.eq.s32.totalorder %s24, 1
      %p252 = scmp.ne.s32.totalorder %s247, %s249
      %p253 = scmp.eq.s32.totalorder %s24, 0
      %p254 = por %p252, %p253
      %p255 = scmp.ne.s32.totalorder %s247, %s249
      %p256 = scmp.eq.s32.totalorder %s29, 1
      %p257 = por %p255, %p256
      %p258 = scmp.ne.s32.totalorder %s249, %s250
      %p259 = scmp.eq.s32.totalorder %s29, 0
      %p260 = por %p258, %p259
      %p261 = scmp.ne.s32.totalorder %s249, %s250
      %p262 = scmp.eq.s32.totalorder %s30, 1
      %p263 = por %p261, %p262
      %p265 = scmp.ne.s32.totalorder %s250, %s264
      %p266 = scmp.eq.s32.totalorder %s30, 0
      %p267 = por %p265, %p266
      %s269 = sadd.s32 %s268, 1
      %p272 = scmp.eq.s32.totalorder %s24, 1
      %p273 = scmp.ne.s32.totalorder %s268, %s270
      %p274 = scmp.eq.s32.totalorder %s24, 0
      %p275 = por %p273, %p274
      %p276 = scmp.ne.s32.totalorder %s268, %s270
      %p277 = scmp.eq.s32.totalorder %s29, 1
      %p278 = por %p276, %p277
      %p279 = scmp.ne.s32.totalorder %s270, %s271
      %p280 = scmp.eq.s32.totalorder %s29, 0
      %p281 = por %p279, %p280
      %p282 = scmp.ne.s32.totalorder %s270, %s271
      %p283 = scmp.eq.s32.totalorder %s30, 1
      %p284 = por %p282, %p283
      %p286 = scmp.ne.s32.totalorder %s271, %s285
      %p287 = scmp.eq.s32.totalorder %s30, 0
      %p288 = por %p286, %p287
      %s290 = sadd.s32 %s289, 1
      %p293 = scmp.eq.s32.totalorder %s24, 1
      %p294 = scmp.ne.s32.totalorder %s289, %s291
      %p295 = scmp.eq.s32.totalorder %s24, 0
      %p296 = por %p294, %p295
      %p297 = scmp.ne.s32.totalorder %s289, %s291
      %p298 = scmp.eq.s32.totalorder %s29, 1
      %p299 = por %p297, %p298
      %p300 = scmp.ne.s32.totalorder %s291, %s292
      %p301 = scmp.eq.s32.totalorder %s29, 0
      %p302 = por %p300, %p301
      %p303 = scmp.ne.s32.totalorder %s291, %s292
      %p304 = scmp.eq.s32.totalorder %s30, 1
      %p305 = por %p303, %p304
      %p307 = scmp.ne.s32.totalorder %s292, %s306
      %p308 = scmp.eq.s32.totalorder %s30, 0
      %p309 = por %p307, %p308
      %s310 = ssub.s32 %s24, %s31
      %p311 = scmp.eq.s32.totalorder %s310, 0
      %s313 = sadd.s32 %s312, 1
      %s314 = scalar_select %p311, %s312, %s313
      %p317 = pneg %p311
      %p318 = scmp.eq.s32.totalorder %s24, 1
      %p319 = por %p317, %p318
      %p320 = scmp.ne.s32.totalorder %s312, %s315
      %p321 = scmp.eq.s32.totalorder %s24, 0
      %p322 = por %p320, %p321
      %p323 = scmp.ne.s32.totalorder %s312, %s315
      %p324 = scmp.eq.s32.totalorder %s29, 1
      %p325 = por %p323, %p324
      %p326 = scmp.ne.s32.totalorder %s315, %s316
      %p327 = scmp.eq.s32.totalorder %s29, 0
      %p328 = por %p326, %p327
      %p329 = scmp.ne.s32.totalorder %s315, %s316
      %p330 = scmp.eq.s32.totalorder %s30, 1
      %p331 = por %p329, %p330
      %p333 = scmp.ne.s32.totalorder %s316, %s332
      %p334 = scmp.eq.s32.totalorder %s30, 0
      %p335 = por %p333, %p334
      %p336 = scmp.le.s32.totalorder 1, %s24
      %p337 = scmp.lt.s32.totalorder %s24, 3
      %p338 = pnand %p336, %p337
      %p339 = pneg %p338
      // Predicated region
      $region9: #{vit_block_forward.1} parent=5 // pred_check
        _
      $region10: #{vit_block_forward.1} parent=5 // pred_check_branch
        %341 = sbr.rel (%p338) target = $region12
      $region11: #{vit_block_forward.1} parent=5 // pred_region
        %s342 = ssub.s32 %s24, 1
        // Predicated region
        $region13: #{vit_block_forward.1} parent=11 // pred_check
          %p343 = pneg %p71
        $region14: #{vit_block_forward.1} parent=11 // pred_check_branch
          %345 = sbr.rel (%p343) target = $region16
        $region15: #{vit_block_forward.1} parent=11 // pred_region
          %347 = vsyncadd [#allocation4], 0
          %s349 = sshll.u32 %s1, 4
          %s350 = int_to_ptr.hbm [resolvable:$true] %s349
          %s351 = sshll.u32 [#allocation3], 4
          %s352 = int_to_ptr.vmem [resolvable:$true] %s351
          %354 = dma.hbm_to_vmem [thread:$0]  %s350, 16, %s352, [#allocation4]
        $region16: #{vit_block_forward.1} parent=11 // pred_fallthru
          _
        // Predicated region
        $region17: #{vit_block_forward.1} parent=11 // pred_check
          %p355 = pneg %p92
        $region18: #{vit_block_forward.1} parent=11 // pred_check_branch
          %357 = sbr.rel (%p355) target = $region20
        $region19: #{vit_block_forward.1} parent=11 // pred_region
          %359 = vsyncadd [#allocation6], 0
          %s361 = sshll.u32 %s2, 4
          %s362 = int_to_ptr.hbm [resolvable:$true] %s361
          %s363 = sshll.u32 [#allocation5], 4
          %s364 = int_to_ptr.vmem [resolvable:$true] %s363
          %366 = dma.hbm_to_vmem [thread:$0]  %s362, 16, %s364, [#allocation6]
        $region20: #{vit_block_forward.1} parent=11 // pred_fallthru
          _
        // Predicated region
        $region21: #{vit_block_forward.1} parent=11 // pred_check
          %p367 = pneg %p113
        $region22: #{vit_block_forward.1} parent=11 // pred_check_branch
          %369 = sbr.rel (%p367) target = $region24
        $region23: #{vit_block_forward.1} parent=11 // pred_region
          %371 = vsyncadd [#allocation6], 0
          %s372 = sshll.u32 %s3, 4
          %s373 = int_to_ptr.hbm [resolvable:$true] %s372
          %s374 = sshll.u32 [#allocation7], 4
          %s375 = int_to_ptr.vmem [resolvable:$true] %s374
          %380 = dma.hbm_to_vmem [thread:$0]  %s373, 3072, %s375, [#allocation6], 192, 192, 12
        $region24: #{vit_block_forward.1} parent=11 // pred_fallthru
          _
        // Predicated region
        $region25: #{vit_block_forward.1} parent=11 // pred_check
          %p381 = pneg %p134
        $region26: #{vit_block_forward.1} parent=11 // pred_check_branch
          %383 = sbr.rel (%p381) target = $region28
        $region27: #{vit_block_forward.1} parent=11 // pred_region
          %385 = vsyncadd [#allocation9], 0
          %s387 = sshll.u32 %s4, 4
          %s388 = int_to_ptr.hbm [resolvable:$true] %s387
          %s389 = sshll.u32 [#allocation8], 4
          %s390 = int_to_ptr.vmem [resolvable:$true] %s389
          %392 = dma.hbm_to_vmem [thread:$0]  %s388, 48, %s390, [#allocation9]
        $region28: #{vit_block_forward.1} parent=11 // pred_fallthru
          _
        // Predicated region
        $region29: #{vit_block_forward.1} parent=11 // pred_check
          %p393 = pneg %p155
        $region30: #{vit_block_forward.1} parent=11 // pred_check_branch
          %395 = sbr.rel (%p393) target = $region32
        $region31: #{vit_block_forward.1} parent=11 // pred_region
          %397 = vsyncadd [#allocation9], 0
          %s398 = sshll.u32 %s5, 4
          %s399 = int_to_ptr.hbm [resolvable:$true] %s398
          %s400 = sshll.u32 [#allocation10], 4
          %s401 = int_to_ptr.vmem [resolvable:$true] %s400
          %406 = dma.hbm_to_vmem [thread:$0]  %s399, 1024, %s401, [#allocation9], 64, 64, 4
        $region32: #{vit_block_forward.1} parent=11 // pred_fallthru
          _
        // Predicated region
        $region33: #{vit_block_forward.1} parent=11 // pred_check
          %p407 = pneg %p176
        $region34: #{vit_block_forward.1} parent=11 // pred_check_branch
          %409 = sbr.rel (%p407) target = $region36
        $region35: #{vit_block_forward.1} parent=11 // pred_region
          _
        $region36: #{vit_block_forward.1} parent=11 // pred_fallthru
          _
        // Predicated region
        $region37: #{vit_block_forward.1} parent=11 // pred_check
          %p410 = pneg %p197
        $region38: #{vit_block_forward.1} parent=11 // pred_check_branch
          %412 = sbr.rel (%p410) target = $region40
        $region39: #{vit_block_forward.1} parent=11 // pred_region
          %414 = vsyncadd [#allocation12], 0
          %s416 = sshll.u32 %s7, 4
          %s417 = int_to_ptr.hbm [resolvable:$true] %s416
          %s418 = sshll.u32 [#allocation11], 4
          %s419 = int_to_ptr.vmem [resolvable:$true] %s418
          %421 = dma.hbm_to_vmem [thread:$0]  %s417, 16, %s419, [#allocation12]
        $region40: #{vit_block_forward.1} parent=11 // pred_fallthru
          _
        // Predicated region
        $region41: #{vit_block_forward.1} parent=11 // pred_check
          %p422 = pneg %p218
        $region42: #{vit_block_forward.1} parent=11 // pred_check_branch
          %424 = sbr.rel (%p422) target = $region44
        $region43: #{vit_block_forward.1} parent=11 // pred_region
          %426 = vsyncadd [#allocation12], 0
          %s428 = sshll.u32 %s8, 4
          %s429 = int_to_ptr.hbm [resolvable:$true] %s428
          %s430 = sshll.u32 [#allocation13], 4
          %s431 = int_to_ptr.vmem [resolvable:$true] %s430
          %433 = dma.hbm_to_vmem [thread:$0]  %s429, 16, %s431, [#allocation12]
        $region44: #{vit_block_forward.1} parent=11 // pred_fallthru
          _
        // Predicated region
        $region45: #{vit_block_forward.1} parent=11 // pred_check
          %p434 = pneg %p239
        $region46: #{vit_block_forward.1} parent=11 // pred_check_branch
          %436 = sbr.rel (%p434) target = $region48
        $region47: #{vit_block_forward.1} parent=11 // pred_region
          _
        $region48: #{vit_block_forward.1} parent=11 // pred_fallthru
          _
        // Predicated region
        $region49: #{vit_block_forward.1} parent=11 // pred_check
          %p437 = pneg %p260
        $region50: #{vit_block_forward.1} parent=11 // pred_check_branch
          %439 = sbr.rel (%p437) target = $region52
        $region51: #{vit_block_forward.1} parent=11 // pred_region
          _
        $region52: #{vit_block_forward.1} parent=11 // pred_fallthru
          _
        // Predicated region
        $region53: #{vit_block_forward.1} parent=11 // pred_check
          %p440 = pneg %p281
        $region54: #{vit_block_forward.1} parent=11 // pred_check_branch
          %442 = sbr.rel (%p440) target = $region56
        $region55: #{vit_block_forward.1} parent=11 // pred_region
          _
        $region56: #{vit_block_forward.1} parent=11 // pred_fallthru
          _
        // Predicated region
        $region57: #{vit_block_forward.1} parent=11 // pred_check
          %p443 = pneg %p302
        $region58: #{vit_block_forward.1} parent=11 // pred_check_branch
          %445 = sbr.rel (%p443) target = $region60
        $region59: #{vit_block_forward.1} parent=11 // pred_region
          %447 = vsyncadd [#allocation15], 0
          %s449 = sshll.u32 %s12, 4
          %s450 = int_to_ptr.hbm [resolvable:$true] %s449
          %s451 = sshll.u32 [#allocation14], 4
          %s452 = int_to_ptr.vmem [resolvable:$true] %s451
          %454 = dma.hbm_to_vmem [thread:$0]  %s450, 16, %s452, [#allocation15]
        $region60: #{vit_block_forward.1} parent=11 // pred_fallthru
          _
      $region12: #{vit_block_forward.1} parent=5 // pred_fallthru
        _
      %p455 = scmp.lt.s32.totalorder %s24, 2
      // Predicated region
      $region61: #{vit_block_forward.1} parent=5 // pred_check
        %p456 = pneg %p455
      $region62: #{vit_block_forward.1} parent=5 // pred_check_branch
        %458 = sbr.rel (%p456) target = $region64
      $region63: #{vit_block_forward.1} parent=5 // pred_region
        // Predicated region
        $region65: #{vit_block_forward.1} parent=63 // pred_check
          %p459 = pneg %p44
        $region66: #{vit_block_forward.1} parent=63 // pred_check_branch
          %461 = sbr.rel (%p459) target = $region68
        $region67: #{vit_block_forward.1} parent=63 // pred_region
          %s462 = sand.u32 %s34, 1
          %s463 = sand.u32 %s34, 1
          %s464 = smul.addr %s463, 128
          %s465 = scalar_lea.vmem [#allocation2], %s464
          %s466 = smul.addr %s24, 8
          %s467 = scalar_lea.vmem %s0, %s466
          // Predicated region
          $region69: #{vit_block_forward.1} parent=67 // pred_check
            _
          $region70: #{vit_block_forward.1} parent=67 // pred_check_branch
            %469 = sbr.rel (0) target = $region72
          $region71: #{vit_block_forward.1} parent=67 // pred_region
            // Predicated region
            $region73: #{vit_block_forward.1} parent=71 // pred_check
              _
            $region74: #{vit_block_forward.1} parent=71 // pred_check_branch
              %471 = sbr.rel (0) target = $region76
            $region75: #{vit_block_forward.1} parent=71 // pred_region
              // Predicated region
              $region88: #{vit_block_forward.1} parent=75 // pred_check
                _
              $region89: #{vit_block_forward.1} parent=75 // pred_check_branch
                %517 = sbr.rel (0) target = $region91
              $region90: #{vit_block_forward.1} parent=75 // pred_region
                loop: start=0, step=1, limit=1
                $region92: #{vit_block_forward.1} parent=90 // loop_pre_header
                  _
                $region93: #{vit_block_forward.1} parent=90 // loop_header
                  %s519 = sphi 0, %s523
                  %p520 = scmp.ge.s32.totalorder %s519, 1
                  %s524 = sphi %s467, %s467
                  %s525 = sphi %s465, %s465
                $region94: #{vit_block_forward.1} parent=90 // loop_header_branch
                  %522 = sbr.rel (%p520) target = $region98
                $region95: #{vit_block_forward.1} parent=90 // loop_body
                  %v526 = vld [vmem:[%s524] sm:$0xff]
                  %527 = vst [vmem:[%s525] sm:$0xff] %v526
                  %v528 = vld [vmem:[%s524 + $0x10] sm:$0xff]
                  %529 = vst [vmem:[%s525 + $0x8] sm:$0xff] %v528
                  %v530 = vld [vmem:[%s524 + $0x20] sm:$0xff]
                  %531 = vst [vmem:[%s525 + $0x10] sm:$0xff] %v530
                  %v532 = vld [vmem:[%s524 + $0x30] sm:$0xff]
                  %533 = vst [vmem:[%s525 + $0x18] sm:$0xff] %v532
                  %v534 = vld [vmem:[%s524 + $0x40] sm:$0xff]
                  %535 = vst [vmem:[%s525 + $0x20] sm:$0xff] %v534
                  %v536 = vld [vmem:[%s524 + $0x50] sm:$0xff]
                  %537 = vst [vmem:[%s525 + $0x28] sm:$0xff] %v536
                  %v538 = vld [vmem:[%s524 + $0x60] sm:$0xff]
                  %539 = vst [vmem:[%s525 + $0x30] sm:$0xff] %v538
                  %v540 = vld [vmem:[%s524 + $0x70] sm:$0xff]
                  %541 = vst [vmem:[%s525 + $0x38] sm:$0xff] %v540
                  %v542 = vld [vmem:[%s524 + $0x80] sm:$0xff]
                  %543 = vst [vmem:[%s525 + $0x40] sm:$0xff] %v542
                  %v544 = vld [vmem:[%s524 + $0x90] sm:$0xff]
                  %545 = vst [vmem:[%s525 + $0x48] sm:$0xff] %v544
                  %v546 = vld [vmem:[%s524 + $0xa0] sm:$0xff]
                  %547 = vst [vmem:[%s525 + $0x50] sm:$0xff] %v546
                  %v548 = vld [vmem:[%s524 + $0xb0] sm:$0xff]
                  %549 = vst [vmem:[%s525 + $0x58] sm:$0xff] %v548
                  %v550 = vld [vmem:[%s524 + $0xc0] sm:$0xff]
                  %551 = vst [vmem:[%s525 + $0x60] sm:$0xff] %v550
                  %v552 = vld [vmem:[%s524 + $0xd0] sm:$0xff]
                  %553 = vst [vmem:[%s525 + $0x68] sm:$0xff] %v552
                  %v554 = vld [vmem:[%s524 + $0xe0] sm:$0xff]
                  %555 = vst [vmem:[%s525 + $0x70] sm:$0xff] %v554
                  %v556 = vld [vmem:[%s524 + $0xf0] sm:$0xff]
                  %557 = vst [vmem:[%s525 + $0x78] sm:$0xff] %v556
                $region96: #{vit_block_forward.1} parent=90 // loop_footer
                  %s523 = sadd.s32 1, %s519
                $region97: #{vit_block_forward.1} parent=90 // loop_footer_branch
                  %518 = sbr.rel target = $region93
                $region98: #{vit_block_forward.1} parent=90 // loop_exit
                  _
              $region91: #{vit_block_forward.1} parent=75 // pred_fallthru
                _
              // Predicated region
              $region99: #{vit_block_forward.1} parent=75 // pred_check
                _
              $region100: #{vit_block_forward.1} parent=75 // pred_check_branch
                %559 = sbr.rel target = $region102
              $region101: #{vit_block_forward.1} parent=75 // pred_region
                _
              $region102: #{vit_block_forward.1} parent=75 // pred_fallthru
                _
            $region76: #{vit_block_forward.1} parent=71 // pred_fallthru
              _
            // Predicated region
            $region77: #{vit_block_forward.1} parent=71 // pred_check
              _
            $region78: #{vit_block_forward.1} parent=71 // pred_check_branch
              %473 = sbr.rel target = $region80
            $region79: #{vit_block_forward.1} parent=71 // pred_region
              %s475 = ssub.s32 256, 1
              loop: start=0, step=1, limit=1
              $region81: #{vit_block_forward.1} parent=79 // loop_pre_header
                _
              $region82: #{vit_block_forward.1} parent=79 // loop_header
                %s477 = sphi 0, %s481
                %p478 = scmp.ge.s32.totalorder %s477, 1
                %s482 = sphi %s467, %s467
                %s483 = sphi %s465, %s465
              $region83: #{vit_block_forward.1} parent=79 // loop_header_branch
                %480 = sbr.rel (%p478) target = $region87
              $region84: #{vit_block_forward.1} parent=79 // loop_body
                %v484 = vld [vmem:[%s482] sm:%s475]
                %485 = vst [vmem:[%s483] sm:%s475] %v484
                %v486 = vld [vmem:[%s482 + $0x10] sm:%s475]
                %487 = vst [vmem:[%s483 + $0x8] sm:%s475] %v486
                %v488 = vld [vmem:[%s482 + $0x20] sm:%s475]
                %489 = vst [vmem:[%s483 + $0x10] sm:%s475] %v488
                %v490 = vld [vmem:[%s482 + $0x30] sm:%s475]
                %491 = vst [vmem:[%s483 + $0x18] sm:%s475] %v490
                %v492 = vld [vmem:[%s482 + $0x40] sm:%s475]
                %493 = vst [vmem:[%s483 + $0x20] sm:%s475] %v492
                %v494 = vld [vmem:[%s482 + $0x50] sm:%s475]
                %495 = vst [vmem:[%s483 + $0x28] sm:%s475] %v494
                %v496 = vld [vmem:[%s482 + $0x60] sm:%s475]
                %497 = vst [vmem:[%s483 + $0x30] sm:%s475] %v496
                %v498 = vld [vmem:[%s482 + $0x70] sm:%s475]
                %499 = vst [vmem:[%s483 + $0x38] sm:%s475] %v498
                %v500 = vld [vmem:[%s482 + $0x80] sm:%s475]
                %501 = vst [vmem:[%s483 + $0x40] sm:%s475] %v500
                %v502 = vld [vmem:[%s482 + $0x90] sm:%s475]
                %503 = vst [vmem:[%s483 + $0x48] sm:%s475] %v502
                %v504 = vld [vmem:[%s482 + $0xa0] sm:%s475]
                %505 = vst [vmem:[%s483 + $0x50] sm:%s475] %v504
                %v506 = vld [vmem:[%s482 + $0xb0] sm:%s475]
                %507 = vst [vmem:[%s483 + $0x58] sm:%s475] %v506
                %v508 = vld [vmem:[%s482 + $0xc0] sm:%s475]
                %509 = vst [vmem:[%s483 + $0x60] sm:%s475] %v508
                %v510 = vld [vmem:[%s482 + $0xd0] sm:%s475]
                %511 = vst [vmem:[%s483 + $0x68] sm:%s475] %v510
                %v512 = vld [vmem:[%s482 + $0xe0] sm:%s475]
                %513 = vst [vmem:[%s483 + $0x70] sm:%s475] %v512
                %v514 = vld [vmem:[%s482 + $0xf0] sm:%s475]
                %515 = vst [vmem:[%s483 + $0x78] sm:%s475] %v514
              $region85: #{vit_block_forward.1} parent=79 // loop_footer
                %s481 = sadd.s32 1, %s477
              $region86: #{vit_block_forward.1} parent=79 // loop_footer_branch
                %476 = sbr.rel target = $region82
              $region87: #{vit_block_forward.1} parent=79 // loop_exit
                _
            $region80: #{vit_block_forward.1} parent=71 // pred_fallthru
              _
          $region72: #{vit_block_forward.1} parent=67 // pred_fallthru
            _
          %560 = vnop
        $region68: #{vit_block_forward.1} parent=63 // pred_fallthru
          _
      $region64: #{vit_block_forward.1} parent=5 // pred_fallthru
        _
      %p561 = scmp.le.s32.totalorder 1, %s24
      %p562 = scmp.lt.s32.totalorder %s24, 3
      %p563 = pnand %p561, %p562
      %p564 = pneg %p563
      // Predicated region
      $region103: #{vit_block_forward.1} parent=5 // pred_check
        _
      $region104: #{vit_block_forward.1} parent=5 // pred_check_branch
        %566 = sbr.rel (%p563) target = $region106
      $region105: #{vit_block_forward.1} parent=5 // pred_region
        %s567 = ssub.s32 %s24, 1
        %s568 = sand.u32 %s37, 1
        %s569 = sand.u32 %s37, 1
        %s570 = smul.addr %s569, 128
        %s571 = scalar_lea.vmem [#allocation2], %s570
        // Predicated region
        $region107: #{vit_block_forward.1} parent=105 // pred_check
          %p572 = pneg %p50
        $region108: #{vit_block_forward.1} parent=105 // pred_check_branch
          %574 = sbr.rel (%p572) target = $region110
        $region109: #{vit_block_forward.1} parent=105 // pred_region
          _
        $region110: #{vit_block_forward.1} parent=105 // pred_fallthru
          _
        // Predicated region
        $region111: #{vit_block_forward.1} parent=105 // pred_check
          %p575 = pneg %p71
        $region112: #{vit_block_forward.1} parent=105 // pred_check_branch
          %577 = sbr.rel (%p575) target = $region114
        $region113: #{vit_block_forward.1} parent=105 // pred_region
          %579 = dma.done [#allocation4], 16
        $region114: #{vit_block_forward.1} parent=105 // pred_fallthru
          _
        // Predicated region
        $region115: #{vit_block_forward.1} parent=105 // pred_check
          %p580 = pneg %p92
        $region116: #{vit_block_forward.1} parent=105 // pred_check_branch
          %582 = sbr.rel (%p580) target = $region118
        $region117: #{vit_block_forward.1} parent=105 // pred_region
          %584 = dma.done [#allocation6], 16
        $region118: #{vit_block_forward.1} parent=105 // pred_fallthru
          _
        // Predicated region
        $region119: #{vit_block_forward.1} parent=105 // pred_check
          %p585 = pneg %p113
        $region120: #{vit_block_forward.1} parent=105 // pred_check_branch
          %587 = sbr.rel (%p585) target = $region122
        $region121: #{vit_block_forward.1} parent=105 // pred_region
          %589 = dma.done [#allocation6], 3072
        $region122: #{vit_block_forward.1} parent=105 // pred_fallthru
          _
        // Predicated region
        $region123: #{vit_block_forward.1} parent=105 // pred_check
          %p590 = pneg %p134
        $region124: #{vit_block_forward.1} parent=105 // pred_check_branch
          %592 = sbr.rel (%p590) target = $region126
        $region125: #{vit_block_forward.1} parent=105 // pred_region
          %594 = dma.done [#allocation9], 48
        $region126: #{vit_block_forward.1} parent=105 // pred_fallthru
          _
        // Predicated region
        $region127: #{vit_block_forward.1} parent=105 // pred_check
          %p595 = pneg %p155
        $region128: #{vit_block_forward.1} parent=105 // pred_check_branch
          %597 = sbr.rel (%p595) target = $region130
        $region129: #{vit_block_forward.1} parent=105 // pred_region
          %599 = dma.done [#allocation9], 1024
        $region130: #{vit_block_forward.1} parent=105 // pred_fallthru
          _
        // Predicated region
        $region131: #{vit_block_forward.1} parent=105 // pred_check
          %p600 = pneg %p197
        $region132: #{vit_block_forward.1} parent=105 // pred_check_branch
          %602 = sbr.rel (%p600) target = $region134
        $region133: #{vit_block_forward.1} parent=105 // pred_region
          %604 = dma.done [#allocation12], 16
        $region134: #{vit_block_forward.1} parent=105 // pred_fallthru
          _
        // Predicated region
        $region135: #{vit_block_forward.1} parent=105 // pred_check
          %p605 = pneg %p218
        $region136: #{vit_block_forward.1} parent=105 // pred_check_branch
          %607 = sbr.rel (%p605) target = $region138
        $region137: #{vit_block_forward.1} parent=105 // pred_region
          %609 = dma.done [#allocation12], 16
        $region138: #{vit_block_forward.1} parent=105 // pred_fallthru
          _
        // Predicated region
        $region139: #{vit_block_forward.1} parent=105 // pred_check
          %p610 = pneg %p302
        $region140: #{vit_block_forward.1} parent=105 // pred_check_branch
          %612 = sbr.rel (%p610) target = $region142
        $region141: #{vit_block_forward.1} parent=105 // pred_region
          %614 = dma.done [#allocation15], 16
        $region142: #{vit_block_forward.1} parent=105 // pred_fallthru
          _
        %s615 = sand.u32 %s37, 1
        %s616 = sand.u32 %s37, 1
        %s617 = smul.addr %s616, 128
        %s618 = scalar_lea.vmem [#allocation2], %s617
        %p619 = pneg %p50
        %p620 = pneg %p47
        %p621 = pneg %p71
        %p622 = pneg %p68
        %p623 = pneg %p92
        %p624 = pneg %p89
        %p625 = pneg %p113
        %p626 = pneg %p110
        %p627 = pneg %p134
        %p628 = pneg %p131
        %p629 = pneg %p155
        %p630 = pneg %p152
        %p631 = pneg %p176
        %p632 = pneg %p173
        %p633 = pneg %p197
        %p634 = pneg %p194
        %p635 = pneg %p218
        %p636 = pneg %p215
        %p637 = pneg %p239
        %p638 = pneg %p236
        %p639 = pneg %p260
        %p640 = pneg %p257
        %p641 = pneg %p281
        %p642 = pneg %p278
        %p643 = pneg %p302
        %p644 = pneg %p299
        %p645 = pneg %p328
        %p646 = pneg %p325
        %s647 = sand.u32 %s315, 1
        %s648 = sand.u32 %s315, 1
        %s649 = smul.addr %s648, 128
        %s650 = scalar_lea.vmem [#allocation16], %s649
        %v651 = vld [vmem:[%s571] sm:$0xff]
        %v652 = vld [vmem:[%s571 + $0x8] sm:$0xff]
        %v653 = vld [vmem:[%s571 + $0x10] sm:$0xff]
        %v654 = vld [vmem:[%s571 + $0x18] sm:$0xff]
        %v655 = vld [vmem:[%s571 + $0x20] sm:$0xff]
        %v656 = vld [vmem:[%s571 + $0x28] sm:$0xff]
        %v657 = vld [vmem:[%s571 + $0x30] sm:$0xff]
        %v658 = vld [vmem:[%s571 + $0x38] sm:$0xff]
        %v659 = vld [vmem:[%s571 + $0x40] sm:$0xff]
        %v660 = vld [vmem:[%s571 + $0x48] sm:$0xff]
        %v661 = vld [vmem:[%s571 + $0x50] sm:$0xff]
        %v662 = vld [vmem:[%s571 + $0x58] sm:$0xff]
        %v663 = vld [vmem:[%s571 + $0x60] sm:$0xff]
        %v664 = vld [vmem:[%s571 + $0x68] sm:$0xff]
        %v665 = vld [vmem:[%s571 + $0x70] sm:$0xff]
        %v666 = vld [vmem:[%s571 + $0x78] sm:$0xff]
        %v667 = vld [vmem:[#allocation3] sm:$0x1]
        %v668 = vld [vmem:[#allocation5] sm:$0x1]
        %669 = vadd.xlane.f32.xlu0 %v651
        %v670 = vpop.xlane.xlu0 %669
        %671 = vadd.xlane.f32.xlu0 %v652
        %v672 = vpop.xlane.xlu0 %671
        %673 = vadd.xlane.f32.xlu0 %v653
        %v674 = vpop.xlane.xlu0 %673
        %675 = vadd.xlane.f32.xlu0 %v654
        %v676 = vpop.xlane.xlu0 %675
        %677 = vadd.xlane.f32.xlu0 %v655
        %v678 = vpop.xlane.xlu0 %677
        %679 = vadd.xlane.f32.xlu0 %v656
        %v680 = vpop.xlane.xlu0 %679
        %681 = vadd.xlane.f32.xlu0 %v657
        %v682 = vpop.xlane.xlu0 %681
        %683 = vadd.xlane.f32.xlu0 %v658
        %v684 = vpop.xlane.xlu0 %683
        %685 = vadd.xlane.f32.xlu0 %v659
        %v686 = vpop.xlane.xlu0 %685
        %687 = vadd.xlane.f32.xlu0 %v660
        %v688 = vpop.xlane.xlu0 %687
        %689 = vadd.xlane.f32.xlu0 %v661
        %v690 = vpop.xlane.xlu0 %689
        %691 = vadd.xlane.f32.xlu0 %v662
        %v692 = vpop.xlane.xlu0 %691
        %693 = vadd.xlane.f32.xlu0 %v663
        %v694 = vpop.xlane.xlu0 %693
        %695 = vadd.xlane.f32.xlu0 %v664
        %v696 = vpop.xlane.xlu0 %695
        %697 = vadd.xlane.f32.xlu0 %v665
        %v698 = vpop.xlane.xlu0 %697
        %699 = vadd.xlane.f32.xlu0 %v666
        %v700 = vpop.xlane.xlu0 %699
        %v701 = vrcp.pop 128.0
        %v702 = vmul.f32 128.0, %v701
        %v703 = vsub.f32 1.0, %v702
        %v704 = vmul.f32 %v701, %v703
        %v705 = vadd.f32 %v701, %v704
        %vm706 = vweird.f32 %v701
        %v707 = vsel %vm706, %v701, %v705
        %v708 = vmul.f32 %v670, %v707
        %v709 = vmul.f32 %v672, %v707
        %v710 = vmul.f32 %v674, %v707
        %v711 = vmul.f32 %v676, %v707
        %v712 = vmul.f32 %v678, %v707
        %v713 = vmul.f32 %v680, %v707
        %v714 = vmul.f32 %v682, %v707
        %v715 = vmul.f32 %v684, %v707
        %v716 = vmul.f32 %v686, %v707
        %v717 = vmul.f32 %v688, %v707
        %v718 = vmul.f32 %v690, %v707
        %v719 = vmul.f32 %v692, %v707
        %v720 = vmul.f32 %v694, %v707
        %v721 = vmul.f32 %v696, %v707
        %v722 = vmul.f32 %v698, %v707
        %v723 = vmul.f32 %v700, %v707
        %v724 = vsub.f32 %v651, %v708
        %v725 = vsub.f32 %v652, %v709
        %v726 = vsub.f32 %v653, %v710
        %v727 = vsub.f32 %v654, %v711
        %v728 = vsub.f32 %v655, %v712
        %v729 = vsub.f32 %v656, %v713
        %v730 = vsub.f32 %v657, %v714
        %v731 = vsub.f32 %v658, %v715
        %v732 = vsub.f32 %v659, %v716
        %v733 = vsub.f32 %v660, %v717
        %v734 = vsub.f32 %v661, %v718
        %v735 = vsub.f32 %v662, %v719
        %v736 = vsub.f32 %v663, %v720
        %v737 = vsub.f32 %v664, %v721
        %v738 = vsub.f32 %v665, %v722
        %v739 = vsub.f32 %v666, %v723
        %v740 = vmul.f32 %v724, %v724
        %v741 = vmul.f32 %v725, %v725
        %v742 = vmul.f32 %v726, %v726
        %v743 = vmul.f32 %v727, %v727
        %v744 = vmul.f32 %v728, %v728
        %v745 = vmul.f32 %v729, %v729
        %v746 = vmul.f32 %v730, %v730
        %v747 = vmul.f32 %v731, %v731
        %v748 = vmul.f32 %v732, %v732
        %v749 = vmul.f32 %v733, %v733
        %v750 = vmul.f32 %v734, %v734
        %v751 = vmul.f32 %v735, %v735
        %v752 = vmul.f32 %v736, %v736
        %v753 = vmul.f32 %v737, %v737
        %v754 = vmul.f32 %v738, %v738
        %v755 = vmul.f32 %v739, %v739
        %756 = vadd.xlane.f32.xlu0 %v740
        %v757 = vpop.xlane.xlu0 %756
        %758 = vadd.xlane.f32.xlu0 %v741
        %v759 = vpop.xlane.xlu0 %758
        %760 = vadd.xlane.f32.xlu0 %v742
        %v761 = vpop.xlane.xlu0 %760
        %762 = vadd.xlane.f32.xlu0 %v743
        %v763 = vpop.xlane.xlu0 %762
        %764 = vadd.xlane.f32.xlu0 %v744
        %v765 = vpop.xlane.xlu0 %764
        %766 = vadd.xlane.f32.xlu0 %v745
        %v767 = vpop.xlane.xlu0 %766
        %768 = vadd.xlane.f32.xlu0 %v746
        %v769 = vpop.xlane.xlu0 %768
        %770 = vadd.xlane.f32.xlu0 %v747
        %v771 = vpop.xlane.xlu0 %770
        %772 = vadd.xlane.f32.xlu0 %v748
        %v773 = vpop.xlane.xlu0 %772
        %774 = vadd.xlane.f32.xlu0 %v749
        %v775 = vpop.xlane.xlu0 %774
        %776 = vadd.xlane.f32.xlu0 %v750
        %v777 = vpop.xlane.xlu0 %776
        %778 = vadd.xlane.f32.xlu0 %v751
        %v779 = vpop.xlane.xlu0 %778
        %780 = vadd.xlane.f32.xlu0 %v752
        %v781 = vpop.xlane.xlu0 %780
        %782 = vadd.xlane.f32.xlu0 %v753
        %v783 = vpop.xlane.xlu0 %782
        %784 = vadd.xlane.f32.xlu0 %v754
        %v785 = vpop.xlane.xlu0 %784
        %786 = vadd.xlane.f32.xlu0 %v755
        %v787 = vpop.xlane.xlu0 %786
        %v788 = vmul.f32 %v757, %v707
        %v789 = vmul.f32 %v759, %v707
        %v790 = vmul.f32 %v761, %v707
        %v791 = vmul.f32 %v763, %v707
        %v792 = vmul.f32 %v765, %v707
        %v793 = vmul.f32 %v767, %v707
        %v794 = vmul.f32 %v769, %v707
        %v795 = vmul.f32 %v771, %v707
        %v796 = vmul.f32 %v773, %v707
        %v797 = vmul.f32 %v775, %v707
        %v798 = vmul.f32 %v777, %v707
        %v799 = vmul.f32 %v779, %v707
        %v800 = vmul.f32 %v781, %v707
        %v801 = vmul.f32 %v783, %v707
        %v802 = vmul.f32 %v785, %v707
        %v803 = vmul.f32 %v787, %v707
        %v804 = vadd.f32 %v788, 1e-05
        %v805 = vadd.f32 %v789, 1e-05
        %v806 = vadd.f32 %v790, 1e-05
        %v807 = vadd.f32 %v791, 1e-05
        %v808 = vadd.f32 %v792, 1e-05
        %v809 = vadd.f32 %v793, 1e-05
        %v810 = vadd.f32 %v794, 1e-05
        %v811 = vadd.f32 %v795, 1e-05
        %v812 = vadd.f32 %v796, 1e-05
        %v813 = vadd.f32 %v797, 1e-05
        %v814 = vadd.f32 %v798, 1e-05
        %v815 = vadd.f32 %v799, 1e-05
        %v816 = vadd.f32 %v800, 1e-05
        %v817 = vadd.f32 %v801, 1e-05
        %v818 = vadd.f32 %v802, 1e-05
        %v819 = vadd.f32 %v803, 1e-05
        %v820 = vrsqrt.pop %v804
        %v821 = vmul.f32 %v820, %v804
        %v822 = vmul.f32 %v821, %v820
        %v823 = vmul.f32 0.5, %v822
        %v824 = vsub.f32 1.5, %v823
        %v825 = vmul.f32 %v820, %v824
        %vm826 = vweird.f32 %v804
        %vm827 = vweird.f32 %v820
        %vm828 = vmor %vm826, %vm827
        %v829 = vsel %vm828, %v820, %v825
        %v830 = vrsqrt.pop %v805
        %v831 = vmul.f32 %v830, %v805
        %v832 = vmul.f32 %v831, %v830
        %v833 = vmul.f32 0.5, %v832
        %v834 = vsub.f32 1.5, %v833
        %v835 = vmul.f32 %v830, %v834
        %vm836 = vweird.f32 %v805
        %vm837 = vweird.f32 %v830
        %vm838 = vmor %vm836, %vm837
        %v839 = vsel %vm838, %v830, %v835
        %v840 = vrsqrt.pop %v806
        %v841 = vmul.f32 %v840, %v806
        %v842 = vmul.f32 %v841, %v840
        %v843 = vmul.f32 0.5, %v842
        %v844 = vsub.f32 1.5, %v843
        %v845 = vmul.f32 %v840, %v844
        %vm846 = vweird.f32 %v806
        %vm847 = vweird.f32 %v840
        %vm848 = vmor %vm846, %vm847
        %v849 = vsel %vm848, %v840, %v845
        %v850 = vrsqrt.pop %v807
        %v851 = vmul.f32 %v850, %v807
        %v852 = vmul.f32 %v851, %v850
        %v853 = vmul.f32 0.5, %v852
        %v854 = vsub.f32 1.5, %v853
        %v855 = vmul.f32 %v850, %v854
        %vm856 = vweird.f32 %v807
        %vm857 = vweird.f32 %v850
        %vm858 = vmor %vm856, %vm857
        %v859 = vsel %vm858, %v850, %v855
        %v860 = vrsqrt.pop %v808
        %v861 = vmul.f32 %v860, %v808
        %v862 = vmul.f32 %v861, %v860
        %v863 = vmul.f32 0.5, %v862
        %v864 = vsub.f32 1.5, %v863
        %v865 = vmul.f32 %v860, %v864
        %vm866 = vweird.f32 %v808
        %vm867 = vweird.f32 %v860
        %vm868 = vmor %vm866, %vm867
        %v869 = vsel %vm868, %v860, %v865
        %v870 = vrsqrt.pop %v809
        %v871 = vmul.f32 %v870, %v809
        %v872 = vmul.f32 %v871, %v870
        %v873 = vmul.f32 0.5, %v872
        %v874 = vsub.f32 1.5, %v873
        %v875 = vmul.f32 %v870, %v874
        %vm876 = vweird.f32 %v809
        %vm877 = vweird.f32 %v870
        %vm878 = vmor %vm876, %vm877
        %v879 = vsel %vm878, %v870, %v875
        %v880 = vrsqrt.pop %v810
        %v881 = vmul.f32 %v880, %v810
        %v882 = vmul.f32 %v881, %v880
        %v883 = vmul.f32 0.5, %v882
        %v884 = vsub.f32 1.5, %v883
        %v885 = vmul.f32 %v880, %v884
        %vm886 = vweird.f32 %v810
        %vm887 = vweird.f32 %v880
        %vm888 = vmor %vm886, %vm887
        %v889 = vsel %vm888, %v880, %v885
        %v890 = vrsqrt.pop %v811
        %v891 = vmul.f32 %v890, %v811
        %v892 = vmul.f32 %v891, %v890
        %v893 = vmul.f32 0.5, %v892
        %v894 = vsub.f32 1.5, %v893
        %v895 = vmul.f32 %v890, %v894
        %vm896 = vweird.f32 %v811
        %vm897 = vweird.f32 %v890
        %vm898 = vmor %vm896, %vm897
        %v899 = vsel %vm898, %v890, %v895
        %v900 = vrsqrt.pop %v812
        %v901 = vmul.f32 %v900, %v812
        %v902 = vmul.f32 %v901, %v900
        %v903 = vmul.f32 0.5, %v902
        %v904 = vsub.f32 1.5, %v903
        %v905 = vmul.f32 %v900, %v904
        %vm906 = vweird.f32 %v812
        %vm907 = vweird.f32 %v900
        %vm908 = vmor %vm906, %vm907
        %v909 = vsel %vm908, %v900, %v905
        %v910 = vrsqrt.pop %v813
        %v911 = vmul.f32 %v910, %v813
        %v912 = vmul.f32 %v911, %v910
        %v913 = vmul.f32 0.5, %v912
        %v914 = vsub.f32 1.5, %v913
        %v915 = vmul.f32 %v910, %v914
        %vm916 = vweird.f32 %v813
        %vm917 = vweird.f32 %v910
        %vm918 = vmor %vm916, %vm917
        %v919 = vsel %vm918, %v910, %v915
        %v920 = vrsqrt.pop %v814
        %v921 = vmul.f32 %v920, %v814
        %v922 = vmul.f32 %v921, %v920
        %v923 = vmul.f32 0.5, %v922
        %v924 = vsub.f32 1.5, %v923
        %v925 = vmul.f32 %v920, %v924
        %vm926 = vweird.f32 %v814
        %vm927 = vweird.f32 %v920
        %vm928 = vmor %vm926, %vm927
        %v929 = vsel %vm928, %v920, %v925
        %v930 = vrsqrt.pop %v815
        %v931 = vmul.f32 %v930, %v815
        %v932 = vmul.f32 %v931, %v930
        %v933 = vmul.f32 0.5, %v932
        %v934 = vsub.f32 1.5, %v933
        %v935 = vmul.f32 %v930, %v934
        %vm936 = vweird.f32 %v815
        %vm937 = vweird.f32 %v930
        %vm938 = vmor %vm936, %vm937
        %v939 = vsel %vm938, %v930, %v935
        %v940 = vrsqrt.pop %v816
        %v941 = vmul.f32 %v940, %v816
        %v942 = vmul.f32 %v941, %v940
        %v943 = vmul.f32 0.5, %v942
        %v944 = vsub.f32 1.5, %v943
        %v945 = vmul.f32 %v940, %v944
        %vm946 = vweird.f32 %v816
        %vm947 = vweird.f32 %v940
        %vm948 = vmor %vm946, %vm947
        %v949 = vsel %vm948, %v940, %v945
        %v950 = vrsqrt.pop %v817
        %v951 = vmul.f32 %v950, %v817
        %v952 = vmul.f32 %v951, %v950
        %v953 = vmul.f32 0.5, %v952
        %v954 = vsub.f32 1.5, %v953
        %v955 = vmul.f32 %v950, %v954
        %vm956 = vweird.f32 %v817
        %vm957 = vweird.f32 %v950
        %vm958 = vmor %vm956, %vm957
        %v959 = vsel %vm958, %v950, %v955
        %v960 = vrsqrt.pop %v818
        %v961 = vmul.f32 %v960, %v818
        %v962 = vmul.f32 %v961, %v960
        %v963 = vmul.f32 0.5, %v962
        %v964 = vsub.f32 1.5, %v963
        %v965 = vmul.f32 %v960, %v964
        %vm966 = vweird.f32 %v818
        %vm967 = vweird.f32 %v960
        %vm968 = vmor %vm966, %vm967
        %v969 = vsel %vm968, %v960, %v965
        %v970 = vrsqrt.pop %v819
        %v971 = vmul.f32 %v970, %v819
        %v972 = vmul.f32 %v971, %v970
        %v973 = vmul.f32 0.5, %v972
        %v974 = vsub.f32 1.5, %v973
        %v975 = vmul.f32 %v970, %v974
        %vm976 = vweird.f32 %v819
        %vm977 = vweird.f32 %v970
        %vm978 = vmor %vm976, %vm977
        %v979 = vsel %vm978, %v970, %v975
        %v980 = vmul.f32 %v724, %v829
        %v981 = vmul.f32 %v725, %v839
        %v982 = vmul.f32 %v726, %v849
        %v983 = vmul.f32 %v727, %v859
        %v984 = vmul.f32 %v728, %v869
        %v985 = vmul.f32 %v729, %v879
        %v986 = vmul.f32 %v730, %v889
        %v987 = vmul.f32 %v731, %v899
        %v988 = vmul.f32 %v732, %v909
        %v989 = vmul.f32 %v733, %v919
        %v990 = vmul.f32 %v734, %v929
        %v991 = vmul.f32 %v735, %v939
        %v992 = vmul.f32 %v736, %v949
        %v993 = vmul.f32 %v737, %v959
        %v994 = vmul.f32 %v738, %v969
        %v995 = vmul.f32 %v739, %v979
        %v997 = vperm.slane %v667, 0
        %v999 = vmul.f32 %v980, %v997
        %v1000 = vmul.f32 %v981, %v997
        %v1001 = vmul.f32 %v982, %v997
        %v1002 = vmul.f32 %v983, %v997
        %v1003 = vmul.f32 %v984, %v997
        %v1004 = vmul.f32 %v985, %v997
        %v1005 = vmul.f32 %v986, %v997
        %v1006 = vmul.f32 %v987, %v997
        %v1007 = vmul.f32 %v988, %v997
        %v1008 = vmul.f32 %v989, %v997
        %v1009 = vmul.f32 %v990, %v997
        %v1010 = vmul.f32 %v991, %v997
        %v1011 = vmul.f32 %v992, %v997
        %v1012 = vmul.f32 %v993, %v997
        %v1013 = vmul.f32 %v994, %v997
        %v1014 = vmul.f32 %v995, %v997
        %v1016 = vperm.slane %v668, 0
        %v1018 = vadd.f32 %v999, %v1016
        %v1019 = vadd.f32 %v1000, %v1016
        %v1020 = vadd.f32 %v1001, %v1016
        %v1021 = vadd.f32 %v1002, %v1016
        %v1022 = vadd.f32 %v1003, %v1016
        %v1023 = vadd.f32 %v1004, %v1016
        %v1024 = vadd.f32 %v1005, %v1016
        %v1025 = vadd.f32 %v1006, %v1016
        %v1026 = vadd.f32 %v1007, %v1016
        %v1027 = vadd.f32 %v1008, %v1016
        %v1028 = vadd.f32 %v1009, %v1016
        %v1029 = vadd.f32 %v1010, %v1016
        %v1030 = vadd.f32 %v1011, %v1016
        %v1031 = vadd.f32 %v1012, %v1016
        %v1032 = vadd.f32 %v1013, %v1016
        %v1033 = vadd.f32 %v1014, %v1016
        %v1034 = vpack.c.bf16 %v1019, %v1018
        %v1035 = vpack.c.bf16 %v1021, %v1020
        %v1036 = vpack.c.bf16 %v1023, %v1022
        %v1037 = vpack.c.bf16 %v1025, %v1024
        %v1038 = vpack.c.bf16 %v1027, %v1026
        %v1039 = vpack.c.bf16 %v1029, %v1028
        %v1040 = vpack.c.bf16 %v1031, %v1030
        %v1041 = vpack.c.bf16 %v1033, %v1032
        %v1042 = vld [vmem:[#allocation7] sm:$0xff]
        %v1043 = vld [vmem:[#allocation7 + $0x8] sm:$0xf]
        %v1044 = vld [vmem:[#allocation7 + $0xc] sm:$0xff]
        %v1045 = vld [vmem:[#allocation7 + $0x14] sm:$0xf]
        %v1046 = vld [vmem:[#allocation7 + $0x18] sm:$0xff]
        %v1047 = vld [vmem:[#allocation7 + $0x20] sm:$0xf]
        %v1048 = vld [vmem:[#allocation7 + $0x24] sm:$0xff]
        %v1049 = vld [vmem:[#allocation7 + $0x2c] sm:$0xf]
        %v1050 = vld [vmem:[#allocation7 + $0x30] sm:$0xff]
        %v1051 = vld [vmem:[#allocation7 + $0x38] sm:$0xf]
        %v1052 = vld [vmem:[#allocation7 + $0x3c] sm:$0xff]
        %v1053 = vld [vmem:[#allocation7 + $0x44] sm:$0xf]
        %v1054 = vld [vmem:[#allocation7 + $0x48] sm:$0xff]
        %v1055 = vld [vmem:[#allocation7 + $0x50] sm:$0xf]
        %v1056 = vld [vmem:[#allocation7 + $0x54] sm:$0xff]
        %v1057 = vld [vmem:[#allocation7 + $0x5c] sm:$0xf]
        %v1058 = vld [vmem:[#allocation7 + $0x60] sm:$0xff]
        %v1059 = vld [vmem:[#allocation7 + $0x68] sm:$0xf]
        %v1060 = vld [vmem:[#allocation7 + $0x6c] sm:$0xff]
        %v1061 = vld [vmem:[#allocation7 + $0x74] sm:$0xf]
        %v1062 = vld [vmem:[#allocation7 + $0x78] sm:$0xff]
        %v1063 = vld [vmem:[#allocation7 + $0x80] sm:$0xf]
        %v1064 = vld [vmem:[#allocation7 + $0x84] sm:$0xff]
        %v1065 = vld [vmem:[#allocation7 + $0x8c] sm:$0xf]
        %v1066 = vld [vmem:[#allocation7 + $0x90] sm:$0xff]
        %v1067 = vld [vmem:[#allocation7 + $0x98] sm:$0xf]
        %v1068 = vld [vmem:[#allocation7 + $0x9c] sm:$0xff]
        %v1069 = vld [vmem:[#allocation7 + $0xa4] sm:$0xf]
        %v1070 = vld [vmem:[#allocation7 + $0xa8] sm:$0xff]
        %v1071 = vld [vmem:[#allocation7 + $0xb0] sm:$0xf]
        %v1072 = vld [vmem:[#allocation7 + $0xb4] sm:$0xff]
        %v1073 = vld [vmem:[#allocation7 + $0xbc] sm:$0xf]
        %v1074 = vld [vmem:[#allocation8] sm:$0x7]
        %v1076 = vperm.slane %v1074, 0
        %v1077 = vperm.slane %v1074, 1
        %v1078 = vperm.slane %v1074, 2
        %v1114 = vunpack.c.l.b16 %v1042
        %v1115 = vunpack.c.h.b16 %v1042
        %v1116 = vunpack.c.l.b16 %v1043
        %v1117 = vunpack.c.l.b16 %v1044
        %v1118 = vunpack.c.h.b16 %v1044
        %v1119 = vunpack.c.l.b16 %v1045
        %v1120 = vunpack.c.l.b16 %v1046
        %v1121 = vunpack.c.h.b16 %v1046
        %v1122 = vunpack.c.l.b16 %v1047
        %v1123 = vunpack.c.l.b16 %v1048
        %v1124 = vunpack.c.h.b16 %v1048
        %v1125 = vunpack.c.l.b16 %v1049
        %v1126 = vunpack.c.l.b16 %v1050
        %v1127 = vunpack.c.h.b16 %v1050
        %v1128 = vunpack.c.l.b16 %v1051
        %v1129 = vunpack.c.l.b16 %v1052
        %v1130 = vunpack.c.h.b16 %v1052
        %v1131 = vunpack.c.l.b16 %v1053
        %v1132 = vunpack.c.l.b16 %v1054
        %v1133 = vunpack.c.h.b16 %v1054
        %v1134 = vunpack.c.l.b16 %v1055
        %v1135 = vunpack.c.l.b16 %v1056
        %v1136 = vunpack.c.h.b16 %v1056
        %v1137 = vunpack.c.l.b16 %v1057
        %v1138 = vunpack.c.l.b16 %v1058
        %v1139 = vunpack.c.h.b16 %v1058
        %v1140 = vunpack.c.l.b16 %v1059
        %v1141 = vunpack.c.l.b16 %v1060
        %v1142 = vunpack.c.h.b16 %v1060
        %v1143 = vunpack.c.l.b16 %v1061
        %v1144 = vunpack.c.l.b16 %v1062
        %v1145 = vunpack.c.h.b16 %v1062
        %v1146 = vunpack.c.l.b16 %v1063
        %v1147 = vunpack.c.l.b16 %v1064
        %v1148 = vunpack.c.h.b16 %v1064
        %v1149 = vunpack.c.l.b16 %v1065
        %v1150 = vunpack.c.l.b16 %v1066
        %v1151 = vunpack.c.h.b16 %v1066
        %v1152 = vunpack.c.l.b16 %v1067
        %v1153 = vunpack.c.l.b16 %v1068
        %v1154 = vunpack.c.h.b16 %v1068
        %v1155 = vunpack.c.l.b16 %v1069
        %v1156 = vunpack.c.l.b16 %v1070
        %v1157 = vunpack.c.h.b16 %v1070
        %v1158 = vunpack.c.l.b16 %v1071
        %v1159 = vunpack.c.l.b16 %v1072
        %v1160 = vunpack.c.h.b16 %v1072
        %v1161 = vunpack.c.l.b16 %v1073
        %v1162 = vpack.c.b16 %v1117, %v1114
        %v1163 = vpack.c.b16 %v1118, %v1115
        %v1164 = vpack.c.b16 %v1119, %v1116
        %v1165 = vpack.c.b16 %v1123, %v1120
        %v1166 = vpack.c.b16 %v1124, %v1121
        %v1167 = vpack.c.b16 %v1125, %v1122
        %v1168 = vpack.c.b16 %v1129, %v1126
        %v1169 = vpack.c.b16 %v1130, %v1127
        %v1170 = vpack.c.b16 %v1131, %v1128
        %v1171 = vpack.c.b16 %v1135, %v1132
        %v1172 = vpack.c.b16 %v1136, %v1133
        %v1173 = vpack.c.b16 %v1137, %v1134
        %v1174 = vpack.c.b16 %v1141, %v1138
        %v1175 = vpack.c.b16 %v1142, %v1139
        %v1176 = vpack.c.b16 %v1143, %v1140
        %v1177 = vpack.c.b16 %v1147, %v1144
        %v1178 = vpack.c.b16 %v1148, %v1145
        %v1179 = vpack.c.b16 %v1149, %v1146
        %v1180 = vpack.c.b16 %v1153, %v1150
        %v1181 = vpack.c.b16 %v1154, %v1151
        %v1182 = vpack.c.b16 %v1155, %v1152
        %v1183 = vpack.c.b16 %v1159, %v1156
        %v1184 = vpack.c.b16 %v1160, %v1157
        %v1185 = vpack.c.b16 %v1161, %v1158
        %1210 = vmatpush.bf16.msra.mxu0 %v1183
        %1211 = vmatpush.bf16.msra.mxu0 %v1180
        %1212 = vmatpush.bf16.msra.mxu0 %v1177
        %1213 = vmatpush.bf16.msra.mxu0 %v1174
        %1214 = vmatpush.bf16.msra.mxu0 %v1171
        %1215 = vmatpush.bf16.msra.mxu0 %v1168
        %1216 = vmatpush.bf16.msra.mxu0 %v1165
        %1217 = vmatpush.bf16.msra.mxu0 %v1162
        %1218 = vmatmul.bf16.gmra.mxu0 %v1034
        %v1219 = vpop.f32.mrf.mxu0
        %v1220 = vadd.f32 %v1076, %v1219
        %v1221 = vpop.f32.mrf.mxu0
        %v1222 = vadd.f32 %v1076, %v1221
        %1223 = vmatmul.bf16.gmra.mxu0 %v1035
        %v1224 = vpop.f32.mrf.mxu0
        %v1225 = vadd.f32 %v1076, %v1224
        %v1226 = vpop.f32.mrf.mxu0
        %v1227 = vadd.f32 %v1076, %v1226
        %1228 = vmatmul.bf16.gmra.mxu0 %v1036
        %v1229 = vpop.f32.mrf.mxu0
        %v1230 = vadd.f32 %v1076, %v1229
        %v1231 = vpop.f32.mrf.mxu0
        %v1232 = vadd.f32 %v1076, %v1231
        %1233 = vmatmul.bf16.gmra.mxu0 %v1037
        %v1234 = vpop.f32.mrf.mxu0
        %v1235 = vadd.f32 %v1076, %v1234
        %v1236 = vpop.f32.mrf.mxu0
        %v1237 = vadd.f32 %v1076, %v1236
        %1238 = vmatmul.bf16.gmra.mxu0 %v1038
        %v1239 = vpop.f32.mrf.mxu0
        %v1240 = vadd.f32 %v1076, %v1239
        %v1241 = vpop.f32.mrf.mxu0
        %v1242 = vadd.f32 %v1076, %v1241
        %1243 = vmatmul.bf16.gmra.mxu0 %v1039
        %v1244 = vpop.f32.mrf.mxu0
        %v1245 = vadd.f32 %v1076, %v1244
        %v1246 = vpop.f32.mrf.mxu0
        %v1247 = vadd.f32 %v1076, %v1246
        %1248 = vmatmul.bf16.gmra.mxu0 %v1040
        %v1249 = vpop.f32.mrf.mxu0
        %v1250 = vadd.f32 %v1076, %v1249
        %v1251 = vpop.f32.mrf.mxu0
        %v1252 = vadd.f32 %v1076, %v1251
        %1253 = vmatmul.bf16.gmra.mxu0 %v1041
        %v1254 = vpop.f32.mrf.mxu0
        %v1255 = vadd.f32 %v1076, %v1254
        %v1256 = vpop.f32.mrf.mxu0
        %v1257 = vadd.f32 %v1076, %v1256
        %1258 = vdwg.mxu0
        %1259 = vmatpush.bf16.msra.mxu0 %v1184
        %1260 = vmatpush.bf16.msra.mxu0 %v1181
        %1261 = vmatpush.bf16.msra.mxu0 %v1178
        %1262 = vmatpush.bf16.msra.mxu0 %v1175
        %1263 = vmatpush.bf16.msra.mxu0 %v1172
        %1264 = vmatpush.bf16.msra.mxu0 %v1169
        %1265 = vmatpush.bf16.msra.mxu0 %v1166
        %1266 = vmatpush.bf16.msra.mxu0 %v1163
        %1267 = vmatmul.bf16.gmra.mxu0 %v1034
        %v1268 = vpop.f32.mrf.mxu0
        %v1269 = vadd.f32 %v1077, %v1268
        %v1270 = vpop.f32.mrf.mxu0
        %v1271 = vadd.f32 %v1077, %v1270
        %1272 = vmatmul.bf16.gmra.mxu0 %v1035
        %v1273 = vpop.f32.mrf.mxu0
        %v1274 = vadd.f32 %v1077, %v1273
        %v1275 = vpop.f32.mrf.mxu0
        %v1276 = vadd.f32 %v1077, %v1275
        %1277 = vmatmul.bf16.gmra.mxu0 %v1036
        %v1278 = vpop.f32.mrf.mxu0
        %v1279 = vadd.f32 %v1077, %v1278
        %v1280 = vpop.f32.mrf.mxu0
        %v1281 = vadd.f32 %v1077, %v1280
        %1282 = vmatmul.bf16.gmra.mxu0 %v1037
        %v1283 = vpop.f32.mrf.mxu0
        %v1284 = vadd.f32 %v1077, %v1283
        %v1285 = vpop.f32.mrf.mxu0
        %v1286 = vadd.f32 %v1077, %v1285
        %1287 = vmatmul.bf16.gmra.mxu0 %v1038
        %v1288 = vpop.f32.mrf.mxu0
        %v1289 = vadd.f32 %v1077, %v1288
        %v1290 = vpop.f32.mrf.mxu0
        %v1291 = vadd.f32 %v1077, %v1290
        %1292 = vmatmul.bf16.gmra.mxu0 %v1039
        %v1293 = vpop.f32.mrf.mxu0
        %v1294 = vadd.f32 %v1077, %v1293
        %v1295 = vpop.f32.mrf.mxu0
        %v1296 = vadd.f32 %v1077, %v1295
        %1297 = vmatmul.bf16.gmra.mxu0 %v1040
        %v1298 = vpop.f32.mrf.mxu0
        %v1299 = vadd.f32 %v1077, %v1298
        %v1300 = vpop.f32.mrf.mxu0
        %v1301 = vadd.f32 %v1077, %v1300
        %1302 = vmatmul.bf16.gmra.mxu0 %v1041
        %v1303 = vpop.f32.mrf.mxu0
        %v1304 = vadd.f32 %v1077, %v1303
        %v1305 = vpop.f32.mrf.mxu0
        %v1306 = vadd.f32 %v1077, %v1305
        %1307 = vdwg.mxu0
        %1308 = vmatpush.bf16.msra.mxu0 %v1185
        %1309 = vmatpush.bf16.msra.mxu0 %v1182
        %1310 = vmatpush.bf16.msra.mxu0 %v1179
        %1311 = vmatpush.bf16.msra.mxu0 %v1176
        %1312 = vmatpush.bf16.msra.mxu0 %v1173
        %1313 = vmatpush.bf16.msra.mxu0 %v1170
        %1314 = vmatpush.bf16.msra.mxu0 %v1167
        %1315 = vmatpush.bf16.msra.mxu0 %v1164
        %1316 = vmatmul.bf16.gmra.mxu0 %v1034
        %v1317 = vpop.f32.mrf.mxu0
        %v1318 = vadd.f32 %v1078, %v1317
        %v1319 = vpop.f32.mrf.mxu0
        %v1320 = vadd.f32 %v1078, %v1319
        %1321 = vmatmul.bf16.gmra.mxu0 %v1035
        %v1322 = vpop.f32.mrf.mxu0
        %v1323 = vadd.f32 %v1078, %v1322
        %v1324 = vpop.f32.mrf.mxu0
        %v1325 = vadd.f32 %v1078, %v1324
        %1326 = vmatmul.bf16.gmra.mxu0 %v1036
        %v1327 = vpop.f32.mrf.mxu0
        %v1328 = vadd.f32 %v1078, %v1327
        %v1329 = vpop.f32.mrf.mxu0
        %v1330 = vadd.f32 %v1078, %v1329
        %1331 = vmatmul.bf16.gmra.mxu0 %v1037
        %v1332 = vpop.f32.mrf.mxu0
        %v1333 = vadd.f32 %v1078, %v1332
        %v1334 = vpop.f32.mrf.mxu0
        %v1335 = vadd.f32 %v1078, %v1334
        %1336 = vmatmul.bf16.gmra.mxu0 %v1038
        %v1337 = vpop.f32.mrf.mxu0
        %v1338 = vadd.f32 %v1078, %v1337
        %v1339 = vpop.f32.mrf.mxu0
        %v1340 = vadd.f32 %v1078, %v1339
        %1341 = vmatmul.bf16.gmra.mxu0 %v1039
        %v1342 = vpop.f32.mrf.mxu0
        %v1343 = vadd.f32 %v1078, %v1342
        %v1344 = vpop.f32.mrf.mxu0
        %v1345 = vadd.f32 %v1078, %v1344
        %1346 = vmatmul.bf16.gmra.mxu0 %v1040
        %v1347 = vpop.f32.mrf.mxu0
        %v1348 = vadd.f32 %v1078, %v1347
        %v1349 = vpop.f32.mrf.mxu0
        %v1350 = vadd.f32 %v1078, %v1349
        %1351 = vmatmul.bf16.gmra.mxu0 %v1041
        %v1352 = vpop.f32.mrf.mxu0
        %v1353 = vadd.f32 %v1078, %v1352
        %v1354 = vpop.f32.mrf.mxu0
        %v1355 = vadd.f32 %v1078, %v1354
        %1356 = vdwg.mxu0
        %v1357 = vmul.f32 %v1220, 0.25
        %v1358 = vmul.f32 %v1222, 0.25
        %v1359 = vmul.f32 %v1225, 0.25
        %v1360 = vmul.f32 %v1227, 0.25
        %v1361 = vmul.f32 %v1230, 0.25
        %v1362 = vmul.f32 %v1232, 0.25
        %v1363 = vmul.f32 %v1235, 0.25
        %v1364 = vmul.f32 %v1237, 0.25
        %v1365 = vmul.f32 %v1240, 0.25
        %v1366 = vmul.f32 %v1242, 0.25
        %v1367 = vmul.f32 %v1245, 0.25
        %v1368 = vmul.f32 %v1247, 0.25
        %v1369 = vmul.f32 %v1250, 0.25
        %v1370 = vmul.f32 %v1252, 0.25
        %v1371 = vmul.f32 %v1255, 0.25
        %v1372 = vmul.f32 %v1257, 0.25
        %v1373 = vpack.c.bf16 %v1357, %v1357
        %v1374 = vpack.c.bf16 %v1358, %v1358
        %v1375 = vpack.c.bf16 %v1359, %v1359
        %v1376 = vpack.c.bf16 %v1360, %v1360
        %v1377 = vpack.c.bf16 %v1361, %v1361
        %v1378 = vpack.c.bf16 %v1362, %v1362
        %v1379 = vpack.c.bf16 %v1363, %v1363
        %v1380 = vpack.c.bf16 %v1364, %v1364
        %v1381 = vpack.c.bf16 %v1365, %v1365
        %v1382 = vpack.c.bf16 %v1366, %v1366
        %v1383 = vpack.c.bf16 %v1367, %v1367
        %v1384 = vpack.c.bf16 %v1368, %v1368
        %v1385 = vpack.c.bf16 %v1369, %v1369
        %v1386 = vpack.c.bf16 %v1370, %v1370
        %v1387 = vpack.c.bf16 %v1371, %v1371
        %v1388 = vpack.c.bf16 %v1372, %v1372
        %v1389 = vpack.c.bf16 %v1269, %v1269
        %v1390 = vpack.c.bf16 %v1271, %v1271
        %v1391 = vpack.c.bf16 %v1274, %v1274
        %v1392 = vpack.c.bf16 %v1276, %v1276
        %v1393 = vpack.c.bf16 %v1279, %v1279
        %v1394 = vpack.c.bf16 %v1281, %v1281
        %v1395 = vpack.c.bf16 %v1284, %v1284
        %v1396 = vpack.c.bf16 %v1286, %v1286
        %v1397 = vpack.c.bf16 %v1289, %v1289
        %v1398 = vpack.c.bf16 %v1291, %v1291
        %v1399 = vpack.c.bf16 %v1294, %v1294
        %v1400 = vpack.c.bf16 %v1296, %v1296
        %v1401 = vpack.c.bf16 %v1299, %v1299
        %v1402 = vpack.c.bf16 %v1301, %v1301
        %v1403 = vpack.c.bf16 %v1304, %v1304
        %v1404 = vpack.c.bf16 %v1306, %v1306
        %v1405 = vpack.c.bf16 %v1318, %v1318
        %v1406 = vpack.c.bf16 %v1320, %v1320
        %v1407 = vpack.c.bf16 %v1323, %v1323
        %v1408 = vpack.c.bf16 %v1325, %v1325
        %v1409 = vpack.c.bf16 %v1328, %v1328
        %v1410 = vpack.c.bf16 %v1330, %v1330
        %v1411 = vpack.c.bf16 %v1333, %v1333
        %v1412 = vpack.c.bf16 %v1335, %v1335
        %v1413 = vpack.c.bf16 %v1338, %v1338
        %v1414 = vpack.c.bf16 %v1340, %v1340
        %v1415 = vpack.c.bf16 %v1343, %v1343
        %v1416 = vpack.c.bf16 %v1345, %v1345
        %v1417 = vpack.c.bf16 %v1348, %v1348
        %v1418 = vpack.c.bf16 %v1350, %v1350
        %v1419 = vpack.c.bf16 %v1353, %v1353
        %v1420 = vpack.c.bf16 %v1355, %v1355
        %v1437 = vunpack.c.l.b16 %v1373
        %v1438 = vunpack.c.l.b16 %v1374
        %v1439 = vunpack.c.l.b16 %v1375
        %v1440 = vunpack.c.l.b16 %v1376
        %v1441 = vunpack.c.l.b16 %v1377
        %v1442 = vunpack.c.l.b16 %v1378
        %v1443 = vunpack.c.l.b16 %v1379
        %v1444 = vunpack.c.l.b16 %v1380
        %v1445 = vunpack.c.l.b16 %v1381
        %v1446 = vunpack.c.l.b16 %v1382
        %v1447 = vunpack.c.l.b16 %v1383
        %v1448 = vunpack.c.l.b16 %v1384
        %v1449 = vunpack.c.l.b16 %v1385
        %v1450 = vunpack.c.l.b16 %v1386
        %v1451 = vunpack.c.l.b16 %v1387
        %v1452 = vunpack.c.l.b16 %v1388
        %v1453 = vpack.c.b16 %v1438, %v1437
        %v1454 = vpack.c.b16 %v1440, %v1439
        %v1455 = vpack.c.b16 %v1442, %v1441
        %v1456 = vpack.c.b16 %v1444, %v1443
        %v1457 = vpack.c.b16 %v1446, %v1445
        %v1458 = vpack.c.b16 %v1448, %v1447
        %v1459 = vpack.c.b16 %v1450, %v1449
        %v1460 = vpack.c.b16 %v1452, %v1451
        %v1477 = vunpack.c.l.b16 %v1389
        %v1478 = vunpack.c.l.b16 %v1390
        %v1479 = vunpack.c.l.b16 %v1391
        %v1480 = vunpack.c.l.b16 %v1392
        %v1481 = vunpack.c.l.b16 %v1393
        %v1482 = vunpack.c.l.b16 %v1394
        %v1483 = vunpack.c.l.b16 %v1395
        %v1484 = vunpack.c.l.b16 %v1396
        %v1485 = vunpack.c.l.b16 %v1397
        %v1486 = vunpack.c.l.b16 %v1398
        %v1487 = vunpack.c.l.b16 %v1399
        %v1488 = vunpack.c.l.b16 %v1400
        %v1489 = vunpack.c.l.b16 %v1401
        %v1490 = vunpack.c.l.b16 %v1402
        %v1491 = vunpack.c.l.b16 %v1403
        %v1492 = vunpack.c.l.b16 %v1404
        %v1493 = vpack.c.b16 %v1478, %v1477
        %v1494 = vpack.c.b16 %v1480, %v1479
        %v1495 = vpack.c.b16 %v1482, %v1481
        %v1496 = vpack.c.b16 %v1484, %v1483
        %v1497 = vpack.c.b16 %v1486, %v1485
        %v1498 = vpack.c.b16 %v1488, %v1487
        %v1499 = vpack.c.b16 %v1490, %v1489
        %v1500 = vpack.c.b16 %v1492, %v1491
        %vm1501 = vcmask 130048
        %v1503 = vsel %vm1501, %v1453, 0
        %v1506 = vsel %vm1501, %v1454, 0
        %v1509 = vsel %vm1501, %v1455, 0
        %v1512 = vsel %vm1501, %v1456, 0
        %v1515 = vsel %vm1501, %v1457, 0
        %v1518 = vsel %vm1501, %v1458, 0
        %v1521 = vsel %vm1501, %v1459, 0
        %v1524 = vsel %vm1501, %v1460, 0
        %v1527 = vsel %vm1501, %v1493, 0
        %v1530 = vsel %vm1501, %v1494, 0
        %v1533 = vsel %vm1501, %v1495, 0
        %v1536 = vsel %vm1501, %v1496, 0
        %v1539 = vsel %vm1501, %v1497, 0
        %v1542 = vsel %vm1501, %v1498, 0
        %v1545 = vsel %vm1501, %v1499, 0
        %v1548 = vsel %vm1501, %v1500, 0
        %1550 = vmatpush.bf16.xpose.msra.mxu0 %v1548
        %1551 = vmatpush.bf16.xpose.msra.mxu0 %v1545
        %1552 = vmatpush.bf16.xpose.msra.mxu0 %v1542
        %1553 = vmatpush.bf16.xpose.msra.mxu0 %v1539
        %1554 = vmatpush.bf16.xpose.msra.mxu0 %v1536
        %1555 = vmatpush.bf16.xpose.msra.mxu0 %v1533
        %1556 = vmatpush.bf16.xpose.msra.mxu0 %v1530
        %1557 = vmatpush.bf16.xpose.msra.mxu0 %v1527
        %1558 = vmatmul.bf16.gmra.mxu0 %v1503
        %v1559 = vpop.f32.mrf.mxu0
        %v1560 = vadd.f32 0.0, %v1559
        %v1561 = vpop.f32.mrf.mxu0
        %v1562 = vadd.f32 0.0, %v1561
        %1563 = vmatmul.bf16.gmra.mxu0 %v1506
        %v1564 = vpop.f32.mrf.mxu0
        %v1565 = vadd.f32 0.0, %v1564
        %v1566 = vpop.f32.mrf.mxu0
        %v1567 = vadd.f32 0.0, %v1566
        %1568 = vmatmul.bf16.gmra.mxu0 %v1509
        %v1569 = vpop.f32.mrf.mxu0
        %v1570 = vadd.f32 0.0, %v1569
        %v1571 = vpop.f32.mrf.mxu0
        %v1572 = vadd.f32 0.0, %v1571
        %1573 = vmatmul.bf16.gmra.mxu0 %v1512
        %v1574 = vpop.f32.mrf.mxu0
        %v1575 = vadd.f32 0.0, %v1574
        %v1576 = vpop.f32.mrf.mxu0
        %v1577 = vadd.f32 0.0, %v1576
        %1578 = vmatmul.bf16.gmra.mxu0 %v1515
        %v1579 = vpop.f32.mrf.mxu0
        %v1580 = vadd.f32 0.0, %v1579
        %v1581 = vpop.f32.mrf.mxu0
        %v1582 = vadd.f32 0.0, %v1581
        %1583 = vmatmul.bf16.gmra.mxu0 %v1518
        %v1584 = vpop.f32.mrf.mxu0
        %v1585 = vadd.f32 0.0, %v1584
        %v1586 = vpop.f32.mrf.mxu0
        %v1587 = vadd.f32 0.0, %v1586
        %1588 = vmatmul.bf16.gmra.mxu0 %v1521
        %v1589 = vpop.f32.mrf.mxu0
        %v1590 = vadd.f32 0.0, %v1589
        %v1591 = vpop.f32.mrf.mxu0
        %v1592 = vadd.f32 0.0, %v1591
        %1593 = vmatmul.bf16.gmra.mxu0 %v1524
        %v1594 = vpop.f32.mrf.mxu0
        %v1595 = vadd.f32 0.0, %v1594
        %v1596 = vpop.f32.mrf.mxu0
        %v1597 = vadd.f32 0.0, %v1596
        %1598 = vdwg.mxu0
        %1599 = vmax.xlane.f32.xlu0 %v1560
        %v1600 = vpop.xlane.xlu0 %1599
        %1601 = vmax.xlane.f32.xlu0 %v1562
        %v1602 = vpop.xlane.xlu0 %1601
        %1603 = vmax.xlane.f32.xlu0 %v1565
        %v1604 = vpop.xlane.xlu0 %1603
        %1605 = vmax.xlane.f32.xlu0 %v1567
        %v1606 = vpop.xlane.xlu0 %1605
        %1607 = vmax.xlane.f32.xlu0 %v1570
        %v1608 = vpop.xlane.xlu0 %1607
        %1609 = vmax.xlane.f32.xlu0 %v1572
        %v1610 = vpop.xlane.xlu0 %1609
        %1611 = vmax.xlane.f32.xlu0 %v1575
        %v1612 = vpop.xlane.xlu0 %1611
        %1613 = vmax.xlane.f32.xlu0 %v1577
        %v1614 = vpop.xlane.xlu0 %1613
        %1615 = vmax.xlane.f32.xlu0 %v1580
        %v1616 = vpop.xlane.xlu0 %1615
        %1617 = vmax.xlane.f32.xlu0 %v1582
        %v1618 = vpop.xlane.xlu0 %1617
        %1619 = vmax.xlane.f32.xlu0 %v1585
        %v1620 = vpop.xlane.xlu0 %1619
        %1621 = vmax.xlane.f32.xlu0 %v1587
        %v1622 = vpop.xlane.xlu0 %1621
        %1623 = vmax.xlane.f32.xlu0 %v1590
        %v1624 = vpop.xlane.xlu0 %1623
        %1625 = vmax.xlane.f32.xlu0 %v1592
        %v1626 = vpop.xlane.xlu0 %1625
        %1627 = vmax.xlane.f32.xlu0 %v1595
        %v1628 = vpop.xlane.xlu0 %1627
        %1629 = vmax.xlane.f32.xlu0 %v1597
        %v1630 = vpop.xlane.xlu0 %1629
        %v1631 = vsub.f32 %v1560, %v1600
        %v1632 = vsub.f32 %v1562, %v1602
        %v1633 = vsub.f32 %v1565, %v1604
        %v1634 = vsub.f32 %v1567, %v1606
        %v1635 = vsub.f32 %v1570, %v1608
        %v1636 = vsub.f32 %v1572, %v1610
        %v1637 = vsub.f32 %v1575, %v1612
        %v1638 = vsub.f32 %v1577, %v1614
        %v1639 = vsub.f32 %v1580, %v1616
        %v1640 = vsub.f32 %v1582, %v1618
        %v1641 = vsub.f32 %v1585, %v1620
        %v1642 = vsub.f32 %v1587, %v1622
        %v1643 = vsub.f32 %v1590, %v1624
        %v1644 = vsub.f32 %v1592, %v1626
        %v1645 = vsub.f32 %v1595, %v1628
        %v1646 = vsub.f32 %v1597, %v1630
        %v1647 = vmul.f32 %v1631, 1.442695
        %v1648 = vpow.pop %v1647
        %v1649 = vmul.f32 %v1632, 1.442695
        %v1650 = vpow.pop %v1649
        %v1651 = vmul.f32 %v1633, 1.442695
        %v1652 = vpow.pop %v1651
        %v1653 = vmul.f32 %v1634, 1.442695
        %v1654 = vpow.pop %v1653
        %v1655 = vmul.f32 %v1635, 1.442695
        %v1656 = vpow.pop %v1655
        %v1657 = vmul.f32 %v1636, 1.442695
        %v1658 = vpow.pop %v1657
        %v1659 = vmul.f32 %v1637, 1.442695
        %v1660 = vpow.pop %v1659
        %v1661 = vmul.f32 %v1638, 1.442695
        %v1662 = vpow.pop %v1661
        %v1663 = vmul.f32 %v1639, 1.442695
        %v1664 = vpow.pop %v1663
        %v1665 = vmul.f32 %v1640, 1.442695
        %v1666 = vpow.pop %v1665
        %v1667 = vmul.f32 %v1641, 1.442695
        %v1668 = vpow.pop %v1667
        %v1669 = vmul.f32 %v1642, 1.442695
        %v1670 = vpow.pop %v1669
        %v1671 = vmul.f32 %v1643, 1.442695
        %v1672 = vpow.pop %v1671
        %v1673 = vmul.f32 %v1644, 1.442695
        %v1674 = vpow.pop %v1673
        %v1675 = vmul.f32 %v1645, 1.442695
        %v1676 = vpow.pop %v1675
        %v1677 = vmul.f32 %v1646, 1.442695
        %v1678 = vpow.pop %v1677
        %1679 = vadd.xlane.f32.xlu0 %v1648
        %v1680 = vpop.xlane.xlu0 %1679
        %1681 = vadd.xlane.f32.xlu0 %v1650
        %v1682 = vpop.xlane.xlu0 %1681
        %1683 = vadd.xlane.f32.xlu0 %v1652
        %v1684 = vpop.xlane.xlu0 %1683
        %1685 = vadd.xlane.f32.xlu0 %v1654
        %v1686 = vpop.xlane.xlu0 %1685
        %1687 = vadd.xlane.f32.xlu0 %v1656
        %v1688 = vpop.xlane.xlu0 %1687
        %1689 = vadd.xlane.f32.xlu0 %v1658
        %v1690 = vpop.xlane.xlu0 %1689
        %1691 = vadd.xlane.f32.xlu0 %v1660
        %v1692 = vpop.xlane.xlu0 %1691
        %1693 = vadd.xlane.f32.xlu0 %v1662
        %v1694 = vpop.xlane.xlu0 %1693
        %1695 = vadd.xlane.f32.xlu0 %v1664
        %v1696 = vpop.xlane.xlu0 %1695
        %1697 = vadd.xlane.f32.xlu0 %v1666
        %v1698 = vpop.xlane.xlu0 %1697
        %1699 = vadd.xlane.f32.xlu0 %v1668
        %v1700 = vpop.xlane.xlu0 %1699
        %1701 = vadd.xlane.f32.xlu0 %v1670
        %v1702 = vpop.xlane.xlu0 %1701
        %1703 = vadd.xlane.f32.xlu0 %v1672
        %v1704 = vpop.xlane.xlu0 %1703
        %1705 = vadd.xlane.f32.xlu0 %v1674
        %v1706 = vpop.xlane.xlu0 %1705
        %1707 = vadd.xlane.f32.xlu0 %v1676
        %v1708 = vpop.xlane.xlu0 %1707
        %1709 = vadd.xlane.f32.xlu0 %v1678
        %v1710 = vpop.xlane.xlu0 %1709
        %v1711 = vrcp.pop %v1680
        %v1712 = vrcp.pop %v1682
        %v1713 = vrcp.pop %v1684
        %v1714 = vrcp.pop %v1686
        %v1715 = vrcp.pop %v1688
        %v1716 = vrcp.pop %v1690
        %v1717 = vrcp.pop %v1692
        %v1718 = vrcp.pop %v1694
        %v1719 = vrcp.pop %v1696
        %v1720 = vrcp.pop %v1698
        %v1721 = vrcp.pop %v1700
        %v1722 = vrcp.pop %v1702
        %v1723 = vrcp.pop %v1704
        %v1724 = vrcp.pop %v1706
        %v1725 = vrcp.pop %v1708
        %v1726 = vrcp.pop %v1710
        %v1727 = vmul.f32 %v1648, %v1711
        %v1728 = vmul.f32 %v1650, %v1712
        %v1729 = vmul.f32 %v1652, %v1713
        %v1730 = vmul.f32 %v1654, %v1714
        %v1731 = vmul.f32 %v1656, %v1715
        %v1732 = vmul.f32 %v1658, %v1716
        %v1733 = vmul.f32 %v1660, %v1717
        %v1734 = vmul.f32 %v1662, %v1718
        %v1735 = vmul.f32 %v1664, %v1719
        %v1736 = vmul.f32 %v1666, %v1720
        %v1737 = vmul.f32 %v1668, %v1721
        %v1738 = vmul.f32 %v1670, %v1722
        %v1739 = vmul.f32 %v1672, %v1723
        %v1740 = vmul.f32 %v1674, %v1724
        %v1741 = vmul.f32 %v1676, %v1725
        %v1742 = vmul.f32 %v1678, %v1726
        %v1743 = vpack.c.bf16 %v1728, %v1727
        %v1744 = vpack.c.bf16 %v1730, %v1729
        %v1745 = vpack.c.bf16 %v1732, %v1731
        %v1746 = vpack.c.bf16 %v1734, %v1733
        %v1747 = vpack.c.bf16 %v1736, %v1735
        %v1748 = vpack.c.bf16 %v1738, %v1737
        %v1749 = vpack.c.bf16 %v1740, %v1739
        %v1750 = vpack.c.bf16 %v1742, %v1741
        %v1767 = vunpack.c.l.b16 %v1405
        %v1768 = vunpack.c.l.b16 %v1406
        %v1769 = vunpack.c.l.b16 %v1407
        %v1770 = vunpack.c.l.b16 %v1408
        %v1771 = vunpack.c.l.b16 %v1409
        %v1772 = vunpack.c.l.b16 %v1410
        %v1773 = vunpack.c.l.b16 %v1411
        %v1774 = vunpack.c.l.b16 %v1412
        %v1775 = vunpack.c.l.b16 %v1413
        %v1776 = vunpack.c.l.b16 %v1414
        %v1777 = vunpack.c.l.b16 %v1415
        %v1778 = vunpack.c.l.b16 %v1416
        %v1779 = vunpack.c.l.b16 %v1417
        %v1780 = vunpack.c.l.b16 %v1418
        %v1781 = vunpack.c.l.b16 %v1419
        %v1782 = vunpack.c.l.b16 %v1420
        %v1783 = vpack.c.b16 %v1768, %v1767
        %v1784 = vpack.c.b16 %v1770, %v1769
        %v1785 = vpack.c.b16 %v1772, %v1771
        %v1786 = vpack.c.b16 %v1774, %v1773
        %v1787 = vpack.c.b16 %v1776, %v1775
        %v1788 = vpack.c.b16 %v1778, %v1777
        %v1789 = vpack.c.b16 %v1780, %v1779
        %v1790 = vpack.c.b16 %v1782, %v1781
        %1799 = vmatpush.bf16.msra.mxu0 %v1790
        %1800 = vmatpush.bf16.msra.mxu0 %v1789
        %1801 = vmatpush.bf16.msra.mxu0 %v1788
        %1802 = vmatpush.bf16.msra.mxu0 %v1787
        %1803 = vmatpush.bf16.msra.mxu0 %v1786
        %1804 = vmatpush.bf16.msra.mxu0 %v1785
        %1805 = vmatpush.bf16.msra.mxu0 %v1784
        %1806 = vmatpush.bf16.msra.mxu0 %v1783
        %1807 = vmatmul.bf16.gmra.mxu0 %v1743
        %v1808 = vpop.f32.mrf.mxu0
        %v1809 = vadd.f32 0.0, %v1808
        %v1810 = vpop.f32.mrf.mxu0
        %v1811 = vadd.f32 0.0, %v1810
        %1812 = vmatmul.bf16.gmra.mxu0 %v1744
        %v1813 = vpop.f32.mrf.mxu0
        %v1814 = vadd.f32 0.0, %v1813
        %v1815 = vpop.f32.mrf.mxu0
        %v1816 = vadd.f32 0.0, %v1815
        %1817 = vmatmul.bf16.gmra.mxu0 %v1745
        %v1818 = vpop.f32.mrf.mxu0
        %v1819 = vadd.f32 0.0, %v1818
        %v1820 = vpop.f32.mrf.mxu0
        %v1821 = vadd.f32 0.0, %v1820
        %1822 = vmatmul.bf16.gmra.mxu0 %v1746
        %v1823 = vpop.f32.mrf.mxu0
        %v1824 = vadd.f32 0.0, %v1823
        %v1825 = vpop.f32.mrf.mxu0
        %v1826 = vadd.f32 0.0, %v1825
        %1827 = vmatmul.bf16.gmra.mxu0 %v1747
        %v1828 = vpop.f32.mrf.mxu0
        %v1829 = vadd.f32 0.0, %v1828
        %v1830 = vpop.f32.mrf.mxu0
        %v1831 = vadd.f32 0.0, %v1830
        %1832 = vmatmul.bf16.gmra.mxu0 %v1748
        %v1833 = vpop.f32.mrf.mxu0
        %v1834 = vadd.f32 0.0, %v1833
        %v1835 = vpop.f32.mrf.mxu0
        %v1836 = vadd.f32 0.0, %v1835
        %1837 = vmatmul.bf16.gmra.mxu0 %v1749
        %v1838 = vpop.f32.mrf.mxu0
        %v1839 = vadd.f32 0.0, %v1838
        %v1840 = vpop.f32.mrf.mxu0
        %v1841 = vadd.f32 0.0, %v1840
        %1842 = vmatmul.bf16.gmra.mxu0 %v1750
        %v1843 = vpop.f32.mrf.mxu0
        %v1844 = vadd.f32 0.0, %v1843
        %v1845 = vpop.f32.mrf.mxu0
        %v1846 = vadd.f32 0.0, %v1845
        %1847 = vdwg.mxu0
        %1848 = vrot.lane.b32.xlu0 %v1453, 112
        %v1849 = vpop.permute.xlu0 %1848
        %1850 = vrot.lane.b32.xlu0 %v1454, 112
        %v1851 = vpop.permute.xlu0 %1850
        %1852 = vrot.lane.b32.xlu0 %v1455, 112
        %v1853 = vpop.permute.xlu0 %1852
        %1854 = vrot.lane.b32.xlu0 %v1456, 112
        %v1855 = vpop.permute.xlu0 %1854
        %1856 = vrot.lane.b32.xlu0 %v1457, 112
        %v1857 = vpop.permute.xlu0 %1856
        %1858 = vrot.lane.b32.xlu0 %v1458, 112
        %v1859 = vpop.permute.xlu0 %1858
        %1860 = vrot.lane.b32.xlu0 %v1459, 112
        %v1861 = vpop.permute.xlu0 %1860
        %1862 = vrot.lane.b32.xlu0 %v1460, 112
        %v1863 = vpop.permute.xlu0 %1862
        %1864 = vrot.lane.b32.xlu0 %v1493, 112
        %v1865 = vpop.permute.xlu0 %1864
        %1866 = vrot.lane.b32.xlu0 %v1494, 112
        %v1867 = vpop.permute.xlu0 %1866
        %1868 = vrot.lane.b32.xlu0 %v1495, 112
        %v1869 = vpop.permute.xlu0 %1868
        %1870 = vrot.lane.b32.xlu0 %v1496, 112
        %v1871 = vpop.permute.xlu0 %1870
        %1872 = vrot.lane.b32.xlu0 %v1497, 112
        %v1873 = vpop.permute.xlu0 %1872
        %1874 = vrot.lane.b32.xlu0 %v1498, 112
        %v1875 = vpop.permute.xlu0 %1874
        %1876 = vrot.lane.b32.xlu0 %v1499, 112
        %v1877 = vpop.permute.xlu0 %1876
        %1878 = vrot.lane.b32.xlu0 %v1500, 112
        %v1879 = vpop.permute.xlu0 %1878
        %v1881 = vsel %vm1501, %v1849, 0
        %v1884 = vsel %vm1501, %v1851, 0
        %v1887 = vsel %vm1501, %v1853, 0
        %v1890 = vsel %vm1501, %v1855, 0
        %v1893 = vsel %vm1501, %v1857, 0
        %v1896 = vsel %vm1501, %v1859, 0
        %v1899 = vsel %vm1501, %v1861, 0
        %v1902 = vsel %vm1501, %v1863, 0
        %v1905 = vsel %vm1501, %v1865, 0
        %v1908 = vsel %vm1501, %v1867, 0
        %v1911 = vsel %vm1501, %v1869, 0
        %v1914 = vsel %vm1501, %v1871, 0
        %v1917 = vsel %vm1501, %v1873, 0
        %v1920 = vsel %vm1501, %v1875, 0
        %v1923 = vsel %vm1501, %v1877, 0
        %v1926 = vsel %vm1501, %v1879, 0
        %1928 = vmatpush.bf16.xpose.msra.mxu0 %v1926
        %1929 = vmatpush.bf16.xpose.msra.mxu0 %v1923
        %1930 = vmatpush.bf16.xpose.msra.mxu0 %v1920
        %1931 = vmatpush.bf16.xpose.msra.mxu0 %v1917
        %1932 = vmatpush.bf16.xpose.msra.mxu0 %v1914
        %1933 = vmatpush.bf16.xpose.msra.mxu0 %v1911
        %1934 = vmatpush.bf16.xpose.msra.mxu0 %v1908
        %1935 = vmatpush.bf16.xpose.msra.mxu0 %v1905
        %1936 = vmatmul.bf16.gmra.mxu0 %v1881
        %v1937 = vpop.f32.mrf.mxu0
        %v1938 = vadd.f32 0.0, %v1937
        %v1939 = vpop.f32.mrf.mxu0
        %v1940 = vadd.f32 0.0, %v1939
        %1941 = vmatmul.bf16.gmra.mxu0 %v1884
        %v1942 = vpop.f32.mrf.mxu0
        %v1943 = vadd.f32 0.0, %v1942
        %v1944 = vpop.f32.mrf.mxu0
        %v1945 = vadd.f32 0.0, %v1944
        %1946 = vmatmul.bf16.gmra.mxu0 %v1887
        %v1947 = vpop.f32.mrf.mxu0
        %v1948 = vadd.f32 0.0, %v1947
        %v1949 = vpop.f32.mrf.mxu0
        %v1950 = vadd.f32 0.0, %v1949
        %1951 = vmatmul.bf16.gmra.mxu0 %v1890
        %v1952 = vpop.f32.mrf.mxu0
        %v1953 = vadd.f32 0.0, %v1952
        %v1954 = vpop.f32.mrf.mxu0
        %v1955 = vadd.f32 0.0, %v1954
        %1956 = vmatmul.bf16.gmra.mxu0 %v1893
        %v1957 = vpop.f32.mrf.mxu0
        %v1958 = vadd.f32 0.0, %v1957
        %v1959 = vpop.f32.mrf.mxu0
        %v1960 = vadd.f32 0.0, %v1959
        %1961 = vmatmul.bf16.gmra.mxu0 %v1896
        %v1962 = vpop.f32.mrf.mxu0
        %v1963 = vadd.f32 0.0, %v1962
        %v1964 = vpop.f32.mrf.mxu0
        %v1965 = vadd.f32 0.0, %v1964
        %1966 = vmatmul.bf16.gmra.mxu0 %v1899
        %v1967 = vpop.f32.mrf.mxu0
        %v1968 = vadd.f32 0.0, %v1967
        %v1969 = vpop.f32.mrf.mxu0
        %v1970 = vadd.f32 0.0, %v1969
        %1971 = vmatmul.bf16.gmra.mxu0 %v1902
        %v1972 = vpop.f32.mrf.mxu0
        %v1973 = vadd.f32 0.0, %v1972
        %v1974 = vpop.f32.mrf.mxu0
        %v1975 = vadd.f32 0.0, %v1974
        %1976 = vdwg.mxu0
        %1977 = vmax.xlane.f32.xlu0 %v1938
        %v1978 = vpop.xlane.xlu0 %1977
        %1979 = vmax.xlane.f32.xlu0 %v1940
        %v1980 = vpop.xlane.xlu0 %1979
        %1981 = vmax.xlane.f32.xlu0 %v1943
        %v1982 = vpop.xlane.xlu0 %1981
        %1983 = vmax.xlane.f32.xlu0 %v1945
        %v1984 = vpop.xlane.xlu0 %1983
        %1985 = vmax.xlane.f32.xlu0 %v1948
        %v1986 = vpop.xlane.xlu0 %1985
        %1987 = vmax.xlane.f32.xlu0 %v1950
        %v1988 = vpop.xlane.xlu0 %1987
        %1989 = vmax.xlane.f32.xlu0 %v1953
        %v1990 = vpop.xlane.xlu0 %1989
        %1991 = vmax.xlane.f32.xlu0 %v1955
        %v1992 = vpop.xlane.xlu0 %1991
        %1993 = vmax.xlane.f32.xlu0 %v1958
        %v1994 = vpop.xlane.xlu0 %1993
        %1995 = vmax.xlane.f32.xlu0 %v1960
        %v1996 = vpop.xlane.xlu0 %1995
        %1997 = vmax.xlane.f32.xlu0 %v1963
        %v1998 = vpop.xlane.xlu0 %1997
        %1999 = vmax.xlane.f32.xlu0 %v1965
        %v2000 = vpop.xlane.xlu0 %1999
        %2001 = vmax.xlane.f32.xlu0 %v1968
        %v2002 = vpop.xlane.xlu0 %2001
        %2003 = vmax.xlane.f32.xlu0 %v1970
        %v2004 = vpop.xlane.xlu0 %2003
        %2005 = vmax.xlane.f32.xlu0 %v1973
        %v2006 = vpop.xlane.xlu0 %2005
        %2007 = vmax.xlane.f32.xlu0 %v1975
        %v2008 = vpop.xlane.xlu0 %2007
        %v2009 = vsub.f32 %v1938, %v1978
        %v2010 = vsub.f32 %v1940, %v1980
        %v2011 = vsub.f32 %v1943, %v1982
        %v2012 = vsub.f32 %v1945, %v1984
        %v2013 = vsub.f32 %v1948, %v1986
        %v2014 = vsub.f32 %v1950, %v1988
        %v2015 = vsub.f32 %v1953, %v1990
        %v2016 = vsub.f32 %v1955, %v1992
        %v2017 = vsub.f32 %v1958, %v1994
        %v2018 = vsub.f32 %v1960, %v1996
        %v2019 = vsub.f32 %v1963, %v1998
        %v2020 = vsub.f32 %v1965, %v2000
        %v2021 = vsub.f32 %v1968, %v2002
        %v2022 = vsub.f32 %v1970, %v2004
        %v2023 = vsub.f32 %v1973, %v2006
        %v2024 = vsub.f32 %v1975, %v2008
        %v2025 = vmul.f32 %v2009, 1.442695
        %v2026 = vpow.pop %v2025
        %v2027 = vmul.f32 %v2010, 1.442695
        %v2028 = vpow.pop %v2027
        %v2029 = vmul.f32 %v2011, 1.442695
        %v2030 = vpow.pop %v2029
        %v2031 = vmul.f32 %v2012, 1.442695
        %v2032 = vpow.pop %v2031
        %v2033 = vmul.f32 %v2013, 1.442695
        %v2034 = vpow.pop %v2033
        %v2035 = vmul.f32 %v2014, 1.442695
        %v2036 = vpow.pop %v2035
        %v2037 = vmul.f32 %v2015, 1.442695
        %v2038 = vpow.pop %v2037
        %v2039 = vmul.f32 %v2016, 1.442695
        %v2040 = vpow.pop %v2039
        %v2041 = vmul.f32 %v2017, 1.442695
        %v2042 = vpow.pop %v2041
        %v2043 = vmul.f32 %v2018, 1.442695
        %v2044 = vpow.pop %v2043
        %v2045 = vmul.f32 %v2019, 1.442695
        %v2046 = vpow.pop %v2045
        %v2047 = vmul.f32 %v2020, 1.442695
        %v2048 = vpow.pop %v2047
        %v2049 = vmul.f32 %v2021, 1.442695
        %v2050 = vpow.pop %v2049
        %v2051 = vmul.f32 %v2022, 1.442695
        %v2052 = vpow.pop %v2051
        %v2053 = vmul.f32 %v2023, 1.442695
        %v2054 = vpow.pop %v2053
        %v2055 = vmul.f32 %v2024, 1.442695
        %v2056 = vpow.pop %v2055
        %2057 = vadd.xlane.f32.xlu0 %v2026
        %v2058 = vpop.xlane.xlu0 %2057
        %2059 = vadd.xlane.f32.xlu0 %v2028
        %v2060 = vpop.xlane.xlu0 %2059
        %2061 = vadd.xlane.f32.xlu0 %v2030
        %v2062 = vpop.xlane.xlu0 %2061
        %2063 = vadd.xlane.f32.xlu0 %v2032
        %v2064 = vpop.xlane.xlu0 %2063
        %2065 = vadd.xlane.f32.xlu0 %v2034
        %v2066 = vpop.xlane.xlu0 %2065
        %2067 = vadd.xlane.f32.xlu0 %v2036
        %v2068 = vpop.xlane.xlu0 %2067
        %2069 = vadd.xlane.f32.xlu0 %v2038
        %v2070 = vpop.xlane.xlu0 %2069
        %2071 = vadd.xlane.f32.xlu0 %v2040
        %v2072 = vpop.xlane.xlu0 %2071
        %2073 = vadd.xlane.f32.xlu0 %v2042
        %v2074 = vpop.xlane.xlu0 %2073
        %2075 = vadd.xlane.f32.xlu0 %v2044
        %v2076 = vpop.xlane.xlu0 %2075
        %2077 = vadd.xlane.f32.xlu0 %v2046
        %v2078 = vpop.xlane.xlu0 %2077
        %2079 = vadd.xlane.f32.xlu0 %v2048
        %v2080 = vpop.xlane.xlu0 %2079
        %2081 = vadd.xlane.f32.xlu0 %v2050
        %v2082 = vpop.xlane.xlu0 %2081
        %2083 = vadd.xlane.f32.xlu0 %v2052
        %v2084 = vpop.xlane.xlu0 %2083
        %2085 = vadd.xlane.f32.xlu0 %v2054
        %v2086 = vpop.xlane.xlu0 %2085
        %2087 = vadd.xlane.f32.xlu0 %v2056
        %v2088 = vpop.xlane.xlu0 %2087
        %v2089 = vrcp.pop %v2058
        %v2090 = vrcp.pop %v2060
        %v2091 = vrcp.pop %v2062
        %v2092 = vrcp.pop %v2064
        %v2093 = vrcp.pop %v2066
        %v2094 = vrcp.pop %v2068
        %v2095 = vrcp.pop %v2070
        %v2096 = vrcp.pop %v2072
        %v2097 = vrcp.pop %v2074
        %v2098 = vrcp.pop %v2076
        %v2099 = vrcp.pop %v2078
        %v2100 = vrcp.pop %v2080
        %v2101 = vrcp.pop %v2082
        %v2102 = vrcp.pop %v2084
        %v2103 = vrcp.pop %v2086
        %v2104 = vrcp.pop %v2088
        %v2105 = vmul.f32 %v2026, %v2089
        %v2106 = vmul.f32 %v2028, %v2090
        %v2107 = vmul.f32 %v2030, %v2091
        %v2108 = vmul.f32 %v2032, %v2092
        %v2109 = vmul.f32 %v2034, %v2093
        %v2110 = vmul.f32 %v2036, %v2094
        %v2111 = vmul.f32 %v2038, %v2095
        %v2112 = vmul.f32 %v2040, %v2096
        %v2113 = vmul.f32 %v2042, %v2097
        %v2114 = vmul.f32 %v2044, %v2098
        %v2115 = vmul.f32 %v2046, %v2099
        %v2116 = vmul.f32 %v2048, %v2100
        %v2117 = vmul.f32 %v2050, %v2101
        %v2118 = vmul.f32 %v2052, %v2102
        %v2119 = vmul.f32 %v2054, %v2103
        %v2120 = vmul.f32 %v2056, %v2104
        %v2121 = vpack.c.bf16 %v2106, %v2105
        %v2122 = vpack.c.bf16 %v2108, %v2107
        %v2123 = vpack.c.bf16 %v2110, %v2109
        %v2124 = vpack.c.bf16 %v2112, %v2111
        %v2125 = vpack.c.bf16 %v2114, %v2113
        %v2126 = vpack.c.bf16 %v2116, %v2115
        %v2127 = vpack.c.bf16 %v2118, %v2117
        %v2128 = vpack.c.bf16 %v2120, %v2119
        %2129 = vrot.lane.b32.xlu0 %v1783, 112
        %v2130 = vpop.permute.xlu0 %2129
        %2131 = vrot.lane.b32.xlu0 %v1784, 112
        %v2132 = vpop.permute.xlu0 %2131
        %2133 = vrot.lane.b32.xlu0 %v1785, 112
        %v2134 = vpop.permute.xlu0 %2133
        %2135 = vrot.lane.b32.xlu0 %v1786, 112
        %v2136 = vpop.permute.xlu0 %2135
        %2137 = vrot.lane.b32.xlu0 %v1787, 112
        %v2138 = vpop.permute.xlu0 %2137
        %2139 = vrot.lane.b32.xlu0 %v1788, 112
        %v2140 = vpop.permute.xlu0 %2139
        %2141 = vrot.lane.b32.xlu0 %v1789, 112
        %v2142 = vpop.permute.xlu0 %2141
        %2143 = vrot.lane.b32.xlu0 %v1790, 112
        %v2144 = vpop.permute.xlu0 %2143
        %2153 = vmatpush.bf16.msra.mxu0 %v2144
        %2154 = vmatpush.bf16.msra.mxu0 %v2142
        %2155 = vmatpush.bf16.msra.mxu0 %v2140
        %2156 = vmatpush.bf16.msra.mxu0 %v2138
        %2157 = vmatpush.bf16.msra.mxu0 %v2136
        %2158 = vmatpush.bf16.msra.mxu0 %v2134
        %2159 = vmatpush.bf16.msra.mxu0 %v2132
        %2160 = vmatpush.bf16.msra.mxu0 %v2130
        %2161 = vmatmul.bf16.gmra.mxu0 %v2121
        %v2162 = vpop.f32.mrf.mxu0
        %v2163 = vadd.f32 0.0, %v2162
        %v2164 = vpop.f32.mrf.mxu0
        %v2165 = vadd.f32 0.0, %v2164
        %2166 = vmatmul.bf16.gmra.mxu0 %v2122
        %v2167 = vpop.f32.mrf.mxu0
        %v2168 = vadd.f32 0.0, %v2167
        %v2169 = vpop.f32.mrf.mxu0
        %v2170 = vadd.f32 0.0, %v2169
        %2171 = vmatmul.bf16.gmra.mxu0 %v2123
        %v2172 = vpop.f32.mrf.mxu0
        %v2173 = vadd.f32 0.0, %v2172
        %v2174 = vpop.f32.mrf.mxu0
        %v2175 = vadd.f32 0.0, %v2174
        %2176 = vmatmul.bf16.gmra.mxu0 %v2124
        %v2177 = vpop.f32.mrf.mxu0
        %v2178 = vadd.f32 0.0, %v2177
        %v2179 = vpop.f32.mrf.mxu0
        %v2180 = vadd.f32 0.0, %v2179
        %2181 = vmatmul.bf16.gmra.mxu0 %v2125
        %v2182 = vpop.f32.mrf.mxu0
        %v2183 = vadd.f32 0.0, %v2182
        %v2184 = vpop.f32.mrf.mxu0
        %v2185 = vadd.f32 0.0, %v2184
        %2186 = vmatmul.bf16.gmra.mxu0 %v2126
        %v2187 = vpop.f32.mrf.mxu0
        %v2188 = vadd.f32 0.0, %v2187
        %v2189 = vpop.f32.mrf.mxu0
        %v2190 = vadd.f32 0.0, %v2189
        %2191 = vmatmul.bf16.gmra.mxu0 %v2127
        %v2192 = vpop.f32.mrf.mxu0
        %v2193 = vadd.f32 0.0, %v2192
        %v2194 = vpop.f32.mrf.mxu0
        %v2195 = vadd.f32 0.0, %v2194
        %2196 = vmatmul.bf16.gmra.mxu0 %v2128
        %v2197 = vpop.f32.mrf.mxu0
        %v2198 = vadd.f32 0.0, %v2197
        %v2199 = vpop.f32.mrf.mxu0
        %v2200 = vadd.f32 0.0, %v2199
        %2201 = vdwg.mxu0
        %2202 = vrot.lane.b32.xlu0 %v1453, 96
        %v2203 = vpop.permute.xlu0 %2202
        %2204 = vrot.lane.b32.xlu0 %v1454, 96
        %v2205 = vpop.permute.xlu0 %2204
        %2206 = vrot.lane.b32.xlu0 %v1455, 96
        %v2207 = vpop.permute.xlu0 %2206
        %2208 = vrot.lane.b32.xlu0 %v1456, 96
        %v2209 = vpop.permute.xlu0 %2208
        %2210 = vrot.lane.b32.xlu0 %v1457, 96
        %v2211 = vpop.permute.xlu0 %2210
        %2212 = vrot.lane.b32.xlu0 %v1458, 96
        %v2213 = vpop.permute.xlu0 %2212
        %2214 = vrot.lane.b32.xlu0 %v1459, 96
        %v2215 = vpop.permute.xlu0 %2214
        %2216 = vrot.lane.b32.xlu0 %v1460, 96
        %v2217 = vpop.permute.xlu0 %2216
        %2218 = vrot.lane.b32.xlu0 %v1493, 96
        %v2219 = vpop.permute.xlu0 %2218
        %2220 = vrot.lane.b32.xlu0 %v1494, 96
        %v2221 = vpop.permute.xlu0 %2220
        %2222 = vrot.lane.b32.xlu0 %v1495, 96
        %v2223 = vpop.permute.xlu0 %2222
        %2224 = vrot.lane.b32.xlu0 %v1496, 96
        %v2225 = vpop.permute.xlu0 %2224
        %2226 = vrot.lane.b32.xlu0 %v1497, 96
        %v2227 = vpop.permute.xlu0 %2226
        %2228 = vrot.lane.b32.xlu0 %v1498, 96
        %v2229 = vpop.permute.xlu0 %2228
        %2230 = vrot.lane.b32.xlu0 %v1499, 96
        %v2231 = vpop.permute.xlu0 %2230
        %2232 = vrot.lane.b32.xlu0 %v1500, 96
        %v2233 = vpop.permute.xlu0 %2232
        %v2235 = vsel %vm1501, %v2203, 0
        %v2238 = vsel %vm1501, %v2205, 0
        %v2241 = vsel %vm1501, %v2207, 0
        %v2244 = vsel %vm1501, %v2209, 0
        %v2247 = vsel %vm1501, %v2211, 0
        %v2250 = vsel %vm1501, %v2213, 0
        %v2253 = vsel %vm1501, %v2215, 0
        %v2256 = vsel %vm1501, %v2217, 0
        %v2259 = vsel %vm1501, %v2219, 0
        %v2262 = vsel %vm1501, %v2221, 0
        %v2265 = vsel %vm1501, %v2223, 0
        %v2268 = vsel %vm1501, %v2225, 0
        %v2271 = vsel %vm1501, %v2227, 0
        %v2274 = vsel %vm1501, %v2229, 0
        %v2277 = vsel %vm1501, %v2231, 0
        %v2280 = vsel %vm1501, %v2233, 0
        %2282 = vmatpush.bf16.xpose.msra.mxu0 %v2280
        %2283 = vmatpush.bf16.xpose.msra.mxu0 %v2277
        %2284 = vmatpush.bf16.xpose.msra.mxu0 %v2274
        %2285 = vmatpush.bf16.xpose.msra.mxu0 %v2271
        %2286 = vmatpush.bf16.xpose.msra.mxu0 %v2268
        %2287 = vmatpush.bf16.xpose.msra.mxu0 %v2265
        %2288 = vmatpush.bf16.xpose.msra.mxu0 %v2262
        %2289 = vmatpush.bf16.xpose.msra.mxu0 %v2259
        %2290 = vmatmul.bf16.gmra.mxu0 %v2235
        %v2291 = vpop.f32.mrf.mxu0
        %v2292 = vadd.f32 0.0, %v2291
        %v2293 = vpop.f32.mrf.mxu0
        %v2294 = vadd.f32 0.0, %v2293
        %2295 = vmatmul.bf16.gmra.mxu0 %v2238
        %v2296 = vpop.f32.mrf.mxu0
        %v2297 = vadd.f32 0.0, %v2296
        %v2298 = vpop.f32.mrf.mxu0
        %v2299 = vadd.f32 0.0, %v2298
        %2300 = vmatmul.bf16.gmra.mxu0 %v2241
        %v2301 = vpop.f32.mrf.mxu0
        %v2302 = vadd.f32 0.0, %v2301
        %v2303 = vpop.f32.mrf.mxu0
        %v2304 = vadd.f32 0.0, %v2303
        %2305 = vmatmul.bf16.gmra.mxu0 %v2244
        %v2306 = vpop.f32.mrf.mxu0
        %v2307 = vadd.f32 0.0, %v2306
        %v2308 = vpop.f32.mrf.mxu0
        %v2309 = vadd.f32 0.0, %v2308
        %2310 = vmatmul.bf16.gmra.mxu0 %v2247
        %v2311 = vpop.f32.mrf.mxu0
        %v2312 = vadd.f32 0.0, %v2311
        %v2313 = vpop.f32.mrf.mxu0
        %v2314 = vadd.f32 0.0, %v2313
        %2315 = vmatmul.bf16.gmra.mxu0 %v2250
        %v2316 = vpop.f32.mrf.mxu0
        %v2317 = vadd.f32 0.0, %v2316
        %v2318 = vpop.f32.mrf.mxu0
        %v2319 = vadd.f32 0.0, %v2318
        %2320 = vmatmul.bf16.gmra.mxu0 %v2253
        %v2321 = vpop.f32.mrf.mxu0
        %v2322 = vadd.f32 0.0, %v2321
        %v2323 = vpop.f32.mrf.mxu0
        %v2324 = vadd.f32 0.0, %v2323
        %2325 = vmatmul.bf16.gmra.mxu0 %v2256
        %v2326 = vpop.f32.mrf.mxu0
        %v2327 = vadd.f32 0.0, %v2326
        %v2328 = vpop.f32.mrf.mxu0
        %v2329 = vadd.f32 0.0, %v2328
        %2330 = vdwg.mxu0
        %2331 = vmax.xlane.f32.xlu0 %v2292
        %v2332 = vpop.xlane.xlu0 %2331
        %2333 = vmax.xlane.f32.xlu0 %v2294
        %v2334 = vpop.xlane.xlu0 %2333
        %2335 = vmax.xlane.f32.xlu0 %v2297
        %v2336 = vpop.xlane.xlu0 %2335
        %2337 = vmax.xlane.f32.xlu0 %v2299
        %v2338 = vpop.xlane.xlu0 %2337
        %2339 = vmax.xlane.f32.xlu0 %v2302
        %v2340 = vpop.xlane.xlu0 %2339
        %2341 = vmax.xlane.f32.xlu0 %v2304
        %v2342 = vpop.xlane.xlu0 %2341
        %2343 = vmax.xlane.f32.xlu0 %v2307
        %v2344 = vpop.xlane.xlu0 %2343
        %2345 = vmax.xlane.f32.xlu0 %v2309
        %v2346 = vpop.xlane.xlu0 %2345
        %2347 = vmax.xlane.f32.xlu0 %v2312
        %v2348 = vpop.xlane.xlu0 %2347
        %2349 = vmax.xlane.f32.xlu0 %v2314
        %v2350 = vpop.xlane.xlu0 %2349
        %2351 = vmax.xlane.f32.xlu0 %v2317
        %v2352 = vpop.xlane.xlu0 %2351
        %2353 = vmax.xlane.f32.xlu0 %v2319
        %v2354 = vpop.xlane.xlu0 %2353
        %2355 = vmax.xlane.f32.xlu0 %v2322
        %v2356 = vpop.xlane.xlu0 %2355
        %2357 = vmax.xlane.f32.xlu0 %v2324
        %v2358 = vpop.xlane.xlu0 %2357
        %2359 = vmax.xlane.f32.xlu0 %v2327
        %v2360 = vpop.xlane.xlu0 %2359
        %2361 = vmax.xlane.f32.xlu0 %v2329
        %v2362 = vpop.xlane.xlu0 %2361
        %v2363 = vsub.f32 %v2292, %v2332
        %v2364 = vsub.f32 %v2294, %v2334
        %v2365 = vsub.f32 %v2297, %v2336
        %v2366 = vsub.f32 %v2299, %v2338
        %v2367 = vsub.f32 %v2302, %v2340
        %v2368 = vsub.f32 %v2304, %v2342
        %v2369 = vsub.f32 %v2307, %v2344
        %v2370 = vsub.f32 %v2309, %v2346
        %v2371 = vsub.f32 %v2312, %v2348
        %v2372 = vsub.f32 %v2314, %v2350
        %v2373 = vsub.f32 %v2317, %v2352
        %v2374 = vsub.f32 %v2319, %v2354
        %v2375 = vsub.f32 %v2322, %v2356
        %v2376 = vsub.f32 %v2324, %v2358
        %v2377 = vsub.f32 %v2327, %v2360
        %v2378 = vsub.f32 %v2329, %v2362
        %v2379 = vmul.f32 %v2363, 1.442695
        %v2380 = vpow.pop %v2379
        %v2381 = vmul.f32 %v2364, 1.442695
        %v2382 = vpow.pop %v2381
        %v2383 = vmul.f32 %v2365, 1.442695
        %v2384 = vpow.pop %v2383
        %v2385 = vmul.f32 %v2366, 1.442695
        %v2386 = vpow.pop %v2385
        %v2387 = vmul.f32 %v2367, 1.442695
        %v2388 = vpow.pop %v2387
        %v2389 = vmul.f32 %v2368, 1.442695
        %v2390 = vpow.pop %v2389
        %v2391 = vmul.f32 %v2369, 1.442695
        %v2392 = vpow.pop %v2391
        %v2393 = vmul.f32 %v2370, 1.442695
        %v2394 = vpow.pop %v2393
        %v2395 = vmul.f32 %v2371, 1.442695
        %v2396 = vpow.pop %v2395
        %v2397 = vmul.f32 %v2372, 1.442695
        %v2398 = vpow.pop %v2397
        %v2399 = vmul.f32 %v2373, 1.442695
        %v2400 = vpow.pop %v2399
        %v2401 = vmul.f32 %v2374, 1.442695
        %v2402 = vpow.pop %v2401
        %v2403 = vmul.f32 %v2375, 1.442695
        %v2404 = vpow.pop %v2403
        %v2405 = vmul.f32 %v2376, 1.442695
        %v2406 = vpow.pop %v2405
        %v2407 = vmul.f32 %v2377, 1.442695
        %v2408 = vpow.pop %v2407
        %v2409 = vmul.f32 %v2378, 1.442695
        %v2410 = vpow.pop %v2409
        %2411 = vadd.xlane.f32.xlu0 %v2380
        %v2412 = vpop.xlane.xlu0 %2411
        %2413 = vadd.xlane.f32.xlu0 %v2382
        %v2414 = vpop.xlane.xlu0 %2413
        %2415 = vadd.xlane.f32.xlu0 %v2384
        %v2416 = vpop.xlane.xlu0 %2415
        %2417 = vadd.xlane.f32.xlu0 %v2386
        %v2418 = vpop.xlane.xlu0 %2417
        %2419 = vadd.xlane.f32.xlu0 %v2388
        %v2420 = vpop.xlane.xlu0 %2419
        %2421 = vadd.xlane.f32.xlu0 %v2390
        %v2422 = vpop.xlane.xlu0 %2421
        %2423 = vadd.xlane.f32.xlu0 %v2392
        %v2424 = vpop.xlane.xlu0 %2423
        %2425 = vadd.xlane.f32.xlu0 %v2394
        %v2426 = vpop.xlane.xlu0 %2425
        %2427 = vadd.xlane.f32.xlu0 %v2396
        %v2428 = vpop.xlane.xlu0 %2427
        %2429 = vadd.xlane.f32.xlu0 %v2398
        %v2430 = vpop.xlane.xlu0 %2429
        %2431 = vadd.xlane.f32.xlu0 %v2400
        %v2432 = vpop.xlane.xlu0 %2431
        %2433 = vadd.xlane.f32.xlu0 %v2402
        %v2434 = vpop.xlane.xlu0 %2433
        %2435 = vadd.xlane.f32.xlu0 %v2404
        %v2436 = vpop.xlane.xlu0 %2435
        %2437 = vadd.xlane.f32.xlu0 %v2406
        %v2438 = vpop.xlane.xlu0 %2437
        %2439 = vadd.xlane.f32.xlu0 %v2408
        %v2440 = vpop.xlane.xlu0 %2439
        %2441 = vadd.xlane.f32.xlu0 %v2410
        %v2442 = vpop.xlane.xlu0 %2441
        %v2443 = vrcp.pop %v2412
        %v2444 = vrcp.pop %v2414
        %v2445 = vrcp.pop %v2416
        %v2446 = vrcp.pop %v2418
        %v2447 = vrcp.pop %v2420
        %v2448 = vrcp.pop %v2422
        %v2449 = vrcp.pop %v2424
        %v2450 = vrcp.pop %v2426
        %v2451 = vrcp.pop %v2428
        %v2452 = vrcp.pop %v2430
        %v2453 = vrcp.pop %v2432
        %v2454 = vrcp.pop %v2434
        %v2455 = vrcp.pop %v2436
        %v2456 = vrcp.pop %v2438
        %v2457 = vrcp.pop %v2440
        %v2458 = vrcp.pop %v2442
        %v2459 = vmul.f32 %v2380, %v2443
        %v2460 = vmul.f32 %v2382, %v2444
        %v2461 = vmul.f32 %v2384, %v2445
        %v2462 = vmul.f32 %v2386, %v2446
        %v2463 = vmul.f32 %v2388, %v2447
        %v2464 = vmul.f32 %v2390, %v2448
        %v2465 = vmul.f32 %v2392, %v2449
        %v2466 = vmul.f32 %v2394, %v2450
        %v2467 = vmul.f32 %v2396, %v2451
        %v2468 = vmul.f32 %v2398, %v2452
        %v2469 = vmul.f32 %v2400, %v2453
        %v2470 = vmul.f32 %v2402, %v2454
        %v2471 = vmul.f32 %v2404, %v2455
        %v2472 = vmul.f32 %v2406, %v2456
        %v2473 = vmul.f32 %v2408, %v2457
        %v2474 = vmul.f32 %v2410, %v2458
        %v2475 = vpack.c.bf16 %v2460, %v2459
        %v2476 = vpack.c.bf16 %v2462, %v2461
        %v2477 = vpack.c.bf16 %v2464, %v2463
        %v2478 = vpack.c.bf16 %v2466, %v2465
        %v2479 = vpack.c.bf16 %v2468, %v2467
        %v2480 = vpack.c.bf16 %v2470, %v2469
        %v2481 = vpack.c.bf16 %v2472, %v2471
        %v2482 = vpack.c.bf16 %v2474, %v2473
        %2483 = vrot.lane.b32.xlu0 %v1783, 96
        %v2484 = vpop.permute.xlu0 %2483
        %2485 = vrot.lane.b32.xlu0 %v1784, 96
        %v2486 = vpop.permute.xlu0 %2485
        %2487 = vrot.lane.b32.xlu0 %v1785, 96
        %v2488 = vpop.permute.xlu0 %2487
        %2489 = vrot.lane.b32.xlu0 %v1786, 96
        %v2490 = vpop.permute.xlu0 %2489
        %2491 = vrot.lane.b32.xlu0 %v1787, 96
        %v2492 = vpop.permute.xlu0 %2491
        %2493 = vrot.lane.b32.xlu0 %v1788, 96
        %v2494 = vpop.permute.xlu0 %2493
        %2495 = vrot.lane.b32.xlu0 %v1789, 96
        %v2496 = vpop.permute.xlu0 %2495
        %2497 = vrot.lane.b32.xlu0 %v1790, 96
        %v2498 = vpop.permute.xlu0 %2497
        %2507 = vmatpush.bf16.msra.mxu0 %v2498
        %2508 = vmatpush.bf16.msra.mxu0 %v2496
        %2509 = vmatpush.bf16.msra.mxu0 %v2494
        %2510 = vmatpush.bf16.msra.mxu0 %v2492
        %2511 = vmatpush.bf16.msra.mxu0 %v2490
        %2512 = vmatpush.bf16.msra.mxu0 %v2488
        %2513 = vmatpush.bf16.msra.mxu0 %v2486
        %2514 = vmatpush.bf16.msra.mxu0 %v2484
        %2515 = vmatmul.bf16.gmra.mxu0 %v2475
        %v2516 = vpop.f32.mrf.mxu0
        %v2517 = vadd.f32 0.0, %v2516
        %v2518 = vpop.f32.mrf.mxu0
        %v2519 = vadd.f32 0.0, %v2518
        %2520 = vmatmul.bf16.gmra.mxu0 %v2476
        %v2521 = vpop.f32.mrf.mxu0
        %v2522 = vadd.f32 0.0, %v2521
        %v2523 = vpop.f32.mrf.mxu0
        %v2524 = vadd.f32 0.0, %v2523
        %2525 = vmatmul.bf16.gmra.mxu0 %v2477
        %v2526 = vpop.f32.mrf.mxu0
        %v2527 = vadd.f32 0.0, %v2526
        %v2528 = vpop.f32.mrf.mxu0
        %v2529 = vadd.f32 0.0, %v2528
        %2530 = vmatmul.bf16.gmra.mxu0 %v2478
        %v2531 = vpop.f32.mrf.mxu0
        %v2532 = vadd.f32 0.0, %v2531
        %v2533 = vpop.f32.mrf.mxu0
        %v2534 = vadd.f32 0.0, %v2533
        %2535 = vmatmul.bf16.gmra.mxu0 %v2479
        %v2536 = vpop.f32.mrf.mxu0
        %v2537 = vadd.f32 0.0, %v2536
        %v2538 = vpop.f32.mrf.mxu0
        %v2539 = vadd.f32 0.0, %v2538
        %2540 = vmatmul.bf16.gmra.mxu0 %v2480
        %v2541 = vpop.f32.mrf.mxu0
        %v2542 = vadd.f32 0.0, %v2541
        %v2543 = vpop.f32.mrf.mxu0
        %v2544 = vadd.f32 0.0, %v2543
        %2545 = vmatmul.bf16.gmra.mxu0 %v2481
        %v2546 = vpop.f32.mrf.mxu0
        %v2547 = vadd.f32 0.0, %v2546
        %v2548 = vpop.f32.mrf.mxu0
        %v2549 = vadd.f32 0.0, %v2548
        %2550 = vmatmul.bf16.gmra.mxu0 %v2482
        %v2551 = vpop.f32.mrf.mxu0
        %v2552 = vadd.f32 0.0, %v2551
        %v2553 = vpop.f32.mrf.mxu0
        %v2554 = vadd.f32 0.0, %v2553
        %2555 = vdwg.mxu0
        %2556 = vrot.lane.b32.xlu0 %v1453, 80
        %v2557 = vpop.permute.xlu0 %2556
        %2558 = vrot.lane.b32.xlu0 %v1454, 80
        %v2559 = vpop.permute.xlu0 %2558
        %2560 = vrot.lane.b32.xlu0 %v1455, 80
        %v2561 = vpop.permute.xlu0 %2560
        %2562 = vrot.lane.b32.xlu0 %v1456, 80
        %v2563 = vpop.permute.xlu0 %2562
        %2564 = vrot.lane.b32.xlu0 %v1457, 80
        %v2565 = vpop.permute.xlu0 %2564
        %2566 = vrot.lane.b32.xlu0 %v1458, 80
        %v2567 = vpop.permute.xlu0 %2566
        %2568 = vrot.lane.b32.xlu0 %v1459, 80
        %v2569 = vpop.permute.xlu0 %2568
        %2570 = vrot.lane.b32.xlu0 %v1460, 80
        %v2571 = vpop.permute.xlu0 %2570
        %2572 = vrot.lane.b32.xlu0 %v1493, 80
        %v2573 = vpop.permute.xlu0 %2572
        %2574 = vrot.lane.b32.xlu0 %v1494, 80
        %v2575 = vpop.permute.xlu0 %2574
        %2576 = vrot.lane.b32.xlu0 %v1495, 80
        %v2577 = vpop.permute.xlu0 %2576
        %2578 = vrot.lane.b32.xlu0 %v1496, 80
        %v2579 = vpop.permute.xlu0 %2578
        %2580 = vrot.lane.b32.xlu0 %v1497, 80
        %v2581 = vpop.permute.xlu0 %2580
        %2582 = vrot.lane.b32.xlu0 %v1498, 80
        %v2583 = vpop.permute.xlu0 %2582
        %2584 = vrot.lane.b32.xlu0 %v1499, 80
        %v2585 = vpop.permute.xlu0 %2584
        %2586 = vrot.lane.b32.xlu0 %v1500, 80
        %v2587 = vpop.permute.xlu0 %2586
        %v2589 = vsel %vm1501, %v2557, 0
        %v2592 = vsel %vm1501, %v2559, 0
        %v2595 = vsel %vm1501, %v2561, 0
        %v2598 = vsel %vm1501, %v2563, 0
        %v2601 = vsel %vm1501, %v2565, 0
        %v2604 = vsel %vm1501, %v2567, 0
        %v2607 = vsel %vm1501, %v2569, 0
        %v2610 = vsel %vm1501, %v2571, 0
        %v2613 = vsel %vm1501, %v2573, 0
        %v2616 = vsel %vm1501, %v2575, 0
        %v2619 = vsel %vm1501, %v2577, 0
        %v2622 = vsel %vm1501, %v2579, 0
        %v2625 = vsel %vm1501, %v2581, 0
        %v2628 = vsel %vm1501, %v2583, 0
        %v2631 = vsel %vm1501, %v2585, 0
        %v2634 = vsel %vm1501, %v2587, 0
        %2636 = vmatpush.bf16.xpose.msra.mxu0 %v2634
        %2637 = vmatpush.bf16.xpose.msra.mxu0 %v2631
        %2638 = vmatpush.bf16.xpose.msra.mxu0 %v2628
        %2639 = vmatpush.bf16.xpose.msra.mxu0 %v2625
        %2640 = vmatpush.bf16.xpose.msra.mxu0 %v2622
        %2641 = vmatpush.bf16.xpose.msra.mxu0 %v2619
        %2642 = vmatpush.bf16.xpose.msra.mxu0 %v2616
        %2643 = vmatpush.bf16.xpose.msra.mxu0 %v2613
        %2644 = vmatmul.bf16.gmra.mxu0 %v2589
        %v2645 = vpop.f32.mrf.mxu0
        %v2646 = vadd.f32 0.0, %v2645
        %v2647 = vpop.f32.mrf.mxu0
        %v2648 = vadd.f32 0.0, %v2647
        %2649 = vmatmul.bf16.gmra.mxu0 %v2592
        %v2650 = vpop.f32.mrf.mxu0
        %v2651 = vadd.f32 0.0, %v2650
        %v2652 = vpop.f32.mrf.mxu0
        %v2653 = vadd.f32 0.0, %v2652
        %2654 = vmatmul.bf16.gmra.mxu0 %v2595
        %v2655 = vpop.f32.mrf.mxu0
        %v2656 = vadd.f32 0.0, %v2655
        %v2657 = vpop.f32.mrf.mxu0
        %v2658 = vadd.f32 0.0, %v2657
        %2659 = vmatmul.bf16.gmra.mxu0 %v2598
        %v2660 = vpop.f32.mrf.mxu0
        %v2661 = vadd.f32 0.0, %v2660
        %v2662 = vpop.f32.mrf.mxu0
        %v2663 = vadd.f32 0.0, %v2662
        %2664 = vmatmul.bf16.gmra.mxu0 %v2601
        %v2665 = vpop.f32.mrf.mxu0
        %v2666 = vadd.f32 0.0, %v2665
        %v2667 = vpop.f32.mrf.mxu0
        %v2668 = vadd.f32 0.0, %v2667
        %2669 = vmatmul.bf16.gmra.mxu0 %v2604
        %v2670 = vpop.f32.mrf.mxu0
        %v2671 = vadd.f32 0.0, %v2670
        %v2672 = vpop.f32.mrf.mxu0
        %v2673 = vadd.f32 0.0, %v2672
        %2674 = vmatmul.bf16.gmra.mxu0 %v2607
        %v2675 = vpop.f32.mrf.mxu0
        %v2676 = vadd.f32 0.0, %v2675
        %v2677 = vpop.f32.mrf.mxu0
        %v2678 = vadd.f32 0.0, %v2677
        %2679 = vmatmul.bf16.gmra.mxu0 %v2610
        %v2680 = vpop.f32.mrf.mxu0
        %v2681 = vadd.f32 0.0, %v2680
        %v2682 = vpop.f32.mrf.mxu0
        %v2683 = vadd.f32 0.0, %v2682
        %2684 = vdwg.mxu0
        %2685 = vmax.xlane.f32.xlu0 %v2646
        %v2686 = vpop.xlane.xlu0 %2685
        %2687 = vmax.xlane.f32.xlu0 %v2648
        %v2688 = vpop.xlane.xlu0 %2687
        %2689 = vmax.xlane.f32.xlu0 %v2651
        %v2690 = vpop.xlane.xlu0 %2689
        %2691 = vmax.xlane.f32.xlu0 %v2653
        %v2692 = vpop.xlane.xlu0 %2691
        %2693 = vmax.xlane.f32.xlu0 %v2656
        %v2694 = vpop.xlane.xlu0 %2693
        %2695 = vmax.xlane.f32.xlu0 %v2658
        %v2696 = vpop.xlane.xlu0 %2695
        %2697 = vmax.xlane.f32.xlu0 %v2661
        %v2698 = vpop.xlane.xlu0 %2697
        %2699 = vmax.xlane.f32.xlu0 %v2663
        %v2700 = vpop.xlane.xlu0 %2699
        %2701 = vmax.xlane.f32.xlu0 %v2666
        %v2702 = vpop.xlane.xlu0 %2701
        %2703 = vmax.xlane.f32.xlu0 %v2668
        %v2704 = vpop.xlane.xlu0 %2703
        %2705 = vmax.xlane.f32.xlu0 %v2671
        %v2706 = vpop.xlane.xlu0 %2705
        %2707 = vmax.xlane.f32.xlu0 %v2673
        %v2708 = vpop.xlane.xlu0 %2707
        %2709 = vmax.xlane.f32.xlu0 %v2676
        %v2710 = vpop.xlane.xlu0 %2709
        %2711 = vmax.xlane.f32.xlu0 %v2678
        %v2712 = vpop.xlane.xlu0 %2711
        %2713 = vmax.xlane.f32.xlu0 %v2681
        %v2714 = vpop.xlane.xlu0 %2713
        %2715 = vmax.xlane.f32.xlu0 %v2683
        %v2716 = vpop.xlane.xlu0 %2715
        %v2717 = vsub.f32 %v2646, %v2686
        %v2718 = vsub.f32 %v2648, %v2688
        %v2719 = vsub.f32 %v2651, %v2690
        %v2720 = vsub.f32 %v2653, %v2692
        %v2721 = vsub.f32 %v2656, %v2694
        %v2722 = vsub.f32 %v2658, %v2696
        %v2723 = vsub.f32 %v2661, %v2698
        %v2724 = vsub.f32 %v2663, %v2700
        %v2725 = vsub.f32 %v2666, %v2702
        %v2726 = vsub.f32 %v2668, %v2704
        %v2727 = vsub.f32 %v2671, %v2706
        %v2728 = vsub.f32 %v2673, %v2708
        %v2729 = vsub.f32 %v2676, %v2710
        %v2730 = vsub.f32 %v2678, %v2712
        %v2731 = vsub.f32 %v2681, %v2714
        %v2732 = vsub.f32 %v2683, %v2716
        %v2733 = vmul.f32 %v2717, 1.442695
        %v2734 = vpow.pop %v2733
        %v2735 = vmul.f32 %v2718, 1.442695
        %v2736 = vpow.pop %v2735
        %v2737 = vmul.f32 %v2719, 1.442695
        %v2738 = vpow.pop %v2737
        %v2739 = vmul.f32 %v2720, 1.442695
        %v2740 = vpow.pop %v2739
        %v2741 = vmul.f32 %v2721, 1.442695
        %v2742 = vpow.pop %v2741
        %v2743 = vmul.f32 %v2722, 1.442695
        %v2744 = vpow.pop %v2743
        %v2745 = vmul.f32 %v2723, 1.442695
        %v2746 = vpow.pop %v2745
        %v2747 = vmul.f32 %v2724, 1.442695
        %v2748 = vpow.pop %v2747
        %v2749 = vmul.f32 %v2725, 1.442695
        %v2750 = vpow.pop %v2749
        %v2751 = vmul.f32 %v2726, 1.442695
        %v2752 = vpow.pop %v2751
        %v2753 = vmul.f32 %v2727, 1.442695
        %v2754 = vpow.pop %v2753
        %v2755 = vmul.f32 %v2728, 1.442695
        %v2756 = vpow.pop %v2755
        %v2757 = vmul.f32 %v2729, 1.442695
        %v2758 = vpow.pop %v2757
        %v2759 = vmul.f32 %v2730, 1.442695
        %v2760 = vpow.pop %v2759
        %v2761 = vmul.f32 %v2731, 1.442695
        %v2762 = vpow.pop %v2761
        %v2763 = vmul.f32 %v2732, 1.442695
        %v2764 = vpow.pop %v2763
        %2765 = vadd.xlane.f32.xlu0 %v2734
        %v2766 = vpop.xlane.xlu0 %2765
        %2767 = vadd.xlane.f32.xlu0 %v2736
        %v2768 = vpop.xlane.xlu0 %2767
        %2769 = vadd.xlane.f32.xlu0 %v2738
        %v2770 = vpop.xlane.xlu0 %2769
        %2771 = vadd.xlane.f32.xlu0 %v2740
        %v2772 = vpop.xlane.xlu0 %2771
        %2773 = vadd.xlane.f32.xlu0 %v2742
        %v2774 = vpop.xlane.xlu0 %2773
        %2775 = vadd.xlane.f32.xlu0 %v2744
        %v2776 = vpop.xlane.xlu0 %2775
        %2777 = vadd.xlane.f32.xlu0 %v2746
        %v2778 = vpop.xlane.xlu0 %2777
        %2779 = vadd.xlane.f32.xlu0 %v2748
        %v2780 = vpop.xlane.xlu0 %2779
        %2781 = vadd.xlane.f32.xlu0 %v2750
        %v2782 = vpop.xlane.xlu0 %2781
        %2783 = vadd.xlane.f32.xlu0 %v2752
        %v2784 = vpop.xlane.xlu0 %2783
        %2785 = vadd.xlane.f32.xlu0 %v2754
        %v2786 = vpop.xlane.xlu0 %2785
        %2787 = vadd.xlane.f32.xlu0 %v2756
        %v2788 = vpop.xlane.xlu0 %2787
        %2789 = vadd.xlane.f32.xlu0 %v2758
        %v2790 = vpop.xlane.xlu0 %2789
        %2791 = vadd.xlane.f32.xlu0 %v2760
        %v2792 = vpop.xlane.xlu0 %2791
        %2793 = vadd.xlane.f32.xlu0 %v2762
        %v2794 = vpop.xlane.xlu0 %2793
        %2795 = vadd.xlane.f32.xlu0 %v2764
        %v2796 = vpop.xlane.xlu0 %2795
        %v2797 = vrcp.pop %v2766
        %v2798 = vrcp.pop %v2768
        %v2799 = vrcp.pop %v2770
        %v2800 = vrcp.pop %v2772
        %v2801 = vrcp.pop %v2774
        %v2802 = vrcp.pop %v2776
        %v2803 = vrcp.pop %v2778
        %v2804 = vrcp.pop %v2780
        %v2805 = vrcp.pop %v2782
        %v2806 = vrcp.pop %v2784
        %v2807 = vrcp.pop %v2786
        %v2808 = vrcp.pop %v2788
        %v2809 = vrcp.pop %v2790
        %v2810 = vrcp.pop %v2792
        %v2811 = vrcp.pop %v2794
        %v2812 = vrcp.pop %v2796
        %v2813 = vmul.f32 %v2734, %v2797
        %v2814 = vmul.f32 %v2736, %v2798
        %v2815 = vmul.f32 %v2738, %v2799
        %v2816 = vmul.f32 %v2740, %v2800
        %v2817 = vmul.f32 %v2742, %v2801
        %v2818 = vmul.f32 %v2744, %v2802
        %v2819 = vmul.f32 %v2746, %v2803
        %v2820 = vmul.f32 %v2748, %v2804
        %v2821 = vmul.f32 %v2750, %v2805
        %v2822 = vmul.f32 %v2752, %v2806
        %v2823 = vmul.f32 %v2754, %v2807
        %v2824 = vmul.f32 %v2756, %v2808
        %v2825 = vmul.f32 %v2758, %v2809
        %v2826 = vmul.f32 %v2760, %v2810
        %v2827 = vmul.f32 %v2762, %v2811
        %v2828 = vmul.f32 %v2764, %v2812
        %v2829 = vpack.c.bf16 %v2814, %v2813
        %v2830 = vpack.c.bf16 %v2816, %v2815
        %v2831 = vpack.c.bf16 %v2818, %v2817
        %v2832 = vpack.c.bf16 %v2820, %v2819
        %v2833 = vpack.c.bf16 %v2822, %v2821
        %v2834 = vpack.c.bf16 %v2824, %v2823
        %v2835 = vpack.c.bf16 %v2826, %v2825
        %v2836 = vpack.c.bf16 %v2828, %v2827
        %2837 = vrot.lane.b32.xlu0 %v1783, 80
        %v2838 = vpop.permute.xlu0 %2837
        %2839 = vrot.lane.b32.xlu0 %v1784, 80
        %v2840 = vpop.permute.xlu0 %2839
        %2841 = vrot.lane.b32.xlu0 %v1785, 80
        %v2842 = vpop.permute.xlu0 %2841
        %2843 = vrot.lane.b32.xlu0 %v1786, 80
        %v2844 = vpop.permute.xlu0 %2843
        %2845 = vrot.lane.b32.xlu0 %v1787, 80
        %v2846 = vpop.permute.xlu0 %2845
        %2847 = vrot.lane.b32.xlu0 %v1788, 80
        %v2848 = vpop.permute.xlu0 %2847
        %2849 = vrot.lane.b32.xlu0 %v1789, 80
        %v2850 = vpop.permute.xlu0 %2849
        %2851 = vrot.lane.b32.xlu0 %v1790, 80
        %v2852 = vpop.permute.xlu0 %2851
        %2861 = vmatpush.bf16.msra.mxu0 %v2852
        %2862 = vmatpush.bf16.msra.mxu0 %v2850
        %2863 = vmatpush.bf16.msra.mxu0 %v2848
        %2864 = vmatpush.bf16.msra.mxu0 %v2846
        %2865 = vmatpush.bf16.msra.mxu0 %v2844
        %2866 = vmatpush.bf16.msra.mxu0 %v2842
        %2867 = vmatpush.bf16.msra.mxu0 %v2840
        %2868 = vmatpush.bf16.msra.mxu0 %v2838
        %2869 = vmatmul.bf16.gmra.mxu0 %v2829
        %v2870 = vpop.f32.mrf.mxu0
        %v2871 = vadd.f32 0.0, %v2870
        %v2872 = vpop.f32.mrf.mxu0
        %v2873 = vadd.f32 0.0, %v2872
        %2874 = vmatmul.bf16.gmra.mxu0 %v2830
        %v2875 = vpop.f32.mrf.mxu0
        %v2876 = vadd.f32 0.0, %v2875
        %v2877 = vpop.f32.mrf.mxu0
        %v2878 = vadd.f32 0.0, %v2877
        %2879 = vmatmul.bf16.gmra.mxu0 %v2831
        %v2880 = vpop.f32.mrf.mxu0
        %v2881 = vadd.f32 0.0, %v2880
        %v2882 = vpop.f32.mrf.mxu0
        %v2883 = vadd.f32 0.0, %v2882
        %2884 = vmatmul.bf16.gmra.mxu0 %v2832
        %v2885 = vpop.f32.mrf.mxu0
        %v2886 = vadd.f32 0.0, %v2885
        %v2887 = vpop.f32.mrf.mxu0
        %v2888 = vadd.f32 0.0, %v2887
        %2889 = vmatmul.bf16.gmra.mxu0 %v2833
        %v2890 = vpop.f32.mrf.mxu0
        %v2891 = vadd.f32 0.0, %v2890
        %v2892 = vpop.f32.mrf.mxu0
        %v2893 = vadd.f32 0.0, %v2892
        %2894 = vmatmul.bf16.gmra.mxu0 %v2834
        %v2895 = vpop.f32.mrf.mxu0
        %v2896 = vadd.f32 0.0, %v2895
        %v2897 = vpop.f32.mrf.mxu0
        %v2898 = vadd.f32 0.0, %v2897
        %2899 = vmatmul.bf16.gmra.mxu0 %v2835
        %v2900 = vpop.f32.mrf.mxu0
        %v2901 = vadd.f32 0.0, %v2900
        %v2902 = vpop.f32.mrf.mxu0
        %v2903 = vadd.f32 0.0, %v2902
        %2904 = vmatmul.bf16.gmra.mxu0 %v2836
        %v2905 = vpop.f32.mrf.mxu0
        %v2906 = vadd.f32 0.0, %v2905
        %v2907 = vpop.f32.mrf.mxu0
        %v2908 = vadd.f32 0.0, %v2907
        %2909 = vdwg.mxu0
        %2910 = vrot.lane.b32.xlu0 %v1453, 64
        %v2911 = vpop.permute.xlu0 %2910
        %2912 = vrot.lane.b32.xlu0 %v1454, 64
        %v2913 = vpop.permute.xlu0 %2912
        %2914 = vrot.lane.b32.xlu0 %v1455, 64
        %v2915 = vpop.permute.xlu0 %2914
        %2916 = vrot.lane.b32.xlu0 %v1456, 64
        %v2917 = vpop.permute.xlu0 %2916
        %2918 = vrot.lane.b32.xlu0 %v1457, 64
        %v2919 = vpop.permute.xlu0 %2918
        %2920 = vrot.lane.b32.xlu0 %v1458, 64
        %v2921 = vpop.permute.xlu0 %2920
        %2922 = vrot.lane.b32.xlu0 %v1459, 64
        %v2923 = vpop.permute.xlu0 %2922
        %2924 = vrot.lane.b32.xlu0 %v1460, 64
        %v2925 = vpop.permute.xlu0 %2924
        %2926 = vrot.lane.b32.xlu0 %v1493, 64
        %v2927 = vpop.permute.xlu0 %2926
        %2928 = vrot.lane.b32.xlu0 %v1494, 64
        %v2929 = vpop.permute.xlu0 %2928
        %2930 = vrot.lane.b32.xlu0 %v1495, 64
        %v2931 = vpop.permute.xlu0 %2930
        %2932 = vrot.lane.b32.xlu0 %v1496, 64
        %v2933 = vpop.permute.xlu0 %2932
        %2934 = vrot.lane.b32.xlu0 %v1497, 64
        %v2935 = vpop.permute.xlu0 %2934
        %2936 = vrot.lane.b32.xlu0 %v1498, 64
        %v2937 = vpop.permute.xlu0 %2936
        %2938 = vrot.lane.b32.xlu0 %v1499, 64
        %v2939 = vpop.permute.xlu0 %2938
        %2940 = vrot.lane.b32.xlu0 %v1500, 64
        %v2941 = vpop.permute.xlu0 %2940
        %v2943 = vsel %vm1501, %v2911, 0
        %v2946 = vsel %vm1501, %v2913, 0
        %v2949 = vsel %vm1501, %v2915, 0
        %v2952 = vsel %vm1501, %v2917, 0
        %v2955 = vsel %vm1501, %v2919, 0
        %v2958 = vsel %vm1501, %v2921, 0
        %v2961 = vsel %vm1501, %v2923, 0
        %v2964 = vsel %vm1501, %v2925, 0
        %v2967 = vsel %vm1501, %v2927, 0
        %v2970 = vsel %vm1501, %v2929, 0
        %v2973 = vsel %vm1501, %v2931, 0
        %v2976 = vsel %vm1501, %v2933, 0
        %v2979 = vsel %vm1501, %v2935, 0
        %v2982 = vsel %vm1501, %v2937, 0
        %v2985 = vsel %vm1501, %v2939, 0
        %v2988 = vsel %vm1501, %v2941, 0
        %2990 = vmatpush.bf16.xpose.msra.mxu0 %v2988
        %2991 = vmatpush.bf16.xpose.msra.mxu0 %v2985
        %2992 = vmatpush.bf16.xpose.msra.mxu0 %v2982
        %2993 = vmatpush.bf16.xpose.msra.mxu0 %v2979
        %2994 = vmatpush.bf16.xpose.msra.mxu0 %v2976
        %2995 = vmatpush.bf16.xpose.msra.mxu0 %v2973
        %2996 = vmatpush.bf16.xpose.msra.mxu0 %v2970
        %2997 = vmatpush.bf16.xpose.msra.mxu0 %v2967
        %2998 = vmatmul.bf16.gmra.mxu0 %v2943
        %v2999 = vpop.f32.mrf.mxu0
        %v3000 = vadd.f32 0.0, %v2999
        %v3001 = vpop.f32.mrf.mxu0
        %v3002 = vadd.f32 0.0, %v3001
        %3003 = vmatmul.bf16.gmra.mxu0 %v2946
        %v3004 = vpop.f32.mrf.mxu0
        %v3005 = vadd.f32 0.0, %v3004
        %v3006 = vpop.f32.mrf.mxu0
        %v3007 = vadd.f32 0.0, %v3006
        %3008 = vmatmul.bf16.gmra.mxu0 %v2949
        %v3009 = vpop.f32.mrf.mxu0
        %v3010 = vadd.f32 0.0, %v3009
        %v3011 = vpop.f32.mrf.mxu0
        %v3012 = vadd.f32 0.0, %v3011
        %3013 = vmatmul.bf16.gmra.mxu0 %v2952
        %v3014 = vpop.f32.mrf.mxu0
        %v3015 = vadd.f32 0.0, %v3014
        %v3016 = vpop.f32.mrf.mxu0
        %v3017 = vadd.f32 0.0, %v3016
        %3018 = vmatmul.bf16.gmra.mxu0 %v2955
        %v3019 = vpop.f32.mrf.mxu0
        %v3020 = vadd.f32 0.0, %v3019
        %v3021 = vpop.f32.mrf.mxu0
        %v3022 = vadd.f32 0.0, %v3021
        %3023 = vmatmul.bf16.gmra.mxu0 %v2958
        %v3024 = vpop.f32.mrf.mxu0
        %v3025 = vadd.f32 0.0, %v3024
        %v3026 = vpop.f32.mrf.mxu0
        %v3027 = vadd.f32 0.0, %v3026
        %3028 = vmatmul.bf16.gmra.mxu0 %v2961
        %v3029 = vpop.f32.mrf.mxu0
        %v3030 = vadd.f32 0.0, %v3029
        %v3031 = vpop.f32.mrf.mxu0
        %v3032 = vadd.f32 0.0, %v3031
        %3033 = vmatmul.bf16.gmra.mxu0 %v2964
        %v3034 = vpop.f32.mrf.mxu0
        %v3035 = vadd.f32 0.0, %v3034
        %v3036 = vpop.f32.mrf.mxu0
        %v3037 = vadd.f32 0.0, %v3036
        %3038 = vdwg.mxu0
        %3039 = vmax.xlane.f32.xlu0 %v3000
        %v3040 = vpop.xlane.xlu0 %3039
        %3041 = vmax.xlane.f32.xlu0 %v3002
        %v3042 = vpop.xlane.xlu0 %3041
        %3043 = vmax.xlane.f32.xlu0 %v3005
        %v3044 = vpop.xlane.xlu0 %3043
        %3045 = vmax.xlane.f32.xlu0 %v3007
        %v3046 = vpop.xlane.xlu0 %3045
        %3047 = vmax.xlane.f32.xlu0 %v3010
        %v3048 = vpop.xlane.xlu0 %3047
        %3049 = vmax.xlane.f32.xlu0 %v3012
        %v3050 = vpop.xlane.xlu0 %3049
        %3051 = vmax.xlane.f32.xlu0 %v3015
        %v3052 = vpop.xlane.xlu0 %3051
        %3053 = vmax.xlane.f32.xlu0 %v3017
        %v3054 = vpop.xlane.xlu0 %3053
        %3055 = vmax.xlane.f32.xlu0 %v3020
        %v3056 = vpop.xlane.xlu0 %3055
        %3057 = vmax.xlane.f32.xlu0 %v3022
        %v3058 = vpop.xlane.xlu0 %3057
        %3059 = vmax.xlane.f32.xlu0 %v3025
        %v3060 = vpop.xlane.xlu0 %3059
        %3061 = vmax.xlane.f32.xlu0 %v3027
        %v3062 = vpop.xlane.xlu0 %3061
        %3063 = vmax.xlane.f32.xlu0 %v3030
        %v3064 = vpop.xlane.xlu0 %3063
        %3065 = vmax.xlane.f32.xlu0 %v3032
        %v3066 = vpop.xlane.xlu0 %3065
        %3067 = vmax.xlane.f32.xlu0 %v3035
        %v3068 = vpop.xlane.xlu0 %3067
        %3069 = vmax.xlane.f32.xlu0 %v3037
        %v3070 = vpop.xlane.xlu0 %3069
        %v3071 = vsub.f32 %v3000, %v3040
        %v3072 = vsub.f32 %v3002, %v3042
        %v3073 = vsub.f32 %v3005, %v3044
        %v3074 = vsub.f32 %v3007, %v3046
        %v3075 = vsub.f32 %v3010, %v3048
        %v3076 = vsub.f32 %v3012, %v3050
        %v3077 = vsub.f32 %v3015, %v3052
        %v3078 = vsub.f32 %v3017, %v3054
        %v3079 = vsub.f32 %v3020, %v3056
        %v3080 = vsub.f32 %v3022, %v3058
        %v3081 = vsub.f32 %v3025, %v3060
        %v3082 = vsub.f32 %v3027, %v3062
        %v3083 = vsub.f32 %v3030, %v3064
        %v3084 = vsub.f32 %v3032, %v3066
        %v3085 = vsub.f32 %v3035, %v3068
        %v3086 = vsub.f32 %v3037, %v3070
        %v3087 = vmul.f32 %v3071, 1.442695
        %v3088 = vpow.pop %v3087
        %v3089 = vmul.f32 %v3072, 1.442695
        %v3090 = vpow.pop %v3089
        %v3091 = vmul.f32 %v3073, 1.442695
        %v3092 = vpow.pop %v3091
        %v3093 = vmul.f32 %v3074, 1.442695
        %v3094 = vpow.pop %v3093
        %v3095 = vmul.f32 %v3075, 1.442695
        %v3096 = vpow.pop %v3095
        %v3097 = vmul.f32 %v3076, 1.442695
        %v3098 = vpow.pop %v3097
        %v3099 = vmul.f32 %v3077, 1.442695
        %v3100 = vpow.pop %v3099
        %v3101 = vmul.f32 %v3078, 1.442695
        %v3102 = vpow.pop %v3101
        %v3103 = vmul.f32 %v3079, 1.442695
        %v3104 = vpow.pop %v3103
        %v3105 = vmul.f32 %v3080, 1.442695
        %v3106 = vpow.pop %v3105
        %v3107 = vmul.f32 %v3081, 1.442695
        %v3108 = vpow.pop %v3107
        %v3109 = vmul.f32 %v3082, 1.442695
        %v3110 = vpow.pop %v3109
        %v3111 = vmul.f32 %v3083, 1.442695
        %v3112 = vpow.pop %v3111
        %v3113 = vmul.f32 %v3084, 1.442695
        %v3114 = vpow.pop %v3113
        %v3115 = vmul.f32 %v3085, 1.442695
        %v3116 = vpow.pop %v3115
        %v3117 = vmul.f32 %v3086, 1.442695
        %v3118 = vpow.pop %v3117
        %3119 = vadd.xlane.f32.xlu0 %v3088
        %v3120 = vpop.xlane.xlu0 %3119
        %3121 = vadd.xlane.f32.xlu0 %v3090
        %v3122 = vpop.xlane.xlu0 %3121
        %3123 = vadd.xlane.f32.xlu0 %v3092
        %v3124 = vpop.xlane.xlu0 %3123
        %3125 = vadd.xlane.f32.xlu0 %v3094
        %v3126 = vpop.xlane.xlu0 %3125
        %3127 = vadd.xlane.f32.xlu0 %v3096
        %v3128 = vpop.xlane.xlu0 %3127
        %3129 = vadd.xlane.f32.xlu0 %v3098
        %v3130 = vpop.xlane.xlu0 %3129
        %3131 = vadd.xlane.f32.xlu0 %v3100
        %v3132 = vpop.xlane.xlu0 %3131
        %3133 = vadd.xlane.f32.xlu0 %v3102
        %v3134 = vpop.xlane.xlu0 %3133
        %3135 = vadd.xlane.f32.xlu0 %v3104
        %v3136 = vpop.xlane.xlu0 %3135
        %3137 = vadd.xlane.f32.xlu0 %v3106
        %v3138 = vpop.xlane.xlu0 %3137
        %3139 = vadd.xlane.f32.xlu0 %v3108
        %v3140 = vpop.xlane.xlu0 %3139
        %3141 = vadd.xlane.f32.xlu0 %v3110
        %v3142 = vpop.xlane.xlu0 %3141
        %3143 = vadd.xlane.f32.xlu0 %v3112
        %v3144 = vpop.xlane.xlu0 %3143
        %3145 = vadd.xlane.f32.xlu0 %v3114
        %v3146 = vpop.xlane.xlu0 %3145
        %3147 = vadd.xlane.f32.xlu0 %v3116
        %v3148 = vpop.xlane.xlu0 %3147
        %3149 = vadd.xlane.f32.xlu0 %v3118
        %v3150 = vpop.xlane.xlu0 %3149
        %v3151 = vrcp.pop %v3120
        %v3152 = vrcp.pop %v3122
        %v3153 = vrcp.pop %v3124
        %v3154 = vrcp.pop %v3126
        %v3155 = vrcp.pop %v3128
        %v3156 = vrcp.pop %v3130
        %v3157 = vrcp.pop %v3132
        %v3158 = vrcp.pop %v3134
        %v3159 = vrcp.pop %v3136
        %v3160 = vrcp.pop %v3138
        %v3161 = vrcp.pop %v3140
        %v3162 = vrcp.pop %v3142
        %v3163 = vrcp.pop %v3144
        %v3164 = vrcp.pop %v3146
        %v3165 = vrcp.pop %v3148
        %v3166 = vrcp.pop %v3150
        %v3167 = vmul.f32 %v3088, %v3151
        %v3168 = vmul.f32 %v3090, %v3152
        %v3169 = vmul.f32 %v3092, %v3153
        %v3170 = vmul.f32 %v3094, %v3154
        %v3171 = vmul.f32 %v3096, %v3155
        %v3172 = vmul.f32 %v3098, %v3156
        %v3173 = vmul.f32 %v3100, %v3157
        %v3174 = vmul.f32 %v3102, %v3158
        %v3175 = vmul.f32 %v3104, %v3159
        %v3176 = vmul.f32 %v3106, %v3160
        %v3177 = vmul.f32 %v3108, %v3161
        %v3178 = vmul.f32 %v3110, %v3162
        %v3179 = vmul.f32 %v3112, %v3163
        %v3180 = vmul.f32 %v3114, %v3164
        %v3181 = vmul.f32 %v3116, %v3165
        %v3182 = vmul.f32 %v3118, %v3166
        %v3183 = vpack.c.bf16 %v3168, %v3167
        %v3184 = vpack.c.bf16 %v3170, %v3169
        %v3185 = vpack.c.bf16 %v3172, %v3171
        %v3186 = vpack.c.bf16 %v3174, %v3173
        %v3187 = vpack.c.bf16 %v3176, %v3175
        %v3188 = vpack.c.bf16 %v3178, %v3177
        %v3189 = vpack.c.bf16 %v3180, %v3179
        %v3190 = vpack.c.bf16 %v3182, %v3181
        %3191 = vrot.lane.b32.xlu0 %v1783, 64
        %v3192 = vpop.permute.xlu0 %3191
        %3193 = vrot.lane.b32.xlu0 %v1784, 64
        %v3194 = vpop.permute.xlu0 %3193
        %3195 = vrot.lane.b32.xlu0 %v1785, 64
        %v3196 = vpop.permute.xlu0 %3195
        %3197 = vrot.lane.b32.xlu0 %v1786, 64
        %v3198 = vpop.permute.xlu0 %3197
        %3199 = vrot.lane.b32.xlu0 %v1787, 64
        %v3200 = vpop.permute.xlu0 %3199
        %3201 = vrot.lane.b32.xlu0 %v1788, 64
        %v3202 = vpop.permute.xlu0 %3201
        %3203 = vrot.lane.b32.xlu0 %v1789, 64
        %v3204 = vpop.permute.xlu0 %3203
        %3205 = vrot.lane.b32.xlu0 %v1790, 64
        %v3206 = vpop.permute.xlu0 %3205
        %3215 = vmatpush.bf16.msra.mxu0 %v3206
        %3216 = vmatpush.bf16.msra.mxu0 %v3204
        %3217 = vmatpush.bf16.msra.mxu0 %v3202
        %3218 = vmatpush.bf16.msra.mxu0 %v3200
        %3219 = vmatpush.bf16.msra.mxu0 %v3198
        %3220 = vmatpush.bf16.msra.mxu0 %v3196
        %3221 = vmatpush.bf16.msra.mxu0 %v3194
        %3222 = vmatpush.bf16.msra.mxu0 %v3192
        %3223 = vmatmul.bf16.gmra.mxu0 %v3183
        %v3224 = vpop.f32.mrf.mxu0
        %v3225 = vadd.f32 0.0, %v3224
        %v3226 = vpop.f32.mrf.mxu0
        %v3227 = vadd.f32 0.0, %v3226
        %3228 = vmatmul.bf16.gmra.mxu0 %v3184
        %v3229 = vpop.f32.mrf.mxu0
        %v3230 = vadd.f32 0.0, %v3229
        %v3231 = vpop.f32.mrf.mxu0
        %v3232 = vadd.f32 0.0, %v3231
        %3233 = vmatmul.bf16.gmra.mxu0 %v3185
        %v3234 = vpop.f32.mrf.mxu0
        %v3235 = vadd.f32 0.0, %v3234
        %v3236 = vpop.f32.mrf.mxu0
        %v3237 = vadd.f32 0.0, %v3236
        %3238 = vmatmul.bf16.gmra.mxu0 %v3186
        %v3239 = vpop.f32.mrf.mxu0
        %v3240 = vadd.f32 0.0, %v3239
        %v3241 = vpop.f32.mrf.mxu0
        %v3242 = vadd.f32 0.0, %v3241
        %3243 = vmatmul.bf16.gmra.mxu0 %v3187
        %v3244 = vpop.f32.mrf.mxu0
        %v3245 = vadd.f32 0.0, %v3244
        %v3246 = vpop.f32.mrf.mxu0
        %v3247 = vadd.f32 0.0, %v3246
        %3248 = vmatmul.bf16.gmra.mxu0 %v3188
        %v3249 = vpop.f32.mrf.mxu0
        %v3250 = vadd.f32 0.0, %v3249
        %v3251 = vpop.f32.mrf.mxu0
        %v3252 = vadd.f32 0.0, %v3251
        %3253 = vmatmul.bf16.gmra.mxu0 %v3189
        %v3254 = vpop.f32.mrf.mxu0
        %v3255 = vadd.f32 0.0, %v3254
        %v3256 = vpop.f32.mrf.mxu0
        %v3257 = vadd.f32 0.0, %v3256
        %3258 = vmatmul.bf16.gmra.mxu0 %v3190
        %v3259 = vpop.f32.mrf.mxu0
        %v3260 = vadd.f32 0.0, %v3259
        %v3261 = vpop.f32.mrf.mxu0
        %v3262 = vadd.f32 0.0, %v3261
        %3263 = vdwg.mxu0
        %3264 = vrot.lane.b32.xlu0 %v1453, 48
        %v3265 = vpop.permute.xlu0 %3264
        %3266 = vrot.lane.b32.xlu0 %v1454, 48
        %v3267 = vpop.permute.xlu0 %3266
        %3268 = vrot.lane.b32.xlu0 %v1455, 48
        %v3269 = vpop.permute.xlu0 %3268
        %3270 = vrot.lane.b32.xlu0 %v1456, 48
        %v3271 = vpop.permute.xlu0 %3270
        %3272 = vrot.lane.b32.xlu0 %v1457, 48
        %v3273 = vpop.permute.xlu0 %3272
        %3274 = vrot.lane.b32.xlu0 %v1458, 48
        %v3275 = vpop.permute.xlu0 %3274
        %3276 = vrot.lane.b32.xlu0 %v1459, 48
        %v3277 = vpop.permute.xlu0 %3276
        %3278 = vrot.lane.b32.xlu0 %v1460, 48
        %v3279 = vpop.permute.xlu0 %3278
        %3280 = vrot.lane.b32.xlu0 %v1493, 48
        %v3281 = vpop.permute.xlu0 %3280
        %3282 = vrot.lane.b32.xlu0 %v1494, 48
        %v3283 = vpop.permute.xlu0 %3282
        %3284 = vrot.lane.b32.xlu0 %v1495, 48
        %v3285 = vpop.permute.xlu0 %3284
        %3286 = vrot.lane.b32.xlu0 %v1496, 48
        %v3287 = vpop.permute.xlu0 %3286
        %3288 = vrot.lane.b32.xlu0 %v1497, 48
        %v3289 = vpop.permute.xlu0 %3288
        %3290 = vrot.lane.b32.xlu0 %v1498, 48
        %v3291 = vpop.permute.xlu0 %3290
        %3292 = vrot.lane.b32.xlu0 %v1499, 48
        %v3293 = vpop.permute.xlu0 %3292
        %3294 = vrot.lane.b32.xlu0 %v1500, 48
        %v3295 = vpop.permute.xlu0 %3294
        %v3297 = vsel %vm1501, %v3265, 0
        %v3300 = vsel %vm1501, %v3267, 0
        %v3303 = vsel %vm1501, %v3269, 0
        %v3306 = vsel %vm1501, %v3271, 0
        %v3309 = vsel %vm1501, %v3273, 0
        %v3312 = vsel %vm1501, %v3275, 0
        %v3315 = vsel %vm1501, %v3277, 0
        %v3318 = vsel %vm1501, %v3279, 0
        %v3321 = vsel %vm1501, %v3281, 0
        %v3324 = vsel %vm1501, %v3283, 0
        %v3327 = vsel %vm1501, %v3285, 0
        %v3330 = vsel %vm1501, %v3287, 0
        %v3333 = vsel %vm1501, %v3289, 0
        %v3336 = vsel %vm1501, %v3291, 0
        %v3339 = vsel %vm1501, %v3293, 0
        %v3342 = vsel %vm1501, %v3295, 0
        %3344 = vmatpush.bf16.xpose.msra.mxu0 %v3342
        %3345 = vmatpush.bf16.xpose.msra.mxu0 %v3339
        %3346 = vmatpush.bf16.xpose.msra.mxu0 %v3336
        %3347 = vmatpush.bf16.xpose.msra.mxu0 %v3333
        %3348 = vmatpush.bf16.xpose.msra.mxu0 %v3330
        %3349 = vmatpush.bf16.xpose.msra.mxu0 %v3327
        %3350 = vmatpush.bf16.xpose.msra.mxu0 %v3324
        %3351 = vmatpush.bf16.xpose.msra.mxu0 %v3321
        %3352 = vmatmul.bf16.gmra.mxu0 %v3297
        %v3353 = vpop.f32.mrf.mxu0
        %v3354 = vadd.f32 0.0, %v3353
        %v3355 = vpop.f32.mrf.mxu0
        %v3356 = vadd.f32 0.0, %v3355
        %3357 = vmatmul.bf16.gmra.mxu0 %v3300
        %v3358 = vpop.f32.mrf.mxu0
        %v3359 = vadd.f32 0.0, %v3358
        %v3360 = vpop.f32.mrf.mxu0
        %v3361 = vadd.f32 0.0, %v3360
        %3362 = vmatmul.bf16.gmra.mxu0 %v3303
        %v3363 = vpop.f32.mrf.mxu0
        %v3364 = vadd.f32 0.0, %v3363
        %v3365 = vpop.f32.mrf.mxu0
        %v3366 = vadd.f32 0.0, %v3365
        %3367 = vmatmul.bf16.gmra.mxu0 %v3306
        %v3368 = vpop.f32.mrf.mxu0
        %v3369 = vadd.f32 0.0, %v3368
        %v3370 = vpop.f32.mrf.mxu0
        %v3371 = vadd.f32 0.0, %v3370
        %3372 = vmatmul.bf16.gmra.mxu0 %v3309
        %v3373 = vpop.f32.mrf.mxu0
        %v3374 = vadd.f32 0.0, %v3373
        %v3375 = vpop.f32.mrf.mxu0
        %v3376 = vadd.f32 0.0, %v3375
        %3377 = vmatmul.bf16.gmra.mxu0 %v3312
        %v3378 = vpop.f32.mrf.mxu0
        %v3379 = vadd.f32 0.0, %v3378
        %v3380 = vpop.f32.mrf.mxu0
        %v3381 = vadd.f32 0.0, %v3380
        %3382 = vmatmul.bf16.gmra.mxu0 %v3315
        %v3383 = vpop.f32.mrf.mxu0
        %v3384 = vadd.f32 0.0, %v3383
        %v3385 = vpop.f32.mrf.mxu0
        %v3386 = vadd.f32 0.0, %v3385
        %3387 = vmatmul.bf16.gmra.mxu0 %v3318
        %v3388 = vpop.f32.mrf.mxu0
        %v3389 = vadd.f32 0.0, %v3388
        %v3390 = vpop.f32.mrf.mxu0
        %v3391 = vadd.f32 0.0, %v3390
        %3392 = vdwg.mxu0
        %3393 = vmax.xlane.f32.xlu0 %v3354
        %v3394 = vpop.xlane.xlu0 %3393
        %3395 = vmax.xlane.f32.xlu0 %v3356
        %v3396 = vpop.xlane.xlu0 %3395
        %3397 = vmax.xlane.f32.xlu0 %v3359
        %v3398 = vpop.xlane.xlu0 %3397
        %3399 = vmax.xlane.f32.xlu0 %v3361
        %v3400 = vpop.xlane.xlu0 %3399
        %3401 = vmax.xlane.f32.xlu0 %v3364
        %v3402 = vpop.xlane.xlu0 %3401
        %3403 = vmax.xlane.f32.xlu0 %v3366
        %v3404 = vpop.xlane.xlu0 %3403
        %3405 = vmax.xlane.f32.xlu0 %v3369
        %v3406 = vpop.xlane.xlu0 %3405
        %3407 = vmax.xlane.f32.xlu0 %v3371
        %v3408 = vpop.xlane.xlu0 %3407
        %3409 = vmax.xlane.f32.xlu0 %v3374
        %v3410 = vpop.xlane.xlu0 %3409
        %3411 = vmax.xlane.f32.xlu0 %v3376
        %v3412 = vpop.xlane.xlu0 %3411
        %3413 = vmax.xlane.f32.xlu0 %v3379
        %v3414 = vpop.xlane.xlu0 %3413
        %3415 = vmax.xlane.f32.xlu0 %v3381
        %v3416 = vpop.xlane.xlu0 %3415
        %3417 = vmax.xlane.f32.xlu0 %v3384
        %v3418 = vpop.xlane.xlu0 %3417
        %3419 = vmax.xlane.f32.xlu0 %v3386
        %v3420 = vpop.xlane.xlu0 %3419
        %3421 = vmax.xlane.f32.xlu0 %v3389
        %v3422 = vpop.xlane.xlu0 %3421
        %3423 = vmax.xlane.f32.xlu0 %v3391
        %v3424 = vpop.xlane.xlu0 %3423
        %v3425 = vsub.f32 %v3354, %v3394
        %v3426 = vsub.f32 %v3356, %v3396
        %v3427 = vsub.f32 %v3359, %v3398
        %v3428 = vsub.f32 %v3361, %v3400
        %v3429 = vsub.f32 %v3364, %v3402
        %v3430 = vsub.f32 %v3366, %v3404
        %v3431 = vsub.f32 %v3369, %v3406
        %v3432 = vsub.f32 %v3371, %v3408
        %v3433 = vsub.f32 %v3374, %v3410
        %v3434 = vsub.f32 %v3376, %v3412
        %v3435 = vsub.f32 %v3379, %v3414
        %v3436 = vsub.f32 %v3381, %v3416
        %v3437 = vsub.f32 %v3384, %v3418
        %v3438 = vsub.f32 %v3386, %v3420
        %v3439 = vsub.f32 %v3389, %v3422
        %v3440 = vsub.f32 %v3391, %v3424
        %v3441 = vmul.f32 %v3425, 1.442695
        %v3442 = vpow.pop %v3441
        %v3443 = vmul.f32 %v3426, 1.442695
        %v3444 = vpow.pop %v3443
        %v3445 = vmul.f32 %v3427, 1.442695
        %v3446 = vpow.pop %v3445
        %v3447 = vmul.f32 %v3428, 1.442695
        %v3448 = vpow.pop %v3447
        %v3449 = vmul.f32 %v3429, 1.442695
        %v3450 = vpow.pop %v3449
        %v3451 = vmul.f32 %v3430, 1.442695
        %v3452 = vpow.pop %v3451
        %v3453 = vmul.f32 %v3431, 1.442695
        %v3454 = vpow.pop %v3453
        %v3455 = vmul.f32 %v3432, 1.442695
        %v3456 = vpow.pop %v3455
        %v3457 = vmul.f32 %v3433, 1.442695
        %v3458 = vpow.pop %v3457
        %v3459 = vmul.f32 %v3434, 1.442695
        %v3460 = vpow.pop %v3459
        %v3461 = vmul.f32 %v3435, 1.442695
        %v3462 = vpow.pop %v3461
        %v3463 = vmul.f32 %v3436, 1.442695
        %v3464 = vpow.pop %v3463
        %v3465 = vmul.f32 %v3437, 1.442695
        %v3466 = vpow.pop %v3465
        %v3467 = vmul.f32 %v3438, 1.442695
        %v3468 = vpow.pop %v3467
        %v3469 = vmul.f32 %v3439, 1.442695
        %v3470 = vpow.pop %v3469
        %v3471 = vmul.f32 %v3440, 1.442695
        %v3472 = vpow.pop %v3471
        %3473 = vadd.xlane.f32.xlu0 %v3442
        %v3474 = vpop.xlane.xlu0 %3473
        %3475 = vadd.xlane.f32.xlu0 %v3444
        %v3476 = vpop.xlane.xlu0 %3475
        %3477 = vadd.xlane.f32.xlu0 %v3446
        %v3478 = vpop.xlane.xlu0 %3477
        %3479 = vadd.xlane.f32.xlu0 %v3448
        %v3480 = vpop.xlane.xlu0 %3479
        %3481 = vadd.xlane.f32.xlu0 %v3450
        %v3482 = vpop.xlane.xlu0 %3481
        %3483 = vadd.xlane.f32.xlu0 %v3452
        %v3484 = vpop.xlane.xlu0 %3483
        %3485 = vadd.xlane.f32.xlu0 %v3454
        %v3486 = vpop.xlane.xlu0 %3485
        %3487 = vadd.xlane.f32.xlu0 %v3456
        %v3488 = vpop.xlane.xlu0 %3487
        %3489 = vadd.xlane.f32.xlu0 %v3458
        %v3490 = vpop.xlane.xlu0 %3489
        %3491 = vadd.xlane.f32.xlu0 %v3460
        %v3492 = vpop.xlane.xlu0 %3491
        %3493 = vadd.xlane.f32.xlu0 %v3462
        %v3494 = vpop.xlane.xlu0 %3493
        %3495 = vadd.xlane.f32.xlu0 %v3464
        %v3496 = vpop.xlane.xlu0 %3495
        %3497 = vadd.xlane.f32.xlu0 %v3466
        %v3498 = vpop.xlane.xlu0 %3497
        %3499 = vadd.xlane.f32.xlu0 %v3468
        %v3500 = vpop.xlane.xlu0 %3499
        %3501 = vadd.xlane.f32.xlu0 %v3470
        %v3502 = vpop.xlane.xlu0 %3501
        %3503 = vadd.xlane.f32.xlu0 %v3472
        %v3504 = vpop.xlane.xlu0 %3503
        %v3505 = vrcp.pop %v3474
        %v3506 = vrcp.pop %v3476
        %v3507 = vrcp.pop %v3478
        %v3508 = vrcp.pop %v3480
        %v3509 = vrcp.pop %v3482
        %v3510 = vrcp.pop %v3484
        %v3511 = vrcp.pop %v3486
        %v3512 = vrcp.pop %v3488
        %v3513 = vrcp.pop %v3490
        %v3514 = vrcp.pop %v3492
        %v3515 = vrcp.pop %v3494
        %v3516 = vrcp.pop %v3496
        %v3517 = vrcp.pop %v3498
        %v3518 = vrcp.pop %v3500
        %v3519 = vrcp.pop %v3502
        %v3520 = vrcp.pop %v3504
        %v3521 = vmul.f32 %v3442, %v3505
        %v3522 = vmul.f32 %v3444, %v3506
        %v3523 = vmul.f32 %v3446, %v3507
        %v3524 = vmul.f32 %v3448, %v3508
        %v3525 = vmul.f32 %v3450, %v3509
        %v3526 = vmul.f32 %v3452, %v3510
        %v3527 = vmul.f32 %v3454, %v3511
        %v3528 = vmul.f32 %v3456, %v3512
        %v3529 = vmul.f32 %v3458, %v3513
        %v3530 = vmul.f32 %v3460, %v3514
        %v3531 = vmul.f32 %v3462, %v3515
        %v3532 = vmul.f32 %v3464, %v3516
        %v3533 = vmul.f32 %v3466, %v3517
        %v3534 = vmul.f32 %v3468, %v3518
        %v3535 = vmul.f32 %v3470, %v3519
        %v3536 = vmul.f32 %v3472, %v3520
        %v3537 = vpack.c.bf16 %v3522, %v3521
        %v3538 = vpack.c.bf16 %v3524, %v3523
        %v3539 = vpack.c.bf16 %v3526, %v3525
        %v3540 = vpack.c.bf16 %v3528, %v3527
        %v3541 = vpack.c.bf16 %v3530, %v3529
        %v3542 = vpack.c.bf16 %v3532, %v3531
        %v3543 = vpack.c.bf16 %v3534, %v3533
        %v3544 = vpack.c.bf16 %v3536, %v3535
        %3545 = vrot.lane.b32.xlu0 %v1783, 48
        %v3546 = vpop.permute.xlu0 %3545
        %3547 = vrot.lane.b32.xlu0 %v1784, 48
        %v3548 = vpop.permute.xlu0 %3547
        %3549 = vrot.lane.b32.xlu0 %v1785, 48
        %v3550 = vpop.permute.xlu0 %3549
        %3551 = vrot.lane.b32.xlu0 %v1786, 48
        %v3552 = vpop.permute.xlu0 %3551
        %3553 = vrot.lane.b32.xlu0 %v1787, 48
        %v3554 = vpop.permute.xlu0 %3553
        %3555 = vrot.lane.b32.xlu0 %v1788, 48
        %v3556 = vpop.permute.xlu0 %3555
        %3557 = vrot.lane.b32.xlu0 %v1789, 48
        %v3558 = vpop.permute.xlu0 %3557
        %3559 = vrot.lane.b32.xlu0 %v1790, 48
        %v3560 = vpop.permute.xlu0 %3559
        %3569 = vmatpush.bf16.msra.mxu0 %v3560
        %3570 = vmatpush.bf16.msra.mxu0 %v3558
        %3571 = vmatpush.bf16.msra.mxu0 %v3556
        %3572 = vmatpush.bf16.msra.mxu0 %v3554
        %3573 = vmatpush.bf16.msra.mxu0 %v3552
        %3574 = vmatpush.bf16.msra.mxu0 %v3550
        %3575 = vmatpush.bf16.msra.mxu0 %v3548
        %3576 = vmatpush.bf16.msra.mxu0 %v3546
        %3577 = vmatmul.bf16.gmra.mxu0 %v3537
        %v3578 = vpop.f32.mrf.mxu0
        %v3579 = vadd.f32 0.0, %v3578
        %v3580 = vpop.f32.mrf.mxu0
        %v3581 = vadd.f32 0.0, %v3580
        %3582 = vmatmul.bf16.gmra.mxu0 %v3538
        %v3583 = vpop.f32.mrf.mxu0
        %v3584 = vadd.f32 0.0, %v3583
        %v3585 = vpop.f32.mrf.mxu0
        %v3586 = vadd.f32 0.0, %v3585
        %3587 = vmatmul.bf16.gmra.mxu0 %v3539
        %v3588 = vpop.f32.mrf.mxu0
        %v3589 = vadd.f32 0.0, %v3588
        %v3590 = vpop.f32.mrf.mxu0
        %v3591 = vadd.f32 0.0, %v3590
        %3592 = vmatmul.bf16.gmra.mxu0 %v3540
        %v3593 = vpop.f32.mrf.mxu0
        %v3594 = vadd.f32 0.0, %v3593
        %v3595 = vpop.f32.mrf.mxu0
        %v3596 = vadd.f32 0.0, %v3595
        %3597 = vmatmul.bf16.gmra.mxu0 %v3541
        %v3598 = vpop.f32.mrf.mxu0
        %v3599 = vadd.f32 0.0, %v3598
        %v3600 = vpop.f32.mrf.mxu0
        %v3601 = vadd.f32 0.0, %v3600
        %3602 = vmatmul.bf16.gmra.mxu0 %v3542
        %v3603 = vpop.f32.mrf.mxu0
        %v3604 = vadd.f32 0.0, %v3603
        %v3605 = vpop.f32.mrf.mxu0
        %v3606 = vadd.f32 0.0, %v3605
        %3607 = vmatmul.bf16.gmra.mxu0 %v3543
        %v3608 = vpop.f32.mrf.mxu0
        %v3609 = vadd.f32 0.0, %v3608
        %v3610 = vpop.f32.mrf.mxu0
        %v3611 = vadd.f32 0.0, %v3610
        %3612 = vmatmul.bf16.gmra.mxu0 %v3544
        %v3613 = vpop.f32.mrf.mxu0
        %v3614 = vadd.f32 0.0, %v3613
        %v3615 = vpop.f32.mrf.mxu0
        %v3616 = vadd.f32 0.0, %v3615
        %3617 = vdwg.mxu0
        %3618 = vrot.lane.b32.xlu0 %v1453, 32
        %v3619 = vpop.permute.xlu0 %3618
        %3620 = vrot.lane.b32.xlu0 %v1454, 32
        %v3621 = vpop.permute.xlu0 %3620
        %3622 = vrot.lane.b32.xlu0 %v1455, 32
        %v3623 = vpop.permute.xlu0 %3622
        %3624 = vrot.lane.b32.xlu0 %v1456, 32
        %v3625 = vpop.permute.xlu0 %3624
        %3626 = vrot.lane.b32.xlu0 %v1457, 32
        %v3627 = vpop.permute.xlu0 %3626
        %3628 = vrot.lane.b32.xlu0 %v1458, 32
        %v3629 = vpop.permute.xlu0 %3628
        %3630 = vrot.lane.b32.xlu0 %v1459, 32
        %v3631 = vpop.permute.xlu0 %3630
        %3632 = vrot.lane.b32.xlu0 %v1460, 32
        %v3633 = vpop.permute.xlu0 %3632
        %3634 = vrot.lane.b32.xlu0 %v1493, 32
        %v3635 = vpop.permute.xlu0 %3634
        %3636 = vrot.lane.b32.xlu0 %v1494, 32
        %v3637 = vpop.permute.xlu0 %3636
        %3638 = vrot.lane.b32.xlu0 %v1495, 32
        %v3639 = vpop.permute.xlu0 %3638
        %3640 = vrot.lane.b32.xlu0 %v1496, 32
        %v3641 = vpop.permute.xlu0 %3640
        %3642 = vrot.lane.b32.xlu0 %v1497, 32
        %v3643 = vpop.permute.xlu0 %3642
        %3644 = vrot.lane.b32.xlu0 %v1498, 32
        %v3645 = vpop.permute.xlu0 %3644
        %3646 = vrot.lane.b32.xlu0 %v1499, 32
        %v3647 = vpop.permute.xlu0 %3646
        %3648 = vrot.lane.b32.xlu0 %v1500, 32
        %v3649 = vpop.permute.xlu0 %3648
        %v3651 = vsel %vm1501, %v3619, 0
        %v3654 = vsel %vm1501, %v3621, 0
        %v3657 = vsel %vm1501, %v3623, 0
        %v3660 = vsel %vm1501, %v3625, 0
        %v3663 = vsel %vm1501, %v3627, 0
        %v3666 = vsel %vm1501, %v3629, 0
        %v3669 = vsel %vm1501, %v3631, 0
        %v3672 = vsel %vm1501, %v3633, 0
        %v3675 = vsel %vm1501, %v3635, 0
        %v3678 = vsel %vm1501, %v3637, 0
        %v3681 = vsel %vm1501, %v3639, 0
        %v3684 = vsel %vm1501, %v3641, 0
        %v3687 = vsel %vm1501, %v3643, 0
        %v3690 = vsel %vm1501, %v3645, 0
        %v3693 = vsel %vm1501, %v3647, 0
        %v3696 = vsel %vm1501, %v3649, 0
        %3698 = vmatpush.bf16.xpose.msra.mxu0 %v3696
        %3699 = vmatpush.bf16.xpose.msra.mxu0 %v3693
        %3700 = vmatpush.bf16.xpose.msra.mxu0 %v3690
        %3701 = vmatpush.bf16.xpose.msra.mxu0 %v3687
        %3702 = vmatpush.bf16.xpose.msra.mxu0 %v3684
        %3703 = vmatpush.bf16.xpose.msra.mxu0 %v3681
        %3704 = vmatpush.bf16.xpose.msra.mxu0 %v3678
        %3705 = vmatpush.bf16.xpose.msra.mxu0 %v3675
        %3706 = vmatmul.bf16.gmra.mxu0 %v3651
        %v3707 = vpop.f32.mrf.mxu0
        %v3708 = vadd.f32 0.0, %v3707
        %v3709 = vpop.f32.mrf.mxu0
        %v3710 = vadd.f32 0.0, %v3709
        %3711 = vmatmul.bf16.gmra.mxu0 %v3654
        %v3712 = vpop.f32.mrf.mxu0
        %v3713 = vadd.f32 0.0, %v3712
        %v3714 = vpop.f32.mrf.mxu0
        %v3715 = vadd.f32 0.0, %v3714
        %3716 = vmatmul.bf16.gmra.mxu0 %v3657
        %v3717 = vpop.f32.mrf.mxu0
        %v3718 = vadd.f32 0.0, %v3717
        %v3719 = vpop.f32.mrf.mxu0
        %v3720 = vadd.f32 0.0, %v3719
        %3721 = vmatmul.bf16.gmra.mxu0 %v3660
        %v3722 = vpop.f32.mrf.mxu0
        %v3723 = vadd.f32 0.0, %v3722
        %v3724 = vpop.f32.mrf.mxu0
        %v3725 = vadd.f32 0.0, %v3724
        %3726 = vmatmul.bf16.gmra.mxu0 %v3663
        %v3727 = vpop.f32.mrf.mxu0
        %v3728 = vadd.f32 0.0, %v3727
        %v3729 = vpop.f32.mrf.mxu0
        %v3730 = vadd.f32 0.0, %v3729
        %3731 = vmatmul.bf16.gmra.mxu0 %v3666
        %v3732 = vpop.f32.mrf.mxu0
        %v3733 = vadd.f32 0.0, %v3732
        %v3734 = vpop.f32.mrf.mxu0
        %v3735 = vadd.f32 0.0, %v3734
        %3736 = vmatmul.bf16.gmra.mxu0 %v3669
        %v3737 = vpop.f32.mrf.mxu0
        %v3738 = vadd.f32 0.0, %v3737
        %v3739 = vpop.f32.mrf.mxu0
        %v3740 = vadd.f32 0.0, %v3739
        %3741 = vmatmul.bf16.gmra.mxu0 %v3672
        %v3742 = vpop.f32.mrf.mxu0
        %v3743 = vadd.f32 0.0, %v3742
        %v3744 = vpop.f32.mrf.mxu0
        %v3745 = vadd.f32 0.0, %v3744
        %3746 = vdwg.mxu0
        %3747 = vmax.xlane.f32.xlu0 %v3708
        %v3748 = vpop.xlane.xlu0 %3747
        %3749 = vmax.xlane.f32.xlu0 %v3710
        %v3750 = vpop.xlane.xlu0 %3749
        %3751 = vmax.xlane.f32.xlu0 %v3713
        %v3752 = vpop.xlane.xlu0 %3751
        %3753 = vmax.xlane.f32.xlu0 %v3715
        %v3754 = vpop.xlane.xlu0 %3753
        %3755 = vmax.xlane.f32.xlu0 %v3718
        %v3756 = vpop.xlane.xlu0 %3755
        %3757 = vmax.xlane.f32.xlu0 %v3720
        %v3758 = vpop.xlane.xlu0 %3757
        %3759 = vmax.xlane.f32.xlu0 %v3723
        %v3760 = vpop.xlane.xlu0 %3759
        %3761 = vmax.xlane.f32.xlu0 %v3725
        %v3762 = vpop.xlane.xlu0 %3761
        %3763 = vmax.xlane.f32.xlu0 %v3728
        %v3764 = vpop.xlane.xlu0 %3763
        %3765 = vmax.xlane.f32.xlu0 %v3730
        %v3766 = vpop.xlane.xlu0 %3765
        %3767 = vmax.xlane.f32.xlu0 %v3733
        %v3768 = vpop.xlane.xlu0 %3767
        %3769 = vmax.xlane.f32.xlu0 %v3735
        %v3770 = vpop.xlane.xlu0 %3769
        %3771 = vmax.xlane.f32.xlu0 %v3738
        %v3772 = vpop.xlane.xlu0 %3771
        %3773 = vmax.xlane.f32.xlu0 %v3740
        %v3774 = vpop.xlane.xlu0 %3773
        %3775 = vmax.xlane.f32.xlu0 %v3743
        %v3776 = vpop.xlane.xlu0 %3775
        %3777 = vmax.xlane.f32.xlu0 %v3745
        %v3778 = vpop.xlane.xlu0 %3777
        %v3779 = vsub.f32 %v3708, %v3748
        %v3780 = vsub.f32 %v3710, %v3750
        %v3781 = vsub.f32 %v3713, %v3752
        %v3782 = vsub.f32 %v3715, %v3754
        %v3783 = vsub.f32 %v3718, %v3756
        %v3784 = vsub.f32 %v3720, %v3758
        %v3785 = vsub.f32 %v3723, %v3760
        %v3786 = vsub.f32 %v3725, %v3762
        %v3787 = vsub.f32 %v3728, %v3764
        %v3788 = vsub.f32 %v3730, %v3766
        %v3789 = vsub.f32 %v3733, %v3768
        %v3790 = vsub.f32 %v3735, %v3770
        %v3791 = vsub.f32 %v3738, %v3772
        %v3792 = vsub.f32 %v3740, %v3774
        %v3793 = vsub.f32 %v3743, %v3776
        %v3794 = vsub.f32 %v3745, %v3778
        %v3795 = vmul.f32 %v3779, 1.442695
        %v3796 = vpow.pop %v3795
        %v3797 = vmul.f32 %v3780, 1.442695
        %v3798 = vpow.pop %v3797
        %v3799 = vmul.f32 %v3781, 1.442695
        %v3800 = vpow.pop %v3799
        %v3801 = vmul.f32 %v3782, 1.442695
        %v3802 = vpow.pop %v3801
        %v3803 = vmul.f32 %v3783, 1.442695
        %v3804 = vpow.pop %v3803
        %v3805 = vmul.f32 %v3784, 1.442695
        %v3806 = vpow.pop %v3805
        %v3807 = vmul.f32 %v3785, 1.442695
        %v3808 = vpow.pop %v3807
        %v3809 = vmul.f32 %v3786, 1.442695
        %v3810 = vpow.pop %v3809
        %v3811 = vmul.f32 %v3787, 1.442695
        %v3812 = vpow.pop %v3811
        %v3813 = vmul.f32 %v3788, 1.442695
        %v3814 = vpow.pop %v3813
        %v3815 = vmul.f32 %v3789, 1.442695
        %v3816 = vpow.pop %v3815
        %v3817 = vmul.f32 %v3790, 1.442695
        %v3818 = vpow.pop %v3817
        %v3819 = vmul.f32 %v3791, 1.442695
        %v3820 = vpow.pop %v3819
        %v3821 = vmul.f32 %v3792, 1.442695
        %v3822 = vpow.pop %v3821
        %v3823 = vmul.f32 %v3793, 1.442695
        %v3824 = vpow.pop %v3823
        %v3825 = vmul.f32 %v3794, 1.442695
        %v3826 = vpow.pop %v3825
        %3827 = vadd.xlane.f32.xlu0 %v3796
        %v3828 = vpop.xlane.xlu0 %3827
        %3829 = vadd.xlane.f32.xlu0 %v3798
        %v3830 = vpop.xlane.xlu0 %3829
        %3831 = vadd.xlane.f32.xlu0 %v3800
        %v3832 = vpop.xlane.xlu0 %3831
        %3833 = vadd.xlane.f32.xlu0 %v3802
        %v3834 = vpop.xlane.xlu0 %3833
        %3835 = vadd.xlane.f32.xlu0 %v3804
        %v3836 = vpop.xlane.xlu0 %3835
        %3837 = vadd.xlane.f32.xlu0 %v3806
        %v3838 = vpop.xlane.xlu0 %3837
        %3839 = vadd.xlane.f32.xlu0 %v3808
        %v3840 = vpop.xlane.xlu0 %3839
        %3841 = vadd.xlane.f32.xlu0 %v3810
        %v3842 = vpop.xlane.xlu0 %3841
        %3843 = vadd.xlane.f32.xlu0 %v3812
        %v3844 = vpop.xlane.xlu0 %3843
        %3845 = vadd.xlane.f32.xlu0 %v3814
        %v3846 = vpop.xlane.xlu0 %3845
        %3847 = vadd.xlane.f32.xlu0 %v3816
        %v3848 = vpop.xlane.xlu0 %3847
        %3849 = vadd.xlane.f32.xlu0 %v3818
        %v3850 = vpop.xlane.xlu0 %3849
        %3851 = vadd.xlane.f32.xlu0 %v3820
        %v3852 = vpop.xlane.xlu0 %3851
        %3853 = vadd.xlane.f32.xlu0 %v3822
        %v3854 = vpop.xlane.xlu0 %3853
        %3855 = vadd.xlane.f32.xlu0 %v3824
        %v3856 = vpop.xlane.xlu0 %3855
        %3857 = vadd.xlane.f32.xlu0 %v3826
        %v3858 = vpop.xlane.xlu0 %3857
        %v3859 = vrcp.pop %v3828
        %v3860 = vrcp.pop %v3830
        %v3861 = vrcp.pop %v3832
        %v3862 = vrcp.pop %v3834
        %v3863 = vrcp.pop %v3836
        %v3864 = vrcp.pop %v3838
        %v3865 = vrcp.pop %v3840
        %v3866 = vrcp.pop %v3842
        %v3867 = vrcp.pop %v3844
        %v3868 = vrcp.pop %v3846
        %v3869 = vrcp.pop %v3848
        %v3870 = vrcp.pop %v3850
        %v3871 = vrcp.pop %v3852
        %v3872 = vrcp.pop %v3854
        %v3873 = vrcp.pop %v3856
        %v3874 = vrcp.pop %v3858
        %v3875 = vmul.f32 %v3796, %v3859
        %v3876 = vmul.f32 %v3798, %v3860
        %v3877 = vmul.f32 %v3800, %v3861
        %v3878 = vmul.f32 %v3802, %v3862
        %v3879 = vmul.f32 %v3804, %v3863
        %v3880 = vmul.f32 %v3806, %v3864
        %v3881 = vmul.f32 %v3808, %v3865
        %v3882 = vmul.f32 %v3810, %v3866
        %v3883 = vmul.f32 %v3812, %v3867
        %v3884 = vmul.f32 %v3814, %v3868
        %v3885 = vmul.f32 %v3816, %v3869
        %v3886 = vmul.f32 %v3818, %v3870
        %v3887 = vmul.f32 %v3820, %v3871
        %v3888 = vmul.f32 %v3822, %v3872
        %v3889 = vmul.f32 %v3824, %v3873
        %v3890 = vmul.f32 %v3826, %v3874
        %v3891 = vpack.c.bf16 %v3876, %v3875
        %v3892 = vpack.c.bf16 %v3878, %v3877
        %v3893 = vpack.c.bf16 %v3880, %v3879
        %v3894 = vpack.c.bf16 %v3882, %v3881
        %v3895 = vpack.c.bf16 %v3884, %v3883
        %v3896 = vpack.c.bf16 %v3886, %v3885
        %v3897 = vpack.c.bf16 %v3888, %v3887
        %v3898 = vpack.c.bf16 %v3890, %v3889
        %3899 = vrot.lane.b32.xlu0 %v1783, 32
        %v3900 = vpop.permute.xlu0 %3899
        %3901 = vrot.lane.b32.xlu0 %v1784, 32
        %v3902 = vpop.permute.xlu0 %3901
        %3903 = vrot.lane.b32.xlu0 %v1785, 32
        %v3904 = vpop.permute.xlu0 %3903
        %3905 = vrot.lane.b32.xlu0 %v1786, 32
        %v3906 = vpop.permute.xlu0 %3905
        %3907 = vrot.lane.b32.xlu0 %v1787, 32
        %v3908 = vpop.permute.xlu0 %3907
        %3909 = vrot.lane.b32.xlu0 %v1788, 32
        %v3910 = vpop.permute.xlu0 %3909
        %3911 = vrot.lane.b32.xlu0 %v1789, 32
        %v3912 = vpop.permute.xlu0 %3911
        %3913 = vrot.lane.b32.xlu0 %v1790, 32
        %v3914 = vpop.permute.xlu0 %3913
        %3923 = vmatpush.bf16.msra.mxu0 %v3914
        %3924 = vmatpush.bf16.msra.mxu0 %v3912
        %3925 = vmatpush.bf16.msra.mxu0 %v3910
        %3926 = vmatpush.bf16.msra.mxu0 %v3908
        %3927 = vmatpush.bf16.msra.mxu0 %v3906
        %3928 = vmatpush.bf16.msra.mxu0 %v3904
        %3929 = vmatpush.bf16.msra.mxu0 %v3902
        %3930 = vmatpush.bf16.msra.mxu0 %v3900
        %3931 = vmatmul.bf16.gmra.mxu0 %v3891
        %v3932 = vpop.f32.mrf.mxu0
        %v3933 = vadd.f32 0.0, %v3932
        %v3934 = vpop.f32.mrf.mxu0
        %v3935 = vadd.f32 0.0, %v3934
        %3936 = vmatmul.bf16.gmra.mxu0 %v3892
        %v3937 = vpop.f32.mrf.mxu0
        %v3938 = vadd.f32 0.0, %v3937
        %v3939 = vpop.f32.mrf.mxu0
        %v3940 = vadd.f32 0.0, %v3939
        %3941 = vmatmul.bf16.gmra.mxu0 %v3893
        %v3942 = vpop.f32.mrf.mxu0
        %v3943 = vadd.f32 0.0, %v3942
        %v3944 = vpop.f32.mrf.mxu0
        %v3945 = vadd.f32 0.0, %v3944
        %3946 = vmatmul.bf16.gmra.mxu0 %v3894
        %v3947 = vpop.f32.mrf.mxu0
        %v3948 = vadd.f32 0.0, %v3947
        %v3949 = vpop.f32.mrf.mxu0
        %v3950 = vadd.f32 0.0, %v3949
        %3951 = vmatmul.bf16.gmra.mxu0 %v3895
        %v3952 = vpop.f32.mrf.mxu0
        %v3953 = vadd.f32 0.0, %v3952
        %v3954 = vpop.f32.mrf.mxu0
        %v3955 = vadd.f32 0.0, %v3954
        %3956 = vmatmul.bf16.gmra.mxu0 %v3896
        %v3957 = vpop.f32.mrf.mxu0
        %v3958 = vadd.f32 0.0, %v3957
        %v3959 = vpop.f32.mrf.mxu0
        %v3960 = vadd.f32 0.0, %v3959
        %3961 = vmatmul.bf16.gmra.mxu0 %v3897
        %v3962 = vpop.f32.mrf.mxu0
        %v3963 = vadd.f32 0.0, %v3962
        %v3964 = vpop.f32.mrf.mxu0
        %v3965 = vadd.f32 0.0, %v3964
        %3966 = vmatmul.bf16.gmra.mxu0 %v3898
        %v3967 = vpop.f32.mrf.mxu0
        %v3968 = vadd.f32 0.0, %v3967
        %v3969 = vpop.f32.mrf.mxu0
        %v3970 = vadd.f32 0.0, %v3969
        %3971 = vdwg.mxu0
        %3972 = vrot.lane.b32.xlu0 %v1453, 16
        %v3973 = vpop.permute.xlu0 %3972
        %3974 = vrot.lane.b32.xlu0 %v1454, 16
        %v3975 = vpop.permute.xlu0 %3974
        %3976 = vrot.lane.b32.xlu0 %v1455, 16
        %v3977 = vpop.permute.xlu0 %3976
        %3978 = vrot.lane.b32.xlu0 %v1456, 16
        %v3979 = vpop.permute.xlu0 %3978
        %3980 = vrot.lane.b32.xlu0 %v1457, 16
        %v3981 = vpop.permute.xlu0 %3980
        %3982 = vrot.lane.b32.xlu0 %v1458, 16
        %v3983 = vpop.permute.xlu0 %3982
        %3984 = vrot.lane.b32.xlu0 %v1459, 16
        %v3985 = vpop.permute.xlu0 %3984
        %3986 = vrot.lane.b32.xlu0 %v1460, 16
        %v3987 = vpop.permute.xlu0 %3986
        %3988 = vrot.lane.b32.xlu0 %v1493, 16
        %v3989 = vpop.permute.xlu0 %3988
        %3990 = vrot.lane.b32.xlu0 %v1494, 16
        %v3991 = vpop.permute.xlu0 %3990
        %3992 = vrot.lane.b32.xlu0 %v1495, 16
        %v3993 = vpop.permute.xlu0 %3992
        %3994 = vrot.lane.b32.xlu0 %v1496, 16
        %v3995 = vpop.permute.xlu0 %3994
        %3996 = vrot.lane.b32.xlu0 %v1497, 16
        %v3997 = vpop.permute.xlu0 %3996
        %3998 = vrot.lane.b32.xlu0 %v1498, 16
        %v3999 = vpop.permute.xlu0 %3998
        %4000 = vrot.lane.b32.xlu0 %v1499, 16
        %v4001 = vpop.permute.xlu0 %4000
        %4002 = vrot.lane.b32.xlu0 %v1500, 16
        %v4003 = vpop.permute.xlu0 %4002
        %v4005 = vsel %vm1501, %v3973, 0
        %v4008 = vsel %vm1501, %v3975, 0
        %v4011 = vsel %vm1501, %v3977, 0
        %v4014 = vsel %vm1501, %v3979, 0
        %v4017 = vsel %vm1501, %v3981, 0
        %v4020 = vsel %vm1501, %v3983, 0
        %v4023 = vsel %vm1501, %v3985, 0
        %v4026 = vsel %vm1501, %v3987, 0
        %v4029 = vsel %vm1501, %v3989, 0
        %v4032 = vsel %vm1501, %v3991, 0
        %v4035 = vsel %vm1501, %v3993, 0
        %v4038 = vsel %vm1501, %v3995, 0
        %v4041 = vsel %vm1501, %v3997, 0
        %v4044 = vsel %vm1501, %v3999, 0
        %v4047 = vsel %vm1501, %v4001, 0
        %v4050 = vsel %vm1501, %v4003, 0
        %4052 = vmatpush.bf16.xpose.msra.mxu0 %v4050
        %4053 = vmatpush.bf16.xpose.msra.mxu0 %v4047
        %4054 = vmatpush.bf16.xpose.msra.mxu0 %v4044
        %4055 = vmatpush.bf16.xpose.msra.mxu0 %v4041
        %4056 = vmatpush.bf16.xpose.msra.mxu0 %v4038
        %4057 = vmatpush.bf16.xpose.msra.mxu0 %v4035
        %4058 = vmatpush.bf16.xpose.msra.mxu0 %v4032
        %4059 = vmatpush.bf16.xpose.msra.mxu0 %v4029
        %4060 = vmatmul.bf16.gmra.mxu0 %v4005
        %v4061 = vpop.f32.mrf.mxu0
        %v4062 = vadd.f32 0.0, %v4061
        %v4063 = vpop.f32.mrf.mxu0
        %v4064 = vadd.f32 0.0, %v4063
        %4065 = vmatmul.bf16.gmra.mxu0 %v4008
        %v4066 = vpop.f32.mrf.mxu0
        %v4067 = vadd.f32 0.0, %v4066
        %v4068 = vpop.f32.mrf.mxu0
        %v4069 = vadd.f32 0.0, %v4068
        %4070 = vmatmul.bf16.gmra.mxu0 %v4011
        %v4071 = vpop.f32.mrf.mxu0
        %v4072 = vadd.f32 0.0, %v4071
        %v4073 = vpop.f32.mrf.mxu0
        %v4074 = vadd.f32 0.0, %v4073
        %4075 = vmatmul.bf16.gmra.mxu0 %v4014
        %v4076 = vpop.f32.mrf.mxu0
        %v4077 = vadd.f32 0.0, %v4076
        %v4078 = vpop.f32.mrf.mxu0
        %v4079 = vadd.f32 0.0, %v4078
        %4080 = vmatmul.bf16.gmra.mxu0 %v4017
        %v4081 = vpop.f32.mrf.mxu0
        %v4082 = vadd.f32 0.0, %v4081
        %v4083 = vpop.f32.mrf.mxu0
        %v4084 = vadd.f32 0.0, %v4083
        %4085 = vmatmul.bf16.gmra.mxu0 %v4020
        %v4086 = vpop.f32.mrf.mxu0
        %v4087 = vadd.f32 0.0, %v4086
        %v4088 = vpop.f32.mrf.mxu0
        %v4089 = vadd.f32 0.0, %v4088
        %4090 = vmatmul.bf16.gmra.mxu0 %v4023
        %v4091 = vpop.f32.mrf.mxu0
        %v4092 = vadd.f32 0.0, %v4091
        %v4093 = vpop.f32.mrf.mxu0
        %v4094 = vadd.f32 0.0, %v4093
        %4095 = vmatmul.bf16.gmra.mxu0 %v4026
        %v4096 = vpop.f32.mrf.mxu0
        %v4097 = vadd.f32 0.0, %v4096
        %v4098 = vpop.f32.mrf.mxu0
        %v4099 = vadd.f32 0.0, %v4098
        %4100 = vdwg.mxu0
        %4101 = vmax.xlane.f32.xlu0 %v4062
        %v4102 = vpop.xlane.xlu0 %4101
        %4103 = vmax.xlane.f32.xlu0 %v4064
        %v4104 = vpop.xlane.xlu0 %4103
        %4105 = vmax.xlane.f32.xlu0 %v4067
        %v4106 = vpop.xlane.xlu0 %4105
        %4107 = vmax.xlane.f32.xlu0 %v4069
        %v4108 = vpop.xlane.xlu0 %4107
        %4109 = vmax.xlane.f32.xlu0 %v4072
        %v4110 = vpop.xlane.xlu0 %4109
        %4111 = vmax.xlane.f32.xlu0 %v4074
        %v4112 = vpop.xlane.xlu0 %4111
        %4113 = vmax.xlane.f32.xlu0 %v4077
        %v4114 = vpop.xlane.xlu0 %4113
        %4115 = vmax.xlane.f32.xlu0 %v4079
        %v4116 = vpop.xlane.xlu0 %4115
        %4117 = vmax.xlane.f32.xlu0 %v4082
        %v4118 = vpop.xlane.xlu0 %4117
        %4119 = vmax.xlane.f32.xlu0 %v4084
        %v4120 = vpop.xlane.xlu0 %4119
        %4121 = vmax.xlane.f32.xlu0 %v4087
        %v4122 = vpop.xlane.xlu0 %4121
        %4123 = vmax.xlane.f32.xlu0 %v4089
        %v4124 = vpop.xlane.xlu0 %4123
        %4125 = vmax.xlane.f32.xlu0 %v4092
        %v4126 = vpop.xlane.xlu0 %4125
        %4127 = vmax.xlane.f32.xlu0 %v4094
        %v4128 = vpop.xlane.xlu0 %4127
        %4129 = vmax.xlane.f32.xlu0 %v4097
        %v4130 = vpop.xlane.xlu0 %4129
        %4131 = vmax.xlane.f32.xlu0 %v4099
        %v4132 = vpop.xlane.xlu0 %4131
        %v4133 = vsub.f32 %v4062, %v4102
        %v4134 = vsub.f32 %v4064, %v4104
        %v4135 = vsub.f32 %v4067, %v4106
        %v4136 = vsub.f32 %v4069, %v4108
        %v4137 = vsub.f32 %v4072, %v4110
        %v4138 = vsub.f32 %v4074, %v4112
        %v4139 = vsub.f32 %v4077, %v4114
        %v4140 = vsub.f32 %v4079, %v4116
        %v4141 = vsub.f32 %v4082, %v4118
        %v4142 = vsub.f32 %v4084, %v4120
        %v4143 = vsub.f32 %v4087, %v4122
        %v4144 = vsub.f32 %v4089, %v4124
        %v4145 = vsub.f32 %v4092, %v4126
        %v4146 = vsub.f32 %v4094, %v4128
        %v4147 = vsub.f32 %v4097, %v4130
        %v4148 = vsub.f32 %v4099, %v4132
        %v4149 = vmul.f32 %v4133, 1.442695
        %v4150 = vpow.pop %v4149
        %v4151 = vmul.f32 %v4134, 1.442695
        %v4152 = vpow.pop %v4151
        %v4153 = vmul.f32 %v4135, 1.442695
        %v4154 = vpow.pop %v4153
        %v4155 = vmul.f32 %v4136, 1.442695
        %v4156 = vpow.pop %v4155
        %v4157 = vmul.f32 %v4137, 1.442695
        %v4158 = vpow.pop %v4157
        %v4159 = vmul.f32 %v4138, 1.442695
        %v4160 = vpow.pop %v4159
        %v4161 = vmul.f32 %v4139, 1.442695
        %v4162 = vpow.pop %v4161
        %v4163 = vmul.f32 %v4140, 1.442695
        %v4164 = vpow.pop %v4163
        %v4165 = vmul.f32 %v4141, 1.442695
        %v4166 = vpow.pop %v4165
        %v4167 = vmul.f32 %v4142, 1.442695
        %v4168 = vpow.pop %v4167
        %v4169 = vmul.f32 %v4143, 1.442695
        %v4170 = vpow.pop %v4169
        %v4171 = vmul.f32 %v4144, 1.442695
        %v4172 = vpow.pop %v4171
        %v4173 = vmul.f32 %v4145, 1.442695
        %v4174 = vpow.pop %v4173
        %v4175 = vmul.f32 %v4146, 1.442695
        %v4176 = vpow.pop %v4175
        %v4177 = vmul.f32 %v4147, 1.442695
        %v4178 = vpow.pop %v4177
        %v4179 = vmul.f32 %v4148, 1.442695
        %v4180 = vpow.pop %v4179
        %4181 = vadd.xlane.f32.xlu0 %v4150
        %v4182 = vpop.xlane.xlu0 %4181
        %4183 = vadd.xlane.f32.xlu0 %v4152
        %v4184 = vpop.xlane.xlu0 %4183
        %4185 = vadd.xlane.f32.xlu0 %v4154
        %v4186 = vpop.xlane.xlu0 %4185
        %4187 = vadd.xlane.f32.xlu0 %v4156
        %v4188 = vpop.xlane.xlu0 %4187
        %4189 = vadd.xlane.f32.xlu0 %v4158
        %v4190 = vpop.xlane.xlu0 %4189
        %4191 = vadd.xlane.f32.xlu0 %v4160
        %v4192 = vpop.xlane.xlu0 %4191
        %4193 = vadd.xlane.f32.xlu0 %v4162
        %v4194 = vpop.xlane.xlu0 %4193
        %4195 = vadd.xlane.f32.xlu0 %v4164
        %v4196 = vpop.xlane.xlu0 %4195
        %4197 = vadd.xlane.f32.xlu0 %v4166
        %v4198 = vpop.xlane.xlu0 %4197
        %4199 = vadd.xlane.f32.xlu0 %v4168
        %v4200 = vpop.xlane.xlu0 %4199
        %4201 = vadd.xlane.f32.xlu0 %v4170
        %v4202 = vpop.xlane.xlu0 %4201
        %4203 = vadd.xlane.f32.xlu0 %v4172
        %v4204 = vpop.xlane.xlu0 %4203
        %4205 = vadd.xlane.f32.xlu0 %v4174
        %v4206 = vpop.xlane.xlu0 %4205
        %4207 = vadd.xlane.f32.xlu0 %v4176
        %v4208 = vpop.xlane.xlu0 %4207
        %4209 = vadd.xlane.f32.xlu0 %v4178
        %v4210 = vpop.xlane.xlu0 %4209
        %4211 = vadd.xlane.f32.xlu0 %v4180
        %v4212 = vpop.xlane.xlu0 %4211
        %v4213 = vrcp.pop %v4182
        %v4214 = vrcp.pop %v4184
        %v4215 = vrcp.pop %v4186
        %v4216 = vrcp.pop %v4188
        %v4217 = vrcp.pop %v4190
        %v4218 = vrcp.pop %v4192
        %v4219 = vrcp.pop %v4194
        %v4220 = vrcp.pop %v4196
        %v4221 = vrcp.pop %v4198
        %v4222 = vrcp.pop %v4200
        %v4223 = vrcp.pop %v4202
        %v4224 = vrcp.pop %v4204
        %v4225 = vrcp.pop %v4206
        %v4226 = vrcp.pop %v4208
        %v4227 = vrcp.pop %v4210
        %v4228 = vrcp.pop %v4212
        %v4229 = vmul.f32 %v4150, %v4213
        %v4230 = vmul.f32 %v4152, %v4214
        %v4231 = vmul.f32 %v4154, %v4215
        %v4232 = vmul.f32 %v4156, %v4216
        %v4233 = vmul.f32 %v4158, %v4217
        %v4234 = vmul.f32 %v4160, %v4218
        %v4235 = vmul.f32 %v4162, %v4219
        %v4236 = vmul.f32 %v4164, %v4220
        %v4237 = vmul.f32 %v4166, %v4221
        %v4238 = vmul.f32 %v4168, %v4222
        %v4239 = vmul.f32 %v4170, %v4223
        %v4240 = vmul.f32 %v4172, %v4224
        %v4241 = vmul.f32 %v4174, %v4225
        %v4242 = vmul.f32 %v4176, %v4226
        %v4243 = vmul.f32 %v4178, %v4227
        %v4244 = vmul.f32 %v4180, %v4228
        %v4245 = vpack.c.bf16 %v4230, %v4229
        %v4246 = vpack.c.bf16 %v4232, %v4231
        %v4247 = vpack.c.bf16 %v4234, %v4233
        %v4248 = vpack.c.bf16 %v4236, %v4235
        %v4249 = vpack.c.bf16 %v4238, %v4237
        %v4250 = vpack.c.bf16 %v4240, %v4239
        %v4251 = vpack.c.bf16 %v4242, %v4241
        %v4252 = vpack.c.bf16 %v4244, %v4243
        %4253 = vrot.lane.b32.xlu0 %v1783, 16
        %v4254 = vpop.permute.xlu0 %4253
        %4255 = vrot.lane.b32.xlu0 %v1784, 16
        %v4256 = vpop.permute.xlu0 %4255
        %4257 = vrot.lane.b32.xlu0 %v1785, 16
        %v4258 = vpop.permute.xlu0 %4257
        %4259 = vrot.lane.b32.xlu0 %v1786, 16
        %v4260 = vpop.permute.xlu0 %4259
        %4261 = vrot.lane.b32.xlu0 %v1787, 16
        %v4262 = vpop.permute.xlu0 %4261
        %4263 = vrot.lane.b32.xlu0 %v1788, 16
        %v4264 = vpop.permute.xlu0 %4263
        %4265 = vrot.lane.b32.xlu0 %v1789, 16
        %v4266 = vpop.permute.xlu0 %4265
        %4267 = vrot.lane.b32.xlu0 %v1790, 16
        %v4268 = vpop.permute.xlu0 %4267
        %4277 = vmatpush.bf16.msra.mxu0 %v4268
        %4278 = vmatpush.bf16.msra.mxu0 %v4266
        %4279 = vmatpush.bf16.msra.mxu0 %v4264
        %4280 = vmatpush.bf16.msra.mxu0 %v4262
        %4281 = vmatpush.bf16.msra.mxu0 %v4260
        %4282 = vmatpush.bf16.msra.mxu0 %v4258
        %4283 = vmatpush.bf16.msra.mxu0 %v4256
        %4284 = vmatpush.bf16.msra.mxu0 %v4254
        %4285 = vmatmul.bf16.gmra.mxu0 %v4245
        %v4286 = vpop.f32.mrf.mxu0
        %v4287 = vadd.f32 0.0, %v4286
        %v4288 = vpop.f32.mrf.mxu0
        %v4289 = vadd.f32 0.0, %v4288
        %4290 = vmatmul.bf16.gmra.mxu0 %v4246
        %v4291 = vpop.f32.mrf.mxu0
        %v4292 = vadd.f32 0.0, %v4291
        %v4293 = vpop.f32.mrf.mxu0
        %v4294 = vadd.f32 0.0, %v4293
        %4295 = vmatmul.bf16.gmra.mxu0 %v4247
        %v4296 = vpop.f32.mrf.mxu0
        %v4297 = vadd.f32 0.0, %v4296
        %v4298 = vpop.f32.mrf.mxu0
        %v4299 = vadd.f32 0.0, %v4298
        %4300 = vmatmul.bf16.gmra.mxu0 %v4248
        %v4301 = vpop.f32.mrf.mxu0
        %v4302 = vadd.f32 0.0, %v4301
        %v4303 = vpop.f32.mrf.mxu0
        %v4304 = vadd.f32 0.0, %v4303
        %4305 = vmatmul.bf16.gmra.mxu0 %v4249
        %v4306 = vpop.f32.mrf.mxu0
        %v4307 = vadd.f32 0.0, %v4306
        %v4308 = vpop.f32.mrf.mxu0
        %v4309 = vadd.f32 0.0, %v4308
        %4310 = vmatmul.bf16.gmra.mxu0 %v4250
        %v4311 = vpop.f32.mrf.mxu0
        %v4312 = vadd.f32 0.0, %v4311
        %v4313 = vpop.f32.mrf.mxu0
        %v4314 = vadd.f32 0.0, %v4313
        %4315 = vmatmul.bf16.gmra.mxu0 %v4251
        %v4316 = vpop.f32.mrf.mxu0
        %v4317 = vadd.f32 0.0, %v4316
        %v4318 = vpop.f32.mrf.mxu0
        %v4319 = vadd.f32 0.0, %v4318
        %4320 = vmatmul.bf16.gmra.mxu0 %v4252
        %v4321 = vpop.f32.mrf.mxu0
        %v4322 = vadd.f32 0.0, %v4321
        %v4323 = vpop.f32.mrf.mxu0
        %v4324 = vadd.f32 0.0, %v4323
        %4325 = vdwg.mxu0
        %4342 = vrot.lane.b32.xlu0 %v2163, 16
        %v4343 = vpop.permute.xlu0 %4342
        %4344 = vrot.lane.b32.xlu0 %v2165, 16
        %v4345 = vpop.permute.xlu0 %4344
        %4346 = vrot.lane.b32.xlu0 %v2168, 16
        %v4347 = vpop.permute.xlu0 %4346
        %4348 = vrot.lane.b32.xlu0 %v2170, 16
        %v4349 = vpop.permute.xlu0 %4348
        %4350 = vrot.lane.b32.xlu0 %v2173, 16
        %v4351 = vpop.permute.xlu0 %4350
        %4352 = vrot.lane.b32.xlu0 %v2175, 16
        %v4353 = vpop.permute.xlu0 %4352
        %4354 = vrot.lane.b32.xlu0 %v2178, 16
        %v4355 = vpop.permute.xlu0 %4354
        %4356 = vrot.lane.b32.xlu0 %v2180, 16
        %v4357 = vpop.permute.xlu0 %4356
        %4358 = vrot.lane.b32.xlu0 %v2183, 16
        %v4359 = vpop.permute.xlu0 %4358
        %4360 = vrot.lane.b32.xlu0 %v2185, 16
        %v4361 = vpop.permute.xlu0 %4360
        %4362 = vrot.lane.b32.xlu0 %v2188, 16
        %v4363 = vpop.permute.xlu0 %4362
        %4364 = vrot.lane.b32.xlu0 %v2190, 16
        %v4365 = vpop.permute.xlu0 %4364
        %4366 = vrot.lane.b32.xlu0 %v2193, 16
        %v4367 = vpop.permute.xlu0 %4366
        %4368 = vrot.lane.b32.xlu0 %v2195, 16
        %v4369 = vpop.permute.xlu0 %4368
        %4370 = vrot.lane.b32.xlu0 %v2198, 16
        %v4371 = vpop.permute.xlu0 %4370
        %4372 = vrot.lane.b32.xlu0 %v2200, 16
        %v4373 = vpop.permute.xlu0 %4372
        %4406 = vrot.lane.b32.xlu0 %v2517, 32
        %v4407 = vpop.permute.xlu0 %4406
        %4408 = vrot.lane.b32.xlu0 %v2519, 32
        %v4409 = vpop.permute.xlu0 %4408
        %4410 = vrot.lane.b32.xlu0 %v2522, 32
        %v4411 = vpop.permute.xlu0 %4410
        %4412 = vrot.lane.b32.xlu0 %v2524, 32
        %v4413 = vpop.permute.xlu0 %4412
        %4414 = vrot.lane.b32.xlu0 %v2527, 32
        %v4415 = vpop.permute.xlu0 %4414
        %4416 = vrot.lane.b32.xlu0 %v2529, 32
        %v4417 = vpop.permute.xlu0 %4416
        %4418 = vrot.lane.b32.xlu0 %v2532, 32
        %v4419 = vpop.permute.xlu0 %4418
        %4420 = vrot.lane.b32.xlu0 %v2534, 32
        %v4421 = vpop.permute.xlu0 %4420
        %4422 = vrot.lane.b32.xlu0 %v2537, 32
        %v4423 = vpop.permute.xlu0 %4422
        %4424 = vrot.lane.b32.xlu0 %v2539, 32
        %v4425 = vpop.permute.xlu0 %4424
        %4426 = vrot.lane.b32.xlu0 %v2542, 32
        %v4427 = vpop.permute.xlu0 %4426
        %4428 = vrot.lane.b32.xlu0 %v2544, 32
        %v4429 = vpop.permute.xlu0 %4428
        %4430 = vrot.lane.b32.xlu0 %v2547, 32
        %v4431 = vpop.permute.xlu0 %4430
        %4432 = vrot.lane.b32.xlu0 %v2549, 32
        %v4433 = vpop.permute.xlu0 %4432
        %4434 = vrot.lane.b32.xlu0 %v2552, 32
        %v4435 = vpop.permute.xlu0 %4434
        %4436 = vrot.lane.b32.xlu0 %v2554, 32
        %v4437 = vpop.permute.xlu0 %4436
        %4470 = vrot.lane.b32.xlu0 %v2871, 48
        %v4471 = vpop.permute.xlu0 %4470
        %4472 = vrot.lane.b32.xlu0 %v2873, 48
        %v4473 = vpop.permute.xlu0 %4472
        %4474 = vrot.lane.b32.xlu0 %v2876, 48
        %v4475 = vpop.permute.xlu0 %4474
        %4476 = vrot.lane.b32.xlu0 %v2878, 48
        %v4477 = vpop.permute.xlu0 %4476
        %4478 = vrot.lane.b32.xlu0 %v2881, 48
        %v4479 = vpop.permute.xlu0 %4478
        %4480 = vrot.lane.b32.xlu0 %v2883, 48
        %v4481 = vpop.permute.xlu0 %4480
        %4482 = vrot.lane.b32.xlu0 %v2886, 48
        %v4483 = vpop.permute.xlu0 %4482
        %4484 = vrot.lane.b32.xlu0 %v2888, 48
        %v4485 = vpop.permute.xlu0 %4484
        %4486 = vrot.lane.b32.xlu0 %v2891, 48
        %v4487 = vpop.permute.xlu0 %4486
        %4488 = vrot.lane.b32.xlu0 %v2893, 48
        %v4489 = vpop.permute.xlu0 %4488
        %4490 = vrot.lane.b32.xlu0 %v2896, 48
        %v4491 = vpop.permute.xlu0 %4490
        %4492 = vrot.lane.b32.xlu0 %v2898, 48
        %v4493 = vpop.permute.xlu0 %4492
        %4494 = vrot.lane.b32.xlu0 %v2901, 48
        %v4495 = vpop.permute.xlu0 %4494
        %4496 = vrot.lane.b32.xlu0 %v2903, 48
        %v4497 = vpop.permute.xlu0 %4496
        %4498 = vrot.lane.b32.xlu0 %v2906, 48
        %v4499 = vpop.permute.xlu0 %4498
        %4500 = vrot.lane.b32.xlu0 %v2908, 48
        %v4501 = vpop.permute.xlu0 %4500
        %4534 = vrot.lane.b32.xlu0 %v3225, 64
        %v4535 = vpop.permute.xlu0 %4534
        %4536 = vrot.lane.b32.xlu0 %v3227, 64
        %v4537 = vpop.permute.xlu0 %4536
        %4538 = vrot.lane.b32.xlu0 %v3230, 64
        %v4539 = vpop.permute.xlu0 %4538
        %4540 = vrot.lane.b32.xlu0 %v3232, 64
        %v4541 = vpop.permute.xlu0 %4540
        %4542 = vrot.lane.b32.xlu0 %v3235, 64
        %v4543 = vpop.permute.xlu0 %4542
        %4544 = vrot.lane.b32.xlu0 %v3237, 64
        %v4545 = vpop.permute.xlu0 %4544
        %4546 = vrot.lane.b32.xlu0 %v3240, 64
        %v4547 = vpop.permute.xlu0 %4546
        %4548 = vrot.lane.b32.xlu0 %v3242, 64
        %v4549 = vpop.permute.xlu0 %4548
        %4550 = vrot.lane.b32.xlu0 %v3245, 64
        %v4551 = vpop.permute.xlu0 %4550
        %4552 = vrot.lane.b32.xlu0 %v3247, 64
        %v4553 = vpop.permute.xlu0 %4552
        %4554 = vrot.lane.b32.xlu0 %v3250, 64
        %v4555 = vpop.permute.xlu0 %4554
        %4556 = vrot.lane.b32.xlu0 %v3252, 64
        %v4557 = vpop.permute.xlu0 %4556
        %4558 = vrot.lane.b32.xlu0 %v3255, 64
        %v4559 = vpop.permute.xlu0 %4558
        %4560 = vrot.lane.b32.xlu0 %v3257, 64
        %v4561 = vpop.permute.xlu0 %4560
        %4562 = vrot.lane.b32.xlu0 %v3260, 64
        %v4563 = vpop.permute.xlu0 %4562
        %4564 = vrot.lane.b32.xlu0 %v3262, 64
        %v4565 = vpop.permute.xlu0 %4564
        %4598 = vrot.lane.b32.xlu0 %v3579, 80
        %v4599 = vpop.permute.xlu0 %4598
        %4600 = vrot.lane.b32.xlu0 %v3581, 80
        %v4601 = vpop.permute.xlu0 %4600
        %4602 = vrot.lane.b32.xlu0 %v3584, 80
        %v4603 = vpop.permute.xlu0 %4602
        %4604 = vrot.lane.b32.xlu0 %v3586, 80
        %v4605 = vpop.permute.xlu0 %4604
        %4606 = vrot.lane.b32.xlu0 %v3589, 80
        %v4607 = vpop.permute.xlu0 %4606
        %4608 = vrot.lane.b32.xlu0 %v3591, 80
        %v4609 = vpop.permute.xlu0 %4608
        %4610 = vrot.lane.b32.xlu0 %v3594, 80
        %v4611 = vpop.permute.xlu0 %4610
        %4612 = vrot.lane.b32.xlu0 %v3596, 80
        %v4613 = vpop.permute.xlu0 %4612
        %4614 = vrot.lane.b32.xlu0 %v3599, 80
        %v4615 = vpop.permute.xlu0 %4614
        %4616 = vrot.lane.b32.xlu0 %v3601, 80
        %v4617 = vpop.permute.xlu0 %4616
        %4618 = vrot.lane.b32.xlu0 %v3604, 80
        %v4619 = vpop.permute.xlu0 %4618
        %4620 = vrot.lane.b32.xlu0 %v3606, 80
        %v4621 = vpop.permute.xlu0 %4620
        %4622 = vrot.lane.b32.xlu0 %v3609, 80
        %v4623 = vpop.permute.xlu0 %4622
        %4624 = vrot.lane.b32.xlu0 %v3611, 80
        %v4625 = vpop.permute.xlu0 %4624
        %4626 = vrot.lane.b32.xlu0 %v3614, 80
        %v4627 = vpop.permute.xlu0 %4626
        %4628 = vrot.lane.b32.xlu0 %v3616, 80
        %v4629 = vpop.permute.xlu0 %4628
        %4662 = vrot.lane.b32.xlu0 %v3933, 96
        %v4663 = vpop.permute.xlu0 %4662
        %4664 = vrot.lane.b32.xlu0 %v3935, 96
        %v4665 = vpop.permute.xlu0 %4664
        %4666 = vrot.lane.b32.xlu0 %v3938, 96
        %v4667 = vpop.permute.xlu0 %4666
        %4668 = vrot.lane.b32.xlu0 %v3940, 96
        %v4669 = vpop.permute.xlu0 %4668
        %4670 = vrot.lane.b32.xlu0 %v3943, 96
        %v4671 = vpop.permute.xlu0 %4670
        %4672 = vrot.lane.b32.xlu0 %v3945, 96
        %v4673 = vpop.permute.xlu0 %4672
        %4674 = vrot.lane.b32.xlu0 %v3948, 96
        %v4675 = vpop.permute.xlu0 %4674
        %4676 = vrot.lane.b32.xlu0 %v3950, 96
        %v4677 = vpop.permute.xlu0 %4676
        %4678 = vrot.lane.b32.xlu0 %v3953, 96
        %v4679 = vpop.permute.xlu0 %4678
        %4680 = vrot.lane.b32.xlu0 %v3955, 96
        %v4681 = vpop.permute.xlu0 %4680
        %4682 = vrot.lane.b32.xlu0 %v3958, 96
        %v4683 = vpop.permute.xlu0 %4682
        %4684 = vrot.lane.b32.xlu0 %v3960, 96
        %v4685 = vpop.permute.xlu0 %4684
        %4686 = vrot.lane.b32.xlu0 %v3963, 96
        %v4687 = vpop.permute.xlu0 %4686
        %4688 = vrot.lane.b32.xlu0 %v3965, 96
        %v4689 = vpop.permute.xlu0 %4688
        %4690 = vrot.lane.b32.xlu0 %v3968, 96
        %v4691 = vpop.permute.xlu0 %4690
        %4692 = vrot.lane.b32.xlu0 %v3970, 96
        %v4693 = vpop.permute.xlu0 %4692
        %4726 = vrot.lane.b32.xlu0 %v4287, 112
        %v4727 = vpop.permute.xlu0 %4726
        %4728 = vrot.lane.b32.xlu0 %v4289, 112
        %v4729 = vpop.permute.xlu0 %4728
        %4730 = vrot.lane.b32.xlu0 %v4292, 112
        %v4731 = vpop.permute.xlu0 %4730
        %4732 = vrot.lane.b32.xlu0 %v4294, 112
        %v4733 = vpop.permute.xlu0 %4732
        %4734 = vrot.lane.b32.xlu0 %v4297, 112
        %v4735 = vpop.permute.xlu0 %4734
        %4736 = vrot.lane.b32.xlu0 %v4299, 112
        %v4737 = vpop.permute.xlu0 %4736
        %4738 = vrot.lane.b32.xlu0 %v4302, 112
        %v4739 = vpop.permute.xlu0 %4738
        %4740 = vrot.lane.b32.xlu0 %v4304, 112
        %v4741 = vpop.permute.xlu0 %4740
        %4742 = vrot.lane.b32.xlu0 %v4307, 112
        %v4743 = vpop.permute.xlu0 %4742
        %4744 = vrot.lane.b32.xlu0 %v4309, 112
        %v4745 = vpop.permute.xlu0 %4744
        %4746 = vrot.lane.b32.xlu0 %v4312, 112
        %v4747 = vpop.permute.xlu0 %4746
        %4748 = vrot.lane.b32.xlu0 %v4314, 112
        %v4749 = vpop.permute.xlu0 %4748
        %4750 = vrot.lane.b32.xlu0 %v4317, 112
        %v4751 = vpop.permute.xlu0 %4750
        %4752 = vrot.lane.b32.xlu0 %v4319, 112
        %v4753 = vpop.permute.xlu0 %4752
        %4754 = vrot.lane.b32.xlu0 %v4322, 112
        %v4755 = vpop.permute.xlu0 %4754
        %4756 = vrot.lane.b32.xlu0 %v4324, 112
        %v4757 = vpop.permute.xlu0 %4756
        %v4774 = vsel %vm1501, %v1809, %v4343
        %v4775 = vsel %vm1501, %v1811, %v4345
        %v4776 = vsel %vm1501, %v1814, %v4347
        %v4777 = vsel %vm1501, %v1816, %v4349
        %v4778 = vsel %vm1501, %v1819, %v4351
        %v4779 = vsel %vm1501, %v1821, %v4353
        %v4780 = vsel %vm1501, %v1824, %v4355
        %v4781 = vsel %vm1501, %v1826, %v4357
        %v4782 = vsel %vm1501, %v1829, %v4359
        %v4783 = vsel %vm1501, %v1831, %v4361
        %v4784 = vsel %vm1501, %v1834, %v4363
        %v4785 = vsel %vm1501, %v1836, %v4365
        %v4786 = vsel %vm1501, %v1839, %v4367
        %v4787 = vsel %vm1501, %v1841, %v4369
        %v4788 = vsel %vm1501, %v1844, %v4371
        %v4789 = vsel %vm1501, %v1846, %v4373
        %vm4790 = vcmask 261120
        %v4791 = vsel %vm4790, %v4774, %v4407
        %v4792 = vsel %vm4790, %v4775, %v4409
        %v4793 = vsel %vm4790, %v4776, %v4411
        %v4794 = vsel %vm4790, %v4777, %v4413
        %v4795 = vsel %vm4790, %v4778, %v4415
        %v4796 = vsel %vm4790, %v4779, %v4417
        %v4797 = vsel %vm4790, %v4780, %v4419
        %v4798 = vsel %vm4790, %v4781, %v4421
        %v4799 = vsel %vm4790, %v4782, %v4423
        %v4800 = vsel %vm4790, %v4783, %v4425
        %v4801 = vsel %vm4790, %v4784, %v4427
        %v4802 = vsel %vm4790, %v4785, %v4429
        %v4803 = vsel %vm4790, %v4786, %v4431
        %v4804 = vsel %vm4790, %v4787, %v4433
        %v4805 = vsel %vm4790, %v4788, %v4435
        %v4806 = vsel %vm4790, %v4789, %v4437
        %vm4807 = vcmask 392192
        %v4808 = vsel %vm4807, %v4791, %v4471
        %v4809 = vsel %vm4807, %v4792, %v4473
        %v4810 = vsel %vm4807, %v4793, %v4475
        %v4811 = vsel %vm4807, %v4794, %v4477
        %v4812 = vsel %vm4807, %v4795, %v4479
        %v4813 = vsel %vm4807, %v4796, %v4481
        %v4814 = vsel %vm4807, %v4797, %v4483
        %v4815 = vsel %vm4807, %v4798, %v4485
        %v4816 = vsel %vm4807, %v4799, %v4487
        %v4817 = vsel %vm4807, %v4800, %v4489
        %v4818 = vsel %vm4807, %v4801, %v4491
        %v4819 = vsel %vm4807, %v4802, %v4493
        %v4820 = vsel %vm4807, %v4803, %v4495
        %v4821 = vsel %vm4807, %v4804, %v4497
        %v4822 = vsel %vm4807, %v4805, %v4499
        %v4823 = vsel %vm4807, %v4806, %v4501
        %vm4824 = vcmask 523264
        %v4825 = vsel %vm4824, %v4808, %v4535
        %v4826 = vsel %vm4824, %v4809, %v4537
        %v4827 = vsel %vm4824, %v4810, %v4539
        %v4828 = vsel %vm4824, %v4811, %v4541
        %v4829 = vsel %vm4824, %v4812, %v4543
        %v4830 = vsel %vm4824, %v4813, %v4545
        %v4831 = vsel %vm4824, %v4814, %v4547
        %v4832 = vsel %vm4824, %v4815, %v4549
        %v4833 = vsel %vm4824, %v4816, %v4551
        %v4834 = vsel %vm4824, %v4817, %v4553
        %v4835 = vsel %vm4824, %v4818, %v4555
        %v4836 = vsel %vm4824, %v4819, %v4557
        %v4837 = vsel %vm4824, %v4820, %v4559
        %v4838 = vsel %vm4824, %v4821, %v4561
        %v4839 = vsel %vm4824, %v4822, %v4563
        %v4840 = vsel %vm4824, %v4823, %v4565
        %vm4841 = vcmask 654336
        %v4842 = vsel %vm4841, %v4825, %v4599
        %v4843 = vsel %vm4841, %v4826, %v4601
        %v4844 = vsel %vm4841, %v4827, %v4603
        %v4845 = vsel %vm4841, %v4828, %v4605
        %v4846 = vsel %vm4841, %v4829, %v4607
        %v4847 = vsel %vm4841, %v4830, %v4609
        %v4848 = vsel %vm4841, %v4831, %v4611
        %v4849 = vsel %vm4841, %v4832, %v4613
        %v4850 = vsel %vm4841, %v4833, %v4615
        %v4851 = vsel %vm4841, %v4834, %v4617
        %v4852 = vsel %vm4841, %v4835, %v4619
        %v4853 = vsel %vm4841, %v4836, %v4621
        %v4854 = vsel %vm4841, %v4837, %v4623
        %v4855 = vsel %vm4841, %v4838, %v4625
        %v4856 = vsel %vm4841, %v4839, %v4627
        %v4857 = vsel %vm4841, %v4840, %v4629
        %vm4858 = vcmask 785408
        %v4859 = vsel %vm4858, %v4842, %v4663
        %v4860 = vsel %vm4858, %v4843, %v4665
        %v4861 = vsel %vm4858, %v4844, %v4667
        %v4862 = vsel %vm4858, %v4845, %v4669
        %v4863 = vsel %vm4858, %v4846, %v4671
        %v4864 = vsel %vm4858, %v4847, %v4673
        %v4865 = vsel %vm4858, %v4848, %v4675
        %v4866 = vsel %vm4858, %v4849, %v4677
        %v4867 = vsel %vm4858, %v4850, %v4679
        %v4868 = vsel %vm4858, %v4851, %v4681
        %v4869 = vsel %vm4858, %v4852, %v4683
        %v4870 = vsel %vm4858, %v4853, %v4685
        %v4871 = vsel %vm4858, %v4854, %v4687
        %v4872 = vsel %vm4858, %v4855, %v4689
        %v4873 = vsel %vm4858, %v4856, %v4691
        %v4874 = vsel %vm4858, %v4857, %v4693
        %vm4875 = vcmask 916480
        %v4876 = vsel %vm4875, %v4859, %v4727
        %v4877 = vsel %vm4875, %v4860, %v4729
        %v4878 = vsel %vm4875, %v4861, %v4731
        %v4879 = vsel %vm4875, %v4862, %v4733
        %v4880 = vsel %vm4875, %v4863, %v4735
        %v4881 = vsel %vm4875, %v4864, %v4737
        %v4882 = vsel %vm4875, %v4865, %v4739
        %v4883 = vsel %vm4875, %v4866, %v4741
        %v4884 = vsel %vm4875, %v4867, %v4743
        %v4885 = vsel %vm4875, %v4868, %v4745
        %v4886 = vsel %vm4875, %v4869, %v4747
        %v4887 = vsel %vm4875, %v4870, %v4749
        %v4888 = vsel %vm4875, %v4871, %v4751
        %v4889 = vsel %vm4875, %v4872, %v4753
        %v4890 = vsel %vm4875, %v4873, %v4755
        %v4891 = vsel %vm4875, %v4874, %v4757
        %v4892 = vpack.c.bf16 %v4877, %v4876
        %v4893 = vpack.c.bf16 %v4879, %v4878
        %v4894 = vpack.c.bf16 %v4881, %v4880
        %v4895 = vpack.c.bf16 %v4883, %v4882
        %v4896 = vpack.c.bf16 %v4885, %v4884
        %v4897 = vpack.c.bf16 %v4887, %v4886
        %v4898 = vpack.c.bf16 %v4889, %v4888
        %v4899 = vpack.c.bf16 %v4891, %v4890
        %v4900 = vld [vmem:[#allocation10] sm:$0xf]
        %v4901 = vld [vmem:[#allocation10 + $0x4] sm:$0xf]
        %v4902 = vld [vmem:[#allocation10 + $0x8] sm:$0xf]
        %v4903 = vld [vmem:[#allocation10 + $0xc] sm:$0xf]
        %v4904 = vld [vmem:[#allocation10 + $0x10] sm:$0xf]
        %v4905 = vld [vmem:[#allocation10 + $0x14] sm:$0xf]
        %v4906 = vld [vmem:[#allocation10 + $0x18] sm:$0xf]
        %v4907 = vld [vmem:[#allocation10 + $0x1c] sm:$0xf]
        %v4908 = vld [vmem:[#allocation10 + $0x20] sm:$0xf]
        %v4909 = vld [vmem:[#allocation10 + $0x24] sm:$0xf]
        %v4910 = vld [vmem:[#allocation10 + $0x28] sm:$0xf]
        %v4911 = vld [vmem:[#allocation10 + $0x2c] sm:$0xf]
        %v4912 = vld [vmem:[#allocation10 + $0x30] sm:$0xf]
        %v4913 = vld [vmem:[#allocation10 + $0x34] sm:$0xf]
        %v4914 = vld [vmem:[#allocation10 + $0x38] sm:$0xf]
        %v4915 = vld [vmem:[#allocation10 + $0x3c] sm:$0xf]
        %v4916 = vld [vmem:[%s6] sm:$0x1]
        %v4918 = vperm.slane %v4916, 0
        %v4936 = vunpack.c.l.b16 %v4900
        %v4937 = vunpack.c.l.b16 %v4901
        %v4938 = vunpack.c.l.b16 %v4902
        %v4939 = vunpack.c.l.b16 %v4903
        %v4940 = vunpack.c.l.b16 %v4904
        %v4941 = vunpack.c.l.b16 %v4905
        %v4942 = vunpack.c.l.b16 %v4906
        %v4943 = vunpack.c.l.b16 %v4907
        %v4944 = vunpack.c.l.b16 %v4908
        %v4945 = vunpack.c.l.b16 %v4909
        %v4946 = vunpack.c.l.b16 %v4910
        %v4947 = vunpack.c.l.b16 %v4911
        %v4948 = vunpack.c.l.b16 %v4912
        %v4949 = vunpack.c.l.b16 %v4913
        %v4950 = vunpack.c.l.b16 %v4914
        %v4951 = vunpack.c.l.b16 %v4915
        %v4952 = vpack.c.b16 %v4937, %v4936
        %v4953 = vpack.c.b16 %v4939, %v4938
        %v4954 = vpack.c.b16 %v4941, %v4940
        %v4955 = vpack.c.b16 %v4943, %v4942
        %v4956 = vpack.c.b16 %v4945, %v4944
        %v4957 = vpack.c.b16 %v4947, %v4946
        %v4958 = vpack.c.b16 %v4949, %v4948
        %v4959 = vpack.c.b16 %v4951, %v4950
        %4968 = vmatpush.bf16.msra.mxu0 %v4959
        %4969 = vmatpush.bf16.msra.mxu0 %v4958
        %4970 = vmatpush.bf16.msra.mxu0 %v4957
        %4971 = vmatpush.bf16.msra.mxu0 %v4956
        %4972 = vmatpush.bf16.msra.mxu0 %v4955
        %4973 = vmatpush.bf16.msra.mxu0 %v4954
        %4974 = vmatpush.bf16.msra.mxu0 %v4953
        %4975 = vmatpush.bf16.msra.mxu0 %v4952
        %4976 = vmatmul.bf16.gmra.mxu0 %v4892
        %v4977 = vpop.f32.mrf.mxu0
        %v4978 = vadd.f32 %v4918, %v4977
        %v4979 = vpop.f32.mrf.mxu0
        %v4980 = vadd.f32 %v4918, %v4979
        %4981 = vmatmul.bf16.gmra.mxu0 %v4893
        %v4982 = vpop.f32.mrf.mxu0
        %v4983 = vadd.f32 %v4918, %v4982
        %v4984 = vpop.f32.mrf.mxu0
        %v4985 = vadd.f32 %v4918, %v4984
        %4986 = vmatmul.bf16.gmra.mxu0 %v4894
        %v4987 = vpop.f32.mrf.mxu0
        %v4988 = vadd.f32 %v4918, %v4987
        %v4989 = vpop.f32.mrf.mxu0
        %v4990 = vadd.f32 %v4918, %v4989
        %4991 = vmatmul.bf16.gmra.mxu0 %v4895
        %v4992 = vpop.f32.mrf.mxu0
        %v4993 = vadd.f32 %v4918, %v4992
        %v4994 = vpop.f32.mrf.mxu0
        %v4995 = vadd.f32 %v4918, %v4994
        %4996 = vmatmul.bf16.gmra.mxu0 %v4896
        %v4997 = vpop.f32.mrf.mxu0
        %v4998 = vadd.f32 %v4918, %v4997
        %v4999 = vpop.f32.mrf.mxu0
        %v5000 = vadd.f32 %v4918, %v4999
        %5001 = vmatmul.bf16.gmra.mxu0 %v4897
        %v5002 = vpop.f32.mrf.mxu0
        %v5003 = vadd.f32 %v4918, %v5002
        %v5004 = vpop.f32.mrf.mxu0
        %v5005 = vadd.f32 %v4918, %v5004
        %5006 = vmatmul.bf16.gmra.mxu0 %v4898
        %v5007 = vpop.f32.mrf.mxu0
        %v5008 = vadd.f32 %v4918, %v5007
        %v5009 = vpop.f32.mrf.mxu0
        %v5010 = vadd.f32 %v4918, %v5009
        %5011 = vmatmul.bf16.gmra.mxu0 %v4899
        %v5012 = vpop.f32.mrf.mxu0
        %v5013 = vadd.f32 %v4918, %v5012
        %v5014 = vpop.f32.mrf.mxu0
        %v5015 = vadd.f32 %v4918, %v5014
        %5016 = vdwg.mxu0
        %v5017 = vadd.f32 %v651, %v4978
        %v5018 = vadd.f32 %v652, %v4980
        %v5019 = vadd.f32 %v653, %v4983
        %v5020 = vadd.f32 %v654, %v4985
        %v5021 = vadd.f32 %v655, %v4988
        %v5022 = vadd.f32 %v656, %v4990
        %v5023 = vadd.f32 %v657, %v4993
        %v5024 = vadd.f32 %v658, %v4995
        %v5025 = vadd.f32 %v659, %v4998
        %v5026 = vadd.f32 %v660, %v5000
        %v5027 = vadd.f32 %v661, %v5003
        %v5028 = vadd.f32 %v662, %v5005
        %v5029 = vadd.f32 %v663, %v5008
        %v5030 = vadd.f32 %v664, %v5010
        %v5031 = vadd.f32 %v665, %v5013
        %v5032 = vadd.f32 %v666, %v5015
        %v5033 = vld [vmem:[#allocation11] sm:$0x1]
        %v5034 = vld [vmem:[#allocation13] sm:$0x1]
        %5035 = vadd.xlane.f32.xlu0 %v5017
        %v5036 = vpop.xlane.xlu0 %5035
        %5037 = vadd.xlane.f32.xlu0 %v5018
        %v5038 = vpop.xlane.xlu0 %5037
        %5039 = vadd.xlane.f32.xlu0 %v5019
        %v5040 = vpop.xlane.xlu0 %5039
        %5041 = vadd.xlane.f32.xlu0 %v5020
        %v5042 = vpop.xlane.xlu0 %5041
        %5043 = vadd.xlane.f32.xlu0 %v5021
        %v5044 = vpop.xlane.xlu0 %5043
        %5045 = vadd.xlane.f32.xlu0 %v5022
        %v5046 = vpop.xlane.xlu0 %5045
        %5047 = vadd.xlane.f32.xlu0 %v5023
        %v5048 = vpop.xlane.xlu0 %5047
        %5049 = vadd.xlane.f32.xlu0 %v5024
        %v5050 = vpop.xlane.xlu0 %5049
        %5051 = vadd.xlane.f32.xlu0 %v5025
        %v5052 = vpop.xlane.xlu0 %5051
        %5053 = vadd.xlane.f32.xlu0 %v5026
        %v5054 = vpop.xlane.xlu0 %5053
        %5055 = vadd.xlane.f32.xlu0 %v5027
        %v5056 = vpop.xlane.xlu0 %5055
        %5057 = vadd.xlane.f32.xlu0 %v5028
        %v5058 = vpop.xlane.xlu0 %5057
        %5059 = vadd.xlane.f32.xlu0 %v5029
        %v5060 = vpop.xlane.xlu0 %5059
        %5061 = vadd.xlane.f32.xlu0 %v5030
        %v5062 = vpop.xlane.xlu0 %5061
        %5063 = vadd.xlane.f32.xlu0 %v5031
        %v5064 = vpop.xlane.xlu0 %5063
        %5065 = vadd.xlane.f32.xlu0 %v5032
        %v5066 = vpop.xlane.xlu0 %5065
        %v5067 = vmul.f32 %v5036, %v707
        %v5068 = vmul.f32 %v5038, %v707
        %v5069 = vmul.f32 %v5040, %v707
        %v5070 = vmul.f32 %v5042, %v707
        %v5071 = vmul.f32 %v5044, %v707
        %v5072 = vmul.f32 %v5046, %v707
        %v5073 = vmul.f32 %v5048, %v707
        %v5074 = vmul.f32 %v5050, %v707
        %v5075 = vmul.f32 %v5052, %v707
        %v5076 = vmul.f32 %v5054, %v707
        %v5077 = vmul.f32 %v5056, %v707
        %v5078 = vmul.f32 %v5058, %v707
        %v5079 = vmul.f32 %v5060, %v707
        %v5080 = vmul.f32 %v5062, %v707
        %v5081 = vmul.f32 %v5064, %v707
        %v5082 = vmul.f32 %v5066, %v707
        %v5083 = vsub.f32 %v5017, %v5067
        %v5084 = vsub.f32 %v5018, %v5068
        %v5085 = vsub.f32 %v5019, %v5069
        %v5086 = vsub.f32 %v5020, %v5070
        %v5087 = vsub.f32 %v5021, %v5071
        %v5088 = vsub.f32 %v5022, %v5072
        %v5089 = vsub.f32 %v5023, %v5073
        %v5090 = vsub.f32 %v5024, %v5074
        %v5091 = vsub.f32 %v5025, %v5075
        %v5092 = vsub.f32 %v5026, %v5076
        %v5093 = vsub.f32 %v5027, %v5077
        %v5094 = vsub.f32 %v5028, %v5078
        %v5095 = vsub.f32 %v5029, %v5079
        %v5096 = vsub.f32 %v5030, %v5080
        %v5097 = vsub.f32 %v5031, %v5081
        %v5098 = vsub.f32 %v5032, %v5082
        %v5099 = vmul.f32 %v5083, %v5083
        %v5100 = vmul.f32 %v5084, %v5084
        %v5101 = vmul.f32 %v5085, %v5085
        %v5102 = vmul.f32 %v5086, %v5086
        %v5103 = vmul.f32 %v5087, %v5087
        %v5104 = vmul.f32 %v5088, %v5088
        %v5105 = vmul.f32 %v5089, %v5089
        %v5106 = vmul.f32 %v5090, %v5090
        %v5107 = vmul.f32 %v5091, %v5091
        %v5108 = vmul.f32 %v5092, %v5092
        %v5109 = vmul.f32 %v5093, %v5093
        %v5110 = vmul.f32 %v5094, %v5094
        %v5111 = vmul.f32 %v5095, %v5095
        %v5112 = vmul.f32 %v5096, %v5096
        %v5113 = vmul.f32 %v5097, %v5097
        %v5114 = vmul.f32 %v5098, %v5098
        %5115 = vadd.xlane.f32.xlu0 %v5099
        %v5116 = vpop.xlane.xlu0 %5115
        %5117 = vadd.xlane.f32.xlu0 %v5100
        %v5118 = vpop.xlane.xlu0 %5117
        %5119 = vadd.xlane.f32.xlu0 %v5101
        %v5120 = vpop.xlane.xlu0 %5119
        %5121 = vadd.xlane.f32.xlu0 %v5102
        %v5122 = vpop.xlane.xlu0 %5121
        %5123 = vadd.xlane.f32.xlu0 %v5103
        %v5124 = vpop.xlane.xlu0 %5123
        %5125 = vadd.xlane.f32.xlu0 %v5104
        %v5126 = vpop.xlane.xlu0 %5125
        %5127 = vadd.xlane.f32.xlu0 %v5105
        %v5128 = vpop.xlane.xlu0 %5127
        %5129 = vadd.xlane.f32.xlu0 %v5106
        %v5130 = vpop.xlane.xlu0 %5129
        %5131 = vadd.xlane.f32.xlu0 %v5107
        %v5132 = vpop.xlane.xlu0 %5131
        %5133 = vadd.xlane.f32.xlu0 %v5108
        %v5134 = vpop.xlane.xlu0 %5133
        %5135 = vadd.xlane.f32.xlu0 %v5109
        %v5136 = vpop.xlane.xlu0 %5135
        %5137 = vadd.xlane.f32.xlu0 %v5110
        %v5138 = vpop.xlane.xlu0 %5137
        %5139 = vadd.xlane.f32.xlu0 %v5111
        %v5140 = vpop.xlane.xlu0 %5139
        %5141 = vadd.xlane.f32.xlu0 %v5112
        %v5142 = vpop.xlane.xlu0 %5141
        %5143 = vadd.xlane.f32.xlu0 %v5113
        %v5144 = vpop.xlane.xlu0 %5143
        %5145 = vadd.xlane.f32.xlu0 %v5114
        %v5146 = vpop.xlane.xlu0 %5145
        %v5147 = vmul.f32 %v5116, %v707
        %v5148 = vmul.f32 %v5118, %v707
        %v5149 = vmul.f32 %v5120, %v707
        %v5150 = vmul.f32 %v5122, %v707
        %v5151 = vmul.f32 %v5124, %v707
        %v5152 = vmul.f32 %v5126, %v707
        %v5153 = vmul.f32 %v5128, %v707
        %v5154 = vmul.f32 %v5130, %v707
        %v5155 = vmul.f32 %v5132, %v707
        %v5156 = vmul.f32 %v5134, %v707
        %v5157 = vmul.f32 %v5136, %v707
        %v5158 = vmul.f32 %v5138, %v707
        %v5159 = vmul.f32 %v5140, %v707
        %v5160 = vmul.f32 %v5142, %v707
        %v5161 = vmul.f32 %v5144, %v707
        %v5162 = vmul.f32 %v5146, %v707
        %v5163 = vadd.f32 %v5147, 1e-05
        %v5164 = vadd.f32 %v5148, 1e-05
        %v5165 = vadd.f32 %v5149, 1e-05
        %v5166 = vadd.f32 %v5150, 1e-05
        %v5167 = vadd.f32 %v5151, 1e-05
        %v5168 = vadd.f32 %v5152, 1e-05
        %v5169 = vadd.f32 %v5153, 1e-05
        %v5170 = vadd.f32 %v5154, 1e-05
        %v5171 = vadd.f32 %v5155, 1e-05
        %v5172 = vadd.f32 %v5156, 1e-05
        %v5173 = vadd.f32 %v5157, 1e-05
        %v5174 = vadd.f32 %v5158, 1e-05
        %v5175 = vadd.f32 %v5159, 1e-05
        %v5176 = vadd.f32 %v5160, 1e-05
        %v5177 = vadd.f32 %v5161, 1e-05
        %v5178 = vadd.f32 %v5162, 1e-05
        %v5179 = vrsqrt.pop %v5163
        %v5180 = vmul.f32 %v5179, %v5163
        %v5181 = vmul.f32 %v5180, %v5179
        %v5182 = vmul.f32 0.5, %v5181
        %v5183 = vsub.f32 1.5, %v5182
        %v5184 = vmul.f32 %v5179, %v5183
        %vm5185 = vweird.f32 %v5163
        %vm5186 = vweird.f32 %v5179
        %vm5187 = vmor %vm5185, %vm5186
        %v5188 = vsel %vm5187, %v5179, %v5184
        %v5189 = vrsqrt.pop %v5164
        %v5190 = vmul.f32 %v5189, %v5164
        %v5191 = vmul.f32 %v5190, %v5189
        %v5192 = vmul.f32 0.5, %v5191
        %v5193 = vsub.f32 1.5, %v5192
        %v5194 = vmul.f32 %v5189, %v5193
        %vm5195 = vweird.f32 %v5164
        %vm5196 = vweird.f32 %v5189
        %vm5197 = vmor %vm5195, %vm5196
        %v5198 = vsel %vm5197, %v5189, %v5194
        %v5199 = vrsqrt.pop %v5165
        %v5200 = vmul.f32 %v5199, %v5165
        %v5201 = vmul.f32 %v5200, %v5199
        %v5202 = vmul.f32 0.5, %v5201
        %v5203 = vsub.f32 1.5, %v5202
        %v5204 = vmul.f32 %v5199, %v5203
        %vm5205 = vweird.f32 %v5165
        %vm5206 = vweird.f32 %v5199
        %vm5207 = vmor %vm5205, %vm5206
        %v5208 = vsel %vm5207, %v5199, %v5204
        %v5209 = vrsqrt.pop %v5166
        %v5210 = vmul.f32 %v5209, %v5166
        %v5211 = vmul.f32 %v5210, %v5209
        %v5212 = vmul.f32 0.5, %v5211
        %v5213 = vsub.f32 1.5, %v5212
        %v5214 = vmul.f32 %v5209, %v5213
        %vm5215 = vweird.f32 %v5166
        %vm5216 = vweird.f32 %v5209
        %vm5217 = vmor %vm5215, %vm5216
        %v5218 = vsel %vm5217, %v5209, %v5214
        %v5219 = vrsqrt.pop %v5167
        %v5220 = vmul.f32 %v5219, %v5167
        %v5221 = vmul.f32 %v5220, %v5219
        %v5222 = vmul.f32 0.5, %v5221
        %v5223 = vsub.f32 1.5, %v5222
        %v5224 = vmul.f32 %v5219, %v5223
        %vm5225 = vweird.f32 %v5167
        %vm5226 = vweird.f32 %v5219
        %vm5227 = vmor %vm5225, %vm5226
        %v5228 = vsel %vm5227, %v5219, %v5224
        %v5229 = vrsqrt.pop %v5168
        %v5230 = vmul.f32 %v5229, %v5168
        %v5231 = vmul.f32 %v5230, %v5229
        %v5232 = vmul.f32 0.5, %v5231
        %v5233 = vsub.f32 1.5, %v5232
        %v5234 = vmul.f32 %v5229, %v5233
        %vm5235 = vweird.f32 %v5168
        %vm5236 = vweird.f32 %v5229
        %vm5237 = vmor %vm5235, %vm5236
        %v5238 = vsel %vm5237, %v5229, %v5234
        %v5239 = vrsqrt.pop %v5169
        %v5240 = vmul.f32 %v5239, %v5169
        %v5241 = vmul.f32 %v5240, %v5239
        %v5242 = vmul.f32 0.5, %v5241
        %v5243 = vsub.f32 1.5, %v5242
        %v5244 = vmul.f32 %v5239, %v5243
        %vm5245 = vweird.f32 %v5169
        %vm5246 = vweird.f32 %v5239
        %vm5247 = vmor %vm5245, %vm5246
        %v5248 = vsel %vm5247, %v5239, %v5244
        %v5249 = vrsqrt.pop %v5170
        %v5250 = vmul.f32 %v5249, %v5170
        %v5251 = vmul.f32 %v5250, %v5249
        %v5252 = vmul.f32 0.5, %v5251
        %v5253 = vsub.f32 1.5, %v5252
        %v5254 = vmul.f32 %v5249, %v5253
        %vm5255 = vweird.f32 %v5170
        %vm5256 = vweird.f32 %v5249
        %vm5257 = vmor %vm5255, %vm5256
        %v5258 = vsel %vm5257, %v5249, %v5254
        %v5259 = vrsqrt.pop %v5171
        %v5260 = vmul.f32 %v5259, %v5171
        %v5261 = vmul.f32 %v5260, %v5259
        %v5262 = vmul.f32 0.5, %v5261
        %v5263 = vsub.f32 1.5, %v5262
        %v5264 = vmul.f32 %v5259, %v5263
        %vm5265 = vweird.f32 %v5171
        %vm5266 = vweird.f32 %v5259
        %vm5267 = vmor %vm5265, %vm5266
        %v5268 = vsel %vm5267, %v5259, %v5264
        %v5269 = vrsqrt.pop %v5172
        %v5270 = vmul.f32 %v5269, %v5172
        %v5271 = vmul.f32 %v5270, %v5269
        %v5272 = vmul.f32 0.5, %v5271
        %v5273 = vsub.f32 1.5, %v5272
        %v5274 = vmul.f32 %v5269, %v5273
        %vm5275 = vweird.f32 %v5172
        %vm5276 = vweird.f32 %v5269
        %vm5277 = vmor %vm5275, %vm5276
        %v5278 = vsel %vm5277, %v5269, %v5274
        %v5279 = vrsqrt.pop %v5173
        %v5280 = vmul.f32 %v5279, %v5173
        %v5281 = vmul.f32 %v5280, %v5279
        %v5282 = vmul.f32 0.5, %v5281
        %v5283 = vsub.f32 1.5, %v5282
        %v5284 = vmul.f32 %v5279, %v5283
        %vm5285 = vweird.f32 %v5173
        %vm5286 = vweird.f32 %v5279
        %vm5287 = vmor %vm5285, %vm5286
        %v5288 = vsel %vm5287, %v5279, %v5284
        %v5289 = vrsqrt.pop %v5174
        %v5290 = vmul.f32 %v5289, %v5174
        %v5291 = vmul.f32 %v5290, %v5289
        %v5292 = vmul.f32 0.5, %v5291
        %v5293 = vsub.f32 1.5, %v5292
        %v5294 = vmul.f32 %v5289, %v5293
        %vm5295 = vweird.f32 %v5174
        %vm5296 = vweird.f32 %v5289
        %vm5297 = vmor %vm5295, %vm5296
        %v5298 = vsel %vm5297, %v5289, %v5294
        %v5299 = vrsqrt.pop %v5175
        %v5300 = vmul.f32 %v5299, %v5175
        %v5301 = vmul.f32 %v5300, %v5299
        %v5302 = vmul.f32 0.5, %v5301
        %v5303 = vsub.f32 1.5, %v5302
        %v5304 = vmul.f32 %v5299, %v5303
        %vm5305 = vweird.f32 %v5175
        %vm5306 = vweird.f32 %v5299
        %vm5307 = vmor %vm5305, %vm5306
        %v5308 = vsel %vm5307, %v5299, %v5304
        %v5309 = vrsqrt.pop %v5176
        %v5310 = vmul.f32 %v5309, %v5176
        %v5311 = vmul.f32 %v5310, %v5309
        %v5312 = vmul.f32 0.5, %v5311
        %v5313 = vsub.f32 1.5, %v5312
        %v5314 = vmul.f32 %v5309, %v5313
        %vm5315 = vweird.f32 %v5176
        %vm5316 = vweird.f32 %v5309
        %vm5317 = vmor %vm5315, %vm5316
        %v5318 = vsel %vm5317, %v5309, %v5314
        %v5319 = vrsqrt.pop %v5177
        %v5320 = vmul.f32 %v5319, %v5177
        %v5321 = vmul.f32 %v5320, %v5319
        %v5322 = vmul.f32 0.5, %v5321
        %v5323 = vsub.f32 1.5, %v5322
        %v5324 = vmul.f32 %v5319, %v5323
        %vm5325 = vweird.f32 %v5177
        %vm5326 = vweird.f32 %v5319
        %vm5327 = vmor %vm5325, %vm5326
        %v5328 = vsel %vm5327, %v5319, %v5324
        %v5329 = vrsqrt.pop %v5178
        %v5330 = vmul.f32 %v5329, %v5178
        %v5331 = vmul.f32 %v5330, %v5329
        %v5332 = vmul.f32 0.5, %v5331
        %v5333 = vsub.f32 1.5, %v5332
        %v5334 = vmul.f32 %v5329, %v5333
        %vm5335 = vweird.f32 %v5178
        %vm5336 = vweird.f32 %v5329
        %vm5337 = vmor %vm5335, %vm5336
        %v5338 = vsel %vm5337, %v5329, %v5334
        %v5339 = vmul.f32 %v5083, %v5188
        %v5340 = vmul.f32 %v5084, %v5198
        %v5341 = vmul.f32 %v5085, %v5208
        %v5342 = vmul.f32 %v5086, %v5218
        %v5343 = vmul.f32 %v5087, %v5228
        %v5344 = vmul.f32 %v5088, %v5238
        %v5345 = vmul.f32 %v5089, %v5248
        %v5346 = vmul.f32 %v5090, %v5258
        %v5347 = vmul.f32 %v5091, %v5268
        %v5348 = vmul.f32 %v5092, %v5278
        %v5349 = vmul.f32 %v5093, %v5288
        %v5350 = vmul.f32 %v5094, %v5298
        %v5351 = vmul.f32 %v5095, %v5308
        %v5352 = vmul.f32 %v5096, %v5318
        %v5353 = vmul.f32 %v5097, %v5328
        %v5354 = vmul.f32 %v5098, %v5338
        %v5356 = vperm.slane %v5033, 0
        %v5358 = vmul.f32 %v5339, %v5356
        %v5359 = vmul.f32 %v5340, %v5356
        %v5360 = vmul.f32 %v5341, %v5356
        %v5361 = vmul.f32 %v5342, %v5356
        %v5362 = vmul.f32 %v5343, %v5356
        %v5363 = vmul.f32 %v5344, %v5356
        %v5364 = vmul.f32 %v5345, %v5356
        %v5365 = vmul.f32 %v5346, %v5356
        %v5366 = vmul.f32 %v5347, %v5356
        %v5367 = vmul.f32 %v5348, %v5356
        %v5368 = vmul.f32 %v5349, %v5356
        %v5369 = vmul.f32 %v5350, %v5356
        %v5370 = vmul.f32 %v5351, %v5356
        %v5371 = vmul.f32 %v5352, %v5356
        %v5372 = vmul.f32 %v5353, %v5356
        %v5373 = vmul.f32 %v5354, %v5356
        %v5375 = vperm.slane %v5034, 0
        %v5377 = vadd.f32 %v5358, %v5375
        %v5378 = vadd.f32 %v5359, %v5375
        %v5379 = vadd.f32 %v5360, %v5375
        %v5380 = vadd.f32 %v5361, %v5375
        %v5381 = vadd.f32 %v5362, %v5375
        %v5382 = vadd.f32 %v5363, %v5375
        %v5383 = vadd.f32 %v5364, %v5375
        %v5384 = vadd.f32 %v5365, %v5375
        %v5385 = vadd.f32 %v5366, %v5375
        %v5386 = vadd.f32 %v5367, %v5375
        %v5387 = vadd.f32 %v5368, %v5375
        %v5388 = vadd.f32 %v5369, %v5375
        %v5389 = vadd.f32 %v5370, %v5375
        %v5390 = vadd.f32 %v5371, %v5375
        %v5391 = vadd.f32 %v5372, %v5375
        %v5392 = vadd.f32 %v5373, %v5375
        %v5393 = vpack.c.bf16 %v5378, %v5377
        %v5394 = vpack.c.bf16 %v5380, %v5379
        %v5395 = vpack.c.bf16 %v5382, %v5381
        %v5396 = vpack.c.bf16 %v5384, %v5383
        %v5397 = vpack.c.bf16 %v5386, %v5385
        %v5398 = vpack.c.bf16 %v5388, %v5387
        %v5399 = vpack.c.bf16 %v5390, %v5389
        %v5400 = vpack.c.bf16 %v5392, %v5391
        %v5401 = vld [vmem:[%s9] sm:$0xff]
        %v5402 = vld [vmem:[%s9 + $0x8] sm:$0xff]
        %v5403 = vld [vmem:[%s9 + $0x10] sm:$0xff]
        %v5404 = vld [vmem:[%s9 + $0x18] sm:$0xff]
        %v5405 = vld [vmem:[%s9 + $0x20] sm:$0xff]
        %v5406 = vld [vmem:[%s9 + $0x28] sm:$0xff]
        %v5407 = vld [vmem:[%s9 + $0x30] sm:$0xff]
        %v5408 = vld [vmem:[%s9 + $0x38] sm:$0xff]
        %v5409 = vld [vmem:[%s9 + $0x40] sm:$0xff]
        %v5410 = vld [vmem:[%s9 + $0x48] sm:$0xff]
        %v5411 = vld [vmem:[%s9 + $0x50] sm:$0xff]
        %v5412 = vld [vmem:[%s9 + $0x58] sm:$0xff]
        %v5413 = vld [vmem:[%s9 + $0x60] sm:$0xff]
        %v5414 = vld [vmem:[%s9 + $0x68] sm:$0xff]
        %v5415 = vld [vmem:[%s9 + $0x70] sm:$0xff]
        %v5416 = vld [vmem:[%s9 + $0x78] sm:$0xff]
        %v5417 = vld [vmem:[%s9 + $0x80] sm:$0xff]
        %v5418 = vld [vmem:[%s9 + $0x88] sm:$0xff]
        %v5419 = vld [vmem:[%s9 + $0x90] sm:$0xff]
        %v5420 = vld [vmem:[%s9 + $0x98] sm:$0xff]
        %v5421 = vld [vmem:[%s9 + $0xa0] sm:$0xff]
        %v5422 = vld [vmem:[%s9 + $0xa8] sm:$0xff]
        %v5423 = vld [vmem:[%s9 + $0xb0] sm:$0xff]
        %v5424 = vld [vmem:[%s9 + $0xb8] sm:$0xff]
        %v5425 = vld [vmem:[%s9 + $0xc0] sm:$0xff]
        %v5426 = vld [vmem:[%s9 + $0xc8] sm:$0xff]
        %v5427 = vld [vmem:[%s9 + $0xd0] sm:$0xff]
        %v5428 = vld [vmem:[%s9 + $0xd8] sm:$0xff]
        %v5429 = vld [vmem:[%s9 + $0xe0] sm:$0xff]
        %v5430 = vld [vmem:[%s9 + $0xe8] sm:$0xff]
        %v5431 = vld [vmem:[%s9 + $0xf0] sm:$0xff]
        %v5432 = vld [vmem:[%s9 + $0xf8] sm:$0xff]
        %v5433 = vld [vmem:[%s10] sm:$0xf]
        %v5435 = vperm.slane %v5433, 0
        %v5436 = vperm.slane %v5433, 1
        %v5437 = vperm.slane %v5433, 2
        %v5438 = vperm.slane %v5433, 3
        %v5475 = vunpack.c.l.b16 %v5401
        %v5476 = vunpack.c.h.b16 %v5401
        %v5477 = vunpack.c.l.b16 %v5402
        %v5478 = vunpack.c.h.b16 %v5402
        %v5479 = vunpack.c.l.b16 %v5403
        %v5480 = vunpack.c.h.b16 %v5403
        %v5481 = vunpack.c.l.b16 %v5404
        %v5482 = vunpack.c.h.b16 %v5404
        %v5483 = vunpack.c.l.b16 %v5405
        %v5484 = vunpack.c.h.b16 %v5405
        %v5485 = vunpack.c.l.b16 %v5406
        %v5486 = vunpack.c.h.b16 %v5406
        %v5487 = vunpack.c.l.b16 %v5407
        %v5488 = vunpack.c.h.b16 %v5407
        %v5489 = vunpack.c.l.b16 %v5408
        %v5490 = vunpack.c.h.b16 %v5408
        %v5491 = vunpack.c.l.b16 %v5409
        %v5492 = vunpack.c.h.b16 %v5409
        %v5493 = vunpack.c.l.b16 %v5410
        %v5494 = vunpack.c.h.b16 %v5410
        %v5495 = vunpack.c.l.b16 %v5411
        %v5496 = vunpack.c.h.b16 %v5411
        %v5497 = vunpack.c.l.b16 %v5412
        %v5498 = vunpack.c.h.b16 %v5412
        %v5499 = vunpack.c.l.b16 %v5413
        %v5500 = vunpack.c.h.b16 %v5413
        %v5501 = vunpack.c.l.b16 %v5414
        %v5502 = vunpack.c.h.b16 %v5414
        %v5503 = vunpack.c.l.b16 %v5415
        %v5504 = vunpack.c.h.b16 %v5415
        %v5505 = vunpack.c.l.b16 %v5416
        %v5506 = vunpack.c.h.b16 %v5416
        %v5507 = vunpack.c.l.b16 %v5417
        %v5508 = vunpack.c.h.b16 %v5417
        %v5509 = vunpack.c.l.b16 %v5418
        %v5510 = vunpack.c.h.b16 %v5418
        %v5511 = vunpack.c.l.b16 %v5419
        %v5512 = vunpack.c.h.b16 %v5419
        %v5513 = vunpack.c.l.b16 %v5420
        %v5514 = vunpack.c.h.b16 %v5420
        %v5515 = vunpack.c.l.b16 %v5421
        %v5516 = vunpack.c.h.b16 %v5421
        %v5517 = vunpack.c.l.b16 %v5422
        %v5518 = vunpack.c.h.b16 %v5422
        %v5519 = vunpack.c.l.b16 %v5423
        %v5520 = vunpack.c.h.b16 %v5423
        %v5521 = vunpack.c.l.b16 %v5424
        %v5522 = vunpack.c.h.b16 %v5424
        %v5523 = vunpack.c.l.b16 %v5425
        %v5524 = vunpack.c.h.b16 %v5425
        %v5525 = vunpack.c.l.b16 %v5426
        %v5526 = vunpack.c.h.b16 %v5426
        %v5527 = vunpack.c.l.b16 %v5427
        %v5528 = vunpack.c.h.b16 %v5427
        %v5529 = vunpack.c.l.b16 %v5428
        %v5530 = vunpack.c.h.b16 %v5428
        %v5531 = vunpack.c.l.b16 %v5429
        %v5532 = vunpack.c.h.b16 %v5429
        %v5533 = vunpack.c.l.b16 %v5430
        %v5534 = vunpack.c.h.b16 %v5430
        %v5535 = vunpack.c.l.b16 %v5431
        %v5536 = vunpack.c.h.b16 %v5431
        %v5537 = vunpack.c.l.b16 %v5432
        %v5538 = vunpack.c.h.b16 %v5432
        %v5539 = vpack.c.b16 %v5479, %v5475
        %v5540 = vpack.c.b16 %v5480, %v5476
        %v5541 = vpack.c.b16 %v5481, %v5477
        %v5542 = vpack.c.b16 %v5482, %v5478
        %v5543 = vpack.c.b16 %v5487, %v5483
        %v5544 = vpack.c.b16 %v5488, %v5484
        %v5545 = vpack.c.b16 %v5489, %v5485
        %v5546 = vpack.c.b16 %v5490, %v5486
        %v5547 = vpack.c.b16 %v5495, %v5491
        %v5548 = vpack.c.b16 %v5496, %v5492
        %v5549 = vpack.c.b16 %v5497, %v5493
        %v5550 = vpack.c.b16 %v5498, %v5494
        %v5551 = vpack.c.b16 %v5503, %v5499
        %v5552 = vpack.c.b16 %v5504, %v5500
        %v5553 = vpack.c.b16 %v5505, %v5501
        %v5554 = vpack.c.b16 %v5506, %v5502
        %v5555 = vpack.c.b16 %v5511, %v5507
        %v5556 = vpack.c.b16 %v5512, %v5508
        %v5557 = vpack.c.b16 %v5513, %v5509
        %v5558 = vpack.c.b16 %v5514, %v5510
        %v5559 = vpack.c.b16 %v5519, %v5515
        %v5560 = vpack.c.b16 %v5520, %v5516
        %v5561 = vpack.c.b16 %v5521, %v5517
        %v5562 = vpack.c.b16 %v5522, %v5518
        %v5563 = vpack.c.b16 %v5527, %v5523
        %v5564 = vpack.c.b16 %v5528, %v5524
        %v5565 = vpack.c.b16 %v5529, %v5525
        %v5566 = vpack.c.b16 %v5530, %v5526
        %v5567 = vpack.c.b16 %v5535, %v5531
        %v5568 = vpack.c.b16 %v5536, %v5532
        %v5569 = vpack.c.b16 %v5537, %v5533
        %v5570 = vpack.c.b16 %v5538, %v5534
        %5603 = vmatpush.bf16.msra.mxu0 %v5567
        %5604 = vmatpush.bf16.msra.mxu0 %v5563
        %5605 = vmatpush.bf16.msra.mxu0 %v5559
        %5606 = vmatpush.bf16.msra.mxu0 %v5555
        %5607 = vmatpush.bf16.msra.mxu0 %v5551
        %5608 = vmatpush.bf16.msra.mxu0 %v5547
        %5609 = vmatpush.bf16.msra.mxu0 %v5543
        %5610 = vmatpush.bf16.msra.mxu0 %v5539
        %5611 = vmatmul.bf16.gmra.mxu0 %v5393
        %v5612 = vpop.f32.mrf.mxu0
        %v5613 = vadd.f32 %v5435, %v5612
        %v5614 = vpop.f32.mrf.mxu0
        %v5615 = vadd.f32 %v5435, %v5614
        %5616 = vmatmul.bf16.gmra.mxu0 %v5394
        %v5617 = vpop.f32.mrf.mxu0
        %v5618 = vadd.f32 %v5435, %v5617
        %v5619 = vpop.f32.mrf.mxu0
        %v5620 = vadd.f32 %v5435, %v5619
        %5621 = vmatmul.bf16.gmra.mxu0 %v5395
        %v5622 = vpop.f32.mrf.mxu0
        %v5623 = vadd.f32 %v5435, %v5622
        %v5624 = vpop.f32.mrf.mxu0
        %v5625 = vadd.f32 %v5435, %v5624
        %5626 = vmatmul.bf16.gmra.mxu0 %v5396
        %v5627 = vpop.f32.mrf.mxu0
        %v5628 = vadd.f32 %v5435, %v5627
        %v5629 = vpop.f32.mrf.mxu0
        %v5630 = vadd.f32 %v5435, %v5629
        %5631 = vmatmul.bf16.gmra.mxu0 %v5397
        %v5632 = vpop.f32.mrf.mxu0
        %v5633 = vadd.f32 %v5435, %v5632
        %v5634 = vpop.f32.mrf.mxu0
        %v5635 = vadd.f32 %v5435, %v5634
        %5636 = vmatmul.bf16.gmra.mxu0 %v5398
        %v5637 = vpop.f32.mrf.mxu0
        %v5638 = vadd.f32 %v5435, %v5637
        %v5639 = vpop.f32.mrf.mxu0
        %v5640 = vadd.f32 %v5435, %v5639
        %5641 = vmatmul.bf16.gmra.mxu0 %v5399
        %v5642 = vpop.f32.mrf.mxu0
        %v5643 = vadd.f32 %v5435, %v5642
        %v5644 = vpop.f32.mrf.mxu0
        %v5645 = vadd.f32 %v5435, %v5644
        %5646 = vmatmul.bf16.gmra.mxu0 %v5400
        %v5647 = vpop.f32.mrf.mxu0
        %v5648 = vadd.f32 %v5435, %v5647
        %v5649 = vpop.f32.mrf.mxu0
        %v5650 = vadd.f32 %v5435, %v5649
        %5651 = vdwg.mxu0
        %5652 = vmatpush.bf16.msra.mxu0 %v5568
        %5653 = vmatpush.bf16.msra.mxu0 %v5564
        %5654 = vmatpush.bf16.msra.mxu0 %v5560
        %5655 = vmatpush.bf16.msra.mxu0 %v5556
        %5656 = vmatpush.bf16.msra.mxu0 %v5552
        %5657 = vmatpush.bf16.msra.mxu0 %v5548
        %5658 = vmatpush.bf16.msra.mxu0 %v5544
        %5659 = vmatpush.bf16.msra.mxu0 %v5540
        %5660 = vmatmul.bf16.gmra.mxu0 %v5393
        %v5661 = vpop.f32.mrf.mxu0
        %v5662 = vadd.f32 %v5436, %v5661
        %v5663 = vpop.f32.mrf.mxu0
        %v5664 = vadd.f32 %v5436, %v5663
        %5665 = vmatmul.bf16.gmra.mxu0 %v5394
        %v5666 = vpop.f32.mrf.mxu0
        %v5667 = vadd.f32 %v5436, %v5666
        %v5668 = vpop.f32.mrf.mxu0
        %v5669 = vadd.f32 %v5436, %v5668
        %5670 = vmatmul.bf16.gmra.mxu0 %v5395
        %v5671 = vpop.f32.mrf.mxu0
        %v5672 = vadd.f32 %v5436, %v5671
        %v5673 = vpop.f32.mrf.mxu0
        %v5674 = vadd.f32 %v5436, %v5673
        %5675 = vmatmul.bf16.gmra.mxu0 %v5396
        %v5676 = vpop.f32.mrf.mxu0
        %v5677 = vadd.f32 %v5436, %v5676
        %v5678 = vpop.f32.mrf.mxu0
        %v5679 = vadd.f32 %v5436, %v5678
        %5680 = vmatmul.bf16.gmra.mxu0 %v5397
        %v5681 = vpop.f32.mrf.mxu0
        %v5682 = vadd.f32 %v5436, %v5681
        %v5683 = vpop.f32.mrf.mxu0
        %v5684 = vadd.f32 %v5436, %v5683
        %5685 = vmatmul.bf16.gmra.mxu0 %v5398
        %v5686 = vpop.f32.mrf.mxu0
        %v5687 = vadd.f32 %v5436, %v5686
        %v5688 = vpop.f32.mrf.mxu0
        %v5689 = vadd.f32 %v5436, %v5688
        %5690 = vmatmul.bf16.gmra.mxu0 %v5399
        %v5691 = vpop.f32.mrf.mxu0
        %v5692 = vadd.f32 %v5436, %v5691
        %v5693 = vpop.f32.mrf.mxu0
        %v5694 = vadd.f32 %v5436, %v5693
        %5695 = vmatmul.bf16.gmra.mxu0 %v5400
        %v5696 = vpop.f32.mrf.mxu0
        %v5697 = vadd.f32 %v5436, %v5696
        %v5698 = vpop.f32.mrf.mxu0
        %v5699 = vadd.f32 %v5436, %v5698
        %5700 = vdwg.mxu0
        %5701 = vmatpush.bf16.msra.mxu0 %v5569
        %5702 = vmatpush.bf16.msra.mxu0 %v5565
        %5703 = vmatpush.bf16.msra.mxu0 %v5561
        %5704 = vmatpush.bf16.msra.mxu0 %v5557
        %5705 = vmatpush.bf16.msra.mxu0 %v5553
        %5706 = vmatpush.bf16.msra.mxu0 %v5549
        %5707 = vmatpush.bf16.msra.mxu0 %v5545
        %5708 = vmatpush.bf16.msra.mxu0 %v5541
        %5709 = vmatmul.bf16.gmra.mxu0 %v5393
        %v5710 = vpop.f32.mrf.mxu0
        %v5711 = vadd.f32 %v5437, %v5710
        %v5712 = vpop.f32.mrf.mxu0
        %v5713 = vadd.f32 %v5437, %v5712
        %5714 = vmatmul.bf16.gmra.mxu0 %v5394
        %v5715 = vpop.f32.mrf.mxu0
        %v5716 = vadd.f32 %v5437, %v5715
        %v5717 = vpop.f32.mrf.mxu0
        %v5718 = vadd.f32 %v5437, %v5717
        %5719 = vmatmul.bf16.gmra.mxu0 %v5395
        %v5720 = vpop.f32.mrf.mxu0
        %v5721 = vadd.f32 %v5437, %v5720
        %v5722 = vpop.f32.mrf.mxu0
        %v5723 = vadd.f32 %v5437, %v5722
        %5724 = vmatmul.bf16.gmra.mxu0 %v5396
        %v5725 = vpop.f32.mrf.mxu0
        %v5726 = vadd.f32 %v5437, %v5725
        %v5727 = vpop.f32.mrf.mxu0
        %v5728 = vadd.f32 %v5437, %v5727
        %5729 = vmatmul.bf16.gmra.mxu0 %v5397
        %v5730 = vpop.f32.mrf.mxu0
        %v5731 = vadd.f32 %v5437, %v5730
        %v5732 = vpop.f32.mrf.mxu0
        %v5733 = vadd.f32 %v5437, %v5732
        %5734 = vmatmul.bf16.gmra.mxu0 %v5398
        %v5735 = vpop.f32.mrf.mxu0
        %v5736 = vadd.f32 %v5437, %v5735
        %v5737 = vpop.f32.mrf.mxu0
        %v5738 = vadd.f32 %v5437, %v5737
        %5739 = vmatmul.bf16.gmra.mxu0 %v5399
        %v5740 = vpop.f32.mrf.mxu0
        %v5741 = vadd.f32 %v5437, %v5740
        %v5742 = vpop.f32.mrf.mxu0
        %v5743 = vadd.f32 %v5437, %v5742
        %5744 = vmatmul.bf16.gmra.mxu0 %v5400
        %v5745 = vpop.f32.mrf.mxu0
        %v5746 = vadd.f32 %v5437, %v5745
        %v5747 = vpop.f32.mrf.mxu0
        %v5748 = vadd.f32 %v5437, %v5747
        %5749 = vdwg.mxu0
        %5750 = vmatpush.bf16.msra.mxu0 %v5570
        %5751 = vmatpush.bf16.msra.mxu0 %v5566
        %5752 = vmatpush.bf16.msra.mxu0 %v5562
        %5753 = vmatpush.bf16.msra.mxu0 %v5558
        %5754 = vmatpush.bf16.msra.mxu0 %v5554
        %5755 = vmatpush.bf16.msra.mxu0 %v5550
        %5756 = vmatpush.bf16.msra.mxu0 %v5546
        %5757 = vmatpush.bf16.msra.mxu0 %v5542
        %5758 = vmatmul.bf16.gmra.mxu0 %v5393
        %v5759 = vpop.f32.mrf.mxu0
        %v5760 = vadd.f32 %v5438, %v5759
        %v5761 = vpop.f32.mrf.mxu0
        %v5762 = vadd.f32 %v5438, %v5761
        %5763 = vmatmul.bf16.gmra.mxu0 %v5394
        %v5764 = vpop.f32.mrf.mxu0
        %v5765 = vadd.f32 %v5438, %v5764
        %v5766 = vpop.f32.mrf.mxu0
        %v5767 = vadd.f32 %v5438, %v5766
        %5768 = vmatmul.bf16.gmra.mxu0 %v5395
        %v5769 = vpop.f32.mrf.mxu0
        %v5770 = vadd.f32 %v5438, %v5769
        %v5771 = vpop.f32.mrf.mxu0
        %v5772 = vadd.f32 %v5438, %v5771
        %5773 = vmatmul.bf16.gmra.mxu0 %v5396
        %v5774 = vpop.f32.mrf.mxu0
        %v5775 = vadd.f32 %v5438, %v5774
        %v5776 = vpop.f32.mrf.mxu0
        %v5777 = vadd.f32 %v5438, %v5776
        %5778 = vmatmul.bf16.gmra.mxu0 %v5397
        %v5779 = vpop.f32.mrf.mxu0
        %v5780 = vadd.f32 %v5438, %v5779
        %v5781 = vpop.f32.mrf.mxu0
        %v5782 = vadd.f32 %v5438, %v5781
        %5783 = vmatmul.bf16.gmra.mxu0 %v5398
        %v5784 = vpop.f32.mrf.mxu0
        %v5785 = vadd.f32 %v5438, %v5784
        %v5786 = vpop.f32.mrf.mxu0
        %v5787 = vadd.f32 %v5438, %v5786
        %5788 = vmatmul.bf16.gmra.mxu0 %v5399
        %v5789 = vpop.f32.mrf.mxu0
        %v5790 = vadd.f32 %v5438, %v5789
        %v5791 = vpop.f32.mrf.mxu0
        %v5792 = vadd.f32 %v5438, %v5791
        %5793 = vmatmul.bf16.gmra.mxu0 %v5400
        %v5794 = vpop.f32.mrf.mxu0
        %v5795 = vadd.f32 %v5438, %v5794
        %v5796 = vpop.f32.mrf.mxu0
        %v5797 = vadd.f32 %v5438, %v5796
        %5798 = vdwg.mxu0
        %v5799 = vmul.f32 %v5613, 0.5
        %v5800 = vmul.f32 %v5662, 0.5
        %v5801 = vmul.f32 %v5711, 0.5
        %v5802 = vmul.f32 %v5760, 0.5
        %v5803 = vmul.f32 %v5615, 0.5
        %v5804 = vmul.f32 %v5664, 0.5
        %v5805 = vmul.f32 %v5713, 0.5
        %v5806 = vmul.f32 %v5762, 0.5
        %v5807 = vmul.f32 %v5618, 0.5
        %v5808 = vmul.f32 %v5667, 0.5
        %v5809 = vmul.f32 %v5716, 0.5
        %v5810 = vmul.f32 %v5765, 0.5
        %v5811 = vmul.f32 %v5620, 0.5
        %v5812 = vmul.f32 %v5669, 0.5
        %v5813 = vmul.f32 %v5718, 0.5
        %v5814 = vmul.f32 %v5767, 0.5
        %v5815 = vmul.f32 %v5623, 0.5
        %v5816 = vmul.f32 %v5672, 0.5
        %v5817 = vmul.f32 %v5721, 0.5
        %v5818 = vmul.f32 %v5770, 0.5
        %v5819 = vmul.f32 %v5625, 0.5
        %v5820 = vmul.f32 %v5674, 0.5
        %v5821 = vmul.f32 %v5723, 0.5
        %v5822 = vmul.f32 %v5772, 0.5
        %v5823 = vmul.f32 %v5628, 0.5
        %v5824 = vmul.f32 %v5677, 0.5
        %v5825 = vmul.f32 %v5726, 0.5
        %v5826 = vmul.f32 %v5775, 0.5
        %v5827 = vmul.f32 %v5630, 0.5
        %v5828 = vmul.f32 %v5679, 0.5
        %v5829 = vmul.f32 %v5728, 0.5
        %v5830 = vmul.f32 %v5777, 0.5
        %v5831 = vmul.f32 %v5633, 0.5
        %v5832 = vmul.f32 %v5682, 0.5
        %v5833 = vmul.f32 %v5731, 0.5
        %v5834 = vmul.f32 %v5780, 0.5
        %v5835 = vmul.f32 %v5635, 0.5
        %v5836 = vmul.f32 %v5684, 0.5
        %v5837 = vmul.f32 %v5733, 0.5
        %v5838 = vmul.f32 %v5782, 0.5
        %v5839 = vmul.f32 %v5638, 0.5
        %v5840 = vmul.f32 %v5687, 0.5
        %v5841 = vmul.f32 %v5736, 0.5
        %v5842 = vmul.f32 %v5785, 0.5
        %v5843 = vmul.f32 %v5640, 0.5
        %v5844 = vmul.f32 %v5689, 0.5
        %v5845 = vmul.f32 %v5738, 0.5
        %v5846 = vmul.f32 %v5787, 0.5
        %v5847 = vmul.f32 %v5643, 0.5
        %v5848 = vmul.f32 %v5692, 0.5
        %v5849 = vmul.f32 %v5741, 0.5
        %v5850 = vmul.f32 %v5790, 0.5
        %v5851 = vmul.f32 %v5645, 0.5
        %v5852 = vmul.f32 %v5694, 0.5
        %v5853 = vmul.f32 %v5743, 0.5
        %v5854 = vmul.f32 %v5792, 0.5
        %v5855 = vmul.f32 %v5648, 0.5
        %v5856 = vmul.f32 %v5697, 0.5
        %v5857 = vmul.f32 %v5746, 0.5
        %v5858 = vmul.f32 %v5795, 0.5
        %v5859 = vmul.f32 %v5650, 0.5
        %v5860 = vmul.f32 %v5699, 0.5
        %v5861 = vmul.f32 %v5748, 0.5
        %v5862 = vmul.f32 %v5797, 0.5
        %v5863 = vmul.f32 %v5613, 0.044715
        %v5864 = vmul.f32 %v5662, 0.044715
        %v5865 = vmul.f32 %v5711, 0.044715
        %v5866 = vmul.f32 %v5760, 0.044715
        %v5867 = vmul.f32 %v5615, 0.044715
        %v5868 = vmul.f32 %v5664, 0.044715
        %v5869 = vmul.f32 %v5713, 0.044715
        %v5870 = vmul.f32 %v5762, 0.044715
        %v5871 = vmul.f32 %v5618, 0.044715
        %v5872 = vmul.f32 %v5667, 0.044715
        %v5873 = vmul.f32 %v5716, 0.044715
        %v5874 = vmul.f32 %v5765, 0.044715
        %v5875 = vmul.f32 %v5620, 0.044715
        %v5876 = vmul.f32 %v5669, 0.044715
        %v5877 = vmul.f32 %v5718, 0.044715
        %v5878 = vmul.f32 %v5767, 0.044715
        %v5879 = vmul.f32 %v5623, 0.044715
        %v5880 = vmul.f32 %v5672, 0.044715
        %v5881 = vmul.f32 %v5721, 0.044715
        %v5882 = vmul.f32 %v5770, 0.044715
        %v5883 = vmul.f32 %v5625, 0.044715
        %v5884 = vmul.f32 %v5674, 0.044715
        %v5885 = vmul.f32 %v5723, 0.044715
        %v5886 = vmul.f32 %v5772, 0.044715
        %v5887 = vmul.f32 %v5628, 0.044715
        %v5888 = vmul.f32 %v5677, 0.044715
        %v5889 = vmul.f32 %v5726, 0.044715
        %v5890 = vmul.f32 %v5775, 0.044715
        %v5891 = vmul.f32 %v5630, 0.044715
        %v5892 = vmul.f32 %v5679, 0.044715
        %v5893 = vmul.f32 %v5728, 0.044715
        %v5894 = vmul.f32 %v5777, 0.044715
        %v5895 = vmul.f32 %v5633, 0.044715
        %v5896 = vmul.f32 %v5682, 0.044715
        %v5897 = vmul.f32 %v5731, 0.044715
        %v5898 = vmul.f32 %v5780, 0.044715
        %v5899 = vmul.f32 %v5635, 0.044715
        %v5900 = vmul.f32 %v5684, 0.044715
        %v5901 = vmul.f32 %v5733, 0.044715
        %v5902 = vmul.f32 %v5782, 0.044715
        %v5903 = vmul.f32 %v5638, 0.044715
        %v5904 = vmul.f32 %v5687, 0.044715
        %v5905 = vmul.f32 %v5736, 0.044715
        %v5906 = vmul.f32 %v5785, 0.044715
        %v5907 = vmul.f32 %v5640, 0.044715
        %v5908 = vmul.f32 %v5689, 0.044715
        %v5909 = vmul.f32 %v5738, 0.044715
        %v5910 = vmul.f32 %v5787, 0.044715
        %v5911 = vmul.f32 %v5643, 0.044715
        %v5912 = vmul.f32 %v5692, 0.044715
        %v5913 = vmul.f32 %v5741, 0.044715
        %v5914 = vmul.f32 %v5790, 0.044715
        %v5915 = vmul.f32 %v5645, 0.044715
        %v5916 = vmul.f32 %v5694, 0.044715
        %v5917 = vmul.f32 %v5743, 0.044715
        %v5918 = vmul.f32 %v5792, 0.044715
        %v5919 = vmul.f32 %v5648, 0.044715
        %v5920 = vmul.f32 %v5697, 0.044715
        %v5921 = vmul.f32 %v5746, 0.044715
        %v5922 = vmul.f32 %v5795, 0.044715
        %v5923 = vmul.f32 %v5650, 0.044715
        %v5924 = vmul.f32 %v5699, 0.044715
        %v5925 = vmul.f32 %v5748, 0.044715
        %v5926 = vmul.f32 %v5797, 0.044715
        %v5927 = vmul.f32 %v5863, %v5613
        %v5928 = vmul.f32 %v5864, %v5662
        %v5929 = vmul.f32 %v5865, %v5711
        %v5930 = vmul.f32 %v5866, %v5760
        %v5931 = vmul.f32 %v5867, %v5615
        %v5932 = vmul.f32 %v5868, %v5664
        %v5933 = vmul.f32 %v5869, %v5713
        %v5934 = vmul.f32 %v5870, %v5762
        %v5935 = vmul.f32 %v5871, %v5618
        %v5936 = vmul.f32 %v5872, %v5667
        %v5937 = vmul.f32 %v5873, %v5716
        %v5938 = vmul.f32 %v5874, %v5765
        %v5939 = vmul.f32 %v5875, %v5620
        %v5940 = vmul.f32 %v5876, %v5669
        %v5941 = vmul.f32 %v5877, %v5718
        %v5942 = vmul.f32 %v5878, %v5767
        %v5943 = vmul.f32 %v5879, %v5623
        %v5944 = vmul.f32 %v5880, %v5672
        %v5945 = vmul.f32 %v5881, %v5721
        %v5946 = vmul.f32 %v5882, %v5770
        %v5947 = vmul.f32 %v5883, %v5625
        %v5948 = vmul.f32 %v5884, %v5674
        %v5949 = vmul.f32 %v5885, %v5723
        %v5950 = vmul.f32 %v5886, %v5772
        %v5951 = vmul.f32 %v5887, %v5628
        %v5952 = vmul.f32 %v5888, %v5677
        %v5953 = vmul.f32 %v5889, %v5726
        %v5954 = vmul.f32 %v5890, %v5775
        %v5955 = vmul.f32 %v5891, %v5630
        %v5956 = vmul.f32 %v5892, %v5679
        %v5957 = vmul.f32 %v5893, %v5728
        %v5958 = vmul.f32 %v5894, %v5777
        %v5959 = vmul.f32 %v5895, %v5633
        %v5960 = vmul.f32 %v5896, %v5682
        %v5961 = vmul.f32 %v5897, %v5731
        %v5962 = vmul.f32 %v5898, %v5780
        %v5963 = vmul.f32 %v5899, %v5635
        %v5964 = vmul.f32 %v5900, %v5684
        %v5965 = vmul.f32 %v5901, %v5733
        %v5966 = vmul.f32 %v5902, %v5782
        %v5967 = vmul.f32 %v5903, %v5638
        %v5968 = vmul.f32 %v5904, %v5687
        %v5969 = vmul.f32 %v5905, %v5736
        %v5970 = vmul.f32 %v5906, %v5785
        %v5971 = vmul.f32 %v5907, %v5640
        %v5972 = vmul.f32 %v5908, %v5689
        %v5973 = vmul.f32 %v5909, %v5738
        %v5974 = vmul.f32 %v5910, %v5787
        %v5975 = vmul.f32 %v5911, %v5643
        %v5976 = vmul.f32 %v5912, %v5692
        %v5977 = vmul.f32 %v5913, %v5741
        %v5978 = vmul.f32 %v5914, %v5790
        %v5979 = vmul.f32 %v5915, %v5645
        %v5980 = vmul.f32 %v5916, %v5694
        %v5981 = vmul.f32 %v5917, %v5743
        %v5982 = vmul.f32 %v5918, %v5792
        %v5983 = vmul.f32 %v5919, %v5648
        %v5984 = vmul.f32 %v5920, %v5697
        %v5985 = vmul.f32 %v5921, %v5746
        %v5986 = vmul.f32 %v5922, %v5795
        %v5987 = vmul.f32 %v5923, %v5650
        %v5988 = vmul.f32 %v5924, %v5699
        %v5989 = vmul.f32 %v5925, %v5748
        %v5990 = vmul.f32 %v5926, %v5797
        %v5991 = vmul.f32 %v5927, %v5613
        %v5992 = vmul.f32 %v5928, %v5662
        %v5993 = vmul.f32 %v5929, %v5711
        %v5994 = vmul.f32 %v5930, %v5760
        %v5995 = vmul.f32 %v5931, %v5615
        %v5996 = vmul.f32 %v5932, %v5664
        %v5997 = vmul.f32 %v5933, %v5713
        %v5998 = vmul.f32 %v5934, %v5762
        %v5999 = vmul.f32 %v5935, %v5618
        %v6000 = vmul.f32 %v5936, %v5667
        %v6001 = vmul.f32 %v5937, %v5716
        %v6002 = vmul.f32 %v5938, %v5765
        %v6003 = vmul.f32 %v5939, %v5620
        %v6004 = vmul.f32 %v5940, %v5669
        %v6005 = vmul.f32 %v5941, %v5718
        %v6006 = vmul.f32 %v5942, %v5767
        %v6007 = vmul.f32 %v5943, %v5623
        %v6008 = vmul.f32 %v5944, %v5672
        %v6009 = vmul.f32 %v5945, %v5721
        %v6010 = vmul.f32 %v5946, %v5770
        %v6011 = vmul.f32 %v5947, %v5625
        %v6012 = vmul.f32 %v5948, %v5674
        %v6013 = vmul.f32 %v5949, %v5723
        %v6014 = vmul.f32 %v5950, %v5772
        %v6015 = vmul.f32 %v5951, %v5628
        %v6016 = vmul.f32 %v5952, %v5677
        %v6017 = vmul.f32 %v5953, %v5726
        %v6018 = vmul.f32 %v5954, %v5775
        %v6019 = vmul.f32 %v5955, %v5630
        %v6020 = vmul.f32 %v5956, %v5679
        %v6021 = vmul.f32 %v5957, %v5728
        %v6022 = vmul.f32 %v5958, %v5777
        %v6023 = vmul.f32 %v5959, %v5633
        %v6024 = vmul.f32 %v5960, %v5682
        %v6025 = vmul.f32 %v5961, %v5731
        %v6026 = vmul.f32 %v5962, %v5780
        %v6027 = vmul.f32 %v5963, %v5635
        %v6028 = vmul.f32 %v5964, %v5684
        %v6029 = vmul.f32 %v5965, %v5733
        %v6030 = vmul.f32 %v5966, %v5782
        %v6031 = vmul.f32 %v5967, %v5638
        %v6032 = vmul.f32 %v5968, %v5687
        %v6033 = vmul.f32 %v5969, %v5736
        %v6034 = vmul.f32 %v5970, %v5785
        %v6035 = vmul.f32 %v5971, %v5640
        %v6036 = vmul.f32 %v5972, %v5689
        %v6037 = vmul.f32 %v5973, %v5738
        %v6038 = vmul.f32 %v5974, %v5787
        %v6039 = vmul.f32 %v5975, %v5643
        %v6040 = vmul.f32 %v5976, %v5692
        %v6041 = vmul.f32 %v5977, %v5741
        %v6042 = vmul.f32 %v5978, %v5790
        %v6043 = vmul.f32 %v5979, %v5645
        %v6044 = vmul.f32 %v5980, %v5694
        %v6045 = vmul.f32 %v5981, %v5743
        %v6046 = vmul.f32 %v5982, %v5792
        %v6047 = vmul.f32 %v5983, %v5648
        %v6048 = vmul.f32 %v5984, %v5697
        %v6049 = vmul.f32 %v5985, %v5746
        %v6050 = vmul.f32 %v5986, %v5795
        %v6051 = vmul.f32 %v5987, %v5650
        %v6052 = vmul.f32 %v5988, %v5699
        %v6053 = vmul.f32 %v5989, %v5748
        %v6054 = vmul.f32 %v5990, %v5797
        %v6055 = vadd.f32 %v5613, %v5991
        %v6056 = vadd.f32 %v5662, %v5992
        %v6057 = vadd.f32 %v5711, %v5993
        %v6058 = vadd.f32 %v5760, %v5994
        %v6059 = vadd.f32 %v5615, %v5995
        %v6060 = vadd.f32 %v5664, %v5996
        %v6061 = vadd.f32 %v5713, %v5997
        %v6062 = vadd.f32 %v5762, %v5998
        %v6063 = vadd.f32 %v5618, %v5999
        %v6064 = vadd.f32 %v5667, %v6000
        %v6065 = vadd.f32 %v5716, %v6001
        %v6066 = vadd.f32 %v5765, %v6002
        %v6067 = vadd.f32 %v5620, %v6003
        %v6068 = vadd.f32 %v5669, %v6004
        %v6069 = vadd.f32 %v5718, %v6005
        %v6070 = vadd.f32 %v5767, %v6006
        %v6071 = vadd.f32 %v5623, %v6007
        %v6072 = vadd.f32 %v5672, %v6008
        %v6073 = vadd.f32 %v5721, %v6009
        %v6074 = vadd.f32 %v5770, %v6010
        %v6075 = vadd.f32 %v5625, %v6011
        %v6076 = vadd.f32 %v5674, %v6012
        %v6077 = vadd.f32 %v5723, %v6013
        %v6078 = vadd.f32 %v5772, %v6014
        %v6079 = vadd.f32 %v5628, %v6015
        %v6080 = vadd.f32 %v5677, %v6016
        %v6081 = vadd.f32 %v5726, %v6017
        %v6082 = vadd.f32 %v5775, %v6018
        %v6083 = vadd.f32 %v5630, %v6019
        %v6084 = vadd.f32 %v5679, %v6020
        %v6085 = vadd.f32 %v5728, %v6021
        %v6086 = vadd.f32 %v5777, %v6022
        %v6087 = vadd.f32 %v5633, %v6023
        %v6088 = vadd.f32 %v5682, %v6024
        %v6089 = vadd.f32 %v5731, %v6025
        %v6090 = vadd.f32 %v5780, %v6026
        %v6091 = vadd.f32 %v5635, %v6027
        %v6092 = vadd.f32 %v5684, %v6028
        %v6093 = vadd.f32 %v5733, %v6029
        %v6094 = vadd.f32 %v5782, %v6030
        %v6095 = vadd.f32 %v5638, %v6031
        %v6096 = vadd.f32 %v5687, %v6032
        %v6097 = vadd.f32 %v5736, %v6033
        %v6098 = vadd.f32 %v5785, %v6034
        %v6099 = vadd.f32 %v5640, %v6035
        %v6100 = vadd.f32 %v5689, %v6036
        %v6101 = vadd.f32 %v5738, %v6037
        %v6102 = vadd.f32 %v5787, %v6038
        %v6103 = vadd.f32 %v5643, %v6039
        %v6104 = vadd.f32 %v5692, %v6040
        %v6105 = vadd.f32 %v5741, %v6041
        %v6106 = vadd.f32 %v5790, %v6042
        %v6107 = vadd.f32 %v5645, %v6043
        %v6108 = vadd.f32 %v5694, %v6044
        %v6109 = vadd.f32 %v5743, %v6045
        %v6110 = vadd.f32 %v5792, %v6046
        %v6111 = vadd.f32 %v5648, %v6047
        %v6112 = vadd.f32 %v5697, %v6048
        %v6113 = vadd.f32 %v5746, %v6049
        %v6114 = vadd.f32 %v5795, %v6050
        %v6115 = vadd.f32 %v5650, %v6051
        %v6116 = vadd.f32 %v5699, %v6052
        %v6117 = vadd.f32 %v5748, %v6053
        %v6118 = vadd.f32 %v5797, %v6054
        %v6119 = vmul.f32 %v6055, 0.7978846
        %v6120 = vmul.f32 %v6056, 0.7978846
        %v6121 = vmul.f32 %v6057, 0.7978846
        %v6122 = vmul.f32 %v6058, 0.7978846
        %v6123 = vmul.f32 %v6059, 0.7978846
        %v6124 = vmul.f32 %v6060, 0.7978846
        %v6125 = vmul.f32 %v6061, 0.7978846
        %v6126 = vmul.f32 %v6062, 0.7978846
        %v6127 = vmul.f32 %v6063, 0.7978846
        %v6128 = vmul.f32 %v6064, 0.7978846
        %v6129 = vmul.f32 %v6065, 0.7978846
        %v6130 = vmul.f32 %v6066, 0.7978846
        %v6131 = vmul.f32 %v6067, 0.7978846
        %v6132 = vmul.f32 %v6068, 0.7978846
        %v6133 = vmul.f32 %v6069, 0.7978846
        %v6134 = vmul.f32 %v6070, 0.7978846
        %v6135 = vmul.f32 %v6071, 0.7978846
        %v6136 = vmul.f32 %v6072, 0.7978846
        %v6137 = vmul.f32 %v6073, 0.7978846
        %v6138 = vmul.f32 %v6074, 0.7978846
        %v6139 = vmul.f32 %v6075, 0.7978846
        %v6140 = vmul.f32 %v6076, 0.7978846
        %v6141 = vmul.f32 %v6077, 0.7978846
        %v6142 = vmul.f32 %v6078, 0.7978846
        %v6143 = vmul.f32 %v6079, 0.7978846
        %v6144 = vmul.f32 %v6080, 0.7978846
        %v6145 = vmul.f32 %v6081, 0.7978846
        %v6146 = vmul.f32 %v6082, 0.7978846
        %v6147 = vmul.f32 %v6083, 0.7978846
        %v6148 = vmul.f32 %v6084, 0.7978846
        %v6149 = vmul.f32 %v6085, 0.7978846
        %v6150 = vmul.f32 %v6086, 0.7978846
        %v6151 = vmul.f32 %v6087, 0.7978846
        %v6152 = vmul.f32 %v6088, 0.7978846
        %v6153 = vmul.f32 %v6089, 0.7978846
        %v6154 = vmul.f32 %v6090, 0.7978846
        %v6155 = vmul.f32 %v6091, 0.7978846
        %v6156 = vmul.f32 %v6092, 0.7978846
        %v6157 = vmul.f32 %v6093, 0.7978846
        %v6158 = vmul.f32 %v6094, 0.7978846
        %v6159 = vmul.f32 %v6095, 0.7978846
        %v6160 = vmul.f32 %v6096, 0.7978846
        %v6161 = vmul.f32 %v6097, 0.7978846
        %v6162 = vmul.f32 %v6098, 0.7978846
        %v6163 = vmul.f32 %v6099, 0.7978846
        %v6164 = vmul.f32 %v6100, 0.7978846
        %v6165 = vmul.f32 %v6101, 0.7978846
        %v6166 = vmul.f32 %v6102, 0.7978846
        %v6167 = vmul.f32 %v6103, 0.7978846
        %v6168 = vmul.f32 %v6104, 0.7978846
        %v6169 = vmul.f32 %v6105, 0.7978846
        %v6170 = vmul.f32 %v6106, 0.7978846
        %v6171 = vmul.f32 %v6107, 0.7978846
        %v6172 = vmul.f32 %v6108, 0.7978846
        %v6173 = vmul.f32 %v6109, 0.7978846
        %v6174 = vmul.f32 %v6110, 0.7978846
        %v6175 = vmul.f32 %v6111, 0.7978846
        %v6176 = vmul.f32 %v6112, 0.7978846
        %v6177 = vmul.f32 %v6113, 0.7978846
        %v6178 = vmul.f32 %v6114, 0.7978846
        %v6179 = vmul.f32 %v6115, 0.7978846
        %v6180 = vmul.f32 %v6116, 0.7978846
        %v6181 = vmul.f32 %v6117, 0.7978846
        %v6182 = vmul.f32 %v6118, 0.7978846
        %v6183 = vtanh.pop %v6119
        %v6184 = vtanh.pop %v6120
        %v6185 = vtanh.pop %v6121
        %v6186 = vtanh.pop %v6122
        %v6187 = vtanh.pop %v6123
        %v6188 = vtanh.pop %v6124
        %v6189 = vtanh.pop %v6125
        %v6190 = vtanh.pop %v6126
        %v6191 = vtanh.pop %v6127
        %v6192 = vtanh.pop %v6128
        %v6193 = vtanh.pop %v6129
        %v6194 = vtanh.pop %v6130
        %v6195 = vtanh.pop %v6131
        %v6196 = vtanh.pop %v6132
        %v6197 = vtanh.pop %v6133
        %v6198 = vtanh.pop %v6134
        %v6199 = vtanh.pop %v6135
        %v6200 = vtanh.pop %v6136
        %v6201 = vtanh.pop %v6137
        %v6202 = vtanh.pop %v6138
        %v6203 = vtanh.pop %v6139
        %v6204 = vtanh.pop %v6140
        %v6205 = vtanh.pop %v6141
        %v6206 = vtanh.pop %v6142
        %v6207 = vtanh.pop %v6143
        %v6208 = vtanh.pop %v6144
        %v6209 = vtanh.pop %v6145
        %v6210 = vtanh.pop %v6146
        %v6211 = vtanh.pop %v6147
        %v6212 = vtanh.pop %v6148
        %v6213 = vtanh.pop %v6149
        %v6214 = vtanh.pop %v6150
        %v6215 = vtanh.pop %v6151
        %v6216 = vtanh.pop %v6152
        %v6217 = vtanh.pop %v6153
        %v6218 = vtanh.pop %v6154
        %v6219 = vtanh.pop %v6155
        %v6220 = vtanh.pop %v6156
        %v6221 = vtanh.pop %v6157
        %v6222 = vtanh.pop %v6158
        %v6223 = vtanh.pop %v6159
        %v6224 = vtanh.pop %v6160
        %v6225 = vtanh.pop %v6161
        %v6226 = vtanh.pop %v6162
        %v6227 = vtanh.pop %v6163
        %v6228 = vtanh.pop %v6164
        %v6229 = vtanh.pop %v6165
        %v6230 = vtanh.pop %v6166
        %v6231 = vtanh.pop %v6167
        %v6232 = vtanh.pop %v6168
        %v6233 = vtanh.pop %v6169
        %v6234 = vtanh.pop %v6170
        %v6235 = vtanh.pop %v6171
        %v6236 = vtanh.pop %v6172
        %v6237 = vtanh.pop %v6173
        %v6238 = vtanh.pop %v6174
        %v6239 = vtanh.pop %v6175
        %v6240 = vtanh.pop %v6176
        %v6241 = vtanh.pop %v6177
        %v6242 = vtanh.pop %v6178
        %v6243 = vtanh.pop %v6179
        %v6244 = vtanh.pop %v6180
        %v6245 = vtanh.pop %v6181
        %v6246 = vtanh.pop %v6182
        %v6247 = vadd.f32 %v6183, 1.0
        %v6248 = vadd.f32 %v6184, 1.0
        %v6249 = vadd.f32 %v6185, 1.0
        %v6250 = vadd.f32 %v6186, 1.0
        %v6251 = vadd.f32 %v6187, 1.0
        %v6252 = vadd.f32 %v6188, 1.0
        %v6253 = vadd.f32 %v6189, 1.0
        %v6254 = vadd.f32 %v6190, 1.0
        %v6255 = vadd.f32 %v6191, 1.0
        %v6256 = vadd.f32 %v6192, 1.0
        %v6257 = vadd.f32 %v6193, 1.0
        %v6258 = vadd.f32 %v6194, 1.0
        %v6259 = vadd.f32 %v6195, 1.0
        %v6260 = vadd.f32 %v6196, 1.0
        %v6261 = vadd.f32 %v6197, 1.0
        %v6262 = vadd.f32 %v6198, 1.0
        %v6263 = vadd.f32 %v6199, 1.0
        %v6264 = vadd.f32 %v6200, 1.0
        %v6265 = vadd.f32 %v6201, 1.0
        %v6266 = vadd.f32 %v6202, 1.0
        %v6267 = vadd.f32 %v6203, 1.0
        %v6268 = vadd.f32 %v6204, 1.0
        %v6269 = vadd.f32 %v6205, 1.0
        %v6270 = vadd.f32 %v6206, 1.0
        %v6271 = vadd.f32 %v6207, 1.0
        %v6272 = vadd.f32 %v6208, 1.0
        %v6273 = vadd.f32 %v6209, 1.0
        %v6274 = vadd.f32 %v6210, 1.0
        %v6275 = vadd.f32 %v6211, 1.0
        %v6276 = vadd.f32 %v6212, 1.0
        %v6277 = vadd.f32 %v6213, 1.0
        %v6278 = vadd.f32 %v6214, 1.0
        %v6279 = vadd.f32 %v6215, 1.0
        %v6280 = vadd.f32 %v6216, 1.0
        %v6281 = vadd.f32 %v6217, 1.0
        %v6282 = vadd.f32 %v6218, 1.0
        %v6283 = vadd.f32 %v6219, 1.0
        %v6284 = vadd.f32 %v6220, 1.0
        %v6285 = vadd.f32 %v6221, 1.0
        %v6286 = vadd.f32 %v6222, 1.0
        %v6287 = vadd.f32 %v6223, 1.0
        %v6288 = vadd.f32 %v6224, 1.0
        %v6289 = vadd.f32 %v6225, 1.0
        %v6290 = vadd.f32 %v6226, 1.0
        %v6291 = vadd.f32 %v6227, 1.0
        %v6292 = vadd.f32 %v6228, 1.0
        %v6293 = vadd.f32 %v6229, 1.0
        %v6294 = vadd.f32 %v6230, 1.0
        %v6295 = vadd.f32 %v6231, 1.0
        %v6296 = vadd.f32 %v6232, 1.0
        %v6297 = vadd.f32 %v6233, 1.0
        %v6298 = vadd.f32 %v6234, 1.0
        %v6299 = vadd.f32 %v6235, 1.0
        %v6300 = vadd.f32 %v6236, 1.0
        %v6301 = vadd.f32 %v6237, 1.0
        %v6302 = vadd.f32 %v6238, 1.0
        %v6303 = vadd.f32 %v6239, 1.0
        %v6304 = vadd.f32 %v6240, 1.0
        %v6305 = vadd.f32 %v6241, 1.0
        %v6306 = vadd.f32 %v6242, 1.0
        %v6307 = vadd.f32 %v6243, 1.0
        %v6308 = vadd.f32 %v6244, 1.0
        %v6309 = vadd.f32 %v6245, 1.0
        %v6310 = vadd.f32 %v6246, 1.0
        %v6311 = vmul.f32 %v5799, %v6247
        %v6312 = vmul.f32 %v5800, %v6248
        %v6313 = vmul.f32 %v5801, %v6249
        %v6314 = vmul.f32 %v5802, %v6250
        %v6315 = vmul.f32 %v5803, %v6251
        %v6316 = vmul.f32 %v5804, %v6252
        %v6317 = vmul.f32 %v5805, %v6253
        %v6318 = vmul.f32 %v5806, %v6254
        %v6319 = vmul.f32 %v5807, %v6255
        %v6320 = vmul.f32 %v5808, %v6256
        %v6321 = vmul.f32 %v5809, %v6257
        %v6322 = vmul.f32 %v5810, %v6258
        %v6323 = vmul.f32 %v5811, %v6259
        %v6324 = vmul.f32 %v5812, %v6260
        %v6325 = vmul.f32 %v5813, %v6261
        %v6326 = vmul.f32 %v5814, %v6262
        %v6327 = vmul.f32 %v5815, %v6263
        %v6328 = vmul.f32 %v5816, %v6264
        %v6329 = vmul.f32 %v5817, %v6265
        %v6330 = vmul.f32 %v5818, %v6266
        %v6331 = vmul.f32 %v5819, %v6267
        %v6332 = vmul.f32 %v5820, %v6268
        %v6333 = vmul.f32 %v5821, %v6269
        %v6334 = vmul.f32 %v5822, %v6270
        %v6335 = vmul.f32 %v5823, %v6271
        %v6336 = vmul.f32 %v5824, %v6272
        %v6337 = vmul.f32 %v5825, %v6273
        %v6338 = vmul.f32 %v5826, %v6274
        %v6339 = vmul.f32 %v5827, %v6275
        %v6340 = vmul.f32 %v5828, %v6276
        %v6341 = vmul.f32 %v5829, %v6277
        %v6342 = vmul.f32 %v5830, %v6278
        %v6343 = vmul.f32 %v5831, %v6279
        %v6344 = vmul.f32 %v5832, %v6280
        %v6345 = vmul.f32 %v5833, %v6281
        %v6346 = vmul.f32 %v5834, %v6282
        %v6347 = vmul.f32 %v5835, %v6283
        %v6348 = vmul.f32 %v5836, %v6284
        %v6349 = vmul.f32 %v5837, %v6285
        %v6350 = vmul.f32 %v5838, %v6286
        %v6351 = vmul.f32 %v5839, %v6287
        %v6352 = vmul.f32 %v5840, %v6288
        %v6353 = vmul.f32 %v5841, %v6289
        %v6354 = vmul.f32 %v5842, %v6290
        %v6355 = vmul.f32 %v5843, %v6291
        %v6356 = vmul.f32 %v5844, %v6292
        %v6357 = vmul.f32 %v5845, %v6293
        %v6358 = vmul.f32 %v5846, %v6294
        %v6359 = vmul.f32 %v5847, %v6295
        %v6360 = vmul.f32 %v5848, %v6296
        %v6361 = vmul.f32 %v5849, %v6297
        %v6362 = vmul.f32 %v5850, %v6298
        %v6363 = vmul.f32 %v5851, %v6299
        %v6364 = vmul.f32 %v5852, %v6300
        %v6365 = vmul.f32 %v5853, %v6301
        %v6366 = vmul.f32 %v5854, %v6302
        %v6367 = vmul.f32 %v5855, %v6303
        %v6368 = vmul.f32 %v5856, %v6304
        %v6369 = vmul.f32 %v5857, %v6305
        %v6370 = vmul.f32 %v5858, %v6306
        %v6371 = vmul.f32 %v5859, %v6307
        %v6372 = vmul.f32 %v5860, %v6308
        %v6373 = vmul.f32 %v5861, %v6309
        %v6374 = vmul.f32 %v5862, %v6310
        %v6375 = vpack.c.bf16 %v6315, %v6311
        %v6376 = vpack.c.bf16 %v6316, %v6312
        %v6377 = vpack.c.bf16 %v6317, %v6313
        %v6378 = vpack.c.bf16 %v6318, %v6314
        %v6379 = vpack.c.bf16 %v6323, %v6319
        %v6380 = vpack.c.bf16 %v6324, %v6320
        %v6381 = vpack.c.bf16 %v6325, %v6321
        %v6382 = vpack.c.bf16 %v6326, %v6322
        %v6383 = vpack.c.bf16 %v6331, %v6327
        %v6384 = vpack.c.bf16 %v6332, %v6328
        %v6385 = vpack.c.bf16 %v6333, %v6329
        %v6386 = vpack.c.bf16 %v6334, %v6330
        %v6387 = vpack.c.bf16 %v6339, %v6335
        %v6388 = vpack.c.bf16 %v6340, %v6336
        %v6389 = vpack.c.bf16 %v6341, %v6337
        %v6390 = vpack.c.bf16 %v6342, %v6338
        %v6391 = vpack.c.bf16 %v6347, %v6343
        %v6392 = vpack.c.bf16 %v6348, %v6344
        %v6393 = vpack.c.bf16 %v6349, %v6345
        %v6394 = vpack.c.bf16 %v6350, %v6346
        %v6395 = vpack.c.bf16 %v6355, %v6351
        %v6396 = vpack.c.bf16 %v6356, %v6352
        %v6397 = vpack.c.bf16 %v6357, %v6353
        %v6398 = vpack.c.bf16 %v6358, %v6354
        %v6399 = vpack.c.bf16 %v6363, %v6359
        %v6400 = vpack.c.bf16 %v6364, %v6360
        %v6401 = vpack.c.bf16 %v6365, %v6361
        %v6402 = vpack.c.bf16 %v6366, %v6362
        %v6403 = vpack.c.bf16 %v6371, %v6367
        %v6404 = vpack.c.bf16 %v6372, %v6368
        %v6405 = vpack.c.bf16 %v6373, %v6369
        %v6406 = vpack.c.bf16 %v6374, %v6370
        %v6407 = vld [vmem:[%s11] sm:$0xf]
        %v6408 = vld [vmem:[%s11 + $0x4] sm:$0xf]
        %v6409 = vld [vmem:[%s11 + $0x8] sm:$0xf]
        %v6410 = vld [vmem:[%s11 + $0xc] sm:$0xf]
        %v6411 = vld [vmem:[%s11 + $0x10] sm:$0xf]
        %v6412 = vld [vmem:[%s11 + $0x14] sm:$0xf]
        %v6413 = vld [vmem:[%s11 + $0x18] sm:$0xf]
        %v6414 = vld [vmem:[%s11 + $0x1c] sm:$0xf]
        %v6415 = vld [vmem:[%s11 + $0x20] sm:$0xf]
        %v6416 = vld [vmem:[%s11 + $0x24] sm:$0xf]
        %v6417 = vld [vmem:[%s11 + $0x28] sm:$0xf]
        %v6418 = vld [vmem:[%s11 + $0x2c] sm:$0xf]
        %v6419 = vld [vmem:[%s11 + $0x30] sm:$0xf]
        %v6420 = vld [vmem:[%s11 + $0x34] sm:$0xf]
        %v6421 = vld [vmem:[%s11 + $0x38] sm:$0xf]
        %v6422 = vld [vmem:[%s11 + $0x3c] sm:$0xf]
        %v6423 = vld [vmem:[%s11 + $0x40] sm:$0xf]
        %v6424 = vld [vmem:[%s11 + $0x44] sm:$0xf]
        %v6425 = vld [vmem:[%s11 + $0x48] sm:$0xf]
        %v6426 = vld [vmem:[%s11 + $0x4c] sm:$0xf]
        %v6427 = vld [vmem:[%s11 + $0x50] sm:$0xf]
        %v6428 = vld [vmem:[%s11 + $0x54] sm:$0xf]
        %v6429 = vld [vmem:[%s11 + $0x58] sm:$0xf]
        %v6430 = vld [vmem:[%s11 + $0x5c] sm:$0xf]
        %v6431 = vld [vmem:[%s11 + $0x60] sm:$0xf]
        %v6432 = vld [vmem:[%s11 + $0x64] sm:$0xf]
        %v6433 = vld [vmem:[%s11 + $0x68] sm:$0xf]
        %v6434 = vld [vmem:[%s11 + $0x6c] sm:$0xf]
        %v6435 = vld [vmem:[%s11 + $0x70] sm:$0xf]
        %v6436 = vld [vmem:[%s11 + $0x74] sm:$0xf]
        %v6437 = vld [vmem:[%s11 + $0x78] sm:$0xf]
        %v6438 = vld [vmem:[%s11 + $0x7c] sm:$0xf]
        %v6439 = vld [vmem:[%s11 + $0x80] sm:$0xf]
        %v6440 = vld [vmem:[%s11 + $0x84] sm:$0xf]
        %v6441 = vld [vmem:[%s11 + $0x88] sm:$0xf]
        %v6442 = vld [vmem:[%s11 + $0x8c] sm:$0xf]
        %v6443 = vld [vmem:[%s11 + $0x90] sm:$0xf]
        %v6444 = vld [vmem:[%s11 + $0x94] sm:$0xf]
        %v6445 = vld [vmem:[%s11 + $0x98] sm:$0xf]
        %v6446 = vld [vmem:[%s11 + $0x9c] sm:$0xf]
        %v6447 = vld [vmem:[%s11 + $0xa0] sm:$0xf]
        %v6448 = vld [vmem:[%s11 + $0xa4] sm:$0xf]
        %v6449 = vld [vmem:[%s11 + $0xa8] sm:$0xf]
        %v6450 = vld [vmem:[%s11 + $0xac] sm:$0xf]
        %v6451 = vld [vmem:[%s11 + $0xb0] sm:$0xf]
        %v6452 = vld [vmem:[%s11 + $0xb4] sm:$0xf]
        %v6453 = vld [vmem:[%s11 + $0xb8] sm:$0xf]
        %v6454 = vld [vmem:[%s11 + $0xbc] sm:$0xf]
        %v6455 = vld [vmem:[%s11 + $0xc0] sm:$0xf]
        %v6456 = vld [vmem:[%s11 + $0xc4] sm:$0xf]
        %v6457 = vld [vmem:[%s11 + $0xc8] sm:$0xf]
        %v6458 = vld [vmem:[%s11 + $0xcc] sm:$0xf]
        %v6459 = vld [vmem:[%s11 + $0xd0] sm:$0xf]
        %v6460 = vld [vmem:[%s11 + $0xd4] sm:$0xf]
        %v6461 = vld [vmem:[%s11 + $0xd8] sm:$0xf]
        %v6462 = vld [vmem:[%s11 + $0xdc] sm:$0xf]
        %v6463 = vld [vmem:[%s11 + $0xe0] sm:$0xf]
        %v6464 = vld [vmem:[%s11 + $0xe4] sm:$0xf]
        %v6465 = vld [vmem:[%s11 + $0xe8] sm:$0xf]
        %v6466 = vld [vmem:[%s11 + $0xec] sm:$0xf]
        %v6467 = vld [vmem:[%s11 + $0xf0] sm:$0xf]
        %v6468 = vld [vmem:[%s11 + $0xf4] sm:$0xf]
        %v6469 = vld [vmem:[%s11 + $0xf8] sm:$0xf]
        %v6470 = vld [vmem:[%s11 + $0xfc] sm:$0xf]
        %v6471 = vld [vmem:[#allocation14] sm:$0x1]
        %v6473 = vperm.slane %v6471, 0
        %v6539 = vunpack.c.l.b16 %v6407
        %v6540 = vunpack.c.l.b16 %v6408
        %v6541 = vunpack.c.l.b16 %v6409
        %v6542 = vunpack.c.l.b16 %v6410
        %v6543 = vunpack.c.l.b16 %v6411
        %v6544 = vunpack.c.l.b16 %v6412
        %v6545 = vunpack.c.l.b16 %v6413
        %v6546 = vunpack.c.l.b16 %v6414
        %v6547 = vunpack.c.l.b16 %v6415
        %v6548 = vunpack.c.l.b16 %v6416
        %v6549 = vunpack.c.l.b16 %v6417
        %v6550 = vunpack.c.l.b16 %v6418
        %v6551 = vunpack.c.l.b16 %v6419
        %v6552 = vunpack.c.l.b16 %v6420
        %v6553 = vunpack.c.l.b16 %v6421
        %v6554 = vunpack.c.l.b16 %v6422
        %v6555 = vunpack.c.l.b16 %v6423
        %v6556 = vunpack.c.l.b16 %v6424
        %v6557 = vunpack.c.l.b16 %v6425
        %v6558 = vunpack.c.l.b16 %v6426
        %v6559 = vunpack.c.l.b16 %v6427
        %v6560 = vunpack.c.l.b16 %v6428
        %v6561 = vunpack.c.l.b16 %v6429
        %v6562 = vunpack.c.l.b16 %v6430
        %v6563 = vunpack.c.l.b16 %v6431
        %v6564 = vunpack.c.l.b16 %v6432
        %v6565 = vunpack.c.l.b16 %v6433
        %v6566 = vunpack.c.l.b16 %v6434
        %v6567 = vunpack.c.l.b16 %v6435
        %v6568 = vunpack.c.l.b16 %v6436
        %v6569 = vunpack.c.l.b16 %v6437
        %v6570 = vunpack.c.l.b16 %v6438
        %v6571 = vunpack.c.l.b16 %v6439
        %v6572 = vunpack.c.l.b16 %v6440
        %v6573 = vunpack.c.l.b16 %v6441
        %v6574 = vunpack.c.l.b16 %v6442
        %v6575 = vunpack.c.l.b16 %v6443
        %v6576 = vunpack.c.l.b16 %v6444
        %v6577 = vunpack.c.l.b16 %v6445
        %v6578 = vunpack.c.l.b16 %v6446
        %v6579 = vunpack.c.l.b16 %v6447
        %v6580 = vunpack.c.l.b16 %v6448
        %v6581 = vunpack.c.l.b16 %v6449
        %v6582 = vunpack.c.l.b16 %v6450
        %v6583 = vunpack.c.l.b16 %v6451
        %v6584 = vunpack.c.l.b16 %v6452
        %v6585 = vunpack.c.l.b16 %v6453
        %v6586 = vunpack.c.l.b16 %v6454
        %v6587 = vunpack.c.l.b16 %v6455
        %v6588 = vunpack.c.l.b16 %v6456
        %v6589 = vunpack.c.l.b16 %v6457
        %v6590 = vunpack.c.l.b16 %v6458
        %v6591 = vunpack.c.l.b16 %v6459
        %v6592 = vunpack.c.l.b16 %v6460
        %v6593 = vunpack.c.l.b16 %v6461
        %v6594 = vunpack.c.l.b16 %v6462
        %v6595 = vunpack.c.l.b16 %v6463
        %v6596 = vunpack.c.l.b16 %v6464
        %v6597 = vunpack.c.l.b16 %v6465
        %v6598 = vunpack.c.l.b16 %v6466
        %v6599 = vunpack.c.l.b16 %v6467
        %v6600 = vunpack.c.l.b16 %v6468
        %v6601 = vunpack.c.l.b16 %v6469
        %v6602 = vunpack.c.l.b16 %v6470
        %v6603 = vpack.c.b16 %v6540, %v6539
        %v6604 = vpack.c.b16 %v6542, %v6541
        %v6605 = vpack.c.b16 %v6544, %v6543
        %v6606 = vpack.c.b16 %v6546, %v6545
        %v6607 = vpack.c.b16 %v6548, %v6547
        %v6608 = vpack.c.b16 %v6550, %v6549
        %v6609 = vpack.c.b16 %v6552, %v6551
        %v6610 = vpack.c.b16 %v6554, %v6553
        %v6611 = vpack.c.b16 %v6556, %v6555
        %v6612 = vpack.c.b16 %v6558, %v6557
        %v6613 = vpack.c.b16 %v6560, %v6559
        %v6614 = vpack.c.b16 %v6562, %v6561
        %v6615 = vpack.c.b16 %v6564, %v6563
        %v6616 = vpack.c.b16 %v6566, %v6565
        %v6617 = vpack.c.b16 %v6568, %v6567
        %v6618 = vpack.c.b16 %v6570, %v6569
        %v6619 = vpack.c.b16 %v6572, %v6571
        %v6620 = vpack.c.b16 %v6574, %v6573
        %v6621 = vpack.c.b16 %v6576, %v6575
        %v6622 = vpack.c.b16 %v6578, %v6577
        %v6623 = vpack.c.b16 %v6580, %v6579
        %v6624 = vpack.c.b16 %v6582, %v6581
        %v6625 = vpack.c.b16 %v6584, %v6583
        %v6626 = vpack.c.b16 %v6586, %v6585
        %v6627 = vpack.c.b16 %v6588, %v6587
        %v6628 = vpack.c.b16 %v6590, %v6589
        %v6629 = vpack.c.b16 %v6592, %v6591
        %v6630 = vpack.c.b16 %v6594, %v6593
        %v6631 = vpack.c.b16 %v6596, %v6595
        %v6632 = vpack.c.b16 %v6598, %v6597
        %v6633 = vpack.c.b16 %v6600, %v6599
        %v6634 = vpack.c.b16 %v6602, %v6601
        %6667 = vmatpush.bf16.msra.mxu0 %v6610
        %6668 = vmatpush.bf16.msra.mxu0 %v6609
        %6669 = vmatpush.bf16.msra.mxu0 %v6608
        %6670 = vmatpush.bf16.msra.mxu0 %v6607
        %6671 = vmatpush.bf16.msra.mxu0 %v6606
        %6672 = vmatpush.bf16.msra.mxu0 %v6605
        %6673 = vmatpush.bf16.msra.mxu0 %v6604
        %6674 = vmatpush.bf16.msra.mxu0 %v6603
        %6675 = vmatmul.bf16.gmra.mxu0 %v6375
        %v6676 = vpop.f32.mrf.mxu0
        %v6677 = vadd.f32 %v6473, %v6676
        %v6678 = vpop.f32.mrf.mxu0
        %v6679 = vadd.f32 %v6473, %v6678
        %6680 = vmatmul.bf16.gmra.mxu0 %v6379
        %v6681 = vpop.f32.mrf.mxu0
        %v6682 = vadd.f32 %v6473, %v6681
        %v6683 = vpop.f32.mrf.mxu0
        %v6684 = vadd.f32 %v6473, %v6683
        %6685 = vmatmul.bf16.gmra.mxu0 %v6383
        %v6686 = vpop.f32.mrf.mxu0
        %v6687 = vadd.f32 %v6473, %v6686
        %v6688 = vpop.f32.mrf.mxu0
        %v6689 = vadd.f32 %v6473, %v6688
        %6690 = vmatmul.bf16.gmra.mxu0 %v6387
        %v6691 = vpop.f32.mrf.mxu0
        %v6692 = vadd.f32 %v6473, %v6691
        %v6693 = vpop.f32.mrf.mxu0
        %v6694 = vadd.f32 %v6473, %v6693
        %6695 = vmatmul.bf16.gmra.mxu0 %v6391
        %v6696 = vpop.f32.mrf.mxu0
        %v6697 = vadd.f32 %v6473, %v6696
        %v6698 = vpop.f32.mrf.mxu0
        %v6699 = vadd.f32 %v6473, %v6698
        %6700 = vmatmul.bf16.gmra.mxu0 %v6395
        %v6701 = vpop.f32.mrf.mxu0
        %v6702 = vadd.f32 %v6473, %v6701
        %v6703 = vpop.f32.mrf.mxu0
        %v6704 = vadd.f32 %v6473, %v6703
        %6705 = vmatmul.bf16.gmra.mxu0 %v6399
        %v6706 = vpop.f32.mrf.mxu0
        %v6707 = vadd.f32 %v6473, %v6706
        %v6708 = vpop.f32.mrf.mxu0
        %v6709 = vadd.f32 %v6473, %v6708
        %6710 = vmatmul.bf16.gmra.mxu0 %v6403
        %v6711 = vpop.f32.mrf.mxu0
        %v6712 = vadd.f32 %v6473, %v6711
        %v6713 = vpop.f32.mrf.mxu0
        %v6714 = vadd.f32 %v6473, %v6713
        %6715 = vdwg.mxu0
        %6716 = vmatpush.bf16.msra.mxu0 %v6618
        %6717 = vmatpush.bf16.msra.mxu0 %v6617
        %6718 = vmatpush.bf16.msra.mxu0 %v6616
        %6719 = vmatpush.bf16.msra.mxu0 %v6615
        %6720 = vmatpush.bf16.msra.mxu0 %v6614
        %6721 = vmatpush.bf16.msra.mxu0 %v6613
        %6722 = vmatpush.bf16.msra.mxu0 %v6612
        %6723 = vmatpush.bf16.msra.mxu0 %v6611
        %6724 = vmatmul.bf16.gmra.mxu0 %v6376
        %v6725 = vpop.f32.mrf.mxu0
        %v6726 = vadd.f32 %v6677, %v6725
        %v6727 = vpop.f32.mrf.mxu0
        %v6728 = vadd.f32 %v6679, %v6727
        %6729 = vmatmul.bf16.gmra.mxu0 %v6380
        %v6730 = vpop.f32.mrf.mxu0
        %v6731 = vadd.f32 %v6682, %v6730
        %v6732 = vpop.f32.mrf.mxu0
        %v6733 = vadd.f32 %v6684, %v6732
        %6734 = vmatmul.bf16.gmra.mxu0 %v6384
        %v6735 = vpop.f32.mrf.mxu0
        %v6736 = vadd.f32 %v6687, %v6735
        %v6737 = vpop.f32.mrf.mxu0
        %v6738 = vadd.f32 %v6689, %v6737
        %6739 = vmatmul.bf16.gmra.mxu0 %v6388
        %v6740 = vpop.f32.mrf.mxu0
        %v6741 = vadd.f32 %v6692, %v6740
        %v6742 = vpop.f32.mrf.mxu0
        %v6743 = vadd.f32 %v6694, %v6742
        %6744 = vmatmul.bf16.gmra.mxu0 %v6392
        %v6745 = vpop.f32.mrf.mxu0
        %v6746 = vadd.f32 %v6697, %v6745
        %v6747 = vpop.f32.mrf.mxu0
        %v6748 = vadd.f32 %v6699, %v6747
        %6749 = vmatmul.bf16.gmra.mxu0 %v6396
        %v6750 = vpop.f32.mrf.mxu0
        %v6751 = vadd.f32 %v6702, %v6750
        %v6752 = vpop.f32.mrf.mxu0
        %v6753 = vadd.f32 %v6704, %v6752
        %6754 = vmatmul.bf16.gmra.mxu0 %v6400
        %v6755 = vpop.f32.mrf.mxu0
        %v6756 = vadd.f32 %v6707, %v6755
        %v6757 = vpop.f32.mrf.mxu0
        %v6758 = vadd.f32 %v6709, %v6757
        %6759 = vmatmul.bf16.gmra.mxu0 %v6404
        %v6760 = vpop.f32.mrf.mxu0
        %v6761 = vadd.f32 %v6712, %v6760
        %v6762 = vpop.f32.mrf.mxu0
        %v6763 = vadd.f32 %v6714, %v6762
        %6764 = vdwg.mxu0
        %6765 = vmatpush.bf16.msra.mxu0 %v6626
        %6766 = vmatpush.bf16.msra.mxu0 %v6625
        %6767 = vmatpush.bf16.msra.mxu0 %v6624
        %6768 = vmatpush.bf16.msra.mxu0 %v6623
        %6769 = vmatpush.bf16.msra.mxu0 %v6622
        %6770 = vmatpush.bf16.msra.mxu0 %v6621
        %6771 = vmatpush.bf16.msra.mxu0 %v6620
        %6772 = vmatpush.bf16.msra.mxu0 %v6619
        %6773 = vmatmul.bf16.gmra.mxu0 %v6377
        %v6774 = vpop.f32.mrf.mxu0
        %v6775 = vadd.f32 %v6726, %v6774
        %v6776 = vpop.f32.mrf.mxu0
        %v6777 = vadd.f32 %v6728, %v6776
        %6778 = vmatmul.bf16.gmra.mxu0 %v6381
        %v6779 = vpop.f32.mrf.mxu0
        %v6780 = vadd.f32 %v6731, %v6779
        %v6781 = vpop.f32.mrf.mxu0
        %v6782 = vadd.f32 %v6733, %v6781
        %6783 = vmatmul.bf16.gmra.mxu0 %v6385
        %v6784 = vpop.f32.mrf.mxu0
        %v6785 = vadd.f32 %v6736, %v6784
        %v6786 = vpop.f32.mrf.mxu0
        %v6787 = vadd.f32 %v6738, %v6786
        %6788 = vmatmul.bf16.gmra.mxu0 %v6389
        %v6789 = vpop.f32.mrf.mxu0
        %v6790 = vadd.f32 %v6741, %v6789
        %v6791 = vpop.f32.mrf.mxu0
        %v6792 = vadd.f32 %v6743, %v6791
        %6793 = vmatmul.bf16.gmra.mxu0 %v6393
        %v6794 = vpop.f32.mrf.mxu0
        %v6795 = vadd.f32 %v6746, %v6794
        %v6796 = vpop.f32.mrf.mxu0
        %v6797 = vadd.f32 %v6748, %v6796
        %6798 = vmatmul.bf16.gmra.mxu0 %v6397
        %v6799 = vpop.f32.mrf.mxu0
        %v6800 = vadd.f32 %v6751, %v6799
        %v6801 = vpop.f32.mrf.mxu0
        %v6802 = vadd.f32 %v6753, %v6801
        %6803 = vmatmul.bf16.gmra.mxu0 %v6401
        %v6804 = vpop.f32.mrf.mxu0
        %v6805 = vadd.f32 %v6756, %v6804
        %v6806 = vpop.f32.mrf.mxu0
        %v6807 = vadd.f32 %v6758, %v6806
        %6808 = vmatmul.bf16.gmra.mxu0 %v6405
        %v6809 = vpop.f32.mrf.mxu0
        %v6810 = vadd.f32 %v6761, %v6809
        %v6811 = vpop.f32.mrf.mxu0
        %v6812 = vadd.f32 %v6763, %v6811
        %6813 = vdwg.mxu0
        %6814 = vmatpush.bf16.msra.mxu0 %v6634
        %6815 = vmatpush.bf16.msra.mxu0 %v6633
        %6816 = vmatpush.bf16.msra.mxu0 %v6632
        %6817 = vmatpush.bf16.msra.mxu0 %v6631
        %6818 = vmatpush.bf16.msra.mxu0 %v6630
        %6819 = vmatpush.bf16.msra.mxu0 %v6629
        %6820 = vmatpush.bf16.msra.mxu0 %v6628
        %6821 = vmatpush.bf16.msra.mxu0 %v6627
        %6822 = vmatmul.bf16.gmra.mxu0 %v6378
        %v6823 = vpop.f32.mrf.mxu0
        %v6824 = vadd.f32 %v6775, %v6823
        %v6825 = vpop.f32.mrf.mxu0
        %v6826 = vadd.f32 %v6777, %v6825
        %6827 = vmatmul.bf16.gmra.mxu0 %v6382
        %v6828 = vpop.f32.mrf.mxu0
        %v6829 = vadd.f32 %v6780, %v6828
        %v6830 = vpop.f32.mrf.mxu0
        %v6831 = vadd.f32 %v6782, %v6830
        %6832 = vmatmul.bf16.gmra.mxu0 %v6386
        %v6833 = vpop.f32.mrf.mxu0
        %v6834 = vadd.f32 %v6785, %v6833
        %v6835 = vpop.f32.mrf.mxu0
        %v6836 = vadd.f32 %v6787, %v6835
        %6837 = vmatmul.bf16.gmra.mxu0 %v6390
        %v6838 = vpop.f32.mrf.mxu0
        %v6839 = vadd.f32 %v6790, %v6838
        %v6840 = vpop.f32.mrf.mxu0
        %v6841 = vadd.f32 %v6792, %v6840
        %6842 = vmatmul.bf16.gmra.mxu0 %v6394
        %v6843 = vpop.f32.mrf.mxu0
        %v6844 = vadd.f32 %v6795, %v6843
        %v6845 = vpop.f32.mrf.mxu0
        %v6846 = vadd.f32 %v6797, %v6845
        %6847 = vmatmul.bf16.gmra.mxu0 %v6398
        %v6848 = vpop.f32.mrf.mxu0
        %v6849 = vadd.f32 %v6800, %v6848
        %v6850 = vpop.f32.mrf.mxu0
        %v6851 = vadd.f32 %v6802, %v6850
        %6852 = vmatmul.bf16.gmra.mxu0 %v6402
        %v6853 = vpop.f32.mrf.mxu0
        %v6854 = vadd.f32 %v6805, %v6853
        %v6855 = vpop.f32.mrf.mxu0
        %v6856 = vadd.f32 %v6807, %v6855
        %6857 = vmatmul.bf16.gmra.mxu0 %v6406
        %v6858 = vpop.f32.mrf.mxu0
        %v6859 = vadd.f32 %v6810, %v6858
        %v6860 = vpop.f32.mrf.mxu0
        %v6861 = vadd.f32 %v6812, %v6860
        %6862 = vdwg.mxu0
        %v6863 = vadd.f32 %v5017, %v6824
        %v6864 = vadd.f32 %v5018, %v6826
        %v6865 = vadd.f32 %v5019, %v6829
        %v6866 = vadd.f32 %v5020, %v6831
        %v6867 = vadd.f32 %v5021, %v6834
        %v6868 = vadd.f32 %v5022, %v6836
        %v6869 = vadd.f32 %v5023, %v6839
        %v6870 = vadd.f32 %v5024, %v6841
        %v6871 = vadd.f32 %v5025, %v6844
        %v6872 = vadd.f32 %v5026, %v6846
        %v6873 = vadd.f32 %v5027, %v6849
        %v6874 = vadd.f32 %v5028, %v6851
        %v6875 = vadd.f32 %v5029, %v6854
        %v6876 = vadd.f32 %v5030, %v6856
        %v6877 = vadd.f32 %v5031, %v6859
        %v6878 = vadd.f32 %v5032, %v6861
        %6879 = vst [vmem:[%s650] sm:$0xff] %v6863
        %6880 = vst [vmem:[%s650 + $0x8] sm:$0xff] %v6864
        %6881 = vst [vmem:[%s650 + $0x10] sm:$0xff] %v6865
        %6882 = vst [vmem:[%s650 + $0x18] sm:$0xff] %v6866
        %6883 = vst [vmem:[%s650 + $0x20] sm:$0xff] %v6867
        %6884 = vst [vmem:[%s650 + $0x28] sm:$0xff] %v6868
        %6885 = vst [vmem:[%s650 + $0x30] sm:$0xff] %v6869
        %6886 = vst [vmem:[%s650 + $0x38] sm:$0xff] %v6870
        %6887 = vst [vmem:[%s650 + $0x40] sm:$0xff] %v6871
        %6888 = vst [vmem:[%s650 + $0x48] sm:$0xff] %v6872
        %6889 = vst [vmem:[%s650 + $0x50] sm:$0xff] %v6873
        %6890 = vst [vmem:[%s650 + $0x58] sm:$0xff] %v6874
        %6891 = vst [vmem:[%s650 + $0x60] sm:$0xff] %v6875
        %6892 = vst [vmem:[%s650 + $0x68] sm:$0xff] %v6876
        %6893 = vst [vmem:[%s650 + $0x70] sm:$0xff] %v6877
        %6894 = vst [vmem:[%s650 + $0x78] sm:$0xff] %v6878
        %s6895 = sand.u32 %s315, 1
        %s6896 = sand.u32 %s315, 1
        %s6897 = smul.addr %s6896, 128
        %s6898 = scalar_lea.vmem [#allocation16], %s6897
        // Predicated region
        $region143: #{vit_block_forward.1} parent=105 // pred_check
          %p6899 = pneg %p325
        $region144: #{vit_block_forward.1} parent=105 // pred_check_branch
          %6901 = sbr.rel (%p6899) target = $region146
        $region145: #{vit_block_forward.1} parent=105 // pred_region
          %s6902 = smul.addr %s29, 8
          %s6903 = scalar_lea.vmem %s13, %s6902
          // Predicated region
          $region147: #{vit_block_forward.1} parent=145 // pred_check
            _
          $region148: #{vit_block_forward.1} parent=145 // pred_check_branch
            %6905 = sbr.rel (0) target = $region150
          $region149: #{vit_block_forward.1} parent=145 // pred_region
            // Predicated region
            $region151: #{vit_block_forward.1} parent=149 // pred_check
              _
            $region152: #{vit_block_forward.1} parent=149 // pred_check_branch
              %6907 = sbr.rel (0) target = $region154
            $region153: #{vit_block_forward.1} parent=149 // pred_region
              // Predicated region
              $region166: #{vit_block_forward.1} parent=153 // pred_check
                _
              $region167: #{vit_block_forward.1} parent=153 // pred_check_branch
                %6953 = sbr.rel (0) target = $region169
              $region168: #{vit_block_forward.1} parent=153 // pred_region
                loop: start=0, step=1, limit=1
                $region170: #{vit_block_forward.1} parent=168 // loop_pre_header
                  _
                $region171: #{vit_block_forward.1} parent=168 // loop_header
                  %s6955 = sphi 0, %s6959
                  %p6956 = scmp.ge.s32.totalorder %s6955, 1
                  %s6960 = sphi %s6898, %s6898
                  %s6961 = sphi %s6903, %s6903
                $region172: #{vit_block_forward.1} parent=168 // loop_header_branch
                  %6958 = sbr.rel (%p6956) target = $region176
                $region173: #{vit_block_forward.1} parent=168 // loop_body
                  %v6962 = vld [vmem:[%s6960] sm:$0xff]
                  %6963 = vst [vmem:[%s6961] sm:$0xff] %v6962
                  %v6964 = vld [vmem:[%s6960 + $0x8] sm:$0xff]
                  %6965 = vst [vmem:[%s6961 + $0x10] sm:$0xff] %v6964
                  %v6966 = vld [vmem:[%s6960 + $0x10] sm:$0xff]
                  %6967 = vst [vmem:[%s6961 + $0x20] sm:$0xff] %v6966
                  %v6968 = vld [vmem:[%s6960 + $0x18] sm:$0xff]
                  %6969 = vst [vmem:[%s6961 + $0x30] sm:$0xff] %v6968
                  %v6970 = vld [vmem:[%s6960 + $0x20] sm:$0xff]
                  %6971 = vst [vmem:[%s6961 + $0x40] sm:$0xff] %v6970
                  %v6972 = vld [vmem:[%s6960 + $0x28] sm:$0xff]
                  %6973 = vst [vmem:[%s6961 + $0x50] sm:$0xff] %v6972
                  %v6974 = vld [vmem:[%s6960 + $0x30] sm:$0xff]
                  %6975 = vst [vmem:[%s6961 + $0x60] sm:$0xff] %v6974
                  %v6976 = vld [vmem:[%s6960 + $0x38] sm:$0xff]
                  %6977 = vst [vmem:[%s6961 + $0x70] sm:$0xff] %v6976
                  %v6978 = vld [vmem:[%s6960 + $0x40] sm:$0xff]
                  %6979 = vst [vmem:[%s6961 + $0x80] sm:$0xff] %v6978
                  %v6980 = vld [vmem:[%s6960 + $0x48] sm:$0xff]
                  %6981 = vst [vmem:[%s6961 + $0x90] sm:$0xff] %v6980
                  %v6982 = vld [vmem:[%s6960 + $0x50] sm:$0xff]
                  %6983 = vst [vmem:[%s6961 + $0xa0] sm:$0xff] %v6982
                  %v6984 = vld [vmem:[%s6960 + $0x58] sm:$0xff]
                  %6985 = vst [vmem:[%s6961 + $0xb0] sm:$0xff] %v6984
                  %v6986 = vld [vmem:[%s6960 + $0x60] sm:$0xff]
                  %6987 = vst [vmem:[%s6961 + $0xc0] sm:$0xff] %v6986
                  %v6988 = vld [vmem:[%s6960 + $0x68] sm:$0xff]
                  %6989 = vst [vmem:[%s6961 + $0xd0] sm:$0xff] %v6988
                  %v6990 = vld [vmem:[%s6960 + $0x70] sm:$0xff]
                  %6991 = vst [vmem:[%s6961 + $0xe0] sm:$0xff] %v6990
                  %v6992 = vld [vmem:[%s6960 + $0x78] sm:$0xff]
                  %6993 = vst [vmem:[%s6961 + $0xf0] sm:$0xff] %v6992
                $region174: #{vit_block_forward.1} parent=168 // loop_footer
                  %s6959 = sadd.s32 1, %s6955
                $region175: #{vit_block_forward.1} parent=168 // loop_footer_branch
                  %6954 = sbr.rel target = $region171
                $region176: #{vit_block_forward.1} parent=168 // loop_exit
                  _
              $region169: #{vit_block_forward.1} parent=153 // pred_fallthru
                _
              // Predicated region
              $region177: #{vit_block_forward.1} parent=153 // pred_check
                _
              $region178: #{vit_block_forward.1} parent=153 // pred_check_branch
                %6995 = sbr.rel target = $region180
              $region179: #{vit_block_forward.1} parent=153 // pred_region
                _
              $region180: #{vit_block_forward.1} parent=153 // pred_fallthru
                _
            $region154: #{vit_block_forward.1} parent=149 // pred_fallthru
              _
            // Predicated region
            $region155: #{vit_block_forward.1} parent=149 // pred_check
              _
            $region156: #{vit_block_forward.1} parent=149 // pred_check_branch
              %6909 = sbr.rel target = $region158
            $region157: #{vit_block_forward.1} parent=149 // pred_region
              %s6911 = ssub.s32 256, 1
              loop: start=0, step=1, limit=1
              $region159: #{vit_block_forward.1} parent=157 // loop_pre_header
                _
              $region160: #{vit_block_forward.1} parent=157 // loop_header
                %s6913 = sphi 0, %s6917
                %p6914 = scmp.ge.s32.totalorder %s6913, 1
                %s6918 = sphi %s6898, %s6898
                %s6919 = sphi %s6903, %s6903
              $region161: #{vit_block_forward.1} parent=157 // loop_header_branch
                %6916 = sbr.rel (%p6914) target = $region165
              $region162: #{vit_block_forward.1} parent=157 // loop_body
                %v6920 = vld [vmem:[%s6918] sm:%s6911]
                %6921 = vst [vmem:[%s6919] sm:%s6911] %v6920
                %v6922 = vld [vmem:[%s6918 + $0x8] sm:%s6911]
                %6923 = vst [vmem:[%s6919 + $0x10] sm:%s6911] %v6922
                %v6924 = vld [vmem:[%s6918 + $0x10] sm:%s6911]
                %6925 = vst [vmem:[%s6919 + $0x20] sm:%s6911] %v6924
                %v6926 = vld [vmem:[%s6918 + $0x18] sm:%s6911]
                %6927 = vst [vmem:[%s6919 + $0x30] sm:%s6911] %v6926
                %v6928 = vld [vmem:[%s6918 + $0x20] sm:%s6911]
                %6929 = vst [vmem:[%s6919 + $0x40] sm:%s6911] %v6928
                %v6930 = vld [vmem:[%s6918 + $0x28] sm:%s6911]
                %6931 = vst [vmem:[%s6919 + $0x50] sm:%s6911] %v6930
                %v6932 = vld [vmem:[%s6918 + $0x30] sm:%s6911]
                %6933 = vst [vmem:[%s6919 + $0x60] sm:%s6911] %v6932
                %v6934 = vld [vmem:[%s6918 + $0x38] sm:%s6911]
                %6935 = vst [vmem:[%s6919 + $0x70] sm:%s6911] %v6934
                %v6936 = vld [vmem:[%s6918 + $0x40] sm:%s6911]
                %6937 = vst [vmem:[%s6919 + $0x80] sm:%s6911] %v6936
                %v6938 = vld [vmem:[%s6918 + $0x48] sm:%s6911]
                %6939 = vst [vmem:[%s6919 + $0x90] sm:%s6911] %v6938
                %v6940 = vld [vmem:[%s6918 + $0x50] sm:%s6911]
                %6941 = vst [vmem:[%s6919 + $0xa0] sm:%s6911] %v6940
                %v6942 = vld [vmem:[%s6918 + $0x58] sm:%s6911]
                %6943 = vst [vmem:[%s6919 + $0xb0] sm:%s6911] %v6942
                %v6944 = vld [vmem:[%s6918 + $0x60] sm:%s6911]
                %6945 = vst [vmem:[%s6919 + $0xc0] sm:%s6911] %v6944
                %v6946 = vld [vmem:[%s6918 + $0x68] sm:%s6911]
                %6947 = vst [vmem:[%s6919 + $0xd0] sm:%s6911] %v6946
                %v6948 = vld [vmem:[%s6918 + $0x70] sm:%s6911]
                %6949 = vst [vmem:[%s6919 + $0xe0] sm:%s6911] %v6948
                %v6950 = vld [vmem:[%s6918 + $0x78] sm:%s6911]
                %6951 = vst [vmem:[%s6919 + $0xf0] sm:%s6911] %v6950
              $region163: #{vit_block_forward.1} parent=157 // loop_footer
                %s6917 = sadd.s32 1, %s6913
              $region164: #{vit_block_forward.1} parent=157 // loop_footer_branch
                %6912 = sbr.rel target = $region160
              $region165: #{vit_block_forward.1} parent=157 // loop_exit
                _
            $region158: #{vit_block_forward.1} parent=149 // pred_fallthru
              _
          $region150: #{vit_block_forward.1} parent=145 // pred_fallthru
            _
          %6996 = vnop
        $region146: #{vit_block_forward.1} parent=105 // pred_fallthru
          _
      $region106: #{vit_block_forward.1} parent=5 // pred_fallthru
        _
      %p6997 = scmp.le.s32.totalorder 2, %s24
      // Predicated region
      $region181: #{vit_block_forward.1} parent=5 // pred_check
        %p6998 = pneg %p6997
      $region182: #{vit_block_forward.1} parent=5 // pred_check_branch
        %7000 = sbr.rel (%p6998) target = $region184
      $region183: #{vit_block_forward.1} parent=5 // pred_region
        %s7001 = ssub.s32 %s24, 2
        // Predicated region
        $region185: #{vit_block_forward.1} parent=183 // pred_check
          %p7002 = pneg %p331
        $region186: #{vit_block_forward.1} parent=183 // pred_check_branch
          %7004 = sbr.rel (%p7002) target = $region188
        $region187: #{vit_block_forward.1} parent=183 // pred_region
          %s7005 = sand.u32 %s316, 1
          %s7006 = sand.u32 %s316, 1
          %s7007 = smul.addr %s7006, 128
          %s7008 = scalar_lea.vmem [#allocation16], %s7007
        $region188: #{vit_block_forward.1} parent=183 // pred_fallthru
          _
      $region184: #{vit_block_forward.1} parent=5 // pred_fallthru
        _
    $region6: #{vit_block_forward.1} parent=1 // loop_footer
      %s28 = sadd.s32 1, %s24
    $region7: #{vit_block_forward.1} parent=1 // loop_footer_branch
      %23 = sbr.rel target = $region3
    $region8: #{vit_block_forward.1} parent=1 // loop_exit
      _
    %7009 = vsyncpa [#allocation4], 1
    %s7010 = scalar_lea.sflag [#allocation4], 1
    %7011 = vsyncpa %s7010, 1
    %7012 = vsyncpa [#allocation6], 1
    %7013 = vsyncpa [#allocation9], 1
    %7014 = vsyncpa [#allocation12], 1
    %7015 = vsyncpa [#allocation15], 1

</llo_original>
